<compile_context>
chip_gen: v7x
topology: tpu7x:2x2x1
jax: 0.10.0
libtpu: 0.0.40
codegen_flags: <defaults>
</compile_context>

<pallas_src>
import functools

import jax
import jax.numpy as jnp
from jax.experimental import pallas as pl
from jax.experimental.pallas import tpu as pltpu


# 48 MiB scoped VMEM: below v7x's 64 MiB physical per TC, generous headroom on
# v5e/v6e (128 MiB physical, where tile_n / buffer depth could be pushed further).
_VMEM_LIMIT_BYTES = 48 * 1024 * 1024


def _round_up(x, m):
    return (x + m - 1) // m * m


# ----------------------------------------------------------------------------
# Pallas kernels
# ----------------------------------------------------------------------------
def _enc_stage1_kernel(x_ref, w1_ref, b1_ref, w2_ref, b2_ref, g_ref):
    # x_ref: (1, T, 8) f32   w1: (8, 128) f32   w2: (128, 256) bf16
    # g_ref: (1, 8, 256) f32 -- this tile's channel max, broadcast over 8 sublanes
    #                           (wrapper finishes the max over tiles; no revisited
    #                            accumulator => both grid axes are "parallel").
    h = jnp.dot(x_ref[0], w1_ref[...], preferred_element_type=jnp.float32)
    h = jnp.maximum(h + b1_ref[...], 0.0)
    f = jnp.dot(h.astype(w2_ref.dtype), w2_ref[...],
                preferred_element_type=jnp.float32)
    f = f + b2_ref[...]
    tile_max = jnp.max(f, axis=0, keepdims=True)            # (1, 256)
    g_ref[0] = jnp.broadcast_to(tile_max, (8, f.shape[1]))


def _enc_stage2_kernel(x_ref, w1_ref, b1_ref, w2_ref, b2_ref,
                       bias3_ref, wp3_ref, w4_ref, b4_ref, feat_ref):
    # Recompute conv1/conv2 from x (cheap) instead of reading a materialized
    # (B, N, 256) tensor back from HBM, then conv3+ReLU -> conv4 -> tile max.
    # bias3: (1, 1, 512) = g @ Wg + b3 (global-feature half of the concat, hoisted)
    h = jnp.dot(x_ref[0], w1_ref[...], preferred_element_type=jnp.float32)
    h = jnp.maximum(h + b1_ref[...], 0.0)
    f = jnp.dot(h.astype(w2_ref.dtype), w2_ref[...],
                preferred_element_type=jnp.float32)
    f = f + b2_ref[...]
    h3 = jnp.dot(f.astype(wp3_ref.dtype), wp3_ref[...],
                 preferred_element_type=jnp.float32)
    h3 = jnp.maximum(h3 + bias3_ref[0], 0.0)
    h4 = jnp.dot(h3.astype(w4_ref.dtype), w4_ref[...],
                 preferred_element_type=jnp.float32)
    h4 = h4 + b4_ref[...]
    tile_max = jnp.max(h4, axis=0, keepdims=True)            # (1, code)
    feat_ref[0] = jnp.broadcast_to(tile_max, (8, h4.shape[1]))


def _decoders_kernel(pts_ref,
                     bias_a1_ref, wa1_ref, wb1_ref, bb1_ref, wc1_ref, bc1_ref,
                     bias_a2_ref, wa2_ref, wb2_ref, bb2_ref, wc2_ref, bc2_ref,
                     u1_ref, u2_ref):
    # Both mlp_conv(code+3, [512,512,3]) stacks fused; u1 feeds decoder 2
    # on-chip and is never round-tripped through HBM.
    # pts: (1, T, 8) f32; bias_a*: (1,1,512) = feat @ Wf_a + b_a (BN folded);
    # wa*: (8,512) f32; wb*: (512,512) bf16; wc*: (512,8) f32 (zero-padded cols 3..7).
    x = pts_ref[0]                                            # (T, 8) f32
    h = jnp.dot(x, wa1_ref[...], preferred_element_type=jnp.float32)
    h = jnp.maximum(h + bias_a1_ref[0], 0.0)
    h = jnp.dot(h.astype(wb1_ref.dtype), wb1_ref[...],
                preferred_element_type=jnp.float32)
    h = jnp.maximum(h + bb1_ref[...], 0.0)
    y1 = jnp.dot(h, wc1_ref[...], preferred_element_type=jnp.float32)
    y1 = y1 + bc1_ref[...]                                    # (T, 8) f32, cols 3..7 == 0
    u1_ref[0] = y1

    h2 = jnp.dot(y1, wa2_ref[...], preferred_element_type=jnp.float32)
    h2 = jnp.maximum(h2 + bias_a2_ref[0], 0.0)
    h2 = jnp.dot(h2.astype(wb2_ref.dtype), wb2_ref[...],
                 preferred_element_type=jnp.float32)
    h2 = jnp.maximum(h2 + bb2_ref[...], 0.0)
    y2 = jnp.dot(h2, wc2_ref[...], preferred_element_type=jnp.float32)
    y2 = y2 + bc2_ref[...]
    u2_ref[0] = y2


# ----------------------------------------------------------------------------
# pallas_call wrappers
# ----------------------------------------------------------------------------
def _encoder_stage1(x8, w1, b1, w2, b2, tile_n):
    B, Np, C8 = x8.shape
    c1 = w1.shape[1]
    c2 = w2.shape[1]
    nt = Np // tile_n
    return pl.pallas_call(
        _enc_stage1_kernel,
        out_shape=jax.ShapeDtypeStruct((B, 8 * nt, c2), jnp.float32),
        grid=(B, nt),
        in_specs=[
            pl.BlockSpec((1, tile_n, C8), lambda b, t: (b, t, 0)),
            pl.BlockSpec((C8, c1), lambda b, t: (0, 0)),
            pl.BlockSpec((1, c1), lambda b, t: (0, 0)),
            pl.BlockSpec((c1, c2), lambda b, t: (0, 0)),
            pl.BlockSpec((1, c2), lambda b, t: (0, 0)),
        ],
        out_specs=pl.BlockSpec((1, 8, c2), lambda b, t: (b, t, 0)),
        compiler_params=pltpu.CompilerParams(
            dimension_semantics=("parallel", "parallel"),
            vmem_limit_bytes=_VMEM_LIMIT_BYTES),
    )(x8, w1, b1, w2, b2)


def _encoder_stage2(x8, w1, b1, w2, b2, bias3, wp3, w4, b4, tile_n):
    B, Np, C8 = x8.shape
    c1 = w1.shape[1]
    c2 = w2.shape[1]
    c3 = wp3.shape[1]
    code = w4.shape[1]
    nt = Np // tile_n
    return pl.pallas_call(
        _enc_stage2_kernel,
        out_shape=jax.ShapeDtypeStruct((B, 8 * nt, code), jnp.float32),
        grid=(B, nt),
        in_specs=[
            pl.BlockSpec((1, tile_n, C8), lambda b, t: (b, t, 0)),
            pl.BlockSpec((C8, c1), lambda b, t: (0, 0)),
            pl.BlockSpec((1, c1), lambda b, t: (0, 0)),
            pl.BlockSpec((c1, c2), lambda b, t: (0, 0)),
            pl.BlockSpec((1, c2), lambda b, t: (0, 0)),
            pl.BlockSpec((1, 1, c3), lambda b, t: (b, 0, 0)),
            pl.BlockSpec((c2, c3), lambda b, t: (0, 0)),
            pl.BlockSpec((c3, code), lambda b, t: (0, 0)),
            pl.BlockSpec((1, code), lambda b, t: (0, 0)),
        ],
        out_specs=pl.BlockSpec((1, 8, code), lambda b, t: (b, t, 0)),
        compiler_params=pltpu.CompilerParams(
            dimension_semantics=("parallel", "parallel"),
            vmem_limit_bytes=_VMEM_LIMIT_BYTES),
    )(x8, w1, b1, w2, b2, bias3, wp3, w4, b4)


def _decoders(x8, bias_a1, m1, bias_a2, m2, tile_n):
    B, Np, C8 = x8.shape
    hid = m1["wb"].shape[0]
    nt = Np // tile_n

    def wspec(shape):
        return pl.BlockSpec(shape, lambda b, t: (0, 0))

    def bspec():
        return pl.BlockSpec((1, 1, hid), lambda b, t: (b, 0, 0))

    io_spec = pl.BlockSpec((1, tile_n, C8), lambda b, t: (b, t, 0))
    return pl.pallas_call(
        _decoders_kernel,
        out_shape=(jax.ShapeDtypeStruct((B, Np, C8), jnp.float32),
                   jax.ShapeDtypeStruct((B, Np, C8), jnp.float32)),
        grid=(B, nt),
        in_specs=[
            io_spec,
            bspec(), wspec((C8, hid)), wspec((hid, hid)), wspec((1, hid)),
            wspec((hid, C8)), wspec((1, C8)),
            bspec(), wspec((C8, hid)), wspec((hid, hid)), wspec((1, hid)),
            wspec((hid, C8)), wspec((1, C8)),
        ],
        out_specs=(io_spec, io_spec),
        compiler_params=pltpu.CompilerParams(
            dimension_semantics=("parallel", "parallel"),
            vmem_limit_bytes=_VMEM_LIMIT_BYTES),
    )(x8, bias_a1, m1["wa"], m1["wb"], m1["bb"], m1["wc"], m1["bc"],
      bias_a2, m2["wa"], m2["wb"], m2["bb"], m2["wc"], m2["bc"])


# ----------------------------------------------------------------------------
# Parameter init (deterministic, synthetic)
# ----------------------------------------------------------------------------
def _uni(key, shape, fan_in):
    k = 1.0 / jnp.sqrt(jnp.float32(fan_in))
    return jax.random.uniform(key, shape, jnp.float32, -k, k)


def init_params(key, code_nfts):
    ks = list(jax.random.split(key, 40))
    nk = iter(ks)
    p = {}
    # ---- PCN_encoder(3, code_nfts) ----
    p["e1_w"] = _uni(next(nk), (3, 128), 3);        p["e1_b"] = _uni(next(nk), (128,), 3)
    p["e2_w"] = _uni(next(nk), (128, 256), 128);    p["e2_b"] = _uni(next(nk), (256,), 128)
    p["e3_wp"] = _uni(next(nk), (256, 512), 512)    # point-feature half of conv3 (Cin=512)
    p["e3_wg"] = _uni(next(nk), (256, 512), 512)    # global-feature half of conv3
    p["e3_b"] = _uni(next(nk), (512,), 512)
    p["e4_w"] = _uni(next(nk), (512, code_nfts), 512)
    p["e4_b"] = _uni(next(nk), (code_nfts,), 512)

    # ---- two mlp_conv(code_nfts + 3, [512, 512, 3], bn=True) decoders ----
    def mlp():
        cin = code_nfts + 3
        m = {}
        m["wp_a"] = _uni(next(nk), (3, 512), cin)          # layer-a weight acting on xyz
        m["wf_a"] = _uni(next(nk), (code_nfts, 512), cin)  # layer-a weight acting on feature
        m["b_a"] = _uni(next(nk), (512,), cin)
        m["g_a"] = 1.0 + 0.1 * jax.random.normal(next(nk), (512,), jnp.float32)
        m["be_a"] = 0.1 * jax.random.normal(next(nk), (512,), jnp.float32)
        m["rm_a"] = jnp.zeros((512,), jnp.float32)
        m["rv_a"] = jnp.ones((512,), jnp.float32)
        m["w_b"] = _uni(next(nk), (512, 512), 512)
        m["b_b"] = _uni(next(nk), (512,), 512)
        m["g_b"] = 1.0 + 0.1 * jax.random.normal(next(nk), (512,), jnp.float32)
        m["be_b"] = 0.1 * jax.random.normal(next(nk), (512,), jnp.float32)
        m["rm_b"] = jnp.zeros((512,), jnp.float32)
        m["rv_b"] = jnp.ones((512,), jnp.float32)
        m["w_c"] = _uni(next(nk), (512, 3), 512)
        m["b_c"] = _uni(next(nk), (3,), 512)
        return m

    p["m1"] = mlp()
    p["m2"] = mlp()
    return p


# ----------------------------------------------------------------------------
# One-time param prep (BN folding, padding, bf16 casts) -- hoisted out of the
# per-forward path; only feature-dependent biases are computed per call.
# ----------------------------------------------------------------------------
def prepare_params(params, eps=1e-5):
    bf = jnp.bfloat16
    prep = {}
    # Encoder. Tiny xyz-side weight stays f32; wide matmuls go bf16.
    prep["w1"] = jnp.pad(params["e1_w"], ((0, 5), (0, 0)))          # (8, 128) f32
    prep["b1"] = params["e1_b"].reshape(1, -1)
    prep["w2"] = params["e2_w"].astype(bf)                          # (128, 256)
    prep["b2"] = params["e2_b"].reshape(1, -1)
    prep["e3_wg"] = params["e3_wg"]                                  # used per-call for bias3
    prep["e3_b"] = params["e3_b"]
    prep["wp3"] = params["e3_wp"].astype(bf)                        # (256, 512)
    prep["w4"] = params["e4_w"].astype(bf)                          # (512, code)
    prep["b4"] = params["e4_b"].reshape(1, -1)

    def dec(m):
        d = {}
        s_a = m["g_a"] * jax.lax.rsqrt(m["rv_a"] + eps)
        d["wf_a"] = m["wf_a"] * s_a[None, :]                        # (code, 512) f32, per-call bias
        d["b_a"] = (m["b_a"] - m["rm_a"]) * s_a + m["be_a"]
        d["wa"] = jnp.pad(m["wp_a"] * s_a[None, :], ((0, 5), (0, 0)))   # (8, 512) f32
        s_b = m["g_b"] * jax.lax.rsqrt(m["rv_b"] + eps)
        d["wb"] = (m["w_b"] * s_b[None, :]).astype(bf)              # (512, 512) bf16
        d["bb"] = ((m["b_b"] - m["rm_b"]) * s_b + m["be_b"]).reshape(1, -1)
        d["wc"] = jnp.pad(m["w_c"], ((0, 0), (0, 5)))               # (512, 8) f32, zero cols 3..7
        d["bc"] = jnp.pad(m["b_c"], (0, 5)).reshape(1, -1)          # (1, 8)
        return d

    prep["m1"] = dec(params["m1"])
    prep["m2"] = dec(params["m2"])
    return prep


# ----------------------------------------------------------------------------
# Forward pass
# ----------------------------------------------------------------------------
def unfolding_net_forward(x, prep, grid_size, tile_n=2048):
    """x: (B, 3, N) in PyTorch NCW layout; requires N == grid_size ** 2."""
    B, C, N = x.shape
    assert C == 3 and N == grid_size ** 2
    assert tile_n % 8 == 0, "tile_n must be a multiple of 8 (sublane tiling)"

    # Channel-last f32; pad N up to a multiple of the tile by replicating point 0
    # (replicas leave the global max unchanged); pad xyz channels 3 -> 8 with zeros.
    x_nc = jnp.transpose(x, (0, 2, 1)).astype(jnp.float32)          # (B, N, 3)
    tile = min(tile_n, _round_up(N, 8))
    Np = _round_up(N, tile)
    if Np > N:
        pad = jnp.broadcast_to(x_nc[:, :1, :], (B, Np - N, C))
        x_nc = jnp.concatenate([x_nc, pad], axis=1)
    x8 = jnp.pad(x_nc, ((0, 0), (0, 0), (0, 8 - C)))                # (B, Np, 8) f32

    # -------- PCN encoder (two fully-parallel kernels, no f materialization) ----
    g_tiles = _encoder_stage1(x8, prep["w1"], prep["b1"], prep["w2"], prep["b2"],
                              tile)                                 # (B, 8*nt, 256)
    g = jnp.max(g_tiles, axis=1)                                    # (B, 256)

    # concat(point_feat, global_feat) conv3 -> split: global half hoisted to a bias.
    bias3 = (g @ prep["e3_wg"] + prep["e3_b"]).reshape(B, 1, -1)    # (B, 1, 512)
    feat_tiles = _encoder_stage2(x8, prep["w1"], prep["b1"], prep["w2"], prep["b2"],
                                 bias3, prep["wp3"], prep["w4"], prep["b4"],
                                 tile)                              # (B, 8*nt, code)
    features = jnp.max(feat_tiles, axis=1)                          # (B, code)

    # -------- both unfolding MLPs fused into one kernel --------
    # torch: u1 = mlp1(cat([feat.repeat(N), x])); u2 = mlp2(cat([feat.repeat(N), u1]))
    m1, m2 = prep["m1"], prep["m2"]
    bias_a1 = (features @ m1["wf_a"] + m1["b_a"]).reshape(B, 1, -1)  # (B, 1, 512)
    bias_a2 = (features @ m2["wf_a"] + m2["b_a"]).reshape(B, 1, -1)
    u1_pad, u2_pad = _decoders(x8, bias_a1, m1, bias_a2, m2, tile)   # (B, Np, 8) f32 each

    # torch returns unfoldX.permute(0, 2, 1) == (B, N, 3), f32.
    unfold1 = u1_pad[:, :N, :3]
    unfold2 = u2_pad[:, :N, :3]
    return unfold1, unfold2


# ----------------------------------------------------------------------------
# Pure-JAX reference (f32, eval-mode BN) for correctness validation
# ----------------------------------------------------------------------------
def _reference_forward(x, params, eps=1e-5):
    xt = jnp.transpose(x, (0, 2, 1)).astype(jnp.float32)            # (B, N, 3)
    h = jax.nn.relu(xt @ params["e1_w"] + params["e1_b"])
    f = h @ params["e2_w"] + params["e2_b"]                          # (B, N, 256)
    g = jnp.max(f, axis=1)                                           # (B, 256)
    h3 = jax.nn.relu(f @ params["e3_wp"]
                     + (g @ params["e3_wg"] + params["e3_b"])[:, None, :])
    h4 = h3 @ params["e4_w"] + params["e4_b"]
    feat = jnp.max(h4, axis=1)                                       # (B, code)

    def mlp(m, pts):
        s_a = m["g_a"] * jax.lax.rsqrt(m["rv_a"] + eps)
        pre_a = pts @ m["wp_a"] + (feat @ m["wf_a"])[:, None, :] + m["b_a"]
        ha = jax.nn.relu((pre_a - m["rm_a"]) * s_a + m["be_a"])
        s_b = m["g_b"] * jax.lax.rsqrt(m["rv_b"] + eps)
        pre_b = ha @ m["w_b"] + m["b_b"]
        hb = jax.nn.relu((pre_b - m["rm_b"]) * s_b + m["be_b"])
        return hb @ m["w_c"] + m["b_c"]

    u1 = mlp(params["m1"], xt)
    u2 = mlp(params["m2"], u1)
    return u1, u2


if __name__ == "__main__":
    B = 2
    grid_size = 10           # small grid -> N = 100 points
    code_nfts = 128          # small code (default is 1024)
    N = grid_size ** 2
    test_tile = 64           # small tile so the multi-tile + N-padding paths run

    key = jax.random.PRNGKey(0)
    kx, kp = jax.random.split(key)
    x = jax.random.normal(kx, (B, 3, N), jnp.float32)
    params = init_params(kp, code_nfts)
    prep = prepare_params(params)        # one-time, outside the jitted forward

    fwd = jax.jit(functools.partial(unfolding_net_forward,
                                    grid_size=grid_size, tile_n=test_tile))
    unfold1, unfold2 = fwd(x, prep)
    jax.block_until_ready((unfold1, unfold2))

    assert unfold1.shape == (B, N, 3), unfold1.shape
    assert unfold2.shape == (B, N, 3), unfold2.shape
    assert jnp.all(jnp.isfinite(unfold1)) and jnp.all(jnp.isfinite(unfold2))

    # Validate against the f32 reference (loose tolerance: bf16 MXU inputs).
    ref1, ref2 = _reference_forward(x, params)
    assert bool(jnp.allclose(unfold1, ref1, atol=5e-2, rtol=5e-2))
    assert bool(jnp.allclose(unfold2, ref2, atol=5e-2, rtol=5e-2))

    print("KERNEL_OK")
</pallas_src>

<mosaic_0001>
module attributes {stable_mosaic.version = 11 : i64} {
  func.func @_enc_stage1_kernel(%arg0: i32, %arg1: i32, %arg2: memref<1x64x8xf32, #tpu.memory_space<vmem>>, %arg3: memref<8x128xf32, #tpu.memory_space<vmem>>, %arg4: memref<1x128xf32, #tpu.memory_space<vmem>>, %arg5: memref<128x256xbf16, #tpu.memory_space<vmem>>, %arg6: memref<1x256xf32, #tpu.memory_space<vmem>>, %arg7: memref<1x8x256xf32, #tpu.memory_space<vmem>>) attributes {dimension_semantics = [#tpu.dimension_semantics<parallel>, #tpu.dimension_semantics<parallel>], iteration_bounds = array<i64: 2, 2>, scalar_prefetch = 0 : i64, scratch_operands = 0 : i64, tpu.core_type = #tpu.core_type<tc>, window_params = [{transform_indices = @transform_0, window_bounds = array<i64: 1, 64, 8>}, {pipeline_mode = #tpu.pipeline_mode<synchronous>, transform_indices = @transform_1, window_bounds = array<i64: 8, 128>}, {pipeline_mode = #tpu.pipeline_mode<synchronous>, transform_indices = @transform_2, window_bounds = array<i64: 1, 128>}, {pipeline_mode = #tpu.pipeline_mode<synchronous>, transform_indices = @transform_3, window_bounds = array<i64: 128, 256>}, {pipeline_mode = #tpu.pipeline_mode<synchronous>, transform_indices = @transform_4, window_bounds = array<i64: 1, 256>}, {transform_indices = @transform_5, window_bounds = array<i64: 1, 8, 256>}]} {
    %c0 = arith.constant 0 : index
    %c0_0 = arith.constant 0 : index
    %c0_1 = arith.constant 0 : index
    %0 = vector.load %arg2[%c0, %c0_0, %c0_1] : memref<1x64x8xf32, #tpu.memory_space<vmem>>, vector<1x64x8xf32>
    %1 = vector.shape_cast %0 : vector<1x64x8xf32> to vector<64x8xf32>
    %c0_2 = arith.constant 0 : index
    %c0_3 = arith.constant 0 : index
    %2 = vector.load %arg3[%c0_2, %c0_3] : memref<8x128xf32, #tpu.memory_space<vmem>>, vector<8x128xf32>
    %cst = arith.constant dense<0.000000e+00> : vector<64x128xf32>
    %3 = tpu.matmul %1, %2, %cst {dimension_numbers = #tpu.dot_dimension_numbers<[1], [0], [0], [1], [0, 0, 1, 1], [], []>} : vector<64x8xf32>, vector<8x128xf32>, vector<64x128xf32> -> vector<64x128xf32>
    %c0_4 = arith.constant 0 : index
    %c0_5 = arith.constant 0 : index
    %4 = vector.load %arg4[%c0_4, %c0_5] : memref<1x128xf32, #tpu.memory_space<vmem>>, vector<1x128xf32>
    %5 = vector.broadcast %4 : vector<1x128xf32> to vector<64x128xf32>
    %6 = arith.addf %3, %5 : vector<64x128xf32>
    %cst_6 = arith.constant 0.000000e+00 : f32
    %7 = vector.broadcast %cst_6 : f32 to vector<64x128xf32>
    %8 = arith.maximumf %6, %7 : vector<64x128xf32>
    %9 = arith.truncf %8 : vector<64x128xf32> to vector<64x128xbf16>
    %c0_7 = arith.constant 0 : index
    %c0_8 = arith.constant 0 : index
    %10 = vector.load %arg5[%c0_7, %c0_8] : memref<128x256xbf16, #tpu.memory_space<vmem>>, vector<128x256xbf16>
    %cst_9 = arith.constant dense<0.000000e+00> : vector<64x256xf32>
    %11 = tpu.matmul %9, %10, %cst_9 {dimension_numbers = #tpu.dot_dimension_numbers<[1], [0], [0], [1], [0, 0, 1, 1], [], []>} : vector<64x128xbf16>, vector<128x256xbf16>, vector<64x256xf32> -> vector<64x256xf32>
    %c0_10 = arith.constant 0 : index
    %c0_11 = arith.constant 0 : index
    %12 = vector.load %arg6[%c0_10, %c0_11] : memref<1x256xf32, #tpu.memory_space<vmem>>, vector<1x256xf32>
    %13 = vector.broadcast %12 : vector<1x256xf32> to vector<64x256xf32>
    %14 = arith.addf %11, %13 : vector<64x256xf32>
    %cst_12 = arith.constant dense<0xFF800000> : vector<256xf32>
    %15 = vector.multi_reduction <maximumf>, %14, %cst_12 [0] : vector<64x256xf32> to vector<256xf32>
    %16 = vector.shape_cast %15 : vector<256xf32> to vector<1x256xf32>
    %17 = vector.shape_cast %16 : vector<1x256xf32> to vector<1x256xf32>
    %18 = vector.broadcast %17 : vector<1x256xf32> to vector<8x256xf32>
    %c0_13 = arith.constant 0 : index
    %c0_14 = arith.constant 0 : index
    %c0_15 = arith.constant 0 : index
    %19 = vector.load %arg7[%c0_13, %c0_14, %c0_15] : memref<1x8x256xf32, #tpu.memory_space<vmem>>, vector<1x8x256xf32>
    %20 = vector.shape_cast %19 : vector<1x8x256xf32> to vector<8x256xf32>
    %21 = vector.shape_cast %18 : vector<8x256xf32> to vector<1x8x256xf32>
    tpu.vector_store %arg7[%c0_13, %c0_14, %c0_15], %21 {strides = array<i32>} : memref<1x8x256xf32, #tpu.memory_space<vmem>>, vector<1x8x256xf32>,
    return
  }
  func.func @transform_0(%arg0: i32, %arg1: i32) -> (i32, i32, i32) {
    %c0_i32 = arith.constant 0 : i32
    %c0_i32_0 = arith.constant 0 : i32
    return %arg0, %arg1, %c0_i32 : i32, i32, i32
  }
  func.func @transform_1(%arg0: i32, %arg1: i32) -> (i32, i32) {
    %c0_i32 = arith.constant 0 : i32
    %c0_i32_0 = arith.constant 0 : i32
    %c0_i32_1 = arith.constant 0 : i32
    return %c0_i32, %c0_i32_0 : i32, i32
  }
  func.func @transform_2(%arg0: i32, %arg1: i32) -> (i32, i32) {
    %c0_i32 = arith.constant 0 : i32
    %c0_i32_0 = arith.constant 0 : i32
    %c0_i32_1 = arith.constant 0 : i32
    return %c0_i32, %c0_i32_0 : i32, i32
  }
  func.func @transform_3(%arg0: i32, %arg1: i32) -> (i32, i32) {
    %c0_i32 = arith.constant 0 : i32
    %c0_i32_0 = arith.constant 0 : i32
    %c0_i32_1 = arith.constant 0 : i32
    return %c0_i32, %c0_i32_0 : i32, i32
  }
  func.func @transform_4(%arg0: i32, %arg1: i32) -> (i32, i32) {
    %c0_i32 = arith.constant 0 : i32
    %c0_i32_0 = arith.constant 0 : i32
    %c0_i32_1 = arith.constant 0 : i32
    return %c0_i32, %c0_i32_0 : i32, i32
  }
  func.func @transform_5(%arg0: i32, %arg1: i32) -> (i32, i32, i32) {
    %c0_i32 = arith.constant 0 : i32
    %c0_i32_0 = arith.constant 0 : i32
    return %arg0, %arg1, %c0_i32 : i32, i32, i32
  }
}

module attributes {stable_mosaic.version = 11 : i64} {
  func.func @_enc_stage2_kernel(%arg0: i32, %arg1: i32, %arg2: memref<1x64x8xf32, #tpu.memory_space<vmem>>, %arg3: memref<8x128xf32, #tpu.memory_space<vmem>>, %arg4: memref<1x128xf32, #tpu.memory_space<vmem>>, %arg5: memref<128x256xbf16, #tpu.memory_space<vmem>>, %arg6: memref<1x256xf32, #tpu.memory_space<vmem>>, %arg7: memref<1x1x512xf32, #tpu.memory_space<vmem>>, %arg8: memref<256x512xbf16, #tpu.memory_space<vmem>>, %arg9: memref<512x128xbf16, #tpu.memory_space<vmem>>, %arg10: memref<1x128xf32, #tpu.memory_space<vmem>>, %arg11: memref<1x8x128xf32, #tpu.memory_space<vmem>>) attributes {dimension_semantics = [#tpu.dimension_semantics<parallel>, #tpu.dimension_semantics<parallel>], iteration_bounds = array<i64: 2, 2>, scalar_prefetch = 0 : i64, scratch_operands = 0 : i64, tpu.core_type = #tpu.core_type<tc>, window_params = [{transform_indices = @transform_0, window_bounds = array<i64: 1, 64, 8>}, {pipeline_mode = #tpu.pipeline_mode<synchronous>, transform_indices = @transform_1, window_bounds = array<i64: 8, 128>}, {pipeline_mode = #tpu.pipeline_mode<synchronous>, transform_indices = @transform_2, window_bounds = array<i64: 1, 128>}, {pipeline_mode = #tpu.pipeline_mode<synchronous>, transform_indices = @transform_3, window_bounds = array<i64: 128, 256>}, {pipeline_mode = #tpu.pipeline_mode<synchronous>, transform_indices = @transform_4, window_bounds = array<i64: 1, 256>}, {transform_indices = @transform_5, window_bounds = array<i64: 1, 1, 512>}, {pipeline_mode = #tpu.pipeline_mode<synchronous>, transform_indices = @transform_6, window_bounds = array<i64: 256, 512>}, {pipeline_mode = #tpu.pipeline_mode<synchronous>, transform_indices = @transform_7, window_bounds = array<i64: 512, 128>}, {pipeline_mode = #tpu.pipeline_mode<synchronous>, transform_indices = @transform_8, window_bounds = array<i64: 1, 128>}, {transform_indices = @transform_9, window_bounds = array<i64: 1, 8, 128>}]} {
    %c0 = arith.constant 0 : index
    %c0_0 = arith.constant 0 : index
    %c0_1 = arith.constant 0 : index
    %0 = vector.load %arg2[%c0, %c0_0, %c0_1] : memref<1x64x8xf32, #tpu.memory_space<vmem>>, vector<1x64x8xf32>
    %1 = vector.shape_cast %0 : vector<1x64x8xf32> to vector<64x8xf32>
    %c0_2 = arith.constant 0 : index
    %c0_3 = arith.constant 0 : index
    %2 = vector.load %arg3[%c0_2, %c0_3] : memref<8x128xf32, #tpu.memory_space<vmem>>, vector<8x128xf32>
    %cst = arith.constant dense<0.000000e+00> : vector<64x128xf32>
    %3 = tpu.matmul %1, %2, %cst {dimension_numbers = #tpu.dot_dimension_numbers<[1], [0], [0], [1], [0, 0, 1, 1], [], []>} : vector<64x8xf32>, vector<8x128xf32>, vector<64x128xf32> -> vector<64x128xf32>
    %c0_4 = arith.constant 0 : index
    %c0_5 = arith.constant 0 : index
    %4 = vector.load %arg4[%c0_4, %c0_5] : memref<1x128xf32, #tpu.memory_space<vmem>>, vector<1x128xf32>
    %5 = vector.broadcast %4 : vector<1x128xf32> to vector<64x128xf32>
    %6 = arith.addf %3, %5 : vector<64x128xf32>
    %cst_6 = arith.constant 0.000000e+00 : f32
    %7 = vector.broadcast %cst_6 : f32 to vector<64x128xf32>
    %8 = arith.maximumf %6, %7 : vector<64x128xf32>
    %9 = arith.truncf %8 : vector<64x128xf32> to vector<64x128xbf16>
    %c0_7 = arith.constant 0 : index
    %c0_8 = arith.constant 0 : index
    %10 = vector.load %arg5[%c0_7, %c0_8] : memref<128x256xbf16, #tpu.memory_space<vmem>>, vector<128x256xbf16>
    %cst_9 = arith.constant dense<0.000000e+00> : vector<64x256xf32>
    %11 = tpu.matmul %9, %10, %cst_9 {dimension_numbers = #tpu.dot_dimension_numbers<[1], [0], [0], [1], [0, 0, 1, 1], [], []>} : vector<64x128xbf16>, vector<128x256xbf16>, vector<64x256xf32> -> vector<64x256xf32>
    %c0_10 = arith.constant 0 : index
    %c0_11 = arith.constant 0 : index
    %12 = vector.load %arg6[%c0_10, %c0_11] : memref<1x256xf32, #tpu.memory_space<vmem>>, vector<1x256xf32>
    %13 = vector.broadcast %12 : vector<1x256xf32> to vector<64x256xf32>
    %14 = arith.addf %11, %13 : vector<64x256xf32>
    %15 = arith.truncf %14 : vector<64x256xf32> to vector<64x256xbf16>
    %c0_12 = arith.constant 0 : index
    %c0_13 = arith.constant 0 : index
    %16 = vector.load %arg8[%c0_12, %c0_13] : memref<256x512xbf16, #tpu.memory_space<vmem>>, vector<256x512xbf16>
    %cst_14 = arith.constant dense<0.000000e+00> : vector<64x512xf32>
    %17 = tpu.matmul %15, %16, %cst_14 {dimension_numbers = #tpu.dot_dimension_numbers<[1], [0], [0], [1], [0, 0, 1, 1], [], []>} : vector<64x256xbf16>, vector<256x512xbf16>, vector<64x512xf32> -> vector<64x512xf32>
    %c0_15 = arith.constant 0 : index
    %c0_16 = arith.constant 0 : index
    %c0_17 = arith.constant 0 : index
    %18 = vector.load %arg7[%c0_15, %c0_16, %c0_17] : memref<1x1x512xf32, #tpu.memory_space<vmem>>, vector<1x1x512xf32>
    %19 = vector.shape_cast %18 : vector<1x1x512xf32> to vector<1x512xf32>
    %20 = vector.broadcast %19 : vector<1x512xf32> to vector<64x512xf32>
    %21 = arith.addf %17, %20 : vector<64x512xf32>
    %cst_18 = arith.constant 0.000000e+00 : f32
    %22 = vector.broadcast %cst_18 : f32 to vector<64x512xf32>
    %23 = arith.maximumf %21, %22 : vector<64x512xf32>
    %24 = arith.truncf %23 : vector<64x512xf32> to vector<64x512xbf16>
    %c0_19 = arith.constant 0 : index
    %c0_20 = arith.constant 0 : index
    %25 = vector.load %arg9[%c0_19, %c0_20] : memref<512x128xbf16, #tpu.memory_space<vmem>>, vector<512x128xbf16>
    %cst_21 = arith.constant dense<0.000000e+00> : vector<64x128xf32>
    %26 = tpu.matmul %24, %25, %cst_21 {dimension_numbers = #tpu.dot_dimension_numbers<[1], [0], [0], [1], [0, 0, 1, 1], [], []>} : vector<64x512xbf16>, vector<512x128xbf16>, vector<64x128xf32> -> vector<64x128xf32>
    %c0_22 = arith.constant 0 : index
    %c0_23 = arith.constant 0 : index
    %27 = vector.load %arg10[%c0_22, %c0_23] : memref<1x128xf32, #tpu.memory_space<vmem>>, vector<1x128xf32>
    %28 = vector.broadcast %27 : vector<1x128xf32> to vector<64x128xf32>
    %29 = arith.addf %26, %28 : vector<64x128xf32>
    %cst_24 = arith.constant dense<0xFF800000> : vector<128xf32>
    %30 = vector.multi_reduction <maximumf>, %29, %cst_24 [0] : vector<64x128xf32> to vector<128xf32>
    %31 = vector.shape_cast %30 : vector<128xf32> to vector<1x128xf32>
    %32 = vector.shape_cast %31 : vector<1x128xf32> to vector<1x128xf32>
    %33 = vector.broadcast %32 : vector<1x128xf32> to vector<8x128xf32>
    %c0_25 = arith.constant 0 : index
    %c0_26 = arith.constant 0 : index
    %c0_27 = arith.constant 0 : index
    %34 = vector.load %arg11[%c0_25, %c0_26, %c0_27] : memref<1x8x128xf32, #tpu.memory_space<vmem>>, vector<1x8x128xf32>
    %35 = vector.shape_cast %34 : vector<1x8x128xf32> to vector<8x128xf32>
    %36 = vector.shape_cast %33 : vector<8x128xf32> to vector<1x8x128xf32>
    tpu.vector_store %arg11[%c0_25, %c0_26, %c0_27], %36 {strides = array<i32>} : memref<1x8x128xf32, #tpu.memory_space<vmem>>, vector<1x8x128xf32>,
    return
  }
  func.func @transform_0(%arg0: i32, %arg1: i32) -> (i32, i32, i32) {
    %c0_i32 = arith.constant 0 : i32
    %c0_i32_0 = arith.constant 0 : i32
    return %arg0, %arg1, %c0_i32 : i32, i32, i32
  }
  func.func @transform_1(%arg0: i32, %arg1: i32) -> (i32, i32) {
    %c0_i32 = arith.constant 0 : i32
    %c0_i32_0 = arith.constant 0 : i32
    %c0_i32_1 = arith.constant 0 : i32
    return %c0_i32, %c0_i32_0 : i32, i32
  }
  func.func @transform_2(%arg0: i32, %arg1: i32) -> (i32, i32) {
    %c0_i32 = arith.constant 0 : i32
    %c0_i32_0 = arith.constant 0 : i32
    %c0_i32_1 = arith.constant 0 : i32
    return %c0_i32, %c0_i32_0 : i32, i32
  }
  func.func @transform_3(%arg0: i32, %arg1: i32) -> (i32, i32) {
    %c0_i32 = arith.constant 0 : i32
    %c0_i32_0 = arith.constant 0 : i32
    %c0_i32_1 = arith.constant 0 : i32
    return %c0_i32, %c0_i32_0 : i32, i32
  }
  func.func @transform_4(%arg0: i32, %arg1: i32) -> (i32, i32) {
    %c0_i32 = arith.constant 0 : i32
    %c0_i32_0 = arith.constant 0 : i32
    %c0_i32_1 = arith.constant 0 : i32
    return %c0_i32, %c0_i32_0 : i32, i32
  }
  func.func @transform_5(%arg0: i32, %arg1: i32) -> (i32, i32, i32) {
    %c0_i32 = arith.constant 0 : i32
    %c0_i32_0 = arith.constant 0 : i32
    %c0_i32_1 = arith.constant 0 : i32
    return %arg0, %c0_i32, %c0_i32_0 : i32, i32, i32
  }
  func.func @transform_6(%arg0: i32, %arg1: i32) -> (i32, i32) {
    %c0_i32 = arith.constant 0 : i32
    %c0_i32_0 = arith.constant 0 : i32
    %c0_i32_1 = arith.constant 0 : i32
    return %c0_i32, %c0_i32_0 : i32, i32
  }
  func.func @transform_7(%arg0: i32, %arg1: i32) -> (i32, i32) {
    %c0_i32 = arith.constant 0 : i32
    %c0_i32_0 = arith.constant 0 : i32
    %c0_i32_1 = arith.constant 0 : i32
    return %c0_i32, %c0_i32_0 : i32, i32
  }
  func.func @transform_8(%arg0: i32, %arg1: i32) -> (i32, i32) {
    %c0_i32 = arith.constant 0 : i32
    %c0_i32_0 = arith.constant 0 : i32
    %c0_i32_1 = arith.constant 0 : i32
    return %c0_i32, %c0_i32_0 : i32, i32
  }
  func.func @transform_9(%arg0: i32, %arg1: i32) -> (i32, i32, i32) {
    %c0_i32 = arith.constant 0 : i32
    %c0_i32_0 = arith.constant 0 : i32
    return %arg0, %arg1, %c0_i32 : i32, i32, i32
  }
}

module attributes {stable_mosaic.version = 11 : i64} {
  func.func @_decoders_kernel(%arg0: i32, %arg1: i32, %arg2: memref<1x64x8xf32, #tpu.memory_space<vmem>>, %arg3: memref<1x1x512xf32, #tpu.memory_space<vmem>>, %arg4: memref<8x512xf32, #tpu.memory_space<vmem>>, %arg5: memref<512x512xbf16, #tpu.memory_space<vmem>>, %arg6: memref<1x512xf32, #tpu.memory_space<vmem>>, %arg7: memref<512x8xf32, #tpu.memory_space<vmem>>, %arg8: memref<1x8xf32, #tpu.memory_space<vmem>>, %arg9: memref<1x1x512xf32, #tpu.memory_space<vmem>>, %arg10: memref<8x512xf32, #tpu.memory_space<vmem>>, %arg11: memref<512x512xbf16, #tpu.memory_space<vmem>>, %arg12: memref<1x512xf32, #tpu.memory_space<vmem>>, %arg13: memref<512x8xf32, #tpu.memory_space<vmem>>, %arg14: memref<1x8xf32, #tpu.memory_space<vmem>>, %arg15: memref<1x64x8xf32, #tpu.memory_space<vmem>>, %arg16: memref<1x64x8xf32, #tpu.memory_space<vmem>>) attributes {dimension_semantics = [#tpu.dimension_semantics<parallel>, #tpu.dimension_semantics<parallel>], iteration_bounds = array<i64: 2, 2>, scalar_prefetch = 0 : i64, scratch_operands = 0 : i64, tpu.core_type = #tpu.core_type<tc>, window_params = [{transform_indices = @transform_0, window_bounds = array<i64: 1, 64, 8>}, {transform_indices = @transform_1, window_bounds = array<i64: 1, 1, 512>}, {pipeline_mode = #tpu.pipeline_mode<synchronous>, transform_indices = @transform_2, window_bounds = array<i64: 8, 512>}, {pipeline_mode = #tpu.pipeline_mode<synchronous>, transform_indices = @transform_3, window_bounds = array<i64: 512, 512>}, {pipeline_mode = #tpu.pipeline_mode<synchronous>, transform_indices = @transform_4, window_bounds = array<i64: 1, 512>}, {pipeline_mode = #tpu.pipeline_mode<synchronous>, transform_indices = @transform_5, window_bounds = array<i64: 512, 8>}, {pipeline_mode = #tpu.pipeline_mode<synchronous>, transform_indices = @transform_6, window_bounds = array<i64: 1, 8>}, {transform_indices = @transform_7, window_bounds = array<i64: 1, 1, 512>}, {pipeline_mode = #tpu.pipeline_mode<synchronous>, transform_indices = @transform_8, window_bounds = array<i64: 8, 512>}, {pipeline_mode = #tpu.pipeline_mode<synchronous>, transform_indices = @transform_9, window_bounds = array<i64: 512, 512>}, {pipeline_mode = #tpu.pipeline_mode<synchronous>, transform_indices = @transform_10, window_bounds = array<i64: 1, 512>}, {pipeline_mode = #tpu.pipeline_mode<synchronous>, transform_indices = @transform_11, window_bounds = array<i64: 512, 8>}, {pipeline_mode = #tpu.pipeline_mode<synchronous>, transform_indices = @transform_12, window_bounds = array<i64: 1, 8>}, {transform_indices = @transform_13, window_bounds = array<i64: 1, 64, 8>}, {transform_indices = @transform_14, window_bounds = array<i64: 1, 64, 8>}]} {
    %c0 = arith.constant 0 : index
    %c0_0 = arith.constant 0 : index
    %c0_1 = arith.constant 0 : index
    %0 = vector.load %arg2[%c0, %c0_0, %c0_1] : memref<1x64x8xf32, #tpu.memory_space<vmem>>, vector<1x64x8xf32>
    %1 = vector.shape_cast %0 : vector<1x64x8xf32> to vector<64x8xf32>
    %c0_2 = arith.constant 0 : index
    %c0_3 = arith.constant 0 : index
    %2 = vector.load %arg4[%c0_2, %c0_3] : memref<8x512xf32, #tpu.memory_space<vmem>>, vector<8x512xf32>
    %cst = arith.constant dense<0.000000e+00> : vector<64x512xf32>
    %3 = tpu.matmul %1, %2, %cst {dimension_numbers = #tpu.dot_dimension_numbers<[1], [0], [0], [1], [0, 0, 1, 1], [], []>} : vector<64x8xf32>, vector<8x512xf32>, vector<64x512xf32> -> vector<64x512xf32>
    %c0_4 = arith.constant 0 : index
    %c0_5 = arith.constant 0 : index
    %c0_6 = arith.constant 0 : index
    %4 = vector.load %arg3[%c0_4, %c0_5, %c0_6] : memref<1x1x512xf32, #tpu.memory_space<vmem>>, vector<1x1x512xf32>
    %5 = vector.shape_cast %4 : vector<1x1x512xf32> to vector<1x512xf32>
    %6 = vector.broadcast %5 : vector<1x512xf32> to vector<64x512xf32>
    %7 = arith.addf %3, %6 : vector<64x512xf32>
    %cst_7 = arith.constant 0.000000e+00 : f32
    %8 = vector.broadcast %cst_7 : f32 to vector<64x512xf32>
    %9 = arith.maximumf %7, %8 : vector<64x512xf32>
    %10 = arith.truncf %9 : vector<64x512xf32> to vector<64x512xbf16>
    %c0_8 = arith.constant 0 : index
    %c0_9 = arith.constant 0 : index
    %11 = vector.load %arg5[%c0_8, %c0_9] : memref<512x512xbf16, #tpu.memory_space<vmem>>, vector<512x512xbf16>
    %cst_10 = arith.constant dense<0.000000e+00> : vector<64x512xf32>
    %12 = tpu.matmul %10, %11, %cst_10 {dimension_numbers = #tpu.dot_dimension_numbers<[1], [0], [0], [1], [0, 0, 1, 1], [], []>} : vector<64x512xbf16>, vector<512x512xbf16>, vector<64x512xf32> -> vector<64x512xf32>
    %c0_11 = arith.constant 0 : index
    %c0_12 = arith.constant 0 : index
    %13 = vector.load %arg6[%c0_11, %c0_12] : memref<1x512xf32, #tpu.memory_space<vmem>>, vector<1x512xf32>
    %14 = vector.broadcast %13 : vector<1x512xf32> to vector<64x512xf32>
    %15 = arith.addf %12, %14 : vector<64x512xf32>
    %cst_13 = arith.constant 0.000000e+00 : f32
    %16 = vector.broadcast %cst_13 : f32 to vector<64x512xf32>
    %17 = arith.maximumf %15, %16 : vector<64x512xf32>
    %c0_14 = arith.constant 0 : index
    %c0_15 = arith.constant 0 : index
    %18 = vector.load %arg7[%c0_14, %c0_15] : memref<512x8xf32, #tpu.memory_space<vmem>>, vector<512x8xf32>
    %cst_16 = arith.constant dense<0.000000e+00> : vector<64x8xf32>
    %19 = tpu.matmul %17, %18, %cst_16 {dimension_numbers = #tpu.dot_dimension_numbers<[1], [0], [0], [1], [0, 0, 1, 1], [], []>} : vector<64x512xf32>, vector<512x8xf32>, vector<64x8xf32> -> vector<64x8xf32>
    %c0_17 = arith.constant 0 : index
    %c0_18 = arith.constant 0 : index
    %20 = vector.load %arg8[%c0_17, %c0_18] : memref<1x8xf32, #tpu.memory_space<vmem>>, vector<1x8xf32>
    %21 = vector.broadcast %20 : vector<1x8xf32> to vector<64x8xf32>
    %22 = arith.addf %19, %21 : vector<64x8xf32>
    %c0_19 = arith.constant 0 : index
    %c0_20 = arith.constant 0 : index
    %c0_21 = arith.constant 0 : index
    %23 = vector.load %arg15[%c0_19, %c0_20, %c0_21] : memref<1x64x8xf32, #tpu.memory_space<vmem>>, vector<1x64x8xf32>
    %24 = vector.shape_cast %23 : vector<1x64x8xf32> to vector<64x8xf32>
    %25 = vector.shape_cast %22 : vector<64x8xf32> to vector<1x64x8xf32>
    tpu.vector_store %arg15[%c0_19, %c0_20, %c0_21], %25 {strides = array<i32>} : memref<1x64x8xf32, #tpu.memory_space<vmem>>, vector<1x64x8xf32>,
    %c0_22 = arith.constant 0 : index
    %c0_23 = arith.constant 0 : index
    %26 = vector.load %arg10[%c0_22, %c0_23] : memref<8x512xf32, #tpu.memory_space<vmem>>, vector<8x512xf32>
    %cst_24 = arith.constant dense<0.000000e+00> : vector<64x512xf32>
    %27 = tpu.matmul %22, %26, %cst_24 {dimension_numbers = #tpu.dot_dimension_numbers<[1], [0], [0], [1], [0, 0, 1, 1], [], []>} : vector<64x8xf32>, vector<8x512xf32>, vector<64x512xf32> -> vector<64x512xf32>
    %c0_25 = arith.constant 0 : index
    %c0_26 = arith.constant 0 : index
    %c0_27 = arith.constant 0 : index
    %28 = vector.load %arg9[%c0_25, %c0_26, %c0_27] : memref<1x1x512xf32, #tpu.memory_space<vmem>>, vector<1x1x512xf32>
    %29 = vector.shape_cast %28 : vector<1x1x512xf32> to vector<1x512xf32>
    %30 = vector.broadcast %29 : vector<1x512xf32> to vector<64x512xf32>
    %31 = arith.addf %27, %30 : vector<64x512xf32>
    %cst_28 = arith.constant 0.000000e+00 : f32
    %32 = vector.broadcast %cst_28 : f32 to vector<64x512xf32>
    %33 = arith.maximumf %31, %32 : vector<64x512xf32>
    %34 = arith.truncf %33 : vector<64x512xf32> to vector<64x512xbf16>
    %c0_29 = arith.constant 0 : index
    %c0_30 = arith.constant 0 : index
    %35 = vector.load %arg11[%c0_29, %c0_30] : memref<512x512xbf16, #tpu.memory_space<vmem>>, vector<512x512xbf16>
    %cst_31 = arith.constant dense<0.000000e+00> : vector<64x512xf32>
    %36 = tpu.matmul %34, %35, %cst_31 {dimension_numbers = #tpu.dot_dimension_numbers<[1], [0], [0], [1], [0, 0, 1, 1], [], []>} : vector<64x512xbf16>, vector<512x512xbf16>, vector<64x512xf32> -> vector<64x512xf32>
    %c0_32 = arith.constant 0 : index
    %c0_33 = arith.constant 0 : index
    %37 = vector.load %arg12[%c0_32, %c0_33] : memref<1x512xf32, #tpu.memory_space<vmem>>, vector<1x512xf32>
    %38 = vector.broadcast %37 : vector<1x512xf32> to vector<64x512xf32>
    %39 = arith.addf %36, %38 : vector<64x512xf32>
    %cst_34 = arith.constant 0.000000e+00 : f32
    %40 = vector.broadcast %cst_34 : f32 to vector<64x512xf32>
    %41 = arith.maximumf %39, %40 : vector<64x512xf32>
    %c0_35 = arith.constant 0 : index
    %c0_36 = arith.constant 0 : index
    %42 = vector.load %arg13[%c0_35, %c0_36] : memref<512x8xf32, #tpu.memory_space<vmem>>, vector<512x8xf32>
    %cst_37 = arith.constant dense<0.000000e+00> : vector<64x8xf32>
    %43 = tpu.matmul %41, %42, %cst_37 {dimension_numbers = #tpu.dot_dimension_numbers<[1], [0], [0], [1], [0, 0, 1, 1], [], []>} : vector<64x512xf32>, vector<512x8xf32>, vector<64x8xf32> -> vector<64x8xf32>
    %c0_38 = arith.constant 0 : index
    %c0_39 = arith.constant 0 : index
    %44 = vector.load %arg14[%c0_38, %c0_39] : memref<1x8xf32, #tpu.memory_space<vmem>>, vector<1x8xf32>
    %45 = vector.broadcast %44 : vector<1x8xf32> to vector<64x8xf32>
    %46 = arith.addf %43, %45 : vector<64x8xf32>
    %c0_40 = arith.constant 0 : index
    %c0_41 = arith.constant 0 : index
    %c0_42 = arith.constant 0 : index
    %47 = vector.load %arg16[%c0_40, %c0_41, %c0_42] : memref<1x64x8xf32, #tpu.memory_space<vmem>>, vector<1x64x8xf32>
    %48 = vector.shape_cast %47 : vector<1x64x8xf32> to vector<64x8xf32>
    %49 = vector.shape_cast %46 : vector<64x8xf32> to vector<1x64x8xf32>
    tpu.vector_store %arg16[%c0_40, %c0_41, %c0_42], %49 {strides = array<i32>} : memref<1x64x8xf32, #tpu.memory_space<vmem>>, vector<1x64x8xf32>,
    return
  }
  func.func @transform_0(%arg0: i32, %arg1: i32) -> (i32, i32, i32) {
    %c0_i32 = arith.constant 0 : i32
    %c0_i32_0 = arith.constant 0 : i32
    return %arg0, %arg1, %c0_i32 : i32, i32, i32
  }
  func.func @transform_1(%arg0: i32, %arg1: i32) -> (i32, i32, i32) {
    %c0_i32 = arith.constant 0 : i32
    %c0_i32_0 = arith.constant 0 : i32
    %c0_i32_1 = arith.constant 0 : i32
    return %arg0, %c0_i32, %c0_i32_0 : i32, i32, i32
  }
  func.func @transform_2(%arg0: i32, %arg1: i32) -> (i32, i32) {
    %c0_i32 = arith.constant 0 : i32
    %c0_i32_0 = arith.constant 0 : i32
    %c0_i32_1 = arith.constant 0 : i32
    return %c0_i32, %c0_i32_0 : i32, i32
  }
  func.func @transform_3(%arg0: i32, %arg1: i32) -> (i32, i32) {
    %c0_i32 = arith.constant 0 : i32
    %c0_i32_0 = arith.constant 0 : i32
    %c0_i32_1 = arith.constant 0 : i32
    return %c0_i32, %c0_i32_0 : i32, i32
  }
  func.func @transform_4(%arg0: i32, %arg1: i32) -> (i32, i32) {
    %c0_i32 = arith.constant 0 : i32
    %c0_i32_0 = arith.constant 0 : i32
    %c0_i32_1 = arith.constant 0 : i32
    return %c0_i32, %c0_i32_0 : i32, i32
  }
  func.func @transform_5(%arg0: i32, %arg1: i32) -> (i32, i32) {
    %c0_i32 = arith.constant 0 : i32
    %c0_i32_0 = arith.constant 0 : i32
    %c0_i32_1 = arith.constant 0 : i32
    return %c0_i32, %c0_i32_0 : i32, i32
  }
  func.func @transform_6(%arg0: i32, %arg1: i32) -> (i32, i32) {
    %c0_i32 = arith.constant 0 : i32
    %c0_i32_0 = arith.constant 0 : i32
    %c0_i32_1 = arith.constant 0 : i32
    return %c0_i32, %c0_i32_0 : i32, i32
  }
  func.func @transform_7(%arg0: i32, %arg1: i32) -> (i32, i32, i32) {
    %c0_i32 = arith.constant 0 : i32
    %c0_i32_0 = arith.constant 0 : i32
    %c0_i32_1 = arith.constant 0 : i32
    return %arg0, %c0_i32, %c0_i32_0 : i32, i32, i32
  }
  func.func @transform_8(%arg0: i32, %arg1: i32) -> (i32, i32) {
    %c0_i32 = arith.constant 0 : i32
    %c0_i32_0 = arith.constant 0 : i32
    %c0_i32_1 = arith.constant 0 : i32
    return %c0_i32, %c0_i32_0 : i32, i32
  }
  func.func @transform_9(%arg0: i32, %arg1: i32) -> (i32, i32) {
    %c0_i32 = arith.constant 0 : i32
    %c0_i32_0 = arith.constant 0 : i32
    %c0_i32_1 = arith.constant 0 : i32
    return %c0_i32, %c0_i32_0 : i32, i32
  }
  func.func @transform_10(%arg0: i32, %arg1: i32) -> (i32, i32) {
    %c0_i32 = arith.constant 0 : i32
    %c0_i32_0 = arith.constant 0 : i32
    %c0_i32_1 = arith.constant 0 : i32
    return %c0_i32, %c0_i32_0 : i32, i32
  }
  func.func @transform_11(%arg0: i32, %arg1: i32) -> (i32, i32) {
    %c0_i32 = arith.constant 0 : i32
    %c0_i32_0 = arith.constant 0 : i32
    %c0_i32_1 = arith.constant 0 : i32
    return %c0_i32, %c0_i32_0 : i32, i32
  }
  func.func @transform_12(%arg0: i32, %arg1: i32) -> (i32, i32) {
    %c0_i32 = arith.constant 0 : i32
    %c0_i32_0 = arith.constant 0 : i32
    %c0_i32_1 = arith.constant 0 : i32
    return %c0_i32, %c0_i32_0 : i32, i32
  }
  func.func @transform_13(%arg0: i32, %arg1: i32) -> (i32, i32, i32) {
    %c0_i32 = arith.constant 0 : i32
    %c0_i32_0 = arith.constant 0 : i32
    return %arg0, %arg1, %c0_i32 : i32, i32, i32
  }
  func.func @transform_14(%arg0: i32, %arg1: i32) -> (i32, i32, i32) {
    %c0_i32 = arith.constant 0 : i32
    %c0_i32_0 = arith.constant 0 : i32
    return %arg0, %arg1, %c0_i32 : i32, i32, i32
  }
}

</mosaic_0001>

<llo_original>
// kernel: unfolding_net_forward.3
$region0: #{unfolding_net_forward.3}
  #allocation0 [shape = 'u32[]', space=smem, size = 0x4, offset = 0x4, fixed_abs, tag = 'smem constant byte address 0x4 - core index']
  #allocation1 [shape = 'u32[144,128]{1,0:T(1,128)}', space=vmem, size = 0x12000, scoped, tag = 'internal scratch']
  %s0 = inlined_call_operand.vmem [shape: f32[2,128,8], index: 0, kind: input, shape index: {}]
  %s1 = inlined_call_operand.vmem [shape: f32[8,128], index: 1, kind: input, shape index: {}]
  %s2 = inlined_call_operand.vmem [shape: f32[1,128], index: 2, kind: input, shape index: {}]
  %s3 = inlined_call_operand.vmem [shape: bf16[128,256], index: 3, kind: input, shape index: {}]
  %s4 = inlined_call_operand.vmem [shape: f32[1,256], index: 4, kind: input, shape index: {}]
  %s5 = inlined_call_operand.vmem [shape: f32[2,16,256], index: 5, kind: output, shape index: {}]
  %s6 = sld [smem:[#allocation0]]
  $region53: #{unfolding_net_forward.3} parent=0
    _
  %s8 = ssub.s32 1, %s6
  %s9 = scalar_select 0, %s8, %s6
  loop: start=0, step=1, limit=6
  $region2: #{unfolding_net_forward.3} parent=0 // loop_pre_header
    _
  $region3: #{unfolding_net_forward.3} parent=0 // loop_header
    %s11 = sphi 0, %s15
    %p12 = scmp.ge.s32.totalorder %s11, 6
    %s18 = sphi 0, %s30
    %s19 = sphi 0, %s26
    %s20 = sphi 0, %s18
    %s21 = sphi 0, %s19
    %s22 = sphi 0, %s20
    %s23 = sphi 0, %s21
    %s35 = sphi 0, %s37
    %s38 = sphi 0, %s35
    %s39 = sphi 0, %s38
    %s55 = sphi 0, %s39
    %s59 = sphi 0, %s59
    %s61 = sphi 0, %s59
    %s62 = sphi 0, %s61
    %s76 = sphi 0, %s62
    %s80 = sphi 0, %s80
    %s82 = sphi 0, %s80
    %s83 = sphi 0, %s82
    %s97 = sphi 0, %s83
    %s101 = sphi 0, %s101
    %s103 = sphi 0, %s101
    %s104 = sphi 0, %s103
    %s118 = sphi 0, %s104
    %s122 = sphi 0, %s122
    %s124 = sphi 0, %s122
    %s125 = sphi 0, %s124
    %s139 = sphi 0, %s125
    %s147 = sphi 0, %s149
    %s150 = sphi 0, %s147
    %s151 = sphi 0, %s150
    %s167 = sphi 0, %s151
  $region4: #{unfolding_net_forward.3} parent=0 // loop_header_branch
    %14 = sbr.rel (%p12) target = $region8
  $region5: #{unfolding_net_forward.3} parent=0 // loop_body
    %s16 = ssub.s32 %s11, 1
    %s17 = ssub.s32 %s11, 2
    %s24 = sadd.s32 1, %s19
    %p25 = scmp.ge.s32.totalorder %s24, 2
    %s26 = scalar_select %p25, 0, %s24
    %s27 = sadd.s32 1, %s18
    %s28 = scalar_select %p25, %s27, %s18
    %p29 = scmp.ge.s32.totalorder %s28, 2
    %s30 = scalar_select %p29, 0, %s28
    %s31 = ssub.s32 %s18, %s30
    %s32 = ssub.s32 %s19, %s26
    %s33 = sor.u32 %s31, %s32
    %p34 = scmp.eq.s32.totalorder %s33, 0
    %s36 = sadd.s32 %s35, 1
    %s37 = scalar_select %p34, %s35, %s36
    %p40 = pneg %p34
    %p41 = scmp.eq.s32.totalorder %s11, 3
    %p42 = por %p40, %p41
    %p43 = scmp.ne.s32.totalorder %s35, %s38
    %p44 = scmp.eq.s32.totalorder %s11, 0
    %p45 = por %p43, %p44
    %p46 = scmp.ne.s32.totalorder %s35, %s38
    %p47 = scmp.eq.s32.totalorder %s16, 3
    %p48 = por %p46, %p47
    %p49 = scmp.ne.s32.totalorder %s38, %s39
    %p50 = scmp.eq.s32.totalorder %s16, 0
    %p51 = por %p49, %p50
    %p52 = scmp.ne.s32.totalorder %s38, %s39
    %p53 = scmp.eq.s32.totalorder %s17, 3
    %p54 = por %p52, %p53
    %p56 = scmp.ne.s32.totalorder %s39, %s55
    %p57 = scmp.eq.s32.totalorder %s17, 0
    %p58 = por %p56, %p57
    %s60 = sadd.s32 %s59, 1
    %p63 = scmp.eq.s32.totalorder %s11, 3
    %p64 = scmp.ne.s32.totalorder %s59, %s61
    %p65 = scmp.eq.s32.totalorder %s11, 0
    %p66 = por %p64, %p65
    %p67 = scmp.ne.s32.totalorder %s59, %s61
    %p68 = scmp.eq.s32.totalorder %s16, 3
    %p69 = por %p67, %p68
    %p70 = scmp.ne.s32.totalorder %s61, %s62
    %p71 = scmp.eq.s32.totalorder %s16, 0
    %p72 = por %p70, %p71
    %p73 = scmp.ne.s32.totalorder %s61, %s62
    %p74 = scmp.eq.s32.totalorder %s17, 3
    %p75 = por %p73, %p74
    %p77 = scmp.ne.s32.totalorder %s62, %s76
    %p78 = scmp.eq.s32.totalorder %s17, 0
    %p79 = por %p77, %p78
    %s81 = sadd.s32 %s80, 1
    %p84 = scmp.eq.s32.totalorder %s11, 3
    %p85 = scmp.ne.s32.totalorder %s80, %s82
    %p86 = scmp.eq.s32.totalorder %s11, 0
    %p87 = por %p85, %p86
    %p88 = scmp.ne.s32.totalorder %s80, %s82
    %p89 = scmp.eq.s32.totalorder %s16, 3
    %p90 = por %p88, %p89
    %p91 = scmp.ne.s32.totalorder %s82, %s83
    %p92 = scmp.eq.s32.totalorder %s16, 0
    %p93 = por %p91, %p92
    %p94 = scmp.ne.s32.totalorder %s82, %s83
    %p95 = scmp.eq.s32.totalorder %s17, 3
    %p96 = por %p94, %p95
    %p98 = scmp.ne.s32.totalorder %s83, %s97
    %p99 = scmp.eq.s32.totalorder %s17, 0
    %p100 = por %p98, %p99
    %s102 = sadd.s32 %s101, 1
    %p105 = scmp.eq.s32.totalorder %s11, 3
    %p106 = scmp.ne.s32.totalorder %s101, %s103
    %p107 = scmp.eq.s32.totalorder %s11, 0
    %p108 = por %p106, %p107
    %p109 = scmp.ne.s32.totalorder %s101, %s103
    %p110 = scmp.eq.s32.totalorder %s16, 3
    %p111 = por %p109, %p110
    %p112 = scmp.ne.s32.totalorder %s103, %s104
    %p113 = scmp.eq.s32.totalorder %s16, 0
    %p114 = por %p112, %p113
    %p115 = scmp.ne.s32.totalorder %s103, %s104
    %p116 = scmp.eq.s32.totalorder %s17, 3
    %p117 = por %p115, %p116
    %p119 = scmp.ne.s32.totalorder %s104, %s118
    %p120 = scmp.eq.s32.totalorder %s17, 0
    %p121 = por %p119, %p120
    %s123 = sadd.s32 %s122, 1
    %p126 = scmp.eq.s32.totalorder %s11, 3
    %p127 = scmp.ne.s32.totalorder %s122, %s124
    %p128 = scmp.eq.s32.totalorder %s11, 0
    %p129 = por %p127, %p128
    %p130 = scmp.ne.s32.totalorder %s122, %s124
    %p131 = scmp.eq.s32.totalorder %s16, 3
    %p132 = por %p130, %p131
    %p133 = scmp.ne.s32.totalorder %s124, %s125
    %p134 = scmp.eq.s32.totalorder %s16, 0
    %p135 = por %p133, %p134
    %p136 = scmp.ne.s32.totalorder %s124, %s125
    %p137 = scmp.eq.s32.totalorder %s17, 3
    %p138 = por %p136, %p137
    %p140 = scmp.ne.s32.totalorder %s125, %s139
    %p141 = scmp.eq.s32.totalorder %s17, 0
    %p142 = por %p140, %p141
    %s143 = ssub.s32 %s18, %s30
    %s144 = ssub.s32 %s19, %s26
    %s145 = sor.u32 %s143, %s144
    %p146 = scmp.eq.s32.totalorder %s145, 0
    %s148 = sadd.s32 %s147, 1
    %s149 = scalar_select %p146, %s147, %s148
    %p152 = pneg %p146
    %p153 = scmp.eq.s32.totalorder %s11, 3
    %p154 = por %p152, %p153
    %p155 = scmp.ne.s32.totalorder %s147, %s150
    %p156 = scmp.eq.s32.totalorder %s11, 0
    %p157 = por %p155, %p156
    %p158 = scmp.ne.s32.totalorder %s147, %s150
    %p159 = scmp.eq.s32.totalorder %s16, 3
    %p160 = por %p158, %p159
    %p161 = scmp.ne.s32.totalorder %s150, %s151
    %p162 = scmp.eq.s32.totalorder %s16, 0
    %p163 = por %p161, %p162
    %p164 = scmp.ne.s32.totalorder %s150, %s151
    %p165 = scmp.eq.s32.totalorder %s17, 3
    %p166 = por %p164, %p165
    %p168 = scmp.ne.s32.totalorder %s151, %s167
    %p169 = scmp.eq.s32.totalorder %s17, 0
    %p170 = por %p168, %p169
    %p171 = scmp.le.s32.totalorder 1, %s11
    %p172 = scmp.lt.s32.totalorder %s11, 5
    %p173 = pnand %p171, %p172
    %p174 = pneg %p173
    // Predicated region
    $region9: #{unfolding_net_forward.3} parent=5 // pred_check
      _
    $region10: #{unfolding_net_forward.3} parent=5 // pred_check_branch
      %176 = sbr.rel (%p173) target = $region12
    $region11: #{unfolding_net_forward.3} parent=5 // pred_region
      %s177 = ssub.s32 %s11, 1
      // Predicated region
      $region13: #{unfolding_net_forward.3} parent=11 // pred_check
        %p178 = pneg %p72
      $region14: #{unfolding_net_forward.3} parent=11 // pred_check_branch
        %180 = sbr.rel (%p178) target = $region16
      $region15: #{unfolding_net_forward.3} parent=11 // pred_region
        _
      $region16: #{unfolding_net_forward.3} parent=11 // pred_fallthru
        _
      // Predicated region
      $region17: #{unfolding_net_forward.3} parent=11 // pred_check
        %p181 = pneg %p93
      $region18: #{unfolding_net_forward.3} parent=11 // pred_check_branch
        %183 = sbr.rel (%p181) target = $region20
      $region19: #{unfolding_net_forward.3} parent=11 // pred_region
        _
      $region20: #{unfolding_net_forward.3} parent=11 // pred_fallthru
        _
      // Predicated region
      $region21: #{unfolding_net_forward.3} parent=11 // pred_check
        %p184 = pneg %p114
      $region22: #{unfolding_net_forward.3} parent=11 // pred_check_branch
        %186 = sbr.rel (%p184) target = $region24
      $region23: #{unfolding_net_forward.3} parent=11 // pred_region
        _
      $region24: #{unfolding_net_forward.3} parent=11 // pred_fallthru
        _
      // Predicated region
      $region25: #{unfolding_net_forward.3} parent=11 // pred_check
        %p187 = pneg %p135
      $region26: #{unfolding_net_forward.3} parent=11 // pred_check_branch
        %189 = sbr.rel (%p187) target = $region28
      $region27: #{unfolding_net_forward.3} parent=11 // pred_region
        _
      $region28: #{unfolding_net_forward.3} parent=11 // pred_fallthru
        _
    $region12: #{unfolding_net_forward.3} parent=5 // pred_fallthru
      _
    %p190 = scmp.lt.s32.totalorder %s11, 4
    // Predicated region
    $region29: #{unfolding_net_forward.3} parent=5 // pred_check
      %p191 = pneg %p190
    $region30: #{unfolding_net_forward.3} parent=5 // pred_check_branch
      %193 = sbr.rel (%p191) target = $region32
    $region31: #{unfolding_net_forward.3} parent=5 // pred_region
      // Predicated region
      $region33: #{unfolding_net_forward.3} parent=31 // pred_check
        %p194 = pneg %p45
      $region34: #{unfolding_net_forward.3} parent=31 // pred_check_branch
        %196 = sbr.rel (%p194) target = $region36
      $region35: #{unfolding_net_forward.3} parent=31 // pred_region
        %s197 = smul.u32 8, %s19
        %p198 = scmp.lt.s32.totalorder %s18, 1
        %s199 = scalar_select %p198, %s18, 1
        %p200 = scmp.lt.s32.totalorder %s197, 15
        %s201 = scalar_select %p200, %s197, 15
        %s202 = smul.addr %s199, 16
        %s203 = sadd.s32 %s201, %s202
        %s204 = smul.addr %s203, 8
        %s205 = scalar_lea.vmem %s0, %s204
        %s206 = smul.u32 8, %s19
      $region36: #{unfolding_net_forward.3} parent=31 // pred_fallthru
        _
    $region32: #{unfolding_net_forward.3} parent=5 // pred_fallthru
      _
    %p207 = scmp.le.s32.totalorder 1, %s11
    %p208 = scmp.lt.s32.totalorder %s11, 5
    %p209 = pnand %p207, %p208
    %p210 = pneg %p209
    // Predicated region
    $region37: #{unfolding_net_forward.3} parent=5 // pred_check
      _
    $region38: #{unfolding_net_forward.3} parent=5 // pred_check_branch
      %212 = sbr.rel (%p209) target = $region40
    $region39: #{unfolding_net_forward.3} parent=5 // pred_region
      %s213 = ssub.s32 %s11, 1
      %s214 = smul.u32 8, %s21
      %p215 = scmp.lt.s32.totalorder %s20, 1
      %s216 = scalar_select %p215, %s20, 1
      %p217 = scmp.lt.s32.totalorder %s214, 15
      %s218 = scalar_select %p217, %s214, 15
      %s219 = smul.addr %s216, 16
      %s220 = sadd.s32 %s218, %s219
      %s221 = smul.addr %s220, 8
      %s222 = scalar_lea.vmem %s0, %s221
      %p223 = pneg %p51
      %p224 = pneg %p48
      %p225 = pneg %p72
      %p226 = pneg %p69
      %p227 = pneg %p93
      %p228 = pneg %p90
      %p229 = pneg %p114
      %p230 = pneg %p111
      %p231 = pneg %p135
      %p232 = pneg %p132
      %p233 = pneg %p163
      %p234 = pneg %p160
      %p235 = scmp.lt.s32.totalorder %s20, 1
      %s236 = scalar_select %p235, %s20, 1
      %p237 = scmp.lt.s32.totalorder %s21, 1
      %s238 = scalar_select %p237, %s21, 1
      %s239 = smul.addr %s238, 2
      %s240 = smul.addr %s236, 4
      %s241 = sadd.s32 %s239, %s240
      %s242 = smul.addr %s241, 8
      %s243 = scalar_lea.vmem %s5, %s242
      %s244 = smul.u32 8, %s21
      %p245 = scmp.lt.s32.totalorder %s20, 1
      %s246 = scalar_select %p245, %s20, 1
      %p247 = scmp.lt.s32.totalorder %s244, 15
      %s248 = scalar_select %p247, %s244, 15
      %s249 = smul.addr %s246, 16
      %s250 = sadd.s32 %s248, %s249
      %s251 = smul.addr %s250, 8
      %s252 = scalar_lea.vmem %s0, %s251
      %s253 = smul.u32 8, %s21
      %p254 = scmp.lt.s32.totalorder %s20, 1
      %s255 = scalar_select %p254, %s20, 1
      %p256 = scmp.lt.s32.totalorder %s21, 1
      %s257 = scalar_select %p256, %s21, 1
      %s258 = smul.addr %s257, 2
      %s259 = smul.addr %s255, 4
      %s260 = sadd.s32 %s258, %s259
      %s261 = smul.addr %s260, 8
      %s262 = scalar_lea.vmem %s5, %s261
      %v264 = vld [vmem:[%s252] sm:$0xff]
      %v265 = vld [vmem:[%s252 + $0x8] sm:$0xff]
      %v266 = vld [vmem:[%s252 + $0x10] sm:$0xff]
      %v267 = vld [vmem:[%s252 + $0x18] sm:$0xff]
      %v268 = vld [vmem:[%s252 + $0x20] sm:$0xff]
      %v269 = vld [vmem:[%s252 + $0x28] sm:$0xff]
      %v270 = vld [vmem:[%s252 + $0x30] sm:$0xff]
      %v271 = vld [vmem:[%s252 + $0x38] sm:$0xff]
      %v272 = vld [vmem:[%s1] sm:$0xff]
      %v273 = vld [vmem:[%s2] sm:$0x1]
      %v275 = vlaneseq
      %v276 = vshrl.u32 %v275, 7
      %v277 = vsub.s32 0, %v276
      %v278 = vrot.slane %v273, %v277
      %vm280 = vcmask 64512
      %v282 = vsel %vm280, %v264, 0
      %v285 = vsel %vm280, %v265, 0
      %v288 = vsel %vm280, %v266, 0
      %v291 = vsel %vm280, %v267, 0
      %v294 = vsel %vm280, %v268, 0
      %v297 = vsel %vm280, %v269, 0
      %v300 = vsel %vm280, %v270, 0
      %v303 = vsel %vm280, %v271, 0
      %305 = vmatprep.subr.mxu0 0.0
      %306 = vmatpush1.msra.mxu0 %v272
      %307 = vmatprep.subr.mxu0 0.0
      %308 = vmatpush1.msra.mxu0 0.0
      %309 = vmatprep.subr.mxu0 0.0
      %310 = vmatpush1.msra.mxu0 0.0
      %311 = vmatprep.subr.mxu0 0.0
      %312 = vmatpush1.msra.mxu0 0.0
      %313 = vmatprep.subr.mxu0 0.0
      %314 = vmatpush1.msra.mxu0 0.0
      %315 = vmatprep.subr.mxu0 0.0
      %316 = vmatpush1.msra.mxu0 0.0
      %317 = vmatprep.subr.mxu0 0.0
      %318 = vmatpush1.msra.mxu0 0.0
      %319 = vmatprep.subr.mxu0 0.0
      %320 = vmatpush1.msra.mxu0 0.0
      %321 = vmatprep.subr.mxu0 0.0
      %322 = vmatpush1.msra.mxu0 0.0
      %323 = vmatprep.subr.mxu0 0.0
      %324 = vmatpush1.msra.mxu0 0.0
      %325 = vmatprep.subr.mxu0 0.0
      %326 = vmatpush1.msra.mxu0 0.0
      %327 = vmatprep.subr.mxu0 0.0
      %328 = vmatpush1.msra.mxu0 0.0
      %329 = vmatprep.subr.mxu0 0.0
      %330 = vmatpush1.msra.mxu0 0.0
      %331 = vmatprep.subr.mxu0 0.0
      %332 = vmatpush1.msra.mxu0 0.0
      %333 = vmatprep.subr.mxu0 0.0
      %334 = vmatpush1.msra.mxu0 0.0
      %335 = vmatprep.subr.mxu0 0.0
      %336 = vmatpush1.msra.mxu0 0.0
      %337 = vmatprep.subr.mxu0 0.0
      %338 = vmatpush1.msra.mxu0 0.0
      %339 = vmatprep.subr.mxu0 0.0
      %340 = vmatpush1.msra.mxu0 0.0
      %341 = vmatprep.subr.mxu0 0.0
      %342 = vmatpush1.msra.mxu0 0.0
      %343 = vmatprep.subr.mxu0 0.0
      %344 = vmatpush1.msra.mxu0 0.0
      %345 = vmatprep.subr.mxu0 0.0
      %346 = vmatpush1.msra.mxu0 0.0
      %347 = vmatprep.subr.mxu0 0.0
      %348 = vmatpush1.msra.mxu0 0.0
      %349 = vmatprep.subr.mxu0 0.0
      %350 = vmatpush1.msra.mxu0 0.0
      %351 = vmatprep.subr.mxu0 0.0
      %352 = vmatpush1.msra.mxu0 0.0
      %353 = vmatprep.subr.mxu0 0.0
      %354 = vmatpush1.msra.mxu0 0.0
      %355 = vmatprep.subr.mxu0 0.0
      %356 = vmatpush1.msra.mxu0 0.0
      %357 = vmatprep.subr.mxu0 0.0
      %358 = vmatpush1.msra.mxu0 0.0
      %359 = vmatprep.subr.mxu0 0.0
      %360 = vmatpush1.msra.mxu0 0.0
      %361 = vmatprep.subr.mxu0 0.0
      %362 = vmatpush1.msra.mxu0 0.0
      %363 = vmatprep.subr.mxu0 0.0
      %364 = vmatpush1.msra.mxu0 0.0
      %365 = vmatprep.subr.mxu0 0.0
      %366 = vmatpush1.msra.mxu0 0.0
      %367 = vmatprep.subr.mxu0 0.0
      %368 = vmatpush1.msra.mxu0 0.0
      %369 = vmatprep.mubr.f32.mxu0 0.0
      %370 = vmatmul.mubr.f32.gmra.mrb[0].mxu0 %v282
      %v371 = vpop.f32.mrb[0].mxu0
      %v372 = vadd.f32 %v278, %v371
      %v373 = vpop.f32.mrb[0].mxu0
      %374 = vmatprep.mubr.f32.mxu0 0.0
      %375 = vmatmul.mubr.f32.gmra.mrb[0].mxu0 %v285
      %v376 = vpop.f32.mrb[0].mxu0
      %v377 = vadd.f32 %v278, %v376
      %v378 = vpop.f32.mrb[0].mxu0
      %379 = vmatprep.mubr.f32.mxu0 0.0
      %380 = vmatmul.mubr.f32.gmra.mrb[0].mxu0 %v288
      %v381 = vpop.f32.mrb[0].mxu0
      %v382 = vadd.f32 %v278, %v381
      %v383 = vpop.f32.mrb[0].mxu0
      %384 = vmatprep.mubr.f32.mxu0 0.0
      %385 = vmatmul.mubr.f32.gmra.mrb[0].mxu0 %v291
      %v386 = vpop.f32.mrb[0].mxu0
      %v387 = vadd.f32 %v278, %v386
      %v388 = vpop.f32.mrb[0].mxu0
      %389 = vmatprep.mubr.f32.mxu0 0.0
      %390 = vmatmul.mubr.f32.gmra.mrb[0].mxu0 %v294
      %v391 = vpop.f32.mrb[0].mxu0
      %v392 = vadd.f32 %v278, %v391
      %v393 = vpop.f32.mrb[0].mxu0
      %394 = vmatprep.mubr.f32.mxu0 0.0
      %395 = vmatmul.mubr.f32.gmra.mrb[0].mxu0 %v297
      %v396 = vpop.f32.mrb[0].mxu0
      %v397 = vadd.f32 %v278, %v396
      %v398 = vpop.f32.mrb[0].mxu0
      %399 = vmatprep.mubr.f32.mxu0 0.0
      %400 = vmatmul.mubr.f32.gmra.mrb[0].mxu0 %v300
      %v401 = vpop.f32.mrb[0].mxu0
      %v402 = vadd.f32 %v278, %v401
      %v403 = vpop.f32.mrb[0].mxu0
      %404 = vmatprep.mubr.f32.mxu0 0.0
      %405 = vmatmul.mubr.f32.gmra.mrb[0].mxu0 %v303
      %v406 = vpop.f32.mrb[0].mxu0
      %v407 = vadd.f32 %v278, %v406
      %v408 = vpop.f32.mrb[0].mxu0
      %409 = vdwg.mxu0
      %v410 = vmax.f32 %v372, 0.0
      %v411 = vmax.f32 %v377, 0.0
      %v412 = vmax.f32 %v382, 0.0
      %v413 = vmax.f32 %v387, 0.0
      %v414 = vmax.f32 %v392, 0.0
      %v415 = vmax.f32 %v397, 0.0
      %v416 = vmax.f32 %v402, 0.0
      %v417 = vmax.f32 %v407, 0.0
      %v418 = vpack.c.bf16 %v411, %v410
      %v419 = vpack.c.bf16 %v413, %v412
      %v420 = vpack.c.bf16 %v415, %v414
      %v421 = vpack.c.bf16 %v417, %v416
      %v422 = vld [vmem:[%s3] sm:$0xff]
      %v423 = vld [vmem:[%s3 + $0x8] sm:$0xff]
      %v424 = vld [vmem:[%s3 + $0x10] sm:$0xff]
      %v425 = vld [vmem:[%s3 + $0x18] sm:$0xff]
      %v426 = vld [vmem:[%s3 + $0x20] sm:$0xff]
      %v427 = vld [vmem:[%s3 + $0x28] sm:$0xff]
      %v428 = vld [vmem:[%s3 + $0x30] sm:$0xff]
      %v429 = vld [vmem:[%s3 + $0x38] sm:$0xff]
      %v430 = vld [vmem:[%s3 + $0x40] sm:$0xff]
      %v431 = vld [vmem:[%s3 + $0x48] sm:$0xff]
      %v432 = vld [vmem:[%s3 + $0x50] sm:$0xff]
      %v433 = vld [vmem:[%s3 + $0x58] sm:$0xff]
      %v434 = vld [vmem:[%s3 + $0x60] sm:$0xff]
      %v435 = vld [vmem:[%s3 + $0x68] sm:$0xff]
      %v436 = vld [vmem:[%s3 + $0x70] sm:$0xff]
      %v437 = vld [vmem:[%s3 + $0x78] sm:$0xff]
      %v438 = vld [vmem:[%s4] sm:$0x3]
      %v440 = vlaneseq
      %v441 = vshrl.u32 %v440, 7
      %v442 = vsub.s32 0, %v441
      %v443 = vrot.slane %v438, %v442
      %v444 = vlaneseq
      %v445 = vshrl.u32 %v444, 7
      %v446 = vsub.s32 1, %v445
      %v447 = vrot.slane %v438, %v446
      %v466 = vunpack.c.l.b16 %v422
      %v467 = vunpack.c.h.b16 %v422
      %v468 = vunpack.c.l.b16 %v423
      %v469 = vunpack.c.h.b16 %v423
      %v470 = vunpack.c.l.b16 %v424
      %v471 = vunpack.c.h.b16 %v424
      %v472 = vunpack.c.l.b16 %v425
      %v473 = vunpack.c.h.b16 %v425
      %v474 = vunpack.c.l.b16 %v426
      %v475 = vunpack.c.h.b16 %v426
      %v476 = vunpack.c.l.b16 %v427
      %v477 = vunpack.c.h.b16 %v427
      %v478 = vunpack.c.l.b16 %v428
      %v479 = vunpack.c.h.b16 %v428
      %v480 = vunpack.c.l.b16 %v429
      %v481 = vunpack.c.h.b16 %v429
      %v482 = vunpack.c.l.b16 %v430
      %v483 = vunpack.c.h.b16 %v430
      %v484 = vunpack.c.l.b16 %v431
      %v485 = vunpack.c.h.b16 %v431
      %v486 = vunpack.c.l.b16 %v432
      %v487 = vunpack.c.h.b16 %v432
      %v488 = vunpack.c.l.b16 %v433
      %v489 = vunpack.c.h.b16 %v433
      %v490 = vunpack.c.l.b16 %v434
      %v491 = vunpack.c.h.b16 %v434
      %v492 = vunpack.c.l.b16 %v435
      %v493 = vunpack.c.h.b16 %v435
      %v494 = vunpack.c.l.b16 %v436
      %v495 = vunpack.c.h.b16 %v436
      %v496 = vunpack.c.l.b16 %v437
      %v497 = vunpack.c.h.b16 %v437
      %v498 = vpack.c.b16 %v468, %v466
      %v499 = vpack.c.b16 %v469, %v467
      %v500 = vpack.c.b16 %v472, %v470
      %v501 = vpack.c.b16 %v473, %v471
      %v502 = vpack.c.b16 %v476, %v474
      %v503 = vpack.c.b16 %v477, %v475
      %v504 = vpack.c.b16 %v480, %v478
      %v505 = vpack.c.b16 %v481, %v479
      %v506 = vpack.c.b16 %v484, %v482
      %v507 = vpack.c.b16 %v485, %v483
      %v508 = vpack.c.b16 %v488, %v486
      %v509 = vpack.c.b16 %v489, %v487
      %v510 = vpack.c.b16 %v492, %v490
      %v511 = vpack.c.b16 %v493, %v491
      %v512 = vpack.c.b16 %v496, %v494
      %v513 = vpack.c.b16 %v497, %v495
      %530 = vmatprep.subr.bf16.mxu0 %v499
      %531 = vmatpush1.bf16.msra.mxu0 %v498
      %532 = vmatprep.subr.bf16.mxu0 %v501
      %533 = vmatpush1.bf16.msra.mxu0 %v500
      %534 = vmatprep.subr.bf16.mxu0 %v503
      %535 = vmatpush1.bf16.msra.mxu0 %v502
      %536 = vmatprep.subr.bf16.mxu0 %v505
      %537 = vmatpush1.bf16.msra.mxu0 %v504
      %538 = vmatprep.subr.bf16.mxu0 %v507
      %539 = vmatpush1.bf16.msra.mxu0 %v506
      %540 = vmatprep.subr.bf16.mxu0 %v509
      %541 = vmatpush1.bf16.msra.mxu0 %v508
      %542 = vmatprep.subr.bf16.mxu0 %v511
      %543 = vmatpush1.bf16.msra.mxu0 %v510
      %544 = vmatprep.subr.bf16.mxu0 %v513
      %545 = vmatpush1.bf16.msra.mxu0 %v512
      %546 = vmatprep.subr.bf16.mxu0 0
      %547 = vmatpush1.bf16.msra.mxu0 0
      %548 = vmatprep.subr.bf16.mxu0 0
      %549 = vmatpush1.bf16.msra.mxu0 0
      %550 = vmatprep.subr.bf16.mxu0 0
      %551 = vmatpush1.bf16.msra.mxu0 0
      %552 = vmatprep.subr.bf16.mxu0 0
      %553 = vmatpush1.bf16.msra.mxu0 0
      %554 = vmatprep.subr.bf16.mxu0 0
      %555 = vmatpush1.bf16.msra.mxu0 0
      %556 = vmatprep.subr.bf16.mxu0 0
      %557 = vmatpush1.bf16.msra.mxu0 0
      %558 = vmatprep.subr.bf16.mxu0 0
      %559 = vmatpush1.bf16.msra.mxu0 0
      %560 = vmatprep.subr.bf16.mxu0 0
      %561 = vmatpush1.bf16.msra.mxu0 0
      %562 = vmatprep.mubr.bf16.mxu0 0
      %563 = vmatmul.mubr.bf16.gmra.mrb[0].mxu0 %v418
      %v564 = vpop.f32.mrb[0].mxu0
      %v565 = vadd.f32 %v443, %v564
      %v566 = vpop.f32.mrb[0].mxu0
      %v567 = vadd.f32 %v447, %v566
      %v568 = vpop.f32.mrb[0].mxu0
      %v569 = vadd.f32 %v443, %v568
      %v570 = vpop.f32.mrb[0].mxu0
      %v571 = vadd.f32 %v447, %v570
      %572 = vmatprep.mubr.bf16.mxu0 0
      %573 = vmatmul.mubr.bf16.gmra.mrb[0].mxu0 %v419
      %v574 = vpop.f32.mrb[0].mxu0
      %v575 = vadd.f32 %v443, %v574
      %v576 = vpop.f32.mrb[0].mxu0
      %v577 = vadd.f32 %v447, %v576
      %v578 = vpop.f32.mrb[0].mxu0
      %v579 = vadd.f32 %v443, %v578
      %v580 = vpop.f32.mrb[0].mxu0
      %v581 = vadd.f32 %v447, %v580
      %582 = vmatprep.mubr.bf16.mxu0 0
      %583 = vmatmul.mubr.bf16.gmra.mrb[0].mxu0 %v420
      %v584 = vpop.f32.mrb[0].mxu0
      %v585 = vadd.f32 %v443, %v584
      %v586 = vpop.f32.mrb[0].mxu0
      %v587 = vadd.f32 %v447, %v586
      %v588 = vpop.f32.mrb[0].mxu0
      %v589 = vadd.f32 %v443, %v588
      %v590 = vpop.f32.mrb[0].mxu0
      %v591 = vadd.f32 %v447, %v590
      %592 = vmatprep.mubr.bf16.mxu0 0
      %593 = vmatmul.mubr.bf16.gmra.mrb[0].mxu0 %v421
      %v594 = vpop.f32.mrb[0].mxu0
      %v595 = vadd.f32 %v443, %v594
      %v596 = vpop.f32.mrb[0].mxu0
      %v597 = vadd.f32 %v447, %v596
      %v598 = vpop.f32.mrb[0].mxu0
      %v599 = vadd.f32 %v443, %v598
      %v600 = vpop.f32.mrb[0].mxu0
      %v601 = vadd.f32 %v447, %v600
      %602 = vdwg.mxu0
      %v603 = vmax.f32 %v565, %v575
      %v604 = vmax.f32 %v569, %v579
      %v605 = vmax.f32 %v603, %v585
      %v606 = vmax.f32 %v604, %v589
      %v607 = vmax.f32 %v605, %v595
      %v608 = vmax.f32 %v606, %v599
      %v609 = vmax.f32 %v607, %v608
      %v610 = vrot.slane %v609, 4
      %v611 = vmax.f32 %v609, %v610
      %v612 = vrot.slane %v611, 2
      %v613 = vmax.f32 %v611, %v612
      %v614 = vrot.slane %v613, 1
      %v615 = vmax.f32 %v613, %v614
      %v616 = vmax.f32 %v567, %v577
      %v617 = vmax.f32 %v571, %v581
      %v618 = vmax.f32 %v616, %v587
      %v619 = vmax.f32 %v617, %v591
      %v620 = vmax.f32 %v618, %v597
      %v621 = vmax.f32 %v619, %v601
      %v622 = vmax.f32 %v620, %v621
      %v623 = vrot.slane %v622, 4
      %v624 = vmax.f32 %v622, %v623
      %v625 = vrot.slane %v624, 2
      %v626 = vmax.f32 %v624, %v625
      %v627 = vrot.slane %v626, 1
      %v628 = vmax.f32 %v626, %v627
      %629 = vst [vmem:[%s262] sm:$0xff] %v615
      %630 = vst [vmem:[%s262 + $0x8] sm:$0xff] %v628
      %p631 = scmp.lt.s32.totalorder %s20, 1
      %s632 = scalar_select %p631, %s20, 1
      %p633 = scmp.lt.s32.totalorder %s21, 1
      %s634 = scalar_select %p633, %s21, 1
      %s635 = smul.addr %s634, 2
      %s636 = smul.addr %s632, 4
      %s637 = sadd.s32 %s635, %s636
      %s638 = smul.addr %s637, 8
      %s639 = scalar_lea.vmem %s5, %s638
      // Predicated region
      $region41: #{unfolding_net_forward.3} parent=39 // pred_check
        %p640 = pneg %p160
      $region42: #{unfolding_net_forward.3} parent=39 // pred_check_branch
        %642 = sbr.rel (%p640) target = $region44
      $region43: #{unfolding_net_forward.3} parent=39 // pred_region
        _
      $region44: #{unfolding_net_forward.3} parent=39 // pred_fallthru
        _
    $region40: #{unfolding_net_forward.3} parent=5 // pred_fallthru
      _
    %p643 = scmp.le.s32.totalorder 2, %s11
    // Predicated region
    $region45: #{unfolding_net_forward.3} parent=5 // pred_check
      %p644 = pneg %p643
    $region46: #{unfolding_net_forward.3} parent=5 // pred_check_branch
      %646 = sbr.rel (%p644) target = $region48
    $region47: #{unfolding_net_forward.3} parent=5 // pred_region
      %s647 = ssub.s32 %s11, 2
      // Predicated region
      $region49: #{unfolding_net_forward.3} parent=47 // pred_check
        %p648 = pneg %p166
      $region50: #{unfolding_net_forward.3} parent=47 // pred_check_branch
        %650 = sbr.rel (%p648) target = $region52
      $region51: #{unfolding_net_forward.3} parent=47 // pred_region
        %p651 = scmp.lt.s32.totalorder %s22, 1
        %s652 = scalar_select %p651, %s22, 1
        %p653 = scmp.lt.s32.totalorder %s23, 1
        %s654 = scalar_select %p653, %s23, 1
        %s655 = smul.addr %s654, 2
        %s656 = smul.addr %s652, 4
        %s657 = sadd.s32 %s655, %s656
        %s658 = smul.addr %s657, 8
        %s659 = scalar_lea.vmem %s5, %s658
      $region52: #{unfolding_net_forward.3} parent=47 // pred_fallthru
        _
    $region48: #{unfolding_net_forward.3} parent=5 // pred_fallthru
      _
  $region6: #{unfolding_net_forward.3} parent=0 // loop_footer
    %s15 = sadd.s32 1, %s11
  $region7: #{unfolding_net_forward.3} parent=0 // loop_footer_branch
    %10 = sbr.rel target = $region3
  $region8: #{unfolding_net_forward.3} parent=0 // loop_exit
    _

// kernel: unfolding_net_forward.4
$region0: #{unfolding_net_forward.4}
  #allocation0 [shape = 'u32[]', space=smem, size = 0x4, offset = 0x4, fixed_abs, tag = 'smem constant byte address 0x4 - core index']
  #allocation1 [shape = 'u32[144,128]{1,0:T(1,128)}', space=vmem, size = 0x12000, scoped, tag = 'internal scratch']
  %s0 = inlined_call_operand.vmem [shape: f32[2,128,8], index: 0, kind: input, shape index: {}]
  %s1 = inlined_call_operand.vmem [shape: f32[8,128], index: 1, kind: input, shape index: {}]
  %s2 = inlined_call_operand.vmem [shape: f32[1,128], index: 2, kind: input, shape index: {}]
  %s3 = inlined_call_operand.vmem [shape: bf16[128,256], index: 3, kind: input, shape index: {}]
  %s4 = inlined_call_operand.vmem [shape: f32[1,256], index: 4, kind: input, shape index: {}]
  %s5 = inlined_call_operand.vmem [shape: f32[2,1,512], index: 5, kind: input, shape index: {}]
  %s6 = inlined_call_operand.vmem [shape: bf16[256,512], index: 6, kind: input, shape index: {}]
  %s7 = inlined_call_operand.vmem [shape: bf16[512,128], index: 7, kind: input, shape index: {}]
  %s8 = inlined_call_operand.vmem [shape: f32[1,128], index: 8, kind: input, shape index: {}]
  %s9 = inlined_call_operand.vmem [shape: f32[2,16,128], index: 9, kind: output, shape index: {}]
  %s10 = sld [smem:[#allocation0]]
  $region69: #{unfolding_net_forward.4} parent=0
    _
  %s12 = ssub.s32 1, %s10
  %s13 = scalar_select 0, %s12, %s10
  loop: start=0, step=1, limit=6
  $region2: #{unfolding_net_forward.4} parent=0 // loop_pre_header
    _
  $region3: #{unfolding_net_forward.4} parent=0 // loop_header
    %s15 = sphi 0, %s19
    %p16 = scmp.ge.s32.totalorder %s15, 6
    %s22 = sphi 0, %s34
    %s23 = sphi 0, %s30
    %s24 = sphi 0, %s22
    %s25 = sphi 0, %s23
    %s26 = sphi 0, %s24
    %s27 = sphi 0, %s25
    %s39 = sphi 0, %s41
    %s42 = sphi 0, %s39
    %s43 = sphi 0, %s42
    %s59 = sphi 0, %s43
    %s63 = sphi 0, %s63
    %s65 = sphi 0, %s63
    %s66 = sphi 0, %s65
    %s80 = sphi 0, %s66
    %s84 = sphi 0, %s84
    %s86 = sphi 0, %s84
    %s87 = sphi 0, %s86
    %s101 = sphi 0, %s87
    %s105 = sphi 0, %s105
    %s107 = sphi 0, %s105
    %s108 = sphi 0, %s107
    %s122 = sphi 0, %s108
    %s126 = sphi 0, %s126
    %s128 = sphi 0, %s126
    %s129 = sphi 0, %s128
    %s143 = sphi 0, %s129
    %s149 = sphi 0, %s151
    %s152 = sphi 0, %s149
    %s153 = sphi 0, %s152
    %s169 = sphi 0, %s153
    %s173 = sphi 0, %s173
    %s175 = sphi 0, %s173
    %s176 = sphi 0, %s175
    %s190 = sphi 0, %s176
    %s194 = sphi 0, %s194
    %s196 = sphi 0, %s194
    %s197 = sphi 0, %s196
    %s211 = sphi 0, %s197
    %s215 = sphi 0, %s215
    %s217 = sphi 0, %s215
    %s218 = sphi 0, %s217
    %s232 = sphi 0, %s218
    %s240 = sphi 0, %s242
    %s243 = sphi 0, %s240
    %s244 = sphi 0, %s243
    %s260 = sphi 0, %s244
  $region4: #{unfolding_net_forward.4} parent=0 // loop_header_branch
    %18 = sbr.rel (%p16) target = $region8
  $region5: #{unfolding_net_forward.4} parent=0 // loop_body
    %s20 = ssub.s32 %s15, 1
    %s21 = ssub.s32 %s15, 2
    %s28 = sadd.s32 1, %s23
    %p29 = scmp.ge.s32.totalorder %s28, 2
    %s30 = scalar_select %p29, 0, %s28
    %s31 = sadd.s32 1, %s22
    %s32 = scalar_select %p29, %s31, %s22
    %p33 = scmp.ge.s32.totalorder %s32, 2
    %s34 = scalar_select %p33, 0, %s32
    %s35 = ssub.s32 %s22, %s34
    %s36 = ssub.s32 %s23, %s30
    %s37 = sor.u32 %s35, %s36
    %p38 = scmp.eq.s32.totalorder %s37, 0
    %s40 = sadd.s32 %s39, 1
    %s41 = scalar_select %p38, %s39, %s40
    %p44 = pneg %p38
    %p45 = scmp.eq.s32.totalorder %s15, 3
    %p46 = por %p44, %p45
    %p47 = scmp.ne.s32.totalorder %s39, %s42
    %p48 = scmp.eq.s32.totalorder %s15, 0
    %p49 = por %p47, %p48
    %p50 = scmp.ne.s32.totalorder %s39, %s42
    %p51 = scmp.eq.s32.totalorder %s20, 3
    %p52 = por %p50, %p51
    %p53 = scmp.ne.s32.totalorder %s42, %s43
    %p54 = scmp.eq.s32.totalorder %s20, 0
    %p55 = por %p53, %p54
    %p56 = scmp.ne.s32.totalorder %s42, %s43
    %p57 = scmp.eq.s32.totalorder %s21, 3
    %p58 = por %p56, %p57
    %p60 = scmp.ne.s32.totalorder %s43, %s59
    %p61 = scmp.eq.s32.totalorder %s21, 0
    %p62 = por %p60, %p61
    %s64 = sadd.s32 %s63, 1
    %p67 = scmp.eq.s32.totalorder %s15, 3
    %p68 = scmp.ne.s32.totalorder %s63, %s65
    %p69 = scmp.eq.s32.totalorder %s15, 0
    %p70 = por %p68, %p69
    %p71 = scmp.ne.s32.totalorder %s63, %s65
    %p72 = scmp.eq.s32.totalorder %s20, 3
    %p73 = por %p71, %p72
    %p74 = scmp.ne.s32.totalorder %s65, %s66
    %p75 = scmp.eq.s32.totalorder %s20, 0
    %p76 = por %p74, %p75
    %p77 = scmp.ne.s32.totalorder %s65, %s66
    %p78 = scmp.eq.s32.totalorder %s21, 3
    %p79 = por %p77, %p78
    %p81 = scmp.ne.s32.totalorder %s66, %s80
    %p82 = scmp.eq.s32.totalorder %s21, 0
    %p83 = por %p81, %p82
    %s85 = sadd.s32 %s84, 1
    %p88 = scmp.eq.s32.totalorder %s15, 3
    %p89 = scmp.ne.s32.totalorder %s84, %s86
    %p90 = scmp.eq.s32.totalorder %s15, 0
    %p91 = por %p89, %p90
    %p92 = scmp.ne.s32.totalorder %s84, %s86
    %p93 = scmp.eq.s32.totalorder %s20, 3
    %p94 = por %p92, %p93
    %p95 = scmp.ne.s32.totalorder %s86, %s87
    %p96 = scmp.eq.s32.totalorder %s20, 0
    %p97 = por %p95, %p96
    %p98 = scmp.ne.s32.totalorder %s86, %s87
    %p99 = scmp.eq.s32.totalorder %s21, 3
    %p100 = por %p98, %p99
    %p102 = scmp.ne.s32.totalorder %s87, %s101
    %p103 = scmp.eq.s32.totalorder %s21, 0
    %p104 = por %p102, %p103
    %s106 = sadd.s32 %s105, 1
    %p109 = scmp.eq.s32.totalorder %s15, 3
    %p110 = scmp.ne.s32.totalorder %s105, %s107
    %p111 = scmp.eq.s32.totalorder %s15, 0
    %p112 = por %p110, %p111
    %p113 = scmp.ne.s32.totalorder %s105, %s107
    %p114 = scmp.eq.s32.totalorder %s20, 3
    %p115 = por %p113, %p114
    %p116 = scmp.ne.s32.totalorder %s107, %s108
    %p117 = scmp.eq.s32.totalorder %s20, 0
    %p118 = por %p116, %p117
    %p119 = scmp.ne.s32.totalorder %s107, %s108
    %p120 = scmp.eq.s32.totalorder %s21, 3
    %p121 = por %p119, %p120
    %p123 = scmp.ne.s32.totalorder %s108, %s122
    %p124 = scmp.eq.s32.totalorder %s21, 0
    %p125 = por %p123, %p124
    %s127 = sadd.s32 %s126, 1
    %p130 = scmp.eq.s32.totalorder %s15, 3
    %p131 = scmp.ne.s32.totalorder %s126, %s128
    %p132 = scmp.eq.s32.totalorder %s15, 0
    %p133 = por %p131, %p132
    %p134 = scmp.ne.s32.totalorder %s126, %s128
    %p135 = scmp.eq.s32.totalorder %s20, 3
    %p136 = por %p134, %p135
    %p137 = scmp.ne.s32.totalorder %s128, %s129
    %p138 = scmp.eq.s32.totalorder %s20, 0
    %p139 = por %p137, %p138
    %p140 = scmp.ne.s32.totalorder %s128, %s129
    %p141 = scmp.eq.s32.totalorder %s21, 3
    %p142 = por %p140, %p141
    %p144 = scmp.ne.s32.totalorder %s129, %s143
    %p145 = scmp.eq.s32.totalorder %s21, 0
    %p146 = por %p144, %p145
    %s147 = ssub.s32 %s22, %s34
    %p148 = scmp.eq.s32.totalorder %s147, 0
    %s150 = sadd.s32 %s149, 1
    %s151 = scalar_select %p148, %s149, %s150
    %p154 = pneg %p148
    %p155 = scmp.eq.s32.totalorder %s15, 3
    %p156 = por %p154, %p155
    %p157 = scmp.ne.s32.totalorder %s149, %s152
    %p158 = scmp.eq.s32.totalorder %s15, 0
    %p159 = por %p157, %p158
    %p160 = scmp.ne.s32.totalorder %s149, %s152
    %p161 = scmp.eq.s32.totalorder %s20, 3
    %p162 = por %p160, %p161
    %p163 = scmp.ne.s32.totalorder %s152, %s153
    %p164 = scmp.eq.s32.totalorder %s20, 0
    %p165 = por %p163, %p164
    %p166 = scmp.ne.s32.totalorder %s152, %s153
    %p167 = scmp.eq.s32.totalorder %s21, 3
    %p168 = por %p166, %p167
    %p170 = scmp.ne.s32.totalorder %s153, %s169
    %p171 = scmp.eq.s32.totalorder %s21, 0
    %p172 = por %p170, %p171
    %s174 = sadd.s32 %s173, 1
    %p177 = scmp.eq.s32.totalorder %s15, 3
    %p178 = scmp.ne.s32.totalorder %s173, %s175
    %p179 = scmp.eq.s32.totalorder %s15, 0
    %p180 = por %p178, %p179
    %p181 = scmp.ne.s32.totalorder %s173, %s175
    %p182 = scmp.eq.s32.totalorder %s20, 3
    %p183 = por %p181, %p182
    %p184 = scmp.ne.s32.totalorder %s175, %s176
    %p185 = scmp.eq.s32.totalorder %s20, 0
    %p186 = por %p184, %p185
    %p187 = scmp.ne.s32.totalorder %s175, %s176
    %p188 = scmp.eq.s32.totalorder %s21, 3
    %p189 = por %p187, %p188
    %p191 = scmp.ne.s32.totalorder %s176, %s190
    %p192 = scmp.eq.s32.totalorder %s21, 0
    %p193 = por %p191, %p192
    %s195 = sadd.s32 %s194, 1
    %p198 = scmp.eq.s32.totalorder %s15, 3
    %p199 = scmp.ne.s32.totalorder %s194, %s196
    %p200 = scmp.eq.s32.totalorder %s15, 0
    %p201 = por %p199, %p200
    %p202 = scmp.ne.s32.totalorder %s194, %s196
    %p203 = scmp.eq.s32.totalorder %s20, 3
    %p204 = por %p202, %p203
    %p205 = scmp.ne.s32.totalorder %s196, %s197
    %p206 = scmp.eq.s32.totalorder %s20, 0
    %p207 = por %p205, %p206
    %p208 = scmp.ne.s32.totalorder %s196, %s197
    %p209 = scmp.eq.s32.totalorder %s21, 3
    %p210 = por %p208, %p209
    %p212 = scmp.ne.s32.totalorder %s197, %s211
    %p213 = scmp.eq.s32.totalorder %s21, 0
    %p214 = por %p212, %p213
    %s216 = sadd.s32 %s215, 1
    %p219 = scmp.eq.s32.totalorder %s15, 3
    %p220 = scmp.ne.s32.totalorder %s215, %s217
    %p221 = scmp.eq.s32.totalorder %s15, 0
    %p222 = por %p220, %p221
    %p223 = scmp.ne.s32.totalorder %s215, %s217
    %p224 = scmp.eq.s32.totalorder %s20, 3
    %p225 = por %p223, %p224
    %p226 = scmp.ne.s32.totalorder %s217, %s218
    %p227 = scmp.eq.s32.totalorder %s20, 0
    %p228 = por %p226, %p227
    %p229 = scmp.ne.s32.totalorder %s217, %s218
    %p230 = scmp.eq.s32.totalorder %s21, 3
    %p231 = por %p229, %p230
    %p233 = scmp.ne.s32.totalorder %s218, %s232
    %p234 = scmp.eq.s32.totalorder %s21, 0
    %p235 = por %p233, %p234
    %s236 = ssub.s32 %s22, %s34
    %s237 = ssub.s32 %s23, %s30
    %s238 = sor.u32 %s236, %s237
    %p239 = scmp.eq.s32.totalorder %s238, 0
    %s241 = sadd.s32 %s240, 1
    %s242 = scalar_select %p239, %s240, %s241
    %p245 = pneg %p239
    %p246 = scmp.eq.s32.totalorder %s15, 3
    %p247 = por %p245, %p246
    %p248 = scmp.ne.s32.totalorder %s240, %s243
    %p249 = scmp.eq.s32.totalorder %s15, 0
    %p250 = por %p248, %p249
    %p251 = scmp.ne.s32.totalorder %s240, %s243
    %p252 = scmp.eq.s32.totalorder %s20, 3
    %p253 = por %p251, %p252
    %p254 = scmp.ne.s32.totalorder %s243, %s244
    %p255 = scmp.eq.s32.totalorder %s20, 0
    %p256 = por %p254, %p255
    %p257 = scmp.ne.s32.totalorder %s243, %s244
    %p258 = scmp.eq.s32.totalorder %s21, 3
    %p259 = por %p257, %p258
    %p261 = scmp.ne.s32.totalorder %s244, %s260
    %p262 = scmp.eq.s32.totalorder %s21, 0
    %p263 = por %p261, %p262
    %p264 = scmp.le.s32.totalorder 1, %s15
    %p265 = scmp.lt.s32.totalorder %s15, 5
    %p266 = pnand %p264, %p265
    %p267 = pneg %p266
    // Predicated region
    $region9: #{unfolding_net_forward.4} parent=5 // pred_check
      _
    $region10: #{unfolding_net_forward.4} parent=5 // pred_check_branch
      %269 = sbr.rel (%p266) target = $region12
    $region11: #{unfolding_net_forward.4} parent=5 // pred_region
      %s270 = ssub.s32 %s15, 1
      // Predicated region
      $region13: #{unfolding_net_forward.4} parent=11 // pred_check
        %p271 = pneg %p76
      $region14: #{unfolding_net_forward.4} parent=11 // pred_check_branch
        %273 = sbr.rel (%p271) target = $region16
      $region15: #{unfolding_net_forward.4} parent=11 // pred_region
        _
      $region16: #{unfolding_net_forward.4} parent=11 // pred_fallthru
        _
      // Predicated region
      $region17: #{unfolding_net_forward.4} parent=11 // pred_check
        %p274 = pneg %p97
      $region18: #{unfolding_net_forward.4} parent=11 // pred_check_branch
        %276 = sbr.rel (%p274) target = $region20
      $region19: #{unfolding_net_forward.4} parent=11 // pred_region
        _
      $region20: #{unfolding_net_forward.4} parent=11 // pred_fallthru
        _
      // Predicated region
      $region21: #{unfolding_net_forward.4} parent=11 // pred_check
        %p277 = pneg %p118
      $region22: #{unfolding_net_forward.4} parent=11 // pred_check_branch
        %279 = sbr.rel (%p277) target = $region24
      $region23: #{unfolding_net_forward.4} parent=11 // pred_region
        _
      $region24: #{unfolding_net_forward.4} parent=11 // pred_fallthru
        _
      // Predicated region
      $region25: #{unfolding_net_forward.4} parent=11 // pred_check
        %p280 = pneg %p139
      $region26: #{unfolding_net_forward.4} parent=11 // pred_check_branch
        %282 = sbr.rel (%p280) target = $region28
      $region27: #{unfolding_net_forward.4} parent=11 // pred_region
        _
      $region28: #{unfolding_net_forward.4} parent=11 // pred_fallthru
        _
      // Predicated region
      $region29: #{unfolding_net_forward.4} parent=11 // pred_check
        %p283 = pneg %p186
      $region30: #{unfolding_net_forward.4} parent=11 // pred_check_branch
        %285 = sbr.rel (%p283) target = $region32
      $region31: #{unfolding_net_forward.4} parent=11 // pred_region
        _
      $region32: #{unfolding_net_forward.4} parent=11 // pred_fallthru
        _
      // Predicated region
      $region33: #{unfolding_net_forward.4} parent=11 // pred_check
        %p286 = pneg %p207
      $region34: #{unfolding_net_forward.4} parent=11 // pred_check_branch
        %288 = sbr.rel (%p286) target = $region36
      $region35: #{unfolding_net_forward.4} parent=11 // pred_region
        _
      $region36: #{unfolding_net_forward.4} parent=11 // pred_fallthru
        _
      // Predicated region
      $region37: #{unfolding_net_forward.4} parent=11 // pred_check
        %p289 = pneg %p228
      $region38: #{unfolding_net_forward.4} parent=11 // pred_check_branch
        %291 = sbr.rel (%p289) target = $region40
      $region39: #{unfolding_net_forward.4} parent=11 // pred_region
        _
      $region40: #{unfolding_net_forward.4} parent=11 // pred_fallthru
        _
    $region12: #{unfolding_net_forward.4} parent=5 // pred_fallthru
      _
    %p292 = scmp.lt.s32.totalorder %s15, 4
    // Predicated region
    $region41: #{unfolding_net_forward.4} parent=5 // pred_check
      %p293 = pneg %p292
    $region42: #{unfolding_net_forward.4} parent=5 // pred_check_branch
      %295 = sbr.rel (%p293) target = $region44
    $region43: #{unfolding_net_forward.4} parent=5 // pred_region
      // Predicated region
      $region45: #{unfolding_net_forward.4} parent=43 // pred_check
        %p296 = pneg %p49
      $region46: #{unfolding_net_forward.4} parent=43 // pred_check_branch
        %298 = sbr.rel (%p296) target = $region48
      $region47: #{unfolding_net_forward.4} parent=43 // pred_region
        %s299 = smul.u32 8, %s23
        %p300 = scmp.lt.s32.totalorder %s22, 1
        %s301 = scalar_select %p300, %s22, 1
        %p302 = scmp.lt.s32.totalorder %s299, 15
        %s303 = scalar_select %p302, %s299, 15
        %s304 = smul.addr %s301, 16
        %s305 = sadd.s32 %s303, %s304
        %s306 = smul.addr %s305, 8
        %s307 = scalar_lea.vmem %s0, %s306
        %s308 = smul.u32 8, %s23
      $region48: #{unfolding_net_forward.4} parent=43 // pred_fallthru
        _
      // Predicated region
      $region49: #{unfolding_net_forward.4} parent=43 // pred_check
        %p309 = pneg %p159
      $region50: #{unfolding_net_forward.4} parent=43 // pred_check_branch
        %311 = sbr.rel (%p309) target = $region52
      $region51: #{unfolding_net_forward.4} parent=43 // pred_region
        %p312 = scmp.lt.s32.totalorder %s22, 1
        %s313 = scalar_select %p312, %s22, 1
        %s314 = smul.addr %s313, 4
        %s315 = scalar_lea.vmem %s5, %s314
      $region52: #{unfolding_net_forward.4} parent=43 // pred_fallthru
        _
    $region44: #{unfolding_net_forward.4} parent=5 // pred_fallthru
      _
    %p316 = scmp.le.s32.totalorder 1, %s15
    %p317 = scmp.lt.s32.totalorder %s15, 5
    %p318 = pnand %p316, %p317
    %p319 = pneg %p318
    // Predicated region
    $region53: #{unfolding_net_forward.4} parent=5 // pred_check
      _
    $region54: #{unfolding_net_forward.4} parent=5 // pred_check_branch
      %321 = sbr.rel (%p318) target = $region56
    $region55: #{unfolding_net_forward.4} parent=5 // pred_region
      %s322 = ssub.s32 %s15, 1
      %s323 = smul.u32 8, %s25
      %p324 = scmp.lt.s32.totalorder %s24, 1
      %s325 = scalar_select %p324, %s24, 1
      %p326 = scmp.lt.s32.totalorder %s323, 15
      %s327 = scalar_select %p326, %s323, 15
      %s328 = smul.addr %s325, 16
      %s329 = sadd.s32 %s327, %s328
      %s330 = smul.addr %s329, 8
      %s331 = scalar_lea.vmem %s0, %s330
      %p332 = pneg %p55
      %p333 = pneg %p52
      %p334 = pneg %p76
      %p335 = pneg %p73
      %p336 = pneg %p97
      %p337 = pneg %p94
      %p338 = pneg %p118
      %p339 = pneg %p115
      %p340 = pneg %p139
      %p341 = pneg %p136
      %p342 = scmp.lt.s32.totalorder %s24, 1
      %s343 = scalar_select %p342, %s24, 1
      %s344 = smul.addr %s343, 4
      %s345 = scalar_lea.vmem %s5, %s344
      %p346 = pneg %p165
      %p347 = pneg %p162
      %p348 = pneg %p186
      %p349 = pneg %p183
      %p350 = pneg %p207
      %p351 = pneg %p204
      %p352 = pneg %p228
      %p353 = pneg %p225
      %p354 = pneg %p256
      %p355 = pneg %p253
      %p356 = scmp.lt.s32.totalorder %s24, 1
      %s357 = scalar_select %p356, %s24, 1
      %p358 = scmp.lt.s32.totalorder %s25, 1
      %s359 = scalar_select %p358, %s25, 1
      %s360 = smul.addr %s357, 2
      %s361 = sadd.s32 %s359, %s360
      %s362 = smul.addr %s361, 8
      %s363 = scalar_lea.vmem %s9, %s362
      %s364 = smul.u32 8, %s25
      %p365 = scmp.lt.s32.totalorder %s24, 1
      %s366 = scalar_select %p365, %s24, 1
      %p367 = scmp.lt.s32.totalorder %s364, 15
      %s368 = scalar_select %p367, %s364, 15
      %s369 = smul.addr %s366, 16
      %s370 = sadd.s32 %s368, %s369
      %s371 = smul.addr %s370, 8
      %s372 = scalar_lea.vmem %s0, %s371
      %s373 = smul.u32 8, %s25
      %p374 = scmp.lt.s32.totalorder %s24, 1
      %s375 = scalar_select %p374, %s24, 1
      %s376 = smul.addr %s375, 4
      %s377 = scalar_lea.vmem %s5, %s376
      %p378 = scmp.lt.s32.totalorder %s24, 1
      %s379 = scalar_select %p378, %s24, 1
      %p380 = scmp.lt.s32.totalorder %s25, 1
      %s381 = scalar_select %p380, %s25, 1
      %s382 = smul.addr %s379, 2
      %s383 = sadd.s32 %s381, %s382
      %s384 = smul.addr %s383, 8
      %s385 = scalar_lea.vmem %s9, %s384
      %v387 = vld [vmem:[%s372] sm:$0xff]
      %v388 = vld [vmem:[%s372 + $0x8] sm:$0xff]
      %v389 = vld [vmem:[%s372 + $0x10] sm:$0xff]
      %v390 = vld [vmem:[%s372 + $0x18] sm:$0xff]
      %v391 = vld [vmem:[%s372 + $0x20] sm:$0xff]
      %v392 = vld [vmem:[%s372 + $0x28] sm:$0xff]
      %v393 = vld [vmem:[%s372 + $0x30] sm:$0xff]
      %v394 = vld [vmem:[%s372 + $0x38] sm:$0xff]
      %v395 = vld [vmem:[%s1] sm:$0xff]
      %v396 = vld [vmem:[%s2] sm:$0x1]
      %v398 = vlaneseq
      %v399 = vshrl.u32 %v398, 7
      %v400 = vsub.s32 0, %v399
      %v401 = vrot.slane %v396, %v400
      %vm403 = vcmask 64512
      %v405 = vsel %vm403, %v387, 0
      %v408 = vsel %vm403, %v388, 0
      %v411 = vsel %vm403, %v389, 0
      %v414 = vsel %vm403, %v390, 0
      %v417 = vsel %vm403, %v391, 0
      %v420 = vsel %vm403, %v392, 0
      %v423 = vsel %vm403, %v393, 0
      %v426 = vsel %vm403, %v394, 0
      %428 = vmatprep.subr.mxu0 0.0
      %429 = vmatpush1.msra.mxu0 %v395
      %430 = vmatprep.subr.mxu0 0.0
      %431 = vmatpush1.msra.mxu0 0.0
      %432 = vmatprep.subr.mxu0 0.0
      %433 = vmatpush1.msra.mxu0 0.0
      %434 = vmatprep.subr.mxu0 0.0
      %435 = vmatpush1.msra.mxu0 0.0
      %436 = vmatprep.subr.mxu0 0.0
      %437 = vmatpush1.msra.mxu0 0.0
      %438 = vmatprep.subr.mxu0 0.0
      %439 = vmatpush1.msra.mxu0 0.0
      %440 = vmatprep.subr.mxu0 0.0
      %441 = vmatpush1.msra.mxu0 0.0
      %442 = vmatprep.subr.mxu0 0.0
      %443 = vmatpush1.msra.mxu0 0.0
      %444 = vmatprep.subr.mxu0 0.0
      %445 = vmatpush1.msra.mxu0 0.0
      %446 = vmatprep.subr.mxu0 0.0
      %447 = vmatpush1.msra.mxu0 0.0
      %448 = vmatprep.subr.mxu0 0.0
      %449 = vmatpush1.msra.mxu0 0.0
      %450 = vmatprep.subr.mxu0 0.0
      %451 = vmatpush1.msra.mxu0 0.0
      %452 = vmatprep.subr.mxu0 0.0
      %453 = vmatpush1.msra.mxu0 0.0
      %454 = vmatprep.subr.mxu0 0.0
      %455 = vmatpush1.msra.mxu0 0.0
      %456 = vmatprep.subr.mxu0 0.0
      %457 = vmatpush1.msra.mxu0 0.0
      %458 = vmatprep.subr.mxu0 0.0
      %459 = vmatpush1.msra.mxu0 0.0
      %460 = vmatprep.subr.mxu0 0.0
      %461 = vmatpush1.msra.mxu0 0.0
      %462 = vmatprep.subr.mxu0 0.0
      %463 = vmatpush1.msra.mxu0 0.0
      %464 = vmatprep.subr.mxu0 0.0
      %465 = vmatpush1.msra.mxu0 0.0
      %466 = vmatprep.subr.mxu0 0.0
      %467 = vmatpush1.msra.mxu0 0.0
      %468 = vmatprep.subr.mxu0 0.0
      %469 = vmatpush1.msra.mxu0 0.0
      %470 = vmatprep.subr.mxu0 0.0
      %471 = vmatpush1.msra.mxu0 0.0
      %472 = vmatprep.subr.mxu0 0.0
      %473 = vmatpush1.msra.mxu0 0.0
      %474 = vmatprep.subr.mxu0 0.0
      %475 = vmatpush1.msra.mxu0 0.0
      %476 = vmatprep.subr.mxu0 0.0
      %477 = vmatpush1.msra.mxu0 0.0
      %478 = vmatprep.subr.mxu0 0.0
      %479 = vmatpush1.msra.mxu0 0.0
      %480 = vmatprep.subr.mxu0 0.0
      %481 = vmatpush1.msra.mxu0 0.0
      %482 = vmatprep.subr.mxu0 0.0
      %483 = vmatpush1.msra.mxu0 0.0
      %484 = vmatprep.subr.mxu0 0.0
      %485 = vmatpush1.msra.mxu0 0.0
      %486 = vmatprep.subr.mxu0 0.0
      %487 = vmatpush1.msra.mxu0 0.0
      %488 = vmatprep.subr.mxu0 0.0
      %489 = vmatpush1.msra.mxu0 0.0
      %490 = vmatprep.subr.mxu0 0.0
      %491 = vmatpush1.msra.mxu0 0.0
      %492 = vmatprep.mubr.f32.mxu0 0.0
      %493 = vmatmul.mubr.f32.gmra.mrb[0].mxu0 %v405
      %v494 = vpop.f32.mrb[0].mxu0
      %v495 = vadd.f32 %v401, %v494
      %v496 = vpop.f32.mrb[0].mxu0
      %497 = vmatprep.mubr.f32.mxu0 0.0
      %498 = vmatmul.mubr.f32.gmra.mrb[0].mxu0 %v408
      %v499 = vpop.f32.mrb[0].mxu0
      %v500 = vadd.f32 %v401, %v499
      %v501 = vpop.f32.mrb[0].mxu0
      %502 = vmatprep.mubr.f32.mxu0 0.0
      %503 = vmatmul.mubr.f32.gmra.mrb[0].mxu0 %v411
      %v504 = vpop.f32.mrb[0].mxu0
      %v505 = vadd.f32 %v401, %v504
      %v506 = vpop.f32.mrb[0].mxu0
      %507 = vmatprep.mubr.f32.mxu0 0.0
      %508 = vmatmul.mubr.f32.gmra.mrb[0].mxu0 %v414
      %v509 = vpop.f32.mrb[0].mxu0
      %v510 = vadd.f32 %v401, %v509
      %v511 = vpop.f32.mrb[0].mxu0
      %512 = vmatprep.mubr.f32.mxu0 0.0
      %513 = vmatmul.mubr.f32.gmra.mrb[0].mxu0 %v417
      %v514 = vpop.f32.mrb[0].mxu0
      %v515 = vadd.f32 %v401, %v514
      %v516 = vpop.f32.mrb[0].mxu0
      %517 = vmatprep.mubr.f32.mxu0 0.0
      %518 = vmatmul.mubr.f32.gmra.mrb[0].mxu0 %v420
      %v519 = vpop.f32.mrb[0].mxu0
      %v520 = vadd.f32 %v401, %v519
      %v521 = vpop.f32.mrb[0].mxu0
      %522 = vmatprep.mubr.f32.mxu0 0.0
      %523 = vmatmul.mubr.f32.gmra.mrb[0].mxu0 %v423
      %v524 = vpop.f32.mrb[0].mxu0
      %v525 = vadd.f32 %v401, %v524
      %v526 = vpop.f32.mrb[0].mxu0
      %527 = vmatprep.mubr.f32.mxu0 0.0
      %528 = vmatmul.mubr.f32.gmra.mrb[0].mxu0 %v426
      %v529 = vpop.f32.mrb[0].mxu0
      %v530 = vadd.f32 %v401, %v529
      %v531 = vpop.f32.mrb[0].mxu0
      %532 = vdwg.mxu0
      %v533 = vmax.f32 %v495, 0.0
      %v534 = vmax.f32 %v500, 0.0
      %v535 = vmax.f32 %v505, 0.0
      %v536 = vmax.f32 %v510, 0.0
      %v537 = vmax.f32 %v515, 0.0
      %v538 = vmax.f32 %v520, 0.0
      %v539 = vmax.f32 %v525, 0.0
      %v540 = vmax.f32 %v530, 0.0
      %v541 = vpack.c.bf16 %v534, %v533
      %v542 = vpack.c.bf16 %v536, %v535
      %v543 = vpack.c.bf16 %v538, %v537
      %v544 = vpack.c.bf16 %v540, %v539
      %v545 = vld [vmem:[%s3] sm:$0xff]
      %v546 = vld [vmem:[%s3 + $0x8] sm:$0xff]
      %v547 = vld [vmem:[%s3 + $0x10] sm:$0xff]
      %v548 = vld [vmem:[%s3 + $0x18] sm:$0xff]
      %v549 = vld [vmem:[%s3 + $0x20] sm:$0xff]
      %v550 = vld [vmem:[%s3 + $0x28] sm:$0xff]
      %v551 = vld [vmem:[%s3 + $0x30] sm:$0xff]
      %v552 = vld [vmem:[%s3 + $0x38] sm:$0xff]
      %v553 = vld [vmem:[%s3 + $0x40] sm:$0xff]
      %v554 = vld [vmem:[%s3 + $0x48] sm:$0xff]
      %v555 = vld [vmem:[%s3 + $0x50] sm:$0xff]
      %v556 = vld [vmem:[%s3 + $0x58] sm:$0xff]
      %v557 = vld [vmem:[%s3 + $0x60] sm:$0xff]
      %v558 = vld [vmem:[%s3 + $0x68] sm:$0xff]
      %v559 = vld [vmem:[%s3 + $0x70] sm:$0xff]
      %v560 = vld [vmem:[%s3 + $0x78] sm:$0xff]
      %v561 = vld [vmem:[%s4] sm:$0x3]
      %v563 = vlaneseq
      %v564 = vshrl.u32 %v563, 7
      %v565 = vsub.s32 0, %v564
      %v566 = vrot.slane %v561, %v565
      %v567 = vlaneseq
      %v568 = vshrl.u32 %v567, 7
      %v569 = vsub.s32 1, %v568
      %v570 = vrot.slane %v561, %v569
      %v589 = vunpack.c.l.b16 %v545
      %v590 = vunpack.c.h.b16 %v545
      %v591 = vunpack.c.l.b16 %v546
      %v592 = vunpack.c.h.b16 %v546
      %v593 = vunpack.c.l.b16 %v547
      %v594 = vunpack.c.h.b16 %v547
      %v595 = vunpack.c.l.b16 %v548
      %v596 = vunpack.c.h.b16 %v548
      %v597 = vunpack.c.l.b16 %v549
      %v598 = vunpack.c.h.b16 %v549
      %v599 = vunpack.c.l.b16 %v550
      %v600 = vunpack.c.h.b16 %v550
      %v601 = vunpack.c.l.b16 %v551
      %v602 = vunpack.c.h.b16 %v551
      %v603 = vunpack.c.l.b16 %v552
      %v604 = vunpack.c.h.b16 %v552
      %v605 = vunpack.c.l.b16 %v553
      %v606 = vunpack.c.h.b16 %v553
      %v607 = vunpack.c.l.b16 %v554
      %v608 = vunpack.c.h.b16 %v554
      %v609 = vunpack.c.l.b16 %v555
      %v610 = vunpack.c.h.b16 %v555
      %v611 = vunpack.c.l.b16 %v556
      %v612 = vunpack.c.h.b16 %v556
      %v613 = vunpack.c.l.b16 %v557
      %v614 = vunpack.c.h.b16 %v557
      %v615 = vunpack.c.l.b16 %v558
      %v616 = vunpack.c.h.b16 %v558
      %v617 = vunpack.c.l.b16 %v559
      %v618 = vunpack.c.h.b16 %v559
      %v619 = vunpack.c.l.b16 %v560
      %v620 = vunpack.c.h.b16 %v560
      %v621 = vpack.c.b16 %v591, %v589
      %v622 = vpack.c.b16 %v592, %v590
      %v623 = vpack.c.b16 %v595, %v593
      %v624 = vpack.c.b16 %v596, %v594
      %v625 = vpack.c.b16 %v599, %v597
      %v626 = vpack.c.b16 %v600, %v598
      %v627 = vpack.c.b16 %v603, %v601
      %v628 = vpack.c.b16 %v604, %v602
      %v629 = vpack.c.b16 %v607, %v605
      %v630 = vpack.c.b16 %v608, %v606
      %v631 = vpack.c.b16 %v611, %v609
      %v632 = vpack.c.b16 %v612, %v610
      %v633 = vpack.c.b16 %v615, %v613
      %v634 = vpack.c.b16 %v616, %v614
      %v635 = vpack.c.b16 %v619, %v617
      %v636 = vpack.c.b16 %v620, %v618
      %653 = vmatprep.subr.bf16.mxu0 %v622
      %654 = vmatpush1.bf16.msra.mxu0 %v621
      %655 = vmatprep.subr.bf16.mxu0 %v624
      %656 = vmatpush1.bf16.msra.mxu0 %v623
      %657 = vmatprep.subr.bf16.mxu0 %v626
      %658 = vmatpush1.bf16.msra.mxu0 %v625
      %659 = vmatprep.subr.bf16.mxu0 %v628
      %660 = vmatpush1.bf16.msra.mxu0 %v627
      %661 = vmatprep.subr.bf16.mxu0 %v630
      %662 = vmatpush1.bf16.msra.mxu0 %v629
      %663 = vmatprep.subr.bf16.mxu0 %v632
      %664 = vmatpush1.bf16.msra.mxu0 %v631
      %665 = vmatprep.subr.bf16.mxu0 %v634
      %666 = vmatpush1.bf16.msra.mxu0 %v633
      %667 = vmatprep.subr.bf16.mxu0 %v636
      %668 = vmatpush1.bf16.msra.mxu0 %v635
      %669 = vmatprep.subr.bf16.mxu0 0
      %670 = vmatpush1.bf16.msra.mxu0 0
      %671 = vmatprep.subr.bf16.mxu0 0
      %672 = vmatpush1.bf16.msra.mxu0 0
      %673 = vmatprep.subr.bf16.mxu0 0
      %674 = vmatpush1.bf16.msra.mxu0 0
      %675 = vmatprep.subr.bf16.mxu0 0
      %676 = vmatpush1.bf16.msra.mxu0 0
      %677 = vmatprep.subr.bf16.mxu0 0
      %678 = vmatpush1.bf16.msra.mxu0 0
      %679 = vmatprep.subr.bf16.mxu0 0
      %680 = vmatpush1.bf16.msra.mxu0 0
      %681 = vmatprep.subr.bf16.mxu0 0
      %682 = vmatpush1.bf16.msra.mxu0 0
      %683 = vmatprep.subr.bf16.mxu0 0
      %684 = vmatpush1.bf16.msra.mxu0 0
      %685 = vmatprep.mubr.bf16.mxu0 0
      %686 = vmatmul.mubr.bf16.gmra.mrb[0].mxu0 %v541
      %v687 = vpop.f32.mrb[0].mxu0
      %v688 = vadd.f32 %v566, %v687
      %v689 = vpop.f32.mrb[0].mxu0
      %v690 = vadd.f32 %v570, %v689
      %v691 = vpop.f32.mrb[0].mxu0
      %v692 = vadd.f32 %v566, %v691
      %v693 = vpop.f32.mrb[0].mxu0
      %v694 = vadd.f32 %v570, %v693
      %695 = vmatprep.mubr.bf16.mxu0 0
      %696 = vmatmul.mubr.bf16.gmra.mrb[0].mxu0 %v542
      %v697 = vpop.f32.mrb[0].mxu0
      %v698 = vadd.f32 %v566, %v697
      %v699 = vpop.f32.mrb[0].mxu0
      %v700 = vadd.f32 %v570, %v699
      %v701 = vpop.f32.mrb[0].mxu0
      %v702 = vadd.f32 %v566, %v701
      %v703 = vpop.f32.mrb[0].mxu0
      %v704 = vadd.f32 %v570, %v703
      %705 = vmatprep.mubr.bf16.mxu0 0
      %706 = vmatmul.mubr.bf16.gmra.mrb[0].mxu0 %v543
      %v707 = vpop.f32.mrb[0].mxu0
      %v708 = vadd.f32 %v566, %v707
      %v709 = vpop.f32.mrb[0].mxu0
      %v710 = vadd.f32 %v570, %v709
      %v711 = vpop.f32.mrb[0].mxu0
      %v712 = vadd.f32 %v566, %v711
      %v713 = vpop.f32.mrb[0].mxu0
      %v714 = vadd.f32 %v570, %v713
      %715 = vmatprep.mubr.bf16.mxu0 0
      %716 = vmatmul.mubr.bf16.gmra.mrb[0].mxu0 %v544
      %v717 = vpop.f32.mrb[0].mxu0
      %v718 = vadd.f32 %v566, %v717
      %v719 = vpop.f32.mrb[0].mxu0
      %v720 = vadd.f32 %v570, %v719
      %v721 = vpop.f32.mrb[0].mxu0
      %v722 = vadd.f32 %v566, %v721
      %v723 = vpop.f32.mrb[0].mxu0
      %v724 = vadd.f32 %v570, %v723
      %725 = vdwg.mxu0
      %v726 = vpack.c.bf16 %v692, %v688
      %v727 = vpack.c.bf16 %v694, %v690
      %v728 = vpack.c.bf16 %v702, %v698
      %v729 = vpack.c.bf16 %v704, %v700
      %v730 = vpack.c.bf16 %v712, %v708
      %v731 = vpack.c.bf16 %v714, %v710
      %v732 = vpack.c.bf16 %v722, %v718
      %v733 = vpack.c.bf16 %v724, %v720
      %v734 = vld [vmem:[%s6] sm:$0xff]
      %v735 = vld [vmem:[%s6 + $0x8] sm:$0xff]
      %v736 = vld [vmem:[%s6 + $0x10] sm:$0xff]
      %v737 = vld [vmem:[%s6 + $0x18] sm:$0xff]
      %v738 = vld [vmem:[%s6 + $0x20] sm:$0xff]
      %v739 = vld [vmem:[%s6 + $0x28] sm:$0xff]
      %v740 = vld [vmem:[%s6 + $0x30] sm:$0xff]
      %v741 = vld [vmem:[%s6 + $0x38] sm:$0xff]
      %v742 = vld [vmem:[%s6 + $0x40] sm:$0xff]
      %v743 = vld [vmem:[%s6 + $0x48] sm:$0xff]
      %v744 = vld [vmem:[%s6 + $0x50] sm:$0xff]
      %v745 = vld [vmem:[%s6 + $0x58] sm:$0xff]
      %v746 = vld [vmem:[%s6 + $0x60] sm:$0xff]
      %v747 = vld [vmem:[%s6 + $0x68] sm:$0xff]
      %v748 = vld [vmem:[%s6 + $0x70] sm:$0xff]
      %v749 = vld [vmem:[%s6 + $0x78] sm:$0xff]
      %v750 = vld [vmem:[%s6 + $0x80] sm:$0xff]
      %v751 = vld [vmem:[%s6 + $0x88] sm:$0xff]
      %v752 = vld [vmem:[%s6 + $0x90] sm:$0xff]
      %v753 = vld [vmem:[%s6 + $0x98] sm:$0xff]
      %v754 = vld [vmem:[%s6 + $0xa0] sm:$0xff]
      %v755 = vld [vmem:[%s6 + $0xa8] sm:$0xff]
      %v756 = vld [vmem:[%s6 + $0xb0] sm:$0xff]
      %v757 = vld [vmem:[%s6 + $0xb8] sm:$0xff]
      %v758 = vld [vmem:[%s6 + $0xc0] sm:$0xff]
      %v759 = vld [vmem:[%s6 + $0xc8] sm:$0xff]
      %v760 = vld [vmem:[%s6 + $0xd0] sm:$0xff]
      %v761 = vld [vmem:[%s6 + $0xd8] sm:$0xff]
      %v762 = vld [vmem:[%s6 + $0xe0] sm:$0xff]
      %v763 = vld [vmem:[%s6 + $0xe8] sm:$0xff]
      %v764 = vld [vmem:[%s6 + $0xf0] sm:$0xff]
      %v765 = vld [vmem:[%s6 + $0xf8] sm:$0xff]
      %v766 = vld [vmem:[%s6 + $0x100] sm:$0xff]
      %v767 = vld [vmem:[%s6 + $0x108] sm:$0xff]
      %v768 = vld [vmem:[%s6 + $0x110] sm:$0xff]
      %v769 = vld [vmem:[%s6 + $0x118] sm:$0xff]
      %v770 = vld [vmem:[%s6 + $0x120] sm:$0xff]
      %v771 = vld [vmem:[%s6 + $0x128] sm:$0xff]
      %v772 = vld [vmem:[%s6 + $0x130] sm:$0xff]
      %v773 = vld [vmem:[%s6 + $0x138] sm:$0xff]
      %v774 = vld [vmem:[%s6 + $0x140] sm:$0xff]
      %v775 = vld [vmem:[%s6 + $0x148] sm:$0xff]
      %v776 = vld [vmem:[%s6 + $0x150] sm:$0xff]
      %v777 = vld [vmem:[%s6 + $0x158] sm:$0xff]
      %v778 = vld [vmem:[%s6 + $0x160] sm:$0xff]
      %v779 = vld [vmem:[%s6 + $0x168] sm:$0xff]
      %v780 = vld [vmem:[%s6 + $0x170] sm:$0xff]
      %v781 = vld [vmem:[%s6 + $0x178] sm:$0xff]
      %v782 = vld [vmem:[%s6 + $0x180] sm:$0xff]
      %v783 = vld [vmem:[%s6 + $0x188] sm:$0xff]
      %v784 = vld [vmem:[%s6 + $0x190] sm:$0xff]
      %v785 = vld [vmem:[%s6 + $0x198] sm:$0xff]
      %v786 = vld [vmem:[%s6 + $0x1a0] sm:$0xff]
      %v787 = vld [vmem:[%s6 + $0x1a8] sm:$0xff]
      %v788 = vld [vmem:[%s6 + $0x1b0] sm:$0xff]
      %v789 = vld [vmem:[%s6 + $0x1b8] sm:$0xff]
      %v790 = vld [vmem:[%s6 + $0x1c0] sm:$0xff]
      %v791 = vld [vmem:[%s6 + $0x1c8] sm:$0xff]
      %v792 = vld [vmem:[%s6 + $0x1d0] sm:$0xff]
      %v793 = vld [vmem:[%s6 + $0x1d8] sm:$0xff]
      %v794 = vld [vmem:[%s6 + $0x1e0] sm:$0xff]
      %v795 = vld [vmem:[%s6 + $0x1e8] sm:$0xff]
      %v796 = vld [vmem:[%s6 + $0x1f0] sm:$0xff]
      %v797 = vld [vmem:[%s6 + $0x1f8] sm:$0xff]
      %v798 = vld [vmem:[%s377] sm:$0xf]
      %v800 = vlaneseq
      %v801 = vshrl.u32 %v800, 7
      %v802 = vsub.s32 0, %v801
      %v803 = vrot.slane %v798, %v802
      %v804 = vlaneseq
      %v805 = vshrl.u32 %v804, 7
      %v806 = vsub.s32 1, %v805
      %v807 = vrot.slane %v798, %v806
      %v808 = vlaneseq
      %v809 = vshrl.u32 %v808, 7
      %v810 = vsub.s32 2, %v809
      %v811 = vrot.slane %v798, %v810
      %v812 = vlaneseq
      %v813 = vshrl.u32 %v812, 7
      %v814 = vsub.s32 3, %v813
      %v815 = vrot.slane %v798, %v814
      %v884 = vunpack.c.l.b16 %v734
      %v885 = vunpack.c.h.b16 %v734
      %v886 = vunpack.c.l.b16 %v735
      %v887 = vunpack.c.h.b16 %v735
      %v888 = vunpack.c.l.b16 %v736
      %v889 = vunpack.c.h.b16 %v736
      %v890 = vunpack.c.l.b16 %v737
      %v891 = vunpack.c.h.b16 %v737
      %v892 = vunpack.c.l.b16 %v738
      %v893 = vunpack.c.h.b16 %v738
      %v894 = vunpack.c.l.b16 %v739
      %v895 = vunpack.c.h.b16 %v739
      %v896 = vunpack.c.l.b16 %v740
      %v897 = vunpack.c.h.b16 %v740
      %v898 = vunpack.c.l.b16 %v741
      %v899 = vunpack.c.h.b16 %v741
      %v900 = vunpack.c.l.b16 %v742
      %v901 = vunpack.c.h.b16 %v742
      %v902 = vunpack.c.l.b16 %v743
      %v903 = vunpack.c.h.b16 %v743
      %v904 = vunpack.c.l.b16 %v744
      %v905 = vunpack.c.h.b16 %v744
      %v906 = vunpack.c.l.b16 %v745
      %v907 = vunpack.c.h.b16 %v745
      %v908 = vunpack.c.l.b16 %v746
      %v909 = vunpack.c.h.b16 %v746
      %v910 = vunpack.c.l.b16 %v747
      %v911 = vunpack.c.h.b16 %v747
      %v912 = vunpack.c.l.b16 %v748
      %v913 = vunpack.c.h.b16 %v748
      %v914 = vunpack.c.l.b16 %v749
      %v915 = vunpack.c.h.b16 %v749
      %v916 = vunpack.c.l.b16 %v750
      %v917 = vunpack.c.h.b16 %v750
      %v918 = vunpack.c.l.b16 %v751
      %v919 = vunpack.c.h.b16 %v751
      %v920 = vunpack.c.l.b16 %v752
      %v921 = vunpack.c.h.b16 %v752
      %v922 = vunpack.c.l.b16 %v753
      %v923 = vunpack.c.h.b16 %v753
      %v924 = vunpack.c.l.b16 %v754
      %v925 = vunpack.c.h.b16 %v754
      %v926 = vunpack.c.l.b16 %v755
      %v927 = vunpack.c.h.b16 %v755
      %v928 = vunpack.c.l.b16 %v756
      %v929 = vunpack.c.h.b16 %v756
      %v930 = vunpack.c.l.b16 %v757
      %v931 = vunpack.c.h.b16 %v757
      %v932 = vunpack.c.l.b16 %v758
      %v933 = vunpack.c.h.b16 %v758
      %v934 = vunpack.c.l.b16 %v759
      %v935 = vunpack.c.h.b16 %v759
      %v936 = vunpack.c.l.b16 %v760
      %v937 = vunpack.c.h.b16 %v760
      %v938 = vunpack.c.l.b16 %v761
      %v939 = vunpack.c.h.b16 %v761
      %v940 = vunpack.c.l.b16 %v762
      %v941 = vunpack.c.h.b16 %v762
      %v942 = vunpack.c.l.b16 %v763
      %v943 = vunpack.c.h.b16 %v763
      %v944 = vunpack.c.l.b16 %v764
      %v945 = vunpack.c.h.b16 %v764
      %v946 = vunpack.c.l.b16 %v765
      %v947 = vunpack.c.h.b16 %v765
      %v948 = vunpack.c.l.b16 %v766
      %v949 = vunpack.c.h.b16 %v766
      %v950 = vunpack.c.l.b16 %v767
      %v951 = vunpack.c.h.b16 %v767
      %v952 = vunpack.c.l.b16 %v768
      %v953 = vunpack.c.h.b16 %v768
      %v954 = vunpack.c.l.b16 %v769
      %v955 = vunpack.c.h.b16 %v769
      %v956 = vunpack.c.l.b16 %v770
      %v957 = vunpack.c.h.b16 %v770
      %v958 = vunpack.c.l.b16 %v771
      %v959 = vunpack.c.h.b16 %v771
      %v960 = vunpack.c.l.b16 %v772
      %v961 = vunpack.c.h.b16 %v772
      %v962 = vunpack.c.l.b16 %v773
      %v963 = vunpack.c.h.b16 %v773
      %v964 = vunpack.c.l.b16 %v774
      %v965 = vunpack.c.h.b16 %v774
      %v966 = vunpack.c.l.b16 %v775
      %v967 = vunpack.c.h.b16 %v775
      %v968 = vunpack.c.l.b16 %v776
      %v969 = vunpack.c.h.b16 %v776
      %v970 = vunpack.c.l.b16 %v777
      %v971 = vunpack.c.h.b16 %v777
      %v972 = vunpack.c.l.b16 %v778
      %v973 = vunpack.c.h.b16 %v778
      %v974 = vunpack.c.l.b16 %v779
      %v975 = vunpack.c.h.b16 %v779
      %v976 = vunpack.c.l.b16 %v780
      %v977 = vunpack.c.h.b16 %v780
      %v978 = vunpack.c.l.b16 %v781
      %v979 = vunpack.c.h.b16 %v781
      %v980 = vunpack.c.l.b16 %v782
      %v981 = vunpack.c.h.b16 %v782
      %v982 = vunpack.c.l.b16 %v783
      %v983 = vunpack.c.h.b16 %v783
      %v984 = vunpack.c.l.b16 %v784
      %v985 = vunpack.c.h.b16 %v784
      %v986 = vunpack.c.l.b16 %v785
      %v987 = vunpack.c.h.b16 %v785
      %v988 = vunpack.c.l.b16 %v786
      %v989 = vunpack.c.h.b16 %v786
      %v990 = vunpack.c.l.b16 %v787
      %v991 = vunpack.c.h.b16 %v787
      %v992 = vunpack.c.l.b16 %v788
      %v993 = vunpack.c.h.b16 %v788
      %v994 = vunpack.c.l.b16 %v789
      %v995 = vunpack.c.h.b16 %v789
      %v996 = vunpack.c.l.b16 %v790
      %v997 = vunpack.c.h.b16 %v790
      %v998 = vunpack.c.l.b16 %v791
      %v999 = vunpack.c.h.b16 %v791
      %v1000 = vunpack.c.l.b16 %v792
      %v1001 = vunpack.c.h.b16 %v792
      %v1002 = vunpack.c.l.b16 %v793
      %v1003 = vunpack.c.h.b16 %v793
      %v1004 = vunpack.c.l.b16 %v794
      %v1005 = vunpack.c.h.b16 %v794
      %v1006 = vunpack.c.l.b16 %v795
      %v1007 = vunpack.c.h.b16 %v795
      %v1008 = vunpack.c.l.b16 %v796
      %v1009 = vunpack.c.h.b16 %v796
      %v1010 = vunpack.c.l.b16 %v797
      %v1011 = vunpack.c.h.b16 %v797
      %v1012 = vpack.c.b16 %v888, %v884
      %v1013 = vpack.c.b16 %v889, %v885
      %v1014 = vpack.c.b16 %v890, %v886
      %v1015 = vpack.c.b16 %v891, %v887
      %v1016 = vpack.c.b16 %v896, %v892
      %v1017 = vpack.c.b16 %v897, %v893
      %v1018 = vpack.c.b16 %v898, %v894
      %v1019 = vpack.c.b16 %v899, %v895
      %v1020 = vpack.c.b16 %v904, %v900
      %v1021 = vpack.c.b16 %v905, %v901
      %v1022 = vpack.c.b16 %v906, %v902
      %v1023 = vpack.c.b16 %v907, %v903
      %v1024 = vpack.c.b16 %v912, %v908
      %v1025 = vpack.c.b16 %v913, %v909
      %v1026 = vpack.c.b16 %v914, %v910
      %v1027 = vpack.c.b16 %v915, %v911
      %v1028 = vpack.c.b16 %v920, %v916
      %v1029 = vpack.c.b16 %v921, %v917
      %v1030 = vpack.c.b16 %v922, %v918
      %v1031 = vpack.c.b16 %v923, %v919
      %v1032 = vpack.c.b16 %v928, %v924
      %v1033 = vpack.c.b16 %v929, %v925
      %v1034 = vpack.c.b16 %v930, %v926
      %v1035 = vpack.c.b16 %v931, %v927
      %v1036 = vpack.c.b16 %v936, %v932
      %v1037 = vpack.c.b16 %v937, %v933
      %v1038 = vpack.c.b16 %v938, %v934
      %v1039 = vpack.c.b16 %v939, %v935
      %v1040 = vpack.c.b16 %v944, %v940
      %v1041 = vpack.c.b16 %v945, %v941
      %v1042 = vpack.c.b16 %v946, %v942
      %v1043 = vpack.c.b16 %v947, %v943
      %v1044 = vpack.c.b16 %v952, %v948
      %v1045 = vpack.c.b16 %v953, %v949
      %v1046 = vpack.c.b16 %v954, %v950
      %v1047 = vpack.c.b16 %v955, %v951
      %v1048 = vpack.c.b16 %v960, %v956
      %v1049 = vpack.c.b16 %v961, %v957
      %v1050 = vpack.c.b16 %v962, %v958
      %v1051 = vpack.c.b16 %v963, %v959
      %v1052 = vpack.c.b16 %v968, %v964
      %v1053 = vpack.c.b16 %v969, %v965
      %v1054 = vpack.c.b16 %v970, %v966
      %v1055 = vpack.c.b16 %v971, %v967
      %v1056 = vpack.c.b16 %v976, %v972
      %v1057 = vpack.c.b16 %v977, %v973
      %v1058 = vpack.c.b16 %v978, %v974
      %v1059 = vpack.c.b16 %v979, %v975
      %v1060 = vpack.c.b16 %v984, %v980
      %v1061 = vpack.c.b16 %v985, %v981
      %v1062 = vpack.c.b16 %v986, %v982
      %v1063 = vpack.c.b16 %v987, %v983
      %v1064 = vpack.c.b16 %v992, %v988
      %v1065 = vpack.c.b16 %v993, %v989
      %v1066 = vpack.c.b16 %v994, %v990
      %v1067 = vpack.c.b16 %v995, %v991
      %v1068 = vpack.c.b16 %v1000, %v996
      %v1069 = vpack.c.b16 %v1001, %v997
      %v1070 = vpack.c.b16 %v1002, %v998
      %v1071 = vpack.c.b16 %v1003, %v999
      %v1072 = vpack.c.b16 %v1008, %v1004
      %v1073 = vpack.c.b16 %v1009, %v1005
      %v1074 = vpack.c.b16 %v1010, %v1006
      %v1075 = vpack.c.b16 %v1011, %v1007
      %1140 = vmatprep.subr.bf16.mxu0 %v1013
      %1141 = vmatpush1.bf16.msra.mxu0 %v1012
      %1142 = vmatprep.subr.bf16.mxu0 %v1017
      %1143 = vmatpush1.bf16.msra.mxu0 %v1016
      %1144 = vmatprep.subr.bf16.mxu0 %v1021
      %1145 = vmatpush1.bf16.msra.mxu0 %v1020
      %1146 = vmatprep.subr.bf16.mxu0 %v1025
      %1147 = vmatpush1.bf16.msra.mxu0 %v1024
      %1148 = vmatprep.subr.bf16.mxu0 %v1029
      %1149 = vmatpush1.bf16.msra.mxu0 %v1028
      %1150 = vmatprep.subr.bf16.mxu0 %v1033
      %1151 = vmatpush1.bf16.msra.mxu0 %v1032
      %1152 = vmatprep.subr.bf16.mxu0 %v1037
      %1153 = vmatpush1.bf16.msra.mxu0 %v1036
      %1154 = vmatprep.subr.bf16.mxu0 %v1041
      %1155 = vmatpush1.bf16.msra.mxu0 %v1040
      %1156 = vmatprep.subr.bf16.mxu0 %v1045
      %1157 = vmatpush1.bf16.msra.mxu0 %v1044
      %1158 = vmatprep.subr.bf16.mxu0 %v1049
      %1159 = vmatpush1.bf16.msra.mxu0 %v1048
      %1160 = vmatprep.subr.bf16.mxu0 %v1053
      %1161 = vmatpush1.bf16.msra.mxu0 %v1052
      %1162 = vmatprep.subr.bf16.mxu0 %v1057
      %1163 = vmatpush1.bf16.msra.mxu0 %v1056
      %1164 = vmatprep.subr.bf16.mxu0 %v1061
      %1165 = vmatpush1.bf16.msra.mxu0 %v1060
      %1166 = vmatprep.subr.bf16.mxu0 %v1065
      %1167 = vmatpush1.bf16.msra.mxu0 %v1064
      %1168 = vmatprep.subr.bf16.mxu0 %v1069
      %1169 = vmatpush1.bf16.msra.mxu0 %v1068
      %1170 = vmatprep.subr.bf16.mxu0 %v1073
      %1171 = vmatpush1.bf16.msra.mxu0 %v1072
      %1172 = vmatprep.mubr.bf16.mxu0 %v727
      %1173 = vmatmul.mubr.bf16.gmra.mrb[0].mxu0 %v726
      %v1174 = vpop.f32.mrb[0].mxu0
      %v1175 = vadd.f32 %v803, %v1174
      %v1176 = vpop.f32.mrb[0].mxu0
      %v1177 = vadd.f32 %v807, %v1176
      %v1178 = vpop.f32.mrb[0].mxu0
      %v1179 = vadd.f32 %v803, %v1178
      %v1180 = vpop.f32.mrb[0].mxu0
      %v1181 = vadd.f32 %v807, %v1180
      %1182 = vmatprep.mubr.bf16.mxu0 %v729
      %1183 = vmatmul.mubr.bf16.gmra.mrb[0].mxu0 %v728
      %v1184 = vpop.f32.mrb[0].mxu0
      %v1185 = vadd.f32 %v803, %v1184
      %v1186 = vpop.f32.mrb[0].mxu0
      %v1187 = vadd.f32 %v807, %v1186
      %v1188 = vpop.f32.mrb[0].mxu0
      %v1189 = vadd.f32 %v803, %v1188
      %v1190 = vpop.f32.mrb[0].mxu0
      %v1191 = vadd.f32 %v807, %v1190
      %1192 = vmatprep.mubr.bf16.mxu0 %v731
      %1193 = vmatmul.mubr.bf16.gmra.mrb[0].mxu0 %v730
      %v1194 = vpop.f32.mrb[0].mxu0
      %v1195 = vadd.f32 %v803, %v1194
      %v1196 = vpop.f32.mrb[0].mxu0
      %v1197 = vadd.f32 %v807, %v1196
      %v1198 = vpop.f32.mrb[0].mxu0
      %v1199 = vadd.f32 %v803, %v1198
      %v1200 = vpop.f32.mrb[0].mxu0
      %v1201 = vadd.f32 %v807, %v1200
      %1202 = vmatprep.mubr.bf16.mxu0 %v733
      %1203 = vmatmul.mubr.bf16.gmra.mrb[0].mxu0 %v732
      %v1204 = vpop.f32.mrb[0].mxu0
      %v1205 = vadd.f32 %v803, %v1204
      %v1206 = vpop.f32.mrb[0].mxu0
      %v1207 = vadd.f32 %v807, %v1206
      %v1208 = vpop.f32.mrb[0].mxu0
      %v1209 = vadd.f32 %v803, %v1208
      %v1210 = vpop.f32.mrb[0].mxu0
      %v1211 = vadd.f32 %v807, %v1210
      %1212 = vdwg.mxu0
      %1213 = vmatprep.subr.bf16.mxu0 %v1015
      %1214 = vmatpush1.bf16.msra.mxu0 %v1014
      %1215 = vmatprep.subr.bf16.mxu0 %v1019
      %1216 = vmatpush1.bf16.msra.mxu0 %v1018
      %1217 = vmatprep.subr.bf16.mxu0 %v1023
      %1218 = vmatpush1.bf16.msra.mxu0 %v1022
      %1219 = vmatprep.subr.bf16.mxu0 %v1027
      %1220 = vmatpush1.bf16.msra.mxu0 %v1026
      %1221 = vmatprep.subr.bf16.mxu0 %v1031
      %1222 = vmatpush1.bf16.msra.mxu0 %v1030
      %1223 = vmatprep.subr.bf16.mxu0 %v1035
      %1224 = vmatpush1.bf16.msra.mxu0 %v1034
      %1225 = vmatprep.subr.bf16.mxu0 %v1039
      %1226 = vmatpush1.bf16.msra.mxu0 %v1038
      %1227 = vmatprep.subr.bf16.mxu0 %v1043
      %1228 = vmatpush1.bf16.msra.mxu0 %v1042
      %1229 = vmatprep.subr.bf16.mxu0 %v1047
      %1230 = vmatpush1.bf16.msra.mxu0 %v1046
      %1231 = vmatprep.subr.bf16.mxu0 %v1051
      %1232 = vmatpush1.bf16.msra.mxu0 %v1050
      %1233 = vmatprep.subr.bf16.mxu0 %v1055
      %1234 = vmatpush1.bf16.msra.mxu0 %v1054
      %1235 = vmatprep.subr.bf16.mxu0 %v1059
      %1236 = vmatpush1.bf16.msra.mxu0 %v1058
      %1237 = vmatprep.subr.bf16.mxu0 %v1063
      %1238 = vmatpush1.bf16.msra.mxu0 %v1062
      %1239 = vmatprep.subr.bf16.mxu0 %v1067
      %1240 = vmatpush1.bf16.msra.mxu0 %v1066
      %1241 = vmatprep.subr.bf16.mxu0 %v1071
      %1242 = vmatpush1.bf16.msra.mxu0 %v1070
      %1243 = vmatprep.subr.bf16.mxu0 %v1075
      %1244 = vmatpush1.bf16.msra.mxu0 %v1074
      %1245 = vmatprep.mubr.bf16.mxu0 %v727
      %1246 = vmatmul.mubr.bf16.gmra.mrb[0].mxu0 %v726
      %v1247 = vpop.f32.mrb[0].mxu0
      %v1248 = vadd.f32 %v811, %v1247
      %v1249 = vpop.f32.mrb[0].mxu0
      %v1250 = vadd.f32 %v815, %v1249
      %v1251 = vpop.f32.mrb[0].mxu0
      %v1252 = vadd.f32 %v811, %v1251
      %v1253 = vpop.f32.mrb[0].mxu0
      %v1254 = vadd.f32 %v815, %v1253
      %1255 = vmatprep.mubr.bf16.mxu0 %v729
      %1256 = vmatmul.mubr.bf16.gmra.mrb[0].mxu0 %v728
      %v1257 = vpop.f32.mrb[0].mxu0
      %v1258 = vadd.f32 %v811, %v1257
      %v1259 = vpop.f32.mrb[0].mxu0
      %v1260 = vadd.f32 %v815, %v1259
      %v1261 = vpop.f32.mrb[0].mxu0
      %v1262 = vadd.f32 %v811, %v1261
      %v1263 = vpop.f32.mrb[0].mxu0
      %v1264 = vadd.f32 %v815, %v1263
      %1265 = vmatprep.mubr.bf16.mxu0 %v731
      %1266 = vmatmul.mubr.bf16.gmra.mrb[0].mxu0 %v730
      %v1267 = vpop.f32.mrb[0].mxu0
      %v1268 = vadd.f32 %v811, %v1267
      %v1269 = vpop.f32.mrb[0].mxu0
      %v1270 = vadd.f32 %v815, %v1269
      %v1271 = vpop.f32.mrb[0].mxu0
      %v1272 = vadd.f32 %v811, %v1271
      %v1273 = vpop.f32.mrb[0].mxu0
      %v1274 = vadd.f32 %v815, %v1273
      %1275 = vmatprep.mubr.bf16.mxu0 %v733
      %1276 = vmatmul.mubr.bf16.gmra.mrb[0].mxu0 %v732
      %v1277 = vpop.f32.mrb[0].mxu0
      %v1278 = vadd.f32 %v811, %v1277
      %v1279 = vpop.f32.mrb[0].mxu0
      %v1280 = vadd.f32 %v815, %v1279
      %v1281 = vpop.f32.mrb[0].mxu0
      %v1282 = vadd.f32 %v811, %v1281
      %v1283 = vpop.f32.mrb[0].mxu0
      %v1284 = vadd.f32 %v815, %v1283
      %1285 = vdwg.mxu0
      %v1286 = vmax.f32 %v1175, 0.0
      %v1287 = vmax.f32 %v1177, 0.0
      %v1288 = vmax.f32 %v1248, 0.0
      %v1289 = vmax.f32 %v1250, 0.0
      %v1290 = vmax.f32 %v1179, 0.0
      %v1291 = vmax.f32 %v1181, 0.0
      %v1292 = vmax.f32 %v1252, 0.0
      %v1293 = vmax.f32 %v1254, 0.0
      %v1294 = vmax.f32 %v1185, 0.0
      %v1295 = vmax.f32 %v1187, 0.0
      %v1296 = vmax.f32 %v1258, 0.0
      %v1297 = vmax.f32 %v1260, 0.0
      %v1298 = vmax.f32 %v1189, 0.0
      %v1299 = vmax.f32 %v1191, 0.0
      %v1300 = vmax.f32 %v1262, 0.0
      %v1301 = vmax.f32 %v1264, 0.0
      %v1302 = vmax.f32 %v1195, 0.0
      %v1303 = vmax.f32 %v1197, 0.0
      %v1304 = vmax.f32 %v1268, 0.0
      %v1305 = vmax.f32 %v1270, 0.0
      %v1306 = vmax.f32 %v1199, 0.0
      %v1307 = vmax.f32 %v1201, 0.0
      %v1308 = vmax.f32 %v1272, 0.0
      %v1309 = vmax.f32 %v1274, 0.0
      %v1310 = vmax.f32 %v1205, 0.0
      %v1311 = vmax.f32 %v1207, 0.0
      %v1312 = vmax.f32 %v1278, 0.0
      %v1313 = vmax.f32 %v1280, 0.0
      %v1314 = vmax.f32 %v1209, 0.0
      %v1315 = vmax.f32 %v1211, 0.0
      %v1316 = vmax.f32 %v1282, 0.0
      %v1317 = vmax.f32 %v1284, 0.0
      %v1318 = vpack.c.bf16 %v1290, %v1286
      %v1319 = vpack.c.bf16 %v1291, %v1287
      %v1320 = vpack.c.bf16 %v1292, %v1288
      %v1321 = vpack.c.bf16 %v1293, %v1289
      %v1322 = vpack.c.bf16 %v1298, %v1294
      %v1323 = vpack.c.bf16 %v1299, %v1295
      %v1324 = vpack.c.bf16 %v1300, %v1296
      %v1325 = vpack.c.bf16 %v1301, %v1297
      %v1326 = vpack.c.bf16 %v1306, %v1302
      %v1327 = vpack.c.bf16 %v1307, %v1303
      %v1328 = vpack.c.bf16 %v1308, %v1304
      %v1329 = vpack.c.bf16 %v1309, %v1305
      %v1330 = vpack.c.bf16 %v1314, %v1310
      %v1331 = vpack.c.bf16 %v1315, %v1311
      %v1332 = vpack.c.bf16 %v1316, %v1312
      %v1333 = vpack.c.bf16 %v1317, %v1313
      %v1334 = vld [vmem:[%s7] sm:$0xf]
      %v1335 = vld [vmem:[%s7 + $0x4] sm:$0xf]
      %v1336 = vld [vmem:[%s7 + $0x8] sm:$0xf]
      %v1337 = vld [vmem:[%s7 + $0xc] sm:$0xf]
      %v1338 = vld [vmem:[%s7 + $0x10] sm:$0xf]
      %v1339 = vld [vmem:[%s7 + $0x14] sm:$0xf]
      %v1340 = vld [vmem:[%s7 + $0x18] sm:$0xf]
      %v1341 = vld [vmem:[%s7 + $0x1c] sm:$0xf]
      %v1342 = vld [vmem:[%s7 + $0x20] sm:$0xf]
      %v1343 = vld [vmem:[%s7 + $0x24] sm:$0xf]
      %v1344 = vld [vmem:[%s7 + $0x28] sm:$0xf]
      %v1345 = vld [vmem:[%s7 + $0x2c] sm:$0xf]
      %v1346 = vld [vmem:[%s7 + $0x30] sm:$0xf]
      %v1347 = vld [vmem:[%s7 + $0x34] sm:$0xf]
      %v1348 = vld [vmem:[%s7 + $0x38] sm:$0xf]
      %v1349 = vld [vmem:[%s7 + $0x3c] sm:$0xf]
      %v1350 = vld [vmem:[%s7 + $0x40] sm:$0xf]
      %v1351 = vld [vmem:[%s7 + $0x44] sm:$0xf]
      %v1352 = vld [vmem:[%s7 + $0x48] sm:$0xf]
      %v1353 = vld [vmem:[%s7 + $0x4c] sm:$0xf]
      %v1354 = vld [vmem:[%s7 + $0x50] sm:$0xf]
      %v1355 = vld [vmem:[%s7 + $0x54] sm:$0xf]
      %v1356 = vld [vmem:[%s7 + $0x58] sm:$0xf]
      %v1357 = vld [vmem:[%s7 + $0x5c] sm:$0xf]
      %v1358 = vld [vmem:[%s7 + $0x60] sm:$0xf]
      %v1359 = vld [vmem:[%s7 + $0x64] sm:$0xf]
      %v1360 = vld [vmem:[%s7 + $0x68] sm:$0xf]
      %v1361 = vld [vmem:[%s7 + $0x6c] sm:$0xf]
      %v1362 = vld [vmem:[%s7 + $0x70] sm:$0xf]
      %v1363 = vld [vmem:[%s7 + $0x74] sm:$0xf]
      %v1364 = vld [vmem:[%s7 + $0x78] sm:$0xf]
      %v1365 = vld [vmem:[%s7 + $0x7c] sm:$0xf]
      %v1366 = vld [vmem:[%s7 + $0x80] sm:$0xf]
      %v1367 = vld [vmem:[%s7 + $0x84] sm:$0xf]
      %v1368 = vld [vmem:[%s7 + $0x88] sm:$0xf]
      %v1369 = vld [vmem:[%s7 + $0x8c] sm:$0xf]
      %v1370 = vld [vmem:[%s7 + $0x90] sm:$0xf]
      %v1371 = vld [vmem:[%s7 + $0x94] sm:$0xf]
      %v1372 = vld [vmem:[%s7 + $0x98] sm:$0xf]
      %v1373 = vld [vmem:[%s7 + $0x9c] sm:$0xf]
      %v1374 = vld [vmem:[%s7 + $0xa0] sm:$0xf]
      %v1375 = vld [vmem:[%s7 + $0xa4] sm:$0xf]
      %v1376 = vld [vmem:[%s7 + $0xa8] sm:$0xf]
      %v1377 = vld [vmem:[%s7 + $0xac] sm:$0xf]
      %v1378 = vld [vmem:[%s7 + $0xb0] sm:$0xf]
      %v1379 = vld [vmem:[%s7 + $0xb4] sm:$0xf]
      %v1380 = vld [vmem:[%s7 + $0xb8] sm:$0xf]
      %v1381 = vld [vmem:[%s7 + $0xbc] sm:$0xf]
      %v1382 = vld [vmem:[%s7 + $0xc0] sm:$0xf]
      %v1383 = vld [vmem:[%s7 + $0xc4] sm:$0xf]
      %v1384 = vld [vmem:[%s7 + $0xc8] sm:$0xf]
      %v1385 = vld [vmem:[%s7 + $0xcc] sm:$0xf]
      %v1386 = vld [vmem:[%s7 + $0xd0] sm:$0xf]
      %v1387 = vld [vmem:[%s7 + $0xd4] sm:$0xf]
      %v1388 = vld [vmem:[%s7 + $0xd8] sm:$0xf]
      %v1389 = vld [vmem:[%s7 + $0xdc] sm:$0xf]
      %v1390 = vld [vmem:[%s7 + $0xe0] sm:$0xf]
      %v1391 = vld [vmem:[%s7 + $0xe4] sm:$0xf]
      %v1392 = vld [vmem:[%s7 + $0xe8] sm:$0xf]
      %v1393 = vld [vmem:[%s7 + $0xec] sm:$0xf]
      %v1394 = vld [vmem:[%s7 + $0xf0] sm:$0xf]
      %v1395 = vld [vmem:[%s7 + $0xf4] sm:$0xf]
      %v1396 = vld [vmem:[%s7 + $0xf8] sm:$0xf]
      %v1397 = vld [vmem:[%s7 + $0xfc] sm:$0xf]
      %v1398 = vld [vmem:[%s8] sm:$0x1]
      %v1400 = vlaneseq
      %v1401 = vshrl.u32 %v1400, 7
      %v1402 = vsub.s32 0, %v1401
      %v1403 = vrot.slane %v1398, %v1402
      %v1469 = vunpack.c.l.b16 %v1334
      %v1470 = vunpack.c.l.b16 %v1335
      %v1471 = vunpack.c.l.b16 %v1336
      %v1472 = vunpack.c.l.b16 %v1337
      %v1473 = vunpack.c.l.b16 %v1338
      %v1474 = vunpack.c.l.b16 %v1339
      %v1475 = vunpack.c.l.b16 %v1340
      %v1476 = vunpack.c.l.b16 %v1341
      %v1477 = vunpack.c.l.b16 %v1342
      %v1478 = vunpack.c.l.b16 %v1343
      %v1479 = vunpack.c.l.b16 %v1344
      %v1480 = vunpack.c.l.b16 %v1345
      %v1481 = vunpack.c.l.b16 %v1346
      %v1482 = vunpack.c.l.b16 %v1347
      %v1483 = vunpack.c.l.b16 %v1348
      %v1484 = vunpack.c.l.b16 %v1349
      %v1485 = vunpack.c.l.b16 %v1350
      %v1486 = vunpack.c.l.b16 %v1351
      %v1487 = vunpack.c.l.b16 %v1352
      %v1488 = vunpack.c.l.b16 %v1353
      %v1489 = vunpack.c.l.b16 %v1354
      %v1490 = vunpack.c.l.b16 %v1355
      %v1491 = vunpack.c.l.b16 %v1356
      %v1492 = vunpack.c.l.b16 %v1357
      %v1493 = vunpack.c.l.b16 %v1358
      %v1494 = vunpack.c.l.b16 %v1359
      %v1495 = vunpack.c.l.b16 %v1360
      %v1496 = vunpack.c.l.b16 %v1361
      %v1497 = vunpack.c.l.b16 %v1362
      %v1498 = vunpack.c.l.b16 %v1363
      %v1499 = vunpack.c.l.b16 %v1364
      %v1500 = vunpack.c.l.b16 %v1365
      %v1501 = vunpack.c.l.b16 %v1366
      %v1502 = vunpack.c.l.b16 %v1367
      %v1503 = vunpack.c.l.b16 %v1368
      %v1504 = vunpack.c.l.b16 %v1369
      %v1505 = vunpack.c.l.b16 %v1370
      %v1506 = vunpack.c.l.b16 %v1371
      %v1507 = vunpack.c.l.b16 %v1372
      %v1508 = vunpack.c.l.b16 %v1373
      %v1509 = vunpack.c.l.b16 %v1374
      %v1510 = vunpack.c.l.b16 %v1375
      %v1511 = vunpack.c.l.b16 %v1376
      %v1512 = vunpack.c.l.b16 %v1377
      %v1513 = vunpack.c.l.b16 %v1378
      %v1514 = vunpack.c.l.b16 %v1379
      %v1515 = vunpack.c.l.b16 %v1380
      %v1516 = vunpack.c.l.b16 %v1381
      %v1517 = vunpack.c.l.b16 %v1382
      %v1518 = vunpack.c.l.b16 %v1383
      %v1519 = vunpack.c.l.b16 %v1384
      %v1520 = vunpack.c.l.b16 %v1385
      %v1521 = vunpack.c.l.b16 %v1386
      %v1522 = vunpack.c.l.b16 %v1387
      %v1523 = vunpack.c.l.b16 %v1388
      %v1524 = vunpack.c.l.b16 %v1389
      %v1525 = vunpack.c.l.b16 %v1390
      %v1526 = vunpack.c.l.b16 %v1391
      %v1527 = vunpack.c.l.b16 %v1392
      %v1528 = vunpack.c.l.b16 %v1393
      %v1529 = vunpack.c.l.b16 %v1394
      %v1530 = vunpack.c.l.b16 %v1395
      %v1531 = vunpack.c.l.b16 %v1396
      %v1532 = vunpack.c.l.b16 %v1397
      %v1533 = vpack.c.b16 %v1470, %v1469
      %v1534 = vpack.c.b16 %v1472, %v1471
      %v1535 = vpack.c.b16 %v1474, %v1473
      %v1536 = vpack.c.b16 %v1476, %v1475
      %v1537 = vpack.c.b16 %v1478, %v1477
      %v1538 = vpack.c.b16 %v1480, %v1479
      %v1539 = vpack.c.b16 %v1482, %v1481
      %v1540 = vpack.c.b16 %v1484, %v1483
      %v1541 = vpack.c.b16 %v1486, %v1485
      %v1542 = vpack.c.b16 %v1488, %v1487
      %v1543 = vpack.c.b16 %v1490, %v1489
      %v1544 = vpack.c.b16 %v1492, %v1491
      %v1545 = vpack.c.b16 %v1494, %v1493
      %v1546 = vpack.c.b16 %v1496, %v1495
      %v1547 = vpack.c.b16 %v1498, %v1497
      %v1548 = vpack.c.b16 %v1500, %v1499
      %v1549 = vpack.c.b16 %v1502, %v1501
      %v1550 = vpack.c.b16 %v1504, %v1503
      %v1551 = vpack.c.b16 %v1506, %v1505
      %v1552 = vpack.c.b16 %v1508, %v1507
      %v1553 = vpack.c.b16 %v1510, %v1509
      %v1554 = vpack.c.b16 %v1512, %v1511
      %v1555 = vpack.c.b16 %v1514, %v1513
      %v1556 = vpack.c.b16 %v1516, %v1515
      %v1557 = vpack.c.b16 %v1518, %v1517
      %v1558 = vpack.c.b16 %v1520, %v1519
      %v1559 = vpack.c.b16 %v1522, %v1521
      %v1560 = vpack.c.b16 %v1524, %v1523
      %v1561 = vpack.c.b16 %v1526, %v1525
      %v1562 = vpack.c.b16 %v1528, %v1527
      %v1563 = vpack.c.b16 %v1530, %v1529
      %v1564 = vpack.c.b16 %v1532, %v1531
      %1597 = vmatprep.subr.bf16.mxu0 0
      %1598 = vmatpush1.bf16.msra.mxu0 %v1533
      %1599 = vmatprep.subr.bf16.mxu0 0
      %1600 = vmatpush1.bf16.msra.mxu0 %v1534
      %1601 = vmatprep.subr.bf16.mxu0 0
      %1602 = vmatpush1.bf16.msra.mxu0 %v1535
      %1603 = vmatprep.subr.bf16.mxu0 0
      %1604 = vmatpush1.bf16.msra.mxu0 %v1536
      %1605 = vmatprep.subr.bf16.mxu0 0
      %1606 = vmatpush1.bf16.msra.mxu0 %v1537
      %1607 = vmatprep.subr.bf16.mxu0 0
      %1608 = vmatpush1.bf16.msra.mxu0 %v1538
      %1609 = vmatprep.subr.bf16.mxu0 0
      %1610 = vmatpush1.bf16.msra.mxu0 %v1539
      %1611 = vmatprep.subr.bf16.mxu0 0
      %1612 = vmatpush1.bf16.msra.mxu0 %v1540
      %1613 = vmatprep.subr.bf16.mxu0 0
      %1614 = vmatpush1.bf16.msra.mxu0 %v1541
      %1615 = vmatprep.subr.bf16.mxu0 0
      %1616 = vmatpush1.bf16.msra.mxu0 %v1542
      %1617 = vmatprep.subr.bf16.mxu0 0
      %1618 = vmatpush1.bf16.msra.mxu0 %v1543
      %1619 = vmatprep.subr.bf16.mxu0 0
      %1620 = vmatpush1.bf16.msra.mxu0 %v1544
      %1621 = vmatprep.subr.bf16.mxu0 0
      %1622 = vmatpush1.bf16.msra.mxu0 %v1545
      %1623 = vmatprep.subr.bf16.mxu0 0
      %1624 = vmatpush1.bf16.msra.mxu0 %v1546
      %1625 = vmatprep.subr.bf16.mxu0 0
      %1626 = vmatpush1.bf16.msra.mxu0 %v1547
      %1627 = vmatprep.subr.bf16.mxu0 0
      %1628 = vmatpush1.bf16.msra.mxu0 %v1548
      %1629 = vmatprep.mubr.bf16.mxu0 %v1319
      %1630 = vmatmul.mubr.bf16.gmra.mrb[0].mxu0 %v1318
      %v1631 = vpop.f32.mrb[0].mxu0
      %v1632 = vadd.f32 %v1403, %v1631
      %v1633 = vpop.f32.mrb[0].mxu0
      %v1634 = vpop.f32.mrb[0].mxu0
      %v1635 = vadd.f32 %v1403, %v1634
      %v1636 = vpop.f32.mrb[0].mxu0
      %1637 = vmatprep.mubr.bf16.mxu0 %v1323
      %1638 = vmatmul.mubr.bf16.gmra.mrb[0].mxu0 %v1322
      %v1639 = vpop.f32.mrb[0].mxu0
      %v1640 = vadd.f32 %v1403, %v1639
      %v1641 = vpop.f32.mrb[0].mxu0
      %v1642 = vpop.f32.mrb[0].mxu0
      %v1643 = vadd.f32 %v1403, %v1642
      %v1644 = vpop.f32.mrb[0].mxu0
      %1645 = vmatprep.mubr.bf16.mxu0 %v1327
      %1646 = vmatmul.mubr.bf16.gmra.mrb[0].mxu0 %v1326
      %v1647 = vpop.f32.mrb[0].mxu0
      %v1648 = vadd.f32 %v1403, %v1647
      %v1649 = vpop.f32.mrb[0].mxu0
      %v1650 = vpop.f32.mrb[0].mxu0
      %v1651 = vadd.f32 %v1403, %v1650
      %v1652 = vpop.f32.mrb[0].mxu0
      %1653 = vmatprep.mubr.bf16.mxu0 %v1331
      %1654 = vmatmul.mubr.bf16.gmra.mrb[0].mxu0 %v1330
      %v1655 = vpop.f32.mrb[0].mxu0
      %v1656 = vadd.f32 %v1403, %v1655
      %v1657 = vpop.f32.mrb[0].mxu0
      %v1658 = vpop.f32.mrb[0].mxu0
      %v1659 = vadd.f32 %v1403, %v1658
      %v1660 = vpop.f32.mrb[0].mxu0
      %1661 = vdwg.mxu0
      %1662 = vmatprep.subr.bf16.mxu0 0
      %1663 = vmatpush1.bf16.msra.mxu0 %v1549
      %1664 = vmatprep.subr.bf16.mxu0 0
      %1665 = vmatpush1.bf16.msra.mxu0 %v1550
      %1666 = vmatprep.subr.bf16.mxu0 0
      %1667 = vmatpush1.bf16.msra.mxu0 %v1551
      %1668 = vmatprep.subr.bf16.mxu0 0
      %1669 = vmatpush1.bf16.msra.mxu0 %v1552
      %1670 = vmatprep.subr.bf16.mxu0 0
      %1671 = vmatpush1.bf16.msra.mxu0 %v1553
      %1672 = vmatprep.subr.bf16.mxu0 0
      %1673 = vmatpush1.bf16.msra.mxu0 %v1554
      %1674 = vmatprep.subr.bf16.mxu0 0
      %1675 = vmatpush1.bf16.msra.mxu0 %v1555
      %1676 = vmatprep.subr.bf16.mxu0 0
      %1677 = vmatpush1.bf16.msra.mxu0 %v1556
      %1678 = vmatprep.subr.bf16.mxu0 0
      %1679 = vmatpush1.bf16.msra.mxu0 %v1557
      %1680 = vmatprep.subr.bf16.mxu0 0
      %1681 = vmatpush1.bf16.msra.mxu0 %v1558
      %1682 = vmatprep.subr.bf16.mxu0 0
      %1683 = vmatpush1.bf16.msra.mxu0 %v1559
      %1684 = vmatprep.subr.bf16.mxu0 0
      %1685 = vmatpush1.bf16.msra.mxu0 %v1560
      %1686 = vmatprep.subr.bf16.mxu0 0
      %1687 = vmatpush1.bf16.msra.mxu0 %v1561
      %1688 = vmatprep.subr.bf16.mxu0 0
      %1689 = vmatpush1.bf16.msra.mxu0 %v1562
      %1690 = vmatprep.subr.bf16.mxu0 0
      %1691 = vmatpush1.bf16.msra.mxu0 %v1563
      %1692 = vmatprep.subr.bf16.mxu0 0
      %1693 = vmatpush1.bf16.msra.mxu0 %v1564
      %1694 = vmatprep.mubr.bf16.mxu0 %v1321
      %1695 = vmatmul.mubr.bf16.gmra.mrb[0].mxu0 %v1320
      %v1696 = vpop.f32.mrb[0].mxu0
      %v1697 = vadd.f32 %v1632, %v1696
      %v1698 = vpop.f32.mrb[0].mxu0
      %v1699 = vpop.f32.mrb[0].mxu0
      %v1700 = vadd.f32 %v1635, %v1699
      %v1701 = vpop.f32.mrb[0].mxu0
      %1702 = vmatprep.mubr.bf16.mxu0 %v1325
      %1703 = vmatmul.mubr.bf16.gmra.mrb[0].mxu0 %v1324
      %v1704 = vpop.f32.mrb[0].mxu0
      %v1705 = vadd.f32 %v1640, %v1704
      %v1706 = vpop.f32.mrb[0].mxu0
      %v1707 = vpop.f32.mrb[0].mxu0
      %v1708 = vadd.f32 %v1643, %v1707
      %v1709 = vpop.f32.mrb[0].mxu0
      %1710 = vmatprep.mubr.bf16.mxu0 %v1329
      %1711 = vmatmul.mubr.bf16.gmra.mrb[0].mxu0 %v1328
      %v1712 = vpop.f32.mrb[0].mxu0
      %v1713 = vadd.f32 %v1648, %v1712
      %v1714 = vpop.f32.mrb[0].mxu0
      %v1715 = vpop.f32.mrb[0].mxu0
      %v1716 = vadd.f32 %v1651, %v1715
      %v1717 = vpop.f32.mrb[0].mxu0
      %1718 = vmatprep.mubr.bf16.mxu0 %v1333
      %1719 = vmatmul.mubr.bf16.gmra.mrb[0].mxu0 %v1332
      %v1720 = vpop.f32.mrb[0].mxu0
      %v1721 = vadd.f32 %v1656, %v1720
      %v1722 = vpop.f32.mrb[0].mxu0
      %v1723 = vpop.f32.mrb[0].mxu0
      %v1724 = vadd.f32 %v1659, %v1723
      %v1725 = vpop.f32.mrb[0].mxu0
      %1726 = vdwg.mxu0
      %v1727 = vmax.f32 %v1697, %v1713
      %v1728 = vmax.f32 %v1700, %v1716
      %v1729 = vmax.f32 %v1705, %v1721
      %v1730 = vmax.f32 %v1708, %v1724
      %v1731 = vmax.f32 %v1727, %v1728
      %v1732 = vmax.f32 %v1729, %v1730
      %v1733 = vmax.f32 %v1731, %v1732
      %v1734 = vrot.slane %v1733, 4
      %v1735 = vmax.f32 %v1733, %v1734
      %v1736 = vrot.slane %v1735, 2
      %v1737 = vmax.f32 %v1735, %v1736
      %v1738 = vrot.slane %v1737, 1
      %v1739 = vmax.f32 %v1737, %v1738
      %1740 = vst [vmem:[%s385] sm:$0xff] %v1739
      %p1741 = scmp.lt.s32.totalorder %s24, 1
      %s1742 = scalar_select %p1741, %s24, 1
      %p1743 = scmp.lt.s32.totalorder %s25, 1
      %s1744 = scalar_select %p1743, %s25, 1
      %s1745 = smul.addr %s1742, 2
      %s1746 = sadd.s32 %s1744, %s1745
      %s1747 = smul.addr %s1746, 8
      %s1748 = scalar_lea.vmem %s9, %s1747
      // Predicated region
      $region57: #{unfolding_net_forward.4} parent=55 // pred_check
        %p1749 = pneg %p253
      $region58: #{unfolding_net_forward.4} parent=55 // pred_check_branch
        %1751 = sbr.rel (%p1749) target = $region60
      $region59: #{unfolding_net_forward.4} parent=55 // pred_region
        _
      $region60: #{unfolding_net_forward.4} parent=55 // pred_fallthru
        _
    $region56: #{unfolding_net_forward.4} parent=5 // pred_fallthru
      _
    %p1752 = scmp.le.s32.totalorder 2, %s15
    // Predicated region
    $region61: #{unfolding_net_forward.4} parent=5 // pred_check
      %p1753 = pneg %p1752
    $region62: #{unfolding_net_forward.4} parent=5 // pred_check_branch
      %1755 = sbr.rel (%p1753) target = $region64
    $region63: #{unfolding_net_forward.4} parent=5 // pred_region
      %s1756 = ssub.s32 %s15, 2
      // Predicated region
      $region65: #{unfolding_net_forward.4} parent=63 // pred_check
        %p1757 = pneg %p259
      $region66: #{unfolding_net_forward.4} parent=63 // pred_check_branch
        %1759 = sbr.rel (%p1757) target = $region68
      $region67: #{unfolding_net_forward.4} parent=63 // pred_region
        %p1760 = scmp.lt.s32.totalorder %s26, 1
        %s1761 = scalar_select %p1760, %s26, 1
        %p1762 = scmp.lt.s32.totalorder %s27, 1
        %s1763 = scalar_select %p1762, %s27, 1
        %s1764 = smul.addr %s1761, 2
        %s1765 = sadd.s32 %s1763, %s1764
        %s1766 = smul.addr %s1765, 8
        %s1767 = scalar_lea.vmem %s9, %s1766
      $region68: #{unfolding_net_forward.4} parent=63 // pred_fallthru
        _
    $region64: #{unfolding_net_forward.4} parent=5 // pred_fallthru
      _
  $region6: #{unfolding_net_forward.4} parent=0 // loop_footer
    %s19 = sadd.s32 1, %s15
  $region7: #{unfolding_net_forward.4} parent=0 // loop_footer_branch
    %14 = sbr.rel target = $region3
  $region8: #{unfolding_net_forward.4} parent=0 // loop_exit
    _

// kernel: unfolding_net_forward.5
$region0: #{unfolding_net_forward.5}
  #allocation0 [shape = 'u32[]', space=smem, size = 0x4, offset = 0x4, fixed_abs, tag = 'smem constant byte address 0x4 - core index']
  #allocation1 [shape = 'u32[144,128]{1,0:T(1,128)}', space=vmem, size = 0x12000, scoped, tag = 'internal scratch']
  %s0 = inlined_call_operand.vmem [shape: f32[2,128,8], index: 0, kind: input, shape index: {}]
  %s1 = inlined_call_operand.vmem [shape: f32[2,1,512], index: 1, kind: input, shape index: {}]
  %s2 = inlined_call_operand.vmem [shape: f32[8,512], index: 2, kind: input, shape index: {}]
  %s3 = inlined_call_operand.vmem [shape: bf16[512,512], index: 3, kind: input, shape index: {}]
  %s4 = inlined_call_operand.vmem [shape: f32[1,512], index: 4, kind: input, shape index: {}]
  %s5 = inlined_call_operand.vmem [shape: f32[512,8], index: 5, kind: input, shape index: {}]
  %s6 = inlined_call_operand.vmem [shape: f32[1,8], index: 6, kind: input, shape index: {}]
  %s7 = inlined_call_operand.vmem [shape: f32[2,1,512], index: 7, kind: input, shape index: {}]
  %s8 = inlined_call_operand.vmem [shape: f32[8,512], index: 8, kind: input, shape index: {}]
  %s9 = inlined_call_operand.vmem [shape: bf16[512,512], index: 9, kind: input, shape index: {}]
  %s10 = inlined_call_operand.vmem [shape: f32[1,512], index: 10, kind: input, shape index: {}]
  %s11 = inlined_call_operand.vmem [shape: f32[512,8], index: 11, kind: input, shape index: {}]
  %s12 = inlined_call_operand.vmem [shape: f32[1,8], index: 12, kind: input, shape index: {}]
  %s13 = inlined_call_operand.vmem [shape: f32[2,128,8], index: 13, kind: output, shape index: {0}]
  %s14 = inlined_call_operand.vmem [shape: f32[2,128,8], index: 14, kind: output, shape index: {1}]
  %15 = xla_tuple %s13, %s14
  %s16 = sld [smem:[#allocation0]]
  $region93: #{unfolding_net_forward.5} parent=0
    _
  %s18 = ssub.s32 1, %s16
  %s19 = scalar_select 0, %s18, %s16
  loop: start=0, step=1, limit=6
  $region2: #{unfolding_net_forward.5} parent=0 // loop_pre_header
    _
  $region3: #{unfolding_net_forward.5} parent=0 // loop_header
    %s21 = sphi 0, %s25
    %p22 = scmp.ge.s32.totalorder %s21, 6
    %s28 = sphi 0, %s40
    %s29 = sphi 0, %s36
    %s30 = sphi 0, %s28
    %s31 = sphi 0, %s29
    %s32 = sphi 0, %s30
    %s33 = sphi 0, %s31
    %s45 = sphi 0, %s47
    %s48 = sphi 0, %s45
    %s49 = sphi 0, %s48
    %s65 = sphi 0, %s49
    %s71 = sphi 0, %s73
    %s74 = sphi 0, %s71
    %s75 = sphi 0, %s74
    %s91 = sphi 0, %s75
    %s95 = sphi 0, %s95
    %s97 = sphi 0, %s95
    %s98 = sphi 0, %s97
    %s112 = sphi 0, %s98
    %s116 = sphi 0, %s116
    %s118 = sphi 0, %s116
    %s119 = sphi 0, %s118
    %s133 = sphi 0, %s119
    %s137 = sphi 0, %s137
    %s139 = sphi 0, %s137
    %s140 = sphi 0, %s139
    %s154 = sphi 0, %s140
    %s158 = sphi 0, %s158
    %s160 = sphi 0, %s158
    %s161 = sphi 0, %s160
    %s175 = sphi 0, %s161
    %s179 = sphi 0, %s179
    %s181 = sphi 0, %s179
    %s182 = sphi 0, %s181
    %s196 = sphi 0, %s182
    %s202 = sphi 0, %s204
    %s205 = sphi 0, %s202
    %s206 = sphi 0, %s205
    %s222 = sphi 0, %s206
    %s226 = sphi 0, %s226
    %s228 = sphi 0, %s226
    %s229 = sphi 0, %s228
    %s243 = sphi 0, %s229
    %s247 = sphi 0, %s247
    %s249 = sphi 0, %s247
    %s250 = sphi 0, %s249
    %s264 = sphi 0, %s250
    %s268 = sphi 0, %s268
    %s270 = sphi 0, %s268
    %s271 = sphi 0, %s270
    %s285 = sphi 0, %s271
    %s289 = sphi 0, %s289
    %s291 = sphi 0, %s289
    %s292 = sphi 0, %s291
    %s306 = sphi 0, %s292
    %s310 = sphi 0, %s310
    %s312 = sphi 0, %s310
    %s313 = sphi 0, %s312
    %s327 = sphi 0, %s313
    %s335 = sphi 0, %s337
    %s338 = sphi 0, %s335
    %s339 = sphi 0, %s338
    %s355 = sphi 0, %s339
    %s363 = sphi 0, %s365
    %s366 = sphi 0, %s363
    %s367 = sphi 0, %s366
    %s383 = sphi 0, %s367
  $region4: #{unfolding_net_forward.5} parent=0 // loop_header_branch
    %24 = sbr.rel (%p22) target = $region8
  $region5: #{unfolding_net_forward.5} parent=0 // loop_body
    %s26 = ssub.s32 %s21, 1
    %s27 = ssub.s32 %s21, 2
    %s34 = sadd.s32 1, %s29
    %p35 = scmp.ge.s32.totalorder %s34, 2
    %s36 = scalar_select %p35, 0, %s34
    %s37 = sadd.s32 1, %s28
    %s38 = scalar_select %p35, %s37, %s28
    %p39 = scmp.ge.s32.totalorder %s38, 2
    %s40 = scalar_select %p39, 0, %s38
    %s41 = ssub.s32 %s28, %s40
    %s42 = ssub.s32 %s29, %s36
    %s43 = sor.u32 %s41, %s42
    %p44 = scmp.eq.s32.totalorder %s43, 0
    %s46 = sadd.s32 %s45, 1
    %s47 = scalar_select %p44, %s45, %s46
    %p50 = pneg %p44
    %p51 = scmp.eq.s32.totalorder %s21, 3
    %p52 = por %p50, %p51
    %p53 = scmp.ne.s32.totalorder %s45, %s48
    %p54 = scmp.eq.s32.totalorder %s21, 0
    %p55 = por %p53, %p54
    %p56 = scmp.ne.s32.totalorder %s45, %s48
    %p57 = scmp.eq.s32.totalorder %s26, 3
    %p58 = por %p56, %p57
    %p59 = scmp.ne.s32.totalorder %s48, %s49
    %p60 = scmp.eq.s32.totalorder %s26, 0
    %p61 = por %p59, %p60
    %p62 = scmp.ne.s32.totalorder %s48, %s49
    %p63 = scmp.eq.s32.totalorder %s27, 3
    %p64 = por %p62, %p63
    %p66 = scmp.ne.s32.totalorder %s49, %s65
    %p67 = scmp.eq.s32.totalorder %s27, 0
    %p68 = por %p66, %p67
    %s69 = ssub.s32 %s28, %s40
    %p70 = scmp.eq.s32.totalorder %s69, 0
    %s72 = sadd.s32 %s71, 1
    %s73 = scalar_select %p70, %s71, %s72
    %p76 = pneg %p70
    %p77 = scmp.eq.s32.totalorder %s21, 3
    %p78 = por %p76, %p77
    %p79 = scmp.ne.s32.totalorder %s71, %s74
    %p80 = scmp.eq.s32.totalorder %s21, 0
    %p81 = por %p79, %p80
    %p82 = scmp.ne.s32.totalorder %s71, %s74
    %p83 = scmp.eq.s32.totalorder %s26, 3
    %p84 = por %p82, %p83
    %p85 = scmp.ne.s32.totalorder %s74, %s75
    %p86 = scmp.eq.s32.totalorder %s26, 0
    %p87 = por %p85, %p86
    %p88 = scmp.ne.s32.totalorder %s74, %s75
    %p89 = scmp.eq.s32.totalorder %s27, 3
    %p90 = por %p88, %p89
    %p92 = scmp.ne.s32.totalorder %s75, %s91
    %p93 = scmp.eq.s32.totalorder %s27, 0
    %p94 = por %p92, %p93
    %s96 = sadd.s32 %s95, 1
    %p99 = scmp.eq.s32.totalorder %s21, 3
    %p100 = scmp.ne.s32.totalorder %s95, %s97
    %p101 = scmp.eq.s32.totalorder %s21, 0
    %p102 = por %p100, %p101
    %p103 = scmp.ne.s32.totalorder %s95, %s97
    %p104 = scmp.eq.s32.totalorder %s26, 3
    %p105 = por %p103, %p104
    %p106 = scmp.ne.s32.totalorder %s97, %s98
    %p107 = scmp.eq.s32.totalorder %s26, 0
    %p108 = por %p106, %p107
    %p109 = scmp.ne.s32.totalorder %s97, %s98
    %p110 = scmp.eq.s32.totalorder %s27, 3
    %p111 = por %p109, %p110
    %p113 = scmp.ne.s32.totalorder %s98, %s112
    %p114 = scmp.eq.s32.totalorder %s27, 0
    %p115 = por %p113, %p114
    %s117 = sadd.s32 %s116, 1
    %p120 = scmp.eq.s32.totalorder %s21, 3
    %p121 = scmp.ne.s32.totalorder %s116, %s118
    %p122 = scmp.eq.s32.totalorder %s21, 0
    %p123 = por %p121, %p122
    %p124 = scmp.ne.s32.totalorder %s116, %s118
    %p125 = scmp.eq.s32.totalorder %s26, 3
    %p126 = por %p124, %p125
    %p127 = scmp.ne.s32.totalorder %s118, %s119
    %p128 = scmp.eq.s32.totalorder %s26, 0
    %p129 = por %p127, %p128
    %p130 = scmp.ne.s32.totalorder %s118, %s119
    %p131 = scmp.eq.s32.totalorder %s27, 3
    %p132 = por %p130, %p131
    %p134 = scmp.ne.s32.totalorder %s119, %s133
    %p135 = scmp.eq.s32.totalorder %s27, 0
    %p136 = por %p134, %p135
    %s138 = sadd.s32 %s137, 1
    %p141 = scmp.eq.s32.totalorder %s21, 3
    %p142 = scmp.ne.s32.totalorder %s137, %s139
    %p143 = scmp.eq.s32.totalorder %s21, 0
    %p144 = por %p142, %p143
    %p145 = scmp.ne.s32.totalorder %s137, %s139
    %p146 = scmp.eq.s32.totalorder %s26, 3
    %p147 = por %p145, %p146
    %p148 = scmp.ne.s32.totalorder %s139, %s140
    %p149 = scmp.eq.s32.totalorder %s26, 0
    %p150 = por %p148, %p149
    %p151 = scmp.ne.s32.totalorder %s139, %s140
    %p152 = scmp.eq.s32.totalorder %s27, 3
    %p153 = por %p151, %p152
    %p155 = scmp.ne.s32.totalorder %s140, %s154
    %p156 = scmp.eq.s32.totalorder %s27, 0
    %p157 = por %p155, %p156
    %s159 = sadd.s32 %s158, 1
    %p162 = scmp.eq.s32.totalorder %s21, 3
    %p163 = scmp.ne.s32.totalorder %s158, %s160
    %p164 = scmp.eq.s32.totalorder %s21, 0
    %p165 = por %p163, %p164
    %p166 = scmp.ne.s32.totalorder %s158, %s160
    %p167 = scmp.eq.s32.totalorder %s26, 3
    %p168 = por %p166, %p167
    %p169 = scmp.ne.s32.totalorder %s160, %s161
    %p170 = scmp.eq.s32.totalorder %s26, 0
    %p171 = por %p169, %p170
    %p172 = scmp.ne.s32.totalorder %s160, %s161
    %p173 = scmp.eq.s32.totalorder %s27, 3
    %p174 = por %p172, %p173
    %p176 = scmp.ne.s32.totalorder %s161, %s175
    %p177 = scmp.eq.s32.totalorder %s27, 0
    %p178 = por %p176, %p177
    %s180 = sadd.s32 %s179, 1
    %p183 = scmp.eq.s32.totalorder %s21, 3
    %p184 = scmp.ne.s32.totalorder %s179, %s181
    %p185 = scmp.eq.s32.totalorder %s21, 0
    %p186 = por %p184, %p185
    %p187 = scmp.ne.s32.totalorder %s179, %s181
    %p188 = scmp.eq.s32.totalorder %s26, 3
    %p189 = por %p187, %p188
    %p190 = scmp.ne.s32.totalorder %s181, %s182
    %p191 = scmp.eq.s32.totalorder %s26, 0
    %p192 = por %p190, %p191
    %p193 = scmp.ne.s32.totalorder %s181, %s182
    %p194 = scmp.eq.s32.totalorder %s27, 3
    %p195 = por %p193, %p194
    %p197 = scmp.ne.s32.totalorder %s182, %s196
    %p198 = scmp.eq.s32.totalorder %s27, 0
    %p199 = por %p197, %p198
    %s200 = ssub.s32 %s28, %s40
    %p201 = scmp.eq.s32.totalorder %s200, 0
    %s203 = sadd.s32 %s202, 1
    %s204 = scalar_select %p201, %s202, %s203
    %p207 = pneg %p201
    %p208 = scmp.eq.s32.totalorder %s21, 3
    %p209 = por %p207, %p208
    %p210 = scmp.ne.s32.totalorder %s202, %s205
    %p211 = scmp.eq.s32.totalorder %s21, 0
    %p212 = por %p210, %p211
    %p213 = scmp.ne.s32.totalorder %s202, %s205
    %p214 = scmp.eq.s32.totalorder %s26, 3
    %p215 = por %p213, %p214
    %p216 = scmp.ne.s32.totalorder %s205, %s206
    %p217 = scmp.eq.s32.totalorder %s26, 0
    %p218 = por %p216, %p217
    %p219 = scmp.ne.s32.totalorder %s205, %s206
    %p220 = scmp.eq.s32.totalorder %s27, 3
    %p221 = por %p219, %p220
    %p223 = scmp.ne.s32.totalorder %s206, %s222
    %p224 = scmp.eq.s32.totalorder %s27, 0
    %p225 = por %p223, %p224
    %s227 = sadd.s32 %s226, 1
    %p230 = scmp.eq.s32.totalorder %s21, 3
    %p231 = scmp.ne.s32.totalorder %s226, %s228
    %p232 = scmp.eq.s32.totalorder %s21, 0
    %p233 = por %p231, %p232
    %p234 = scmp.ne.s32.totalorder %s226, %s228
    %p235 = scmp.eq.s32.totalorder %s26, 3
    %p236 = por %p234, %p235
    %p237 = scmp.ne.s32.totalorder %s228, %s229
    %p238 = scmp.eq.s32.totalorder %s26, 0
    %p239 = por %p237, %p238
    %p240 = scmp.ne.s32.totalorder %s228, %s229
    %p241 = scmp.eq.s32.totalorder %s27, 3
    %p242 = por %p240, %p241
    %p244 = scmp.ne.s32.totalorder %s229, %s243
    %p245 = scmp.eq.s32.totalorder %s27, 0
    %p246 = por %p244, %p245
    %s248 = sadd.s32 %s247, 1
    %p251 = scmp.eq.s32.totalorder %s21, 3
    %p252 = scmp.ne.s32.totalorder %s247, %s249
    %p253 = scmp.eq.s32.totalorder %s21, 0
    %p254 = por %p252, %p253
    %p255 = scmp.ne.s32.totalorder %s247, %s249
    %p256 = scmp.eq.s32.totalorder %s26, 3
    %p257 = por %p255, %p256
    %p258 = scmp.ne.s32.totalorder %s249, %s250
    %p259 = scmp.eq.s32.totalorder %s26, 0
    %p260 = por %p258, %p259
    %p261 = scmp.ne.s32.totalorder %s249, %s250
    %p262 = scmp.eq.s32.totalorder %s27, 3
    %p263 = por %p261, %p262
    %p265 = scmp.ne.s32.totalorder %s250, %s264
    %p266 = scmp.eq.s32.totalorder %s27, 0
    %p267 = por %p265, %p266
    %s269 = sadd.s32 %s268, 1
    %p272 = scmp.eq.s32.totalorder %s21, 3
    %p273 = scmp.ne.s32.totalorder %s268, %s270
    %p274 = scmp.eq.s32.totalorder %s21, 0
    %p275 = por %p273, %p274
    %p276 = scmp.ne.s32.totalorder %s268, %s270
    %p277 = scmp.eq.s32.totalorder %s26, 3
    %p278 = por %p276, %p277
    %p279 = scmp.ne.s32.totalorder %s270, %s271
    %p280 = scmp.eq.s32.totalorder %s26, 0
    %p281 = por %p279, %p280
    %p282 = scmp.ne.s32.totalorder %s270, %s271
    %p283 = scmp.eq.s32.totalorder %s27, 3
    %p284 = por %p282, %p283
    %p286 = scmp.ne.s32.totalorder %s271, %s285
    %p287 = scmp.eq.s32.totalorder %s27, 0
    %p288 = por %p286, %p287
    %s290 = sadd.s32 %s289, 1
    %p293 = scmp.eq.s32.totalorder %s21, 3
    %p294 = scmp.ne.s32.totalorder %s289, %s291
    %p295 = scmp.eq.s32.totalorder %s21, 0
    %p296 = por %p294, %p295
    %p297 = scmp.ne.s32.totalorder %s289, %s291
    %p298 = scmp.eq.s32.totalorder %s26, 3
    %p299 = por %p297, %p298
    %p300 = scmp.ne.s32.totalorder %s291, %s292
    %p301 = scmp.eq.s32.totalorder %s26, 0
    %p302 = por %p300, %p301
    %p303 = scmp.ne.s32.totalorder %s291, %s292
    %p304 = scmp.eq.s32.totalorder %s27, 3
    %p305 = por %p303, %p304
    %p307 = scmp.ne.s32.totalorder %s292, %s306
    %p308 = scmp.eq.s32.totalorder %s27, 0
    %p309 = por %p307, %p308
    %s311 = sadd.s32 %s310, 1
    %p314 = scmp.eq.s32.totalorder %s21, 3
    %p315 = scmp.ne.s32.totalorder %s310, %s312
    %p316 = scmp.eq.s32.totalorder %s21, 0
    %p317 = por %p315, %p316
    %p318 = scmp.ne.s32.totalorder %s310, %s312
    %p319 = scmp.eq.s32.totalorder %s26, 3
    %p320 = por %p318, %p319
    %p321 = scmp.ne.s32.totalorder %s312, %s313
    %p322 = scmp.eq.s32.totalorder %s26, 0
    %p323 = por %p321, %p322
    %p324 = scmp.ne.s32.totalorder %s312, %s313
    %p325 = scmp.eq.s32.totalorder %s27, 3
    %p326 = por %p324, %p325
    %p328 = scmp.ne.s32.totalorder %s313, %s327
    %p329 = scmp.eq.s32.totalorder %s27, 0
    %p330 = por %p328, %p329
    %s331 = ssub.s32 %s28, %s40
    %s332 = ssub.s32 %s29, %s36
    %s333 = sor.u32 %s331, %s332
    %p334 = scmp.eq.s32.totalorder %s333, 0
    %s336 = sadd.s32 %s335, 1
    %s337 = scalar_select %p334, %s335, %s336
    %p340 = pneg %p334
    %p341 = scmp.eq.s32.totalorder %s21, 3
    %p342 = por %p340, %p341
    %p343 = scmp.ne.s32.totalorder %s335, %s338
    %p344 = scmp.eq.s32.totalorder %s21, 0
    %p345 = por %p343, %p344
    %p346 = scmp.ne.s32.totalorder %s335, %s338
    %p347 = scmp.eq.s32.totalorder %s26, 3
    %p348 = por %p346, %p347
    %p349 = scmp.ne.s32.totalorder %s338, %s339
    %p350 = scmp.eq.s32.totalorder %s26, 0
    %p351 = por %p349, %p350
    %p352 = scmp.ne.s32.totalorder %s338, %s339
    %p353 = scmp.eq.s32.totalorder %s27, 3
    %p354 = por %p352, %p353
    %p356 = scmp.ne.s32.totalorder %s339, %s355
    %p357 = scmp.eq.s32.totalorder %s27, 0
    %p358 = por %p356, %p357
    %s359 = ssub.s32 %s28, %s40
    %s360 = ssub.s32 %s29, %s36
    %s361 = sor.u32 %s359, %s360
    %p362 = scmp.eq.s32.totalorder %s361, 0
    %s364 = sadd.s32 %s363, 1
    %s365 = scalar_select %p362, %s363, %s364
    %p368 = pneg %p362
    %p369 = scmp.eq.s32.totalorder %s21, 3
    %p370 = por %p368, %p369
    %p371 = scmp.ne.s32.totalorder %s363, %s366
    %p372 = scmp.eq.s32.totalorder %s21, 0
    %p373 = por %p371, %p372
    %p374 = scmp.ne.s32.totalorder %s363, %s366
    %p375 = scmp.eq.s32.totalorder %s26, 3
    %p376 = por %p374, %p375
    %p377 = scmp.ne.s32.totalorder %s366, %s367
    %p378 = scmp.eq.s32.totalorder %s26, 0
    %p379 = por %p377, %p378
    %p380 = scmp.ne.s32.totalorder %s366, %s367
    %p381 = scmp.eq.s32.totalorder %s27, 3
    %p382 = por %p380, %p381
    %p384 = scmp.ne.s32.totalorder %s367, %s383
    %p385 = scmp.eq.s32.totalorder %s27, 0
    %p386 = por %p384, %p385
    %p387 = scmp.le.s32.totalorder 1, %s21
    %p388 = scmp.lt.s32.totalorder %s21, 5
    %p389 = pnand %p387, %p388
    %p390 = pneg %p389
    // Predicated region
    $region9: #{unfolding_net_forward.5} parent=5 // pred_check
      _
    $region10: #{unfolding_net_forward.5} parent=5 // pred_check_branch
      %392 = sbr.rel (%p389) target = $region12
    $region11: #{unfolding_net_forward.5} parent=5 // pred_region
      %s393 = ssub.s32 %s21, 1
      // Predicated region
      $region13: #{unfolding_net_forward.5} parent=11 // pred_check
        %p394 = pneg %p108
      $region14: #{unfolding_net_forward.5} parent=11 // pred_check_branch
        %396 = sbr.rel (%p394) target = $region16
      $region15: #{unfolding_net_forward.5} parent=11 // pred_region
        _
      $region16: #{unfolding_net_forward.5} parent=11 // pred_fallthru
        _
      // Predicated region
      $region17: #{unfolding_net_forward.5} parent=11 // pred_check
        %p397 = pneg %p129
      $region18: #{unfolding_net_forward.5} parent=11 // pred_check_branch
        %399 = sbr.rel (%p397) target = $region20
      $region19: #{unfolding_net_forward.5} parent=11 // pred_region
        _
      $region20: #{unfolding_net_forward.5} parent=11 // pred_fallthru
        _
      // Predicated region
      $region21: #{unfolding_net_forward.5} parent=11 // pred_check
        %p400 = pneg %p150
      $region22: #{unfolding_net_forward.5} parent=11 // pred_check_branch
        %402 = sbr.rel (%p400) target = $region24
      $region23: #{unfolding_net_forward.5} parent=11 // pred_region
        _
      $region24: #{unfolding_net_forward.5} parent=11 // pred_fallthru
        _
      // Predicated region
      $region25: #{unfolding_net_forward.5} parent=11 // pred_check
        %p403 = pneg %p171
      $region26: #{unfolding_net_forward.5} parent=11 // pred_check_branch
        %405 = sbr.rel (%p403) target = $region28
      $region27: #{unfolding_net_forward.5} parent=11 // pred_region
        _
      $region28: #{unfolding_net_forward.5} parent=11 // pred_fallthru
        _
      // Predicated region
      $region29: #{unfolding_net_forward.5} parent=11 // pred_check
        %p406 = pneg %p192
      $region30: #{unfolding_net_forward.5} parent=11 // pred_check_branch
        %408 = sbr.rel (%p406) target = $region32
      $region31: #{unfolding_net_forward.5} parent=11 // pred_region
        _
      $region32: #{unfolding_net_forward.5} parent=11 // pred_fallthru
        _
      // Predicated region
      $region33: #{unfolding_net_forward.5} parent=11 // pred_check
        %p409 = pneg %p239
      $region34: #{unfolding_net_forward.5} parent=11 // pred_check_branch
        %411 = sbr.rel (%p409) target = $region36
      $region35: #{unfolding_net_forward.5} parent=11 // pred_region
        _
      $region36: #{unfolding_net_forward.5} parent=11 // pred_fallthru
        _
      // Predicated region
      $region37: #{unfolding_net_forward.5} parent=11 // pred_check
        %p412 = pneg %p260
      $region38: #{unfolding_net_forward.5} parent=11 // pred_check_branch
        %414 = sbr.rel (%p412) target = $region40
      $region39: #{unfolding_net_forward.5} parent=11 // pred_region
        _
      $region40: #{unfolding_net_forward.5} parent=11 // pred_fallthru
        _
      // Predicated region
      $region41: #{unfolding_net_forward.5} parent=11 // pred_check
        %p415 = pneg %p281
      $region42: #{unfolding_net_forward.5} parent=11 // pred_check_branch
        %417 = sbr.rel (%p415) target = $region44
      $region43: #{unfolding_net_forward.5} parent=11 // pred_region
        _
      $region44: #{unfolding_net_forward.5} parent=11 // pred_fallthru
        _
      // Predicated region
      $region45: #{unfolding_net_forward.5} parent=11 // pred_check
        %p418 = pneg %p302
      $region46: #{unfolding_net_forward.5} parent=11 // pred_check_branch
        %420 = sbr.rel (%p418) target = $region48
      $region47: #{unfolding_net_forward.5} parent=11 // pred_region
        _
      $region48: #{unfolding_net_forward.5} parent=11 // pred_fallthru
        _
      // Predicated region
      $region49: #{unfolding_net_forward.5} parent=11 // pred_check
        %p421 = pneg %p323
      $region50: #{unfolding_net_forward.5} parent=11 // pred_check_branch
        %423 = sbr.rel (%p421) target = $region52
      $region51: #{unfolding_net_forward.5} parent=11 // pred_region
        _
      $region52: #{unfolding_net_forward.5} parent=11 // pred_fallthru
        _
    $region12: #{unfolding_net_forward.5} parent=5 // pred_fallthru
      _
    %p424 = scmp.lt.s32.totalorder %s21, 4
    // Predicated region
    $region53: #{unfolding_net_forward.5} parent=5 // pred_check
      %p425 = pneg %p424
    $region54: #{unfolding_net_forward.5} parent=5 // pred_check_branch
      %427 = sbr.rel (%p425) target = $region56
    $region55: #{unfolding_net_forward.5} parent=5 // pred_region
      // Predicated region
      $region57: #{unfolding_net_forward.5} parent=55 // pred_check
        %p428 = pneg %p55
      $region58: #{unfolding_net_forward.5} parent=55 // pred_check_branch
        %430 = sbr.rel (%p428) target = $region60
      $region59: #{unfolding_net_forward.5} parent=55 // pred_region
        %s431 = smul.u32 8, %s29
        %p432 = scmp.lt.s32.totalorder %s28, 1
        %s433 = scalar_select %p432, %s28, 1
        %p434 = scmp.lt.s32.totalorder %s431, 15
        %s435 = scalar_select %p434, %s431, 15
        %s436 = smul.addr %s433, 16
        %s437 = sadd.s32 %s435, %s436
        %s438 = smul.addr %s437, 8
        %s439 = scalar_lea.vmem %s0, %s438
        %s440 = smul.u32 8, %s29
      $region60: #{unfolding_net_forward.5} parent=55 // pred_fallthru
        _
      // Predicated region
      $region61: #{unfolding_net_forward.5} parent=55 // pred_check
        %p441 = pneg %p81
      $region62: #{unfolding_net_forward.5} parent=55 // pred_check_branch
        %443 = sbr.rel (%p441) target = $region64
      $region63: #{unfolding_net_forward.5} parent=55 // pred_region
        %p444 = scmp.lt.s32.totalorder %s28, 1
        %s445 = scalar_select %p444, %s28, 1
        %s446 = smul.addr %s445, 4
        %s447 = scalar_lea.vmem %s1, %s446
      $region64: #{unfolding_net_forward.5} parent=55 // pred_fallthru
        _
      // Predicated region
      $region65: #{unfolding_net_forward.5} parent=55 // pred_check
        %p448 = pneg %p212
      $region66: #{unfolding_net_forward.5} parent=55 // pred_check_branch
        %450 = sbr.rel (%p448) target = $region68
      $region67: #{unfolding_net_forward.5} parent=55 // pred_region
        %p451 = scmp.lt.s32.totalorder %s28, 1
        %s452 = scalar_select %p451, %s28, 1
        %s453 = smul.addr %s452, 4
        %s454 = scalar_lea.vmem %s7, %s453
      $region68: #{unfolding_net_forward.5} parent=55 // pred_fallthru
        _
    $region56: #{unfolding_net_forward.5} parent=5 // pred_fallthru
      _
    %p455 = scmp.le.s32.totalorder 1, %s21
    %p456 = scmp.lt.s32.totalorder %s21, 5
    %p457 = pnand %p455, %p456
    %p458 = pneg %p457
    // Predicated region
    $region69: #{unfolding_net_forward.5} parent=5 // pred_check
      _
    $region70: #{unfolding_net_forward.5} parent=5 // pred_check_branch
      %460 = sbr.rel (%p457) target = $region72
    $region71: #{unfolding_net_forward.5} parent=5 // pred_region
      %s461 = ssub.s32 %s21, 1
      %s462 = smul.u32 8, %s31
      %p463 = scmp.lt.s32.totalorder %s30, 1
      %s464 = scalar_select %p463, %s30, 1
      %p465 = scmp.lt.s32.totalorder %s462, 15
      %s466 = scalar_select %p465, %s462, 15
      %s467 = smul.addr %s464, 16
      %s468 = sadd.s32 %s466, %s467
      %s469 = smul.addr %s468, 8
      %s470 = scalar_lea.vmem %s0, %s469
      %p471 = pneg %p61
      %p472 = pneg %p58
      %p473 = scmp.lt.s32.totalorder %s30, 1
      %s474 = scalar_select %p473, %s30, 1
      %s475 = smul.addr %s474, 4
      %s476 = scalar_lea.vmem %s1, %s475
      %p477 = pneg %p87
      %p478 = pneg %p84
      %p479 = pneg %p108
      %p480 = pneg %p105
      %p481 = pneg %p129
      %p482 = pneg %p126
      %p483 = pneg %p150
      %p484 = pneg %p147
      %p485 = pneg %p171
      %p486 = pneg %p168
      %p487 = pneg %p192
      %p488 = pneg %p189
      %p489 = scmp.lt.s32.totalorder %s30, 1
      %s490 = scalar_select %p489, %s30, 1
      %s491 = smul.addr %s490, 4
      %s492 = scalar_lea.vmem %s7, %s491
      %p493 = pneg %p218
      %p494 = pneg %p215
      %p495 = pneg %p239
      %p496 = pneg %p236
      %p497 = pneg %p260
      %p498 = pneg %p257
      %p499 = pneg %p281
      %p500 = pneg %p278
      %p501 = pneg %p302
      %p502 = pneg %p299
      %p503 = pneg %p323
      %p504 = pneg %p320
      %p505 = pneg %p351
      %p506 = pneg %p348
      %s507 = smul.u32 8, %s31
      %p508 = scmp.lt.s32.totalorder %s30, 1
      %s509 = scalar_select %p508, %s30, 1
      %p510 = scmp.lt.s32.totalorder %s507, 15
      %s511 = scalar_select %p510, %s507, 15
      %s512 = smul.addr %s509, 16
      %s513 = sadd.s32 %s511, %s512
      %s514 = smul.addr %s513, 8
      %s515 = scalar_lea.vmem %s13, %s514
      %p516 = pneg %p379
      %p517 = pneg %p376
      %s518 = smul.u32 8, %s31
      %p519 = scmp.lt.s32.totalorder %s30, 1
      %s520 = scalar_select %p519, %s30, 1
      %p521 = scmp.lt.s32.totalorder %s518, 15
      %s522 = scalar_select %p521, %s518, 15
      %s523 = smul.addr %s520, 16
      %s524 = sadd.s32 %s522, %s523
      %s525 = smul.addr %s524, 8
      %s526 = scalar_lea.vmem %s14, %s525
      %s527 = smul.u32 8, %s31
      %p528 = scmp.lt.s32.totalorder %s30, 1
      %s529 = scalar_select %p528, %s30, 1
      %p530 = scmp.lt.s32.totalorder %s527, 15
      %s531 = scalar_select %p530, %s527, 15
      %s532 = smul.addr %s529, 16
      %s533 = sadd.s32 %s531, %s532
      %s534 = smul.addr %s533, 8
      %s535 = scalar_lea.vmem %s0, %s534
      %s536 = smul.u32 8, %s31
      %p537 = scmp.lt.s32.totalorder %s30, 1
      %s538 = scalar_select %p537, %s30, 1
      %s539 = smul.addr %s538, 4
      %s540 = scalar_lea.vmem %s1, %s539
      %p541 = scmp.lt.s32.totalorder %s30, 1
      %s542 = scalar_select %p541, %s30, 1
      %s543 = smul.addr %s542, 4
      %s544 = scalar_lea.vmem %s7, %s543
      %s545 = smul.u32 8, %s31
      %p546 = scmp.lt.s32.totalorder %s30, 1
      %s547 = scalar_select %p546, %s30, 1
      %p548 = scmp.lt.s32.totalorder %s545, 15
      %s549 = scalar_select %p548, %s545, 15
      %s550 = smul.addr %s547, 16
      %s551 = sadd.s32 %s549, %s550
      %s552 = smul.addr %s551, 8
      %s553 = scalar_lea.vmem %s13, %s552
      %s554 = smul.u32 8, %s31
      %s555 = smul.u32 8, %s31
      %p556 = scmp.lt.s32.totalorder %s30, 1
      %s557 = scalar_select %p556, %s30, 1
      %p558 = scmp.lt.s32.totalorder %s555, 15
      %s559 = scalar_select %p558, %s555, 15
      %s560 = smul.addr %s557, 16
      %s561 = sadd.s32 %s559, %s560
      %s562 = smul.addr %s561, 8
      %s563 = scalar_lea.vmem %s14, %s562
      %s564 = smul.u32 8, %s31
      %v565 = vld [vmem:[%s535] sm:$0xff]
      %v566 = vld [vmem:[%s535 + $0x8] sm:$0xff]
      %v567 = vld [vmem:[%s535 + $0x10] sm:$0xff]
      %v568 = vld [vmem:[%s535 + $0x18] sm:$0xff]
      %v569 = vld [vmem:[%s535 + $0x20] sm:$0xff]
      %v570 = vld [vmem:[%s535 + $0x28] sm:$0xff]
      %v571 = vld [vmem:[%s535 + $0x30] sm:$0xff]
      %v572 = vld [vmem:[%s535 + $0x38] sm:$0xff]
      %v573 = vld [vmem:[%s2] sm:$0xff]
      %v574 = vld [vmem:[%s2 + $0x8] sm:$0xff]
      %v575 = vld [vmem:[%s2 + $0x10] sm:$0xff]
      %v576 = vld [vmem:[%s2 + $0x18] sm:$0xff]
      %v577 = vld [vmem:[%s540] sm:$0xf]
      %v579 = vlaneseq
      %v580 = vshrl.u32 %v579, 7
      %v581 = vsub.s32 0, %v580
      %v582 = vrot.slane %v577, %v581
      %v583 = vlaneseq
      %v584 = vshrl.u32 %v583, 7
      %v585 = vsub.s32 1, %v584
      %v586 = vrot.slane %v577, %v585
      %v587 = vlaneseq
      %v588 = vshrl.u32 %v587, 7
      %v589 = vsub.s32 2, %v588
      %v590 = vrot.slane %v577, %v589
      %v591 = vlaneseq
      %v592 = vshrl.u32 %v591, 7
      %v593 = vsub.s32 3, %v592
      %v594 = vrot.slane %v577, %v593
      %vm599 = vcmask 64512
      %v601 = vsel %vm599, %v565, 0
      %v604 = vsel %vm599, %v566, 0
      %v607 = vsel %vm599, %v567, 0
      %v610 = vsel %vm599, %v568, 0
      %v613 = vsel %vm599, %v569, 0
      %v616 = vsel %vm599, %v570, 0
      %v619 = vsel %vm599, %v571, 0
      %v622 = vsel %vm599, %v572, 0
      %624 = vmatprep.subr.mxu0 %v574
      %625 = vmatpush1.msra.mxu0 %v573
      %626 = vmatprep.subr.mxu0 0.0
      %627 = vmatpush1.msra.mxu0 0.0
      %628 = vmatprep.subr.mxu0 0.0
      %629 = vmatpush1.msra.mxu0 0.0
      %630 = vmatprep.subr.mxu0 0.0
      %631 = vmatpush1.msra.mxu0 0.0
      %632 = vmatprep.subr.mxu0 0.0
      %633 = vmatpush1.msra.mxu0 0.0
      %634 = vmatprep.subr.mxu0 0.0
      %635 = vmatpush1.msra.mxu0 0.0
      %636 = vmatprep.subr.mxu0 0.0
      %637 = vmatpush1.msra.mxu0 0.0
      %638 = vmatprep.subr.mxu0 0.0
      %639 = vmatpush1.msra.mxu0 0.0
      %640 = vmatprep.subr.mxu0 0.0
      %641 = vmatpush1.msra.mxu0 0.0
      %642 = vmatprep.subr.mxu0 0.0
      %643 = vmatpush1.msra.mxu0 0.0
      %644 = vmatprep.subr.mxu0 0.0
      %645 = vmatpush1.msra.mxu0 0.0
      %646 = vmatprep.subr.mxu0 0.0
      %647 = vmatpush1.msra.mxu0 0.0
      %648 = vmatprep.subr.mxu0 0.0
      %649 = vmatpush1.msra.mxu0 0.0
      %650 = vmatprep.subr.mxu0 0.0
      %651 = vmatpush1.msra.mxu0 0.0
      %652 = vmatprep.subr.mxu0 0.0
      %653 = vmatpush1.msra.mxu0 0.0
      %654 = vmatprep.subr.mxu0 0.0
      %655 = vmatpush1.msra.mxu0 0.0
      %656 = vmatprep.subr.mxu0 0.0
      %657 = vmatpush1.msra.mxu0 0.0
      %658 = vmatprep.subr.mxu0 0.0
      %659 = vmatpush1.msra.mxu0 0.0
      %660 = vmatprep.subr.mxu0 0.0
      %661 = vmatpush1.msra.mxu0 0.0
      %662 = vmatprep.subr.mxu0 0.0
      %663 = vmatpush1.msra.mxu0 0.0
      %664 = vmatprep.subr.mxu0 0.0
      %665 = vmatpush1.msra.mxu0 0.0
      %666 = vmatprep.subr.mxu0 0.0
      %667 = vmatpush1.msra.mxu0 0.0
      %668 = vmatprep.subr.mxu0 0.0
      %669 = vmatpush1.msra.mxu0 0.0
      %670 = vmatprep.subr.mxu0 0.0
      %671 = vmatpush1.msra.mxu0 0.0
      %672 = vmatprep.subr.mxu0 0.0
      %673 = vmatpush1.msra.mxu0 0.0
      %674 = vmatprep.subr.mxu0 0.0
      %675 = vmatpush1.msra.mxu0 0.0
      %676 = vmatprep.subr.mxu0 0.0
      %677 = vmatpush1.msra.mxu0 0.0
      %678 = vmatprep.subr.mxu0 0.0
      %679 = vmatpush1.msra.mxu0 0.0
      %680 = vmatprep.subr.mxu0 0.0
      %681 = vmatpush1.msra.mxu0 0.0
      %682 = vmatprep.subr.mxu0 0.0
      %683 = vmatpush1.msra.mxu0 0.0
      %684 = vmatprep.subr.mxu0 0.0
      %685 = vmatpush1.msra.mxu0 0.0
      %686 = vmatprep.subr.mxu0 0.0
      %687 = vmatpush1.msra.mxu0 0.0
      %688 = vmatprep.mubr.f32.mxu0 0.0
      %689 = vmatmul.mubr.f32.gmra.mrb[0].mxu0 %v601
      %v690 = vpop.f32.mrb[0].mxu0
      %v691 = vadd.f32 %v582, %v690
      %v692 = vpop.f32.mrb[0].mxu0
      %v693 = vadd.f32 %v586, %v692
      %694 = vmatprep.mubr.f32.mxu0 0.0
      %695 = vmatmul.mubr.f32.gmra.mrb[0].mxu0 %v604
      %v696 = vpop.f32.mrb[0].mxu0
      %v697 = vadd.f32 %v582, %v696
      %v698 = vpop.f32.mrb[0].mxu0
      %v699 = vadd.f32 %v586, %v698
      %700 = vmatprep.mubr.f32.mxu0 0.0
      %701 = vmatmul.mubr.f32.gmra.mrb[0].mxu0 %v607
      %v702 = vpop.f32.mrb[0].mxu0
      %v703 = vadd.f32 %v582, %v702
      %v704 = vpop.f32.mrb[0].mxu0
      %v705 = vadd.f32 %v586, %v704
      %706 = vmatprep.mubr.f32.mxu0 0.0
      %707 = vmatmul.mubr.f32.gmra.mrb[0].mxu0 %v610
      %v708 = vpop.f32.mrb[0].mxu0
      %v709 = vadd.f32 %v582, %v708
      %v710 = vpop.f32.mrb[0].mxu0
      %v711 = vadd.f32 %v586, %v710
      %712 = vmatprep.mubr.f32.mxu0 0.0
      %713 = vmatmul.mubr.f32.gmra.mrb[0].mxu0 %v613
      %v714 = vpop.f32.mrb[0].mxu0
      %v715 = vadd.f32 %v582, %v714
      %v716 = vpop.f32.mrb[0].mxu0
      %v717 = vadd.f32 %v586, %v716
      %718 = vmatprep.mubr.f32.mxu0 0.0
      %719 = vmatmul.mubr.f32.gmra.mrb[0].mxu0 %v616
      %v720 = vpop.f32.mrb[0].mxu0
      %v721 = vadd.f32 %v582, %v720
      %v722 = vpop.f32.mrb[0].mxu0
      %v723 = vadd.f32 %v586, %v722
      %724 = vmatprep.mubr.f32.mxu0 0.0
      %725 = vmatmul.mubr.f32.gmra.mrb[0].mxu0 %v619
      %v726 = vpop.f32.mrb[0].mxu0
      %v727 = vadd.f32 %v582, %v726
      %v728 = vpop.f32.mrb[0].mxu0
      %v729 = vadd.f32 %v586, %v728
      %730 = vmatprep.mubr.f32.mxu0 0.0
      %731 = vmatmul.mubr.f32.gmra.mrb[0].mxu0 %v622
      %v732 = vpop.f32.mrb[0].mxu0
      %v733 = vadd.f32 %v582, %v732
      %v734 = vpop.f32.mrb[0].mxu0
      %v735 = vadd.f32 %v586, %v734
      %736 = vdwg.mxu0
      %737 = vmatprep.subr.mxu0 %v576
      %738 = vmatpush1.msra.mxu0 %v575
      %739 = vmatprep.subr.mxu0 0.0
      %740 = vmatpush1.msra.mxu0 0.0
      %741 = vmatprep.subr.mxu0 0.0
      %742 = vmatpush1.msra.mxu0 0.0
      %743 = vmatprep.subr.mxu0 0.0
      %744 = vmatpush1.msra.mxu0 0.0
      %745 = vmatprep.subr.mxu0 0.0
      %746 = vmatpush1.msra.mxu0 0.0
      %747 = vmatprep.subr.mxu0 0.0
      %748 = vmatpush1.msra.mxu0 0.0
      %749 = vmatprep.subr.mxu0 0.0
      %750 = vmatpush1.msra.mxu0 0.0
      %751 = vmatprep.subr.mxu0 0.0
      %752 = vmatpush1.msra.mxu0 0.0
      %753 = vmatprep.subr.mxu0 0.0
      %754 = vmatpush1.msra.mxu0 0.0
      %755 = vmatprep.subr.mxu0 0.0
      %756 = vmatpush1.msra.mxu0 0.0
      %757 = vmatprep.subr.mxu0 0.0
      %758 = vmatpush1.msra.mxu0 0.0
      %759 = vmatprep.subr.mxu0 0.0
      %760 = vmatpush1.msra.mxu0 0.0
      %761 = vmatprep.subr.mxu0 0.0
      %762 = vmatpush1.msra.mxu0 0.0
      %763 = vmatprep.subr.mxu0 0.0
      %764 = vmatpush1.msra.mxu0 0.0
      %765 = vmatprep.subr.mxu0 0.0
      %766 = vmatpush1.msra.mxu0 0.0
      %767 = vmatprep.subr.mxu0 0.0
      %768 = vmatpush1.msra.mxu0 0.0
      %769 = vmatprep.subr.mxu0 0.0
      %770 = vmatpush1.msra.mxu0 0.0
      %771 = vmatprep.subr.mxu0 0.0
      %772 = vmatpush1.msra.mxu0 0.0
      %773 = vmatprep.subr.mxu0 0.0
      %774 = vmatpush1.msra.mxu0 0.0
      %775 = vmatprep.subr.mxu0 0.0
      %776 = vmatpush1.msra.mxu0 0.0
      %777 = vmatprep.subr.mxu0 0.0
      %778 = vmatpush1.msra.mxu0 0.0
      %779 = vmatprep.subr.mxu0 0.0
      %780 = vmatpush1.msra.mxu0 0.0
      %781 = vmatprep.subr.mxu0 0.0
      %782 = vmatpush1.msra.mxu0 0.0
      %783 = vmatprep.subr.mxu0 0.0
      %784 = vmatpush1.msra.mxu0 0.0
      %785 = vmatprep.subr.mxu0 0.0
      %786 = vmatpush1.msra.mxu0 0.0
      %787 = vmatprep.subr.mxu0 0.0
      %788 = vmatpush1.msra.mxu0 0.0
      %789 = vmatprep.subr.mxu0 0.0
      %790 = vmatpush1.msra.mxu0 0.0
      %791 = vmatprep.subr.mxu0 0.0
      %792 = vmatpush1.msra.mxu0 0.0
      %793 = vmatprep.subr.mxu0 0.0
      %794 = vmatpush1.msra.mxu0 0.0
      %795 = vmatprep.subr.mxu0 0.0
      %796 = vmatpush1.msra.mxu0 0.0
      %797 = vmatprep.subr.mxu0 0.0
      %798 = vmatpush1.msra.mxu0 0.0
      %799 = vmatprep.subr.mxu0 0.0
      %800 = vmatpush1.msra.mxu0 0.0
      %801 = vmatprep.mubr.f32.mxu0 0.0
      %802 = vmatmul.mubr.f32.gmra.mrb[0].mxu0 %v601
      %v803 = vpop.f32.mrb[0].mxu0
      %v804 = vadd.f32 %v590, %v803
      %v805 = vpop.f32.mrb[0].mxu0
      %v806 = vadd.f32 %v594, %v805
      %807 = vmatprep.mubr.f32.mxu0 0.0
      %808 = vmatmul.mubr.f32.gmra.mrb[0].mxu0 %v604
      %v809 = vpop.f32.mrb[0].mxu0
      %v810 = vadd.f32 %v590, %v809
      %v811 = vpop.f32.mrb[0].mxu0
      %v812 = vadd.f32 %v594, %v811
      %813 = vmatprep.mubr.f32.mxu0 0.0
      %814 = vmatmul.mubr.f32.gmra.mrb[0].mxu0 %v607
      %v815 = vpop.f32.mrb[0].mxu0
      %v816 = vadd.f32 %v590, %v815
      %v817 = vpop.f32.mrb[0].mxu0
      %v818 = vadd.f32 %v594, %v817
      %819 = vmatprep.mubr.f32.mxu0 0.0
      %820 = vmatmul.mubr.f32.gmra.mrb[0].mxu0 %v610
      %v821 = vpop.f32.mrb[0].mxu0
      %v822 = vadd.f32 %v590, %v821
      %v823 = vpop.f32.mrb[0].mxu0
      %v824 = vadd.f32 %v594, %v823
      %825 = vmatprep.mubr.f32.mxu0 0.0
      %826 = vmatmul.mubr.f32.gmra.mrb[0].mxu0 %v613
      %v827 = vpop.f32.mrb[0].mxu0
      %v828 = vadd.f32 %v590, %v827
      %v829 = vpop.f32.mrb[0].mxu0
      %v830 = vadd.f32 %v594, %v829
      %831 = vmatprep.mubr.f32.mxu0 0.0
      %832 = vmatmul.mubr.f32.gmra.mrb[0].mxu0 %v616
      %v833 = vpop.f32.mrb[0].mxu0
      %v834 = vadd.f32 %v590, %v833
      %v835 = vpop.f32.mrb[0].mxu0
      %v836 = vadd.f32 %v594, %v835
      %837 = vmatprep.mubr.f32.mxu0 0.0
      %838 = vmatmul.mubr.f32.gmra.mrb[0].mxu0 %v619
      %v839 = vpop.f32.mrb[0].mxu0
      %v840 = vadd.f32 %v590, %v839
      %v841 = vpop.f32.mrb[0].mxu0
      %v842 = vadd.f32 %v594, %v841
      %843 = vmatprep.mubr.f32.mxu0 0.0
      %844 = vmatmul.mubr.f32.gmra.mrb[0].mxu0 %v622
      %v845 = vpop.f32.mrb[0].mxu0
      %v846 = vadd.f32 %v590, %v845
      %v847 = vpop.f32.mrb[0].mxu0
      %v848 = vadd.f32 %v594, %v847
      %849 = vdwg.mxu0
      %v850 = vmax.f32 %v691, 0.0
      %v851 = vmax.f32 %v693, 0.0
      %v852 = vmax.f32 %v804, 0.0
      %v853 = vmax.f32 %v806, 0.0
      %v854 = vmax.f32 %v697, 0.0
      %v855 = vmax.f32 %v699, 0.0
      %v856 = vmax.f32 %v810, 0.0
      %v857 = vmax.f32 %v812, 0.0
      %v858 = vmax.f32 %v703, 0.0
      %v859 = vmax.f32 %v705, 0.0
      %v860 = vmax.f32 %v816, 0.0
      %v861 = vmax.f32 %v818, 0.0
      %v862 = vmax.f32 %v709, 0.0
      %v863 = vmax.f32 %v711, 0.0
      %v864 = vmax.f32 %v822, 0.0
      %v865 = vmax.f32 %v824, 0.0
      %v866 = vmax.f32 %v715, 0.0
      %v867 = vmax.f32 %v717, 0.0
      %v868 = vmax.f32 %v828, 0.0
      %v869 = vmax.f32 %v830, 0.0
      %v870 = vmax.f32 %v721, 0.0
      %v871 = vmax.f32 %v723, 0.0
      %v872 = vmax.f32 %v834, 0.0
      %v873 = vmax.f32 %v836, 0.0
      %v874 = vmax.f32 %v727, 0.0
      %v875 = vmax.f32 %v729, 0.0
      %v876 = vmax.f32 %v840, 0.0
      %v877 = vmax.f32 %v842, 0.0
      %v878 = vmax.f32 %v733, 0.0
      %v879 = vmax.f32 %v735, 0.0
      %v880 = vmax.f32 %v846, 0.0
      %v881 = vmax.f32 %v848, 0.0
      %v882 = vpack.c.bf16 %v854, %v850
      %v883 = vpack.c.bf16 %v855, %v851
      %v884 = vpack.c.bf16 %v856, %v852
      %v885 = vpack.c.bf16 %v857, %v853
      %v886 = vpack.c.bf16 %v862, %v858
      %v887 = vpack.c.bf16 %v863, %v859
      %v888 = vpack.c.bf16 %v864, %v860
      %v889 = vpack.c.bf16 %v865, %v861
      %v890 = vpack.c.bf16 %v870, %v866
      %v891 = vpack.c.bf16 %v871, %v867
      %v892 = vpack.c.bf16 %v872, %v868
      %v893 = vpack.c.bf16 %v873, %v869
      %v894 = vpack.c.bf16 %v878, %v874
      %v895 = vpack.c.bf16 %v879, %v875
      %v896 = vpack.c.bf16 %v880, %v876
      %v897 = vpack.c.bf16 %v881, %v877
      %v898 = vld [vmem:[%s3] sm:$0xff]
      %v899 = vld [vmem:[%s3 + $0x8] sm:$0xff]
      %v900 = vld [vmem:[%s3 + $0x10] sm:$0xff]
      %v901 = vld [vmem:[%s3 + $0x18] sm:$0xff]
      %v902 = vld [vmem:[%s3 + $0x20] sm:$0xff]
      %v903 = vld [vmem:[%s3 + $0x28] sm:$0xff]
      %v904 = vld [vmem:[%s3 + $0x30] sm:$0xff]
      %v905 = vld [vmem:[%s3 + $0x38] sm:$0xff]
      %v906 = vld [vmem:[%s3 + $0x40] sm:$0xff]
      %v907 = vld [vmem:[%s3 + $0x48] sm:$0xff]
      %v908 = vld [vmem:[%s3 + $0x50] sm:$0xff]
      %v909 = vld [vmem:[%s3 + $0x58] sm:$0xff]
      %v910 = vld [vmem:[%s3 + $0x60] sm:$0xff]
      %v911 = vld [vmem:[%s3 + $0x68] sm:$0xff]
      %v912 = vld [vmem:[%s3 + $0x70] sm:$0xff]
      %v913 = vld [vmem:[%s3 + $0x78] sm:$0xff]
      %v914 = vld [vmem:[%s3 + $0x80] sm:$0xff]
      %v915 = vld [vmem:[%s3 + $0x88] sm:$0xff]
      %v916 = vld [vmem:[%s3 + $0x90] sm:$0xff]
      %v917 = vld [vmem:[%s3 + $0x98] sm:$0xff]
      %v918 = vld [vmem:[%s3 + $0xa0] sm:$0xff]
      %v919 = vld [vmem:[%s3 + $0xa8] sm:$0xff]
      %v920 = vld [vmem:[%s3 + $0xb0] sm:$0xff]
      %v921 = vld [vmem:[%s3 + $0xb8] sm:$0xff]
      %v922 = vld [vmem:[%s3 + $0xc0] sm:$0xff]
      %v923 = vld [vmem:[%s3 + $0xc8] sm:$0xff]
      %v924 = vld [vmem:[%s3 + $0xd0] sm:$0xff]
      %v925 = vld [vmem:[%s3 + $0xd8] sm:$0xff]
      %v926 = vld [vmem:[%s3 + $0xe0] sm:$0xff]
      %v927 = vld [vmem:[%s3 + $0xe8] sm:$0xff]
      %v928 = vld [vmem:[%s3 + $0xf0] sm:$0xff]
      %v929 = vld [vmem:[%s3 + $0xf8] sm:$0xff]
      %v930 = vld [vmem:[%s3 + $0x100] sm:$0xff]
      %v931 = vld [vmem:[%s3 + $0x108] sm:$0xff]
      %v932 = vld [vmem:[%s3 + $0x110] sm:$0xff]
      %v933 = vld [vmem:[%s3 + $0x118] sm:$0xff]
      %v934 = vld [vmem:[%s3 + $0x120] sm:$0xff]
      %v935 = vld [vmem:[%s3 + $0x128] sm:$0xff]
      %v936 = vld [vmem:[%s3 + $0x130] sm:$0xff]
      %v937 = vld [vmem:[%s3 + $0x138] sm:$0xff]
      %v938 = vld [vmem:[%s3 + $0x140] sm:$0xff]
      %v939 = vld [vmem:[%s3 + $0x148] sm:$0xff]
      %v940 = vld [vmem:[%s3 + $0x150] sm:$0xff]
      %v941 = vld [vmem:[%s3 + $0x158] sm:$0xff]
      %v942 = vld [vmem:[%s3 + $0x160] sm:$0xff]
      %v943 = vld [vmem:[%s3 + $0x168] sm:$0xff]
      %v944 = vld [vmem:[%s3 + $0x170] sm:$0xff]
      %v945 = vld [vmem:[%s3 + $0x178] sm:$0xff]
      %v946 = vld [vmem:[%s3 + $0x180] sm:$0xff]
      %v947 = vld [vmem:[%s3 + $0x188] sm:$0xff]
      %v948 = vld [vmem:[%s3 + $0x190] sm:$0xff]
      %v949 = vld [vmem:[%s3 + $0x198] sm:$0xff]
      %v950 = vld [vmem:[%s3 + $0x1a0] sm:$0xff]
      %v951 = vld [vmem:[%s3 + $0x1a8] sm:$0xff]
      %v952 = vld [vmem:[%s3 + $0x1b0] sm:$0xff]
      %v953 = vld [vmem:[%s3 + $0x1b8] sm:$0xff]
      %v954 = vld [vmem:[%s3 + $0x1c0] sm:$0xff]
      %v955 = vld [vmem:[%s3 + $0x1c8] sm:$0xff]
      %v956 = vld [vmem:[%s3 + $0x1d0] sm:$0xff]
      %v957 = vld [vmem:[%s3 + $0x1d8] sm:$0xff]
      %v958 = vld [vmem:[%s3 + $0x1e0] sm:$0xff]
      %v959 = vld [vmem:[%s3 + $0x1e8] sm:$0xff]
      %v960 = vld [vmem:[%s3 + $0x1f0] sm:$0xff]
      %v961 = vld [vmem:[%s3 + $0x1f8] sm:$0xff]
      %v962 = vld [vmem:[%s3 + $0x200] sm:$0xff]
      %v963 = vld [vmem:[%s3 + $0x208] sm:$0xff]
      %v964 = vld [vmem:[%s3 + $0x210] sm:$0xff]
      %v965 = vld [vmem:[%s3 + $0x218] sm:$0xff]
      %v966 = vld [vmem:[%s3 + $0x220] sm:$0xff]
      %v967 = vld [vmem:[%s3 + $0x228] sm:$0xff]
      %v968 = vld [vmem:[%s3 + $0x230] sm:$0xff]
      %v969 = vld [vmem:[%s3 + $0x238] sm:$0xff]
      %v970 = vld [vmem:[%s3 + $0x240] sm:$0xff]
      %v971 = vld [vmem:[%s3 + $0x248] sm:$0xff]
      %v972 = vld [vmem:[%s3 + $0x250] sm:$0xff]
      %v973 = vld [vmem:[%s3 + $0x258] sm:$0xff]
      %v974 = vld [vmem:[%s3 + $0x260] sm:$0xff]
      %v975 = vld [vmem:[%s3 + $0x268] sm:$0xff]
      %v976 = vld [vmem:[%s3 + $0x270] sm:$0xff]
      %v977 = vld [vmem:[%s3 + $0x278] sm:$0xff]
      %v978 = vld [vmem:[%s3 + $0x280] sm:$0xff]
      %v979 = vld [vmem:[%s3 + $0x288] sm:$0xff]
      %v980 = vld [vmem:[%s3 + $0x290] sm:$0xff]
      %v981 = vld [vmem:[%s3 + $0x298] sm:$0xff]
      %v982 = vld [vmem:[%s3 + $0x2a0] sm:$0xff]
      %v983 = vld [vmem:[%s3 + $0x2a8] sm:$0xff]
      %v984 = vld [vmem:[%s3 + $0x2b0] sm:$0xff]
      %v985 = vld [vmem:[%s3 + $0x2b8] sm:$0xff]
      %v986 = vld [vmem:[%s3 + $0x2c0] sm:$0xff]
      %v987 = vld [vmem:[%s3 + $0x2c8] sm:$0xff]
      %v988 = vld [vmem:[%s3 + $0x2d0] sm:$0xff]
      %v989 = vld [vmem:[%s3 + $0x2d8] sm:$0xff]
      %v990 = vld [vmem:[%s3 + $0x2e0] sm:$0xff]
      %v991 = vld [vmem:[%s3 + $0x2e8] sm:$0xff]
      %v992 = vld [vmem:[%s3 + $0x2f0] sm:$0xff]
      %v993 = vld [vmem:[%s3 + $0x2f8] sm:$0xff]
      %v994 = vld [vmem:[%s3 + $0x300] sm:$0xff]
      %v995 = vld [vmem:[%s3 + $0x308] sm:$0xff]
      %v996 = vld [vmem:[%s3 + $0x310] sm:$0xff]
      %v997 = vld [vmem:[%s3 + $0x318] sm:$0xff]
      %v998 = vld [vmem:[%s3 + $0x320] sm:$0xff]
      %v999 = vld [vmem:[%s3 + $0x328] sm:$0xff]
      %v1000 = vld [vmem:[%s3 + $0x330] sm:$0xff]
      %v1001 = vld [vmem:[%s3 + $0x338] sm:$0xff]
      %v1002 = vld [vmem:[%s3 + $0x340] sm:$0xff]
      %v1003 = vld [vmem:[%s3 + $0x348] sm:$0xff]
      %v1004 = vld [vmem:[%s3 + $0x350] sm:$0xff]
      %v1005 = vld [vmem:[%s3 + $0x358] sm:$0xff]
      %v1006 = vld [vmem:[%s3 + $0x360] sm:$0xff]
      %v1007 = vld [vmem:[%s3 + $0x368] sm:$0xff]
      %v1008 = vld [vmem:[%s3 + $0x370] sm:$0xff]
      %v1009 = vld [vmem:[%s3 + $0x378] sm:$0xff]
      %v1010 = vld [vmem:[%s3 + $0x380] sm:$0xff]
      %v1011 = vld [vmem:[%s3 + $0x388] sm:$0xff]
      %v1012 = vld [vmem:[%s3 + $0x390] sm:$0xff]
      %v1013 = vld [vmem:[%s3 + $0x398] sm:$0xff]
      %v1014 = vld [vmem:[%s3 + $0x3a0] sm:$0xff]
      %v1015 = vld [vmem:[%s3 + $0x3a8] sm:$0xff]
      %v1016 = vld [vmem:[%s3 + $0x3b0] sm:$0xff]
      %v1017 = vld [vmem:[%s3 + $0x3b8] sm:$0xff]
      %v1018 = vld [vmem:[%s3 + $0x3c0] sm:$0xff]
      %v1019 = vld [vmem:[%s3 + $0x3c8] sm:$0xff]
      %v1020 = vld [vmem:[%s3 + $0x3d0] sm:$0xff]
      %v1021 = vld [vmem:[%s3 + $0x3d8] sm:$0xff]
      %v1022 = vld [vmem:[%s3 + $0x3e0] sm:$0xff]
      %v1023 = vld [vmem:[%s3 + $0x3e8] sm:$0xff]
      %v1024 = vld [vmem:[%s3 + $0x3f0] sm:$0xff]
      %v1025 = vld [vmem:[%s3 + $0x3f8] sm:$0xff]
      %v1026 = vld [vmem:[%s4] sm:$0xf]
      %v1028 = vlaneseq
      %v1029 = vshrl.u32 %v1028, 7
      %v1030 = vsub.s32 0, %v1029
      %v1031 = vrot.slane %v1026, %v1030
      %v1032 = vlaneseq
      %v1033 = vshrl.u32 %v1032, 7
      %v1034 = vsub.s32 1, %v1033
      %v1035 = vrot.slane %v1026, %v1034
      %v1036 = vlaneseq
      %v1037 = vshrl.u32 %v1036, 7
      %v1038 = vsub.s32 2, %v1037
      %v1039 = vrot.slane %v1026, %v1038
      %v1040 = vlaneseq
      %v1041 = vshrl.u32 %v1040, 7
      %v1042 = vsub.s32 3, %v1041
      %v1043 = vrot.slane %v1026, %v1042
      %v1176 = vunpack.c.l.b16 %v898
      %v1177 = vunpack.c.h.b16 %v898
      %v1178 = vunpack.c.l.b16 %v899
      %v1179 = vunpack.c.h.b16 %v899
      %v1180 = vunpack.c.l.b16 %v900
      %v1181 = vunpack.c.h.b16 %v900
      %v1182 = vunpack.c.l.b16 %v901
      %v1183 = vunpack.c.h.b16 %v901
      %v1184 = vunpack.c.l.b16 %v902
      %v1185 = vunpack.c.h.b16 %v902
      %v1186 = vunpack.c.l.b16 %v903
      %v1187 = vunpack.c.h.b16 %v903
      %v1188 = vunpack.c.l.b16 %v904
      %v1189 = vunpack.c.h.b16 %v904
      %v1190 = vunpack.c.l.b16 %v905
      %v1191 = vunpack.c.h.b16 %v905
      %v1192 = vunpack.c.l.b16 %v906
      %v1193 = vunpack.c.h.b16 %v906
      %v1194 = vunpack.c.l.b16 %v907
      %v1195 = vunpack.c.h.b16 %v907
      %v1196 = vunpack.c.l.b16 %v908
      %v1197 = vunpack.c.h.b16 %v908
      %v1198 = vunpack.c.l.b16 %v909
      %v1199 = vunpack.c.h.b16 %v909
      %v1200 = vunpack.c.l.b16 %v910
      %v1201 = vunpack.c.h.b16 %v910
      %v1202 = vunpack.c.l.b16 %v911
      %v1203 = vunpack.c.h.b16 %v911
      %v1204 = vunpack.c.l.b16 %v912
      %v1205 = vunpack.c.h.b16 %v912
      %v1206 = vunpack.c.l.b16 %v913
      %v1207 = vunpack.c.h.b16 %v913
      %v1208 = vunpack.c.l.b16 %v914
      %v1209 = vunpack.c.h.b16 %v914
      %v1210 = vunpack.c.l.b16 %v915
      %v1211 = vunpack.c.h.b16 %v915
      %v1212 = vunpack.c.l.b16 %v916
      %v1213 = vunpack.c.h.b16 %v916
      %v1214 = vunpack.c.l.b16 %v917
      %v1215 = vunpack.c.h.b16 %v917
      %v1216 = vunpack.c.l.b16 %v918
      %v1217 = vunpack.c.h.b16 %v918
      %v1218 = vunpack.c.l.b16 %v919
      %v1219 = vunpack.c.h.b16 %v919
      %v1220 = vunpack.c.l.b16 %v920
      %v1221 = vunpack.c.h.b16 %v920
      %v1222 = vunpack.c.l.b16 %v921
      %v1223 = vunpack.c.h.b16 %v921
      %v1224 = vunpack.c.l.b16 %v922
      %v1225 = vunpack.c.h.b16 %v922
      %v1226 = vunpack.c.l.b16 %v923
      %v1227 = vunpack.c.h.b16 %v923
      %v1228 = vunpack.c.l.b16 %v924
      %v1229 = vunpack.c.h.b16 %v924
      %v1230 = vunpack.c.l.b16 %v925
      %v1231 = vunpack.c.h.b16 %v925
      %v1232 = vunpack.c.l.b16 %v926
      %v1233 = vunpack.c.h.b16 %v926
      %v1234 = vunpack.c.l.b16 %v927
      %v1235 = vunpack.c.h.b16 %v927
      %v1236 = vunpack.c.l.b16 %v928
      %v1237 = vunpack.c.h.b16 %v928
      %v1238 = vunpack.c.l.b16 %v929
      %v1239 = vunpack.c.h.b16 %v929
      %v1240 = vunpack.c.l.b16 %v930
      %v1241 = vunpack.c.h.b16 %v930
      %v1242 = vunpack.c.l.b16 %v931
      %v1243 = vunpack.c.h.b16 %v931
      %v1244 = vunpack.c.l.b16 %v932
      %v1245 = vunpack.c.h.b16 %v932
      %v1246 = vunpack.c.l.b16 %v933
      %v1247 = vunpack.c.h.b16 %v933
      %v1248 = vunpack.c.l.b16 %v934
      %v1249 = vunpack.c.h.b16 %v934
      %v1250 = vunpack.c.l.b16 %v935
      %v1251 = vunpack.c.h.b16 %v935
      %v1252 = vunpack.c.l.b16 %v936
      %v1253 = vunpack.c.h.b16 %v936
      %v1254 = vunpack.c.l.b16 %v937
      %v1255 = vunpack.c.h.b16 %v937
      %v1256 = vunpack.c.l.b16 %v938
      %v1257 = vunpack.c.h.b16 %v938
      %v1258 = vunpack.c.l.b16 %v939
      %v1259 = vunpack.c.h.b16 %v939
      %v1260 = vunpack.c.l.b16 %v940
      %v1261 = vunpack.c.h.b16 %v940
      %v1262 = vunpack.c.l.b16 %v941
      %v1263 = vunpack.c.h.b16 %v941
      %v1264 = vunpack.c.l.b16 %v942
      %v1265 = vunpack.c.h.b16 %v942
      %v1266 = vunpack.c.l.b16 %v943
      %v1267 = vunpack.c.h.b16 %v943
      %v1268 = vunpack.c.l.b16 %v944
      %v1269 = vunpack.c.h.b16 %v944
      %v1270 = vunpack.c.l.b16 %v945
      %v1271 = vunpack.c.h.b16 %v945
      %v1272 = vunpack.c.l.b16 %v946
      %v1273 = vunpack.c.h.b16 %v946
      %v1274 = vunpack.c.l.b16 %v947
      %v1275 = vunpack.c.h.b16 %v947
      %v1276 = vunpack.c.l.b16 %v948
      %v1277 = vunpack.c.h.b16 %v948
      %v1278 = vunpack.c.l.b16 %v949
      %v1279 = vunpack.c.h.b16 %v949
      %v1280 = vunpack.c.l.b16 %v950
      %v1281 = vunpack.c.h.b16 %v950
      %v1282 = vunpack.c.l.b16 %v951
      %v1283 = vunpack.c.h.b16 %v951
      %v1284 = vunpack.c.l.b16 %v952
      %v1285 = vunpack.c.h.b16 %v952
      %v1286 = vunpack.c.l.b16 %v953
      %v1287 = vunpack.c.h.b16 %v953
      %v1288 = vunpack.c.l.b16 %v954
      %v1289 = vunpack.c.h.b16 %v954
      %v1290 = vunpack.c.l.b16 %v955
      %v1291 = vunpack.c.h.b16 %v955
      %v1292 = vunpack.c.l.b16 %v956
      %v1293 = vunpack.c.h.b16 %v956
      %v1294 = vunpack.c.l.b16 %v957
      %v1295 = vunpack.c.h.b16 %v957
      %v1296 = vunpack.c.l.b16 %v958
      %v1297 = vunpack.c.h.b16 %v958
      %v1298 = vunpack.c.l.b16 %v959
      %v1299 = vunpack.c.h.b16 %v959
      %v1300 = vunpack.c.l.b16 %v960
      %v1301 = vunpack.c.h.b16 %v960
      %v1302 = vunpack.c.l.b16 %v961
      %v1303 = vunpack.c.h.b16 %v961
      %v1304 = vunpack.c.l.b16 %v962
      %v1305 = vunpack.c.h.b16 %v962
      %v1306 = vunpack.c.l.b16 %v963
      %v1307 = vunpack.c.h.b16 %v963
      %v1308 = vunpack.c.l.b16 %v964
      %v1309 = vunpack.c.h.b16 %v964
      %v1310 = vunpack.c.l.b16 %v965
      %v1311 = vunpack.c.h.b16 %v965
      %v1312 = vunpack.c.l.b16 %v966
      %v1313 = vunpack.c.h.b16 %v966
      %v1314 = vunpack.c.l.b16 %v967
      %v1315 = vunpack.c.h.b16 %v967
      %v1316 = vunpack.c.l.b16 %v968
      %v1317 = vunpack.c.h.b16 %v968
      %v1318 = vunpack.c.l.b16 %v969
      %v1319 = vunpack.c.h.b16 %v969
      %v1320 = vunpack.c.l.b16 %v970
      %v1321 = vunpack.c.h.b16 %v970
      %v1322 = vunpack.c.l.b16 %v971
      %v1323 = vunpack.c.h.b16 %v971
      %v1324 = vunpack.c.l.b16 %v972
      %v1325 = vunpack.c.h.b16 %v972
      %v1326 = vunpack.c.l.b16 %v973
      %v1327 = vunpack.c.h.b16 %v973
      %v1328 = vunpack.c.l.b16 %v974
      %v1329 = vunpack.c.h.b16 %v974
      %v1330 = vunpack.c.l.b16 %v975
      %v1331 = vunpack.c.h.b16 %v975
      %v1332 = vunpack.c.l.b16 %v976
      %v1333 = vunpack.c.h.b16 %v976
      %v1334 = vunpack.c.l.b16 %v977
      %v1335 = vunpack.c.h.b16 %v977
      %v1336 = vunpack.c.l.b16 %v978
      %v1337 = vunpack.c.h.b16 %v978
      %v1338 = vunpack.c.l.b16 %v979
      %v1339 = vunpack.c.h.b16 %v979
      %v1340 = vunpack.c.l.b16 %v980
      %v1341 = vunpack.c.h.b16 %v980
      %v1342 = vunpack.c.l.b16 %v981
      %v1343 = vunpack.c.h.b16 %v981
      %v1344 = vunpack.c.l.b16 %v982
      %v1345 = vunpack.c.h.b16 %v982
      %v1346 = vunpack.c.l.b16 %v983
      %v1347 = vunpack.c.h.b16 %v983
      %v1348 = vunpack.c.l.b16 %v984
      %v1349 = vunpack.c.h.b16 %v984
      %v1350 = vunpack.c.l.b16 %v985
      %v1351 = vunpack.c.h.b16 %v985
      %v1352 = vunpack.c.l.b16 %v986
      %v1353 = vunpack.c.h.b16 %v986
      %v1354 = vunpack.c.l.b16 %v987
      %v1355 = vunpack.c.h.b16 %v987
      %v1356 = vunpack.c.l.b16 %v988
      %v1357 = vunpack.c.h.b16 %v988
      %v1358 = vunpack.c.l.b16 %v989
      %v1359 = vunpack.c.h.b16 %v989
      %v1360 = vunpack.c.l.b16 %v990
      %v1361 = vunpack.c.h.b16 %v990
      %v1362 = vunpack.c.l.b16 %v991
      %v1363 = vunpack.c.h.b16 %v991
      %v1364 = vunpack.c.l.b16 %v992
      %v1365 = vunpack.c.h.b16 %v992
      %v1366 = vunpack.c.l.b16 %v993
      %v1367 = vunpack.c.h.b16 %v993
      %v1368 = vunpack.c.l.b16 %v994
      %v1369 = vunpack.c.h.b16 %v994
      %v1370 = vunpack.c.l.b16 %v995
      %v1371 = vunpack.c.h.b16 %v995
      %v1372 = vunpack.c.l.b16 %v996
      %v1373 = vunpack.c.h.b16 %v996
      %v1374 = vunpack.c.l.b16 %v997
      %v1375 = vunpack.c.h.b16 %v997
      %v1376 = vunpack.c.l.b16 %v998
      %v1377 = vunpack.c.h.b16 %v998
      %v1378 = vunpack.c.l.b16 %v999
      %v1379 = vunpack.c.h.b16 %v999
      %v1380 = vunpack.c.l.b16 %v1000
      %v1381 = vunpack.c.h.b16 %v1000
      %v1382 = vunpack.c.l.b16 %v1001
      %v1383 = vunpack.c.h.b16 %v1001
      %v1384 = vunpack.c.l.b16 %v1002
      %v1385 = vunpack.c.h.b16 %v1002
      %v1386 = vunpack.c.l.b16 %v1003
      %v1387 = vunpack.c.h.b16 %v1003
      %v1388 = vunpack.c.l.b16 %v1004
      %v1389 = vunpack.c.h.b16 %v1004
      %v1390 = vunpack.c.l.b16 %v1005
      %v1391 = vunpack.c.h.b16 %v1005
      %v1392 = vunpack.c.l.b16 %v1006
      %v1393 = vunpack.c.h.b16 %v1006
      %v1394 = vunpack.c.l.b16 %v1007
      %v1395 = vunpack.c.h.b16 %v1007
      %v1396 = vunpack.c.l.b16 %v1008
      %v1397 = vunpack.c.h.b16 %v1008
      %v1398 = vunpack.c.l.b16 %v1009
      %v1399 = vunpack.c.h.b16 %v1009
      %v1400 = vunpack.c.l.b16 %v1010
      %v1401 = vunpack.c.h.b16 %v1010
      %v1402 = vunpack.c.l.b16 %v1011
      %v1403 = vunpack.c.h.b16 %v1011
      %v1404 = vunpack.c.l.b16 %v1012
      %v1405 = vunpack.c.h.b16 %v1012
      %v1406 = vunpack.c.l.b16 %v1013
      %v1407 = vunpack.c.h.b16 %v1013
      %v1408 = vunpack.c.l.b16 %v1014
      %v1409 = vunpack.c.h.b16 %v1014
      %v1410 = vunpack.c.l.b16 %v1015
      %v1411 = vunpack.c.h.b16 %v1015
      %v1412 = vunpack.c.l.b16 %v1016
      %v1413 = vunpack.c.h.b16 %v1016
      %v1414 = vunpack.c.l.b16 %v1017
      %v1415 = vunpack.c.h.b16 %v1017
      %v1416 = vunpack.c.l.b16 %v1018
      %v1417 = vunpack.c.h.b16 %v1018
      %v1418 = vunpack.c.l.b16 %v1019
      %v1419 = vunpack.c.h.b16 %v1019
      %v1420 = vunpack.c.l.b16 %v1020
      %v1421 = vunpack.c.h.b16 %v1020
      %v1422 = vunpack.c.l.b16 %v1021
      %v1423 = vunpack.c.h.b16 %v1021
      %v1424 = vunpack.c.l.b16 %v1022
      %v1425 = vunpack.c.h.b16 %v1022
      %v1426 = vunpack.c.l.b16 %v1023
      %v1427 = vunpack.c.h.b16 %v1023
      %v1428 = vunpack.c.l.b16 %v1024
      %v1429 = vunpack.c.h.b16 %v1024
      %v1430 = vunpack.c.l.b16 %v1025
      %v1431 = vunpack.c.h.b16 %v1025
      %v1432 = vpack.c.b16 %v1180, %v1176
      %v1433 = vpack.c.b16 %v1181, %v1177
      %v1434 = vpack.c.b16 %v1182, %v1178
      %v1435 = vpack.c.b16 %v1183, %v1179
      %v1436 = vpack.c.b16 %v1188, %v1184
      %v1437 = vpack.c.b16 %v1189, %v1185
      %v1438 = vpack.c.b16 %v1190, %v1186
      %v1439 = vpack.c.b16 %v1191, %v1187
      %v1440 = vpack.c.b16 %v1196, %v1192
      %v1441 = vpack.c.b16 %v1197, %v1193
      %v1442 = vpack.c.b16 %v1198, %v1194
      %v1443 = vpack.c.b16 %v1199, %v1195
      %v1444 = vpack.c.b16 %v1204, %v1200
      %v1445 = vpack.c.b16 %v1205, %v1201
      %v1446 = vpack.c.b16 %v1206, %v1202
      %v1447 = vpack.c.b16 %v1207, %v1203
      %v1448 = vpack.c.b16 %v1212, %v1208
      %v1449 = vpack.c.b16 %v1213, %v1209
      %v1450 = vpack.c.b16 %v1214, %v1210
      %v1451 = vpack.c.b16 %v1215, %v1211
      %v1452 = vpack.c.b16 %v1220, %v1216
      %v1453 = vpack.c.b16 %v1221, %v1217
      %v1454 = vpack.c.b16 %v1222, %v1218
      %v1455 = vpack.c.b16 %v1223, %v1219
      %v1456 = vpack.c.b16 %v1228, %v1224
      %v1457 = vpack.c.b16 %v1229, %v1225
      %v1458 = vpack.c.b16 %v1230, %v1226
      %v1459 = vpack.c.b16 %v1231, %v1227
      %v1460 = vpack.c.b16 %v1236, %v1232
      %v1461 = vpack.c.b16 %v1237, %v1233
      %v1462 = vpack.c.b16 %v1238, %v1234
      %v1463 = vpack.c.b16 %v1239, %v1235
      %v1464 = vpack.c.b16 %v1244, %v1240
      %v1465 = vpack.c.b16 %v1245, %v1241
      %v1466 = vpack.c.b16 %v1246, %v1242
      %v1467 = vpack.c.b16 %v1247, %v1243
      %v1468 = vpack.c.b16 %v1252, %v1248
      %v1469 = vpack.c.b16 %v1253, %v1249
      %v1470 = vpack.c.b16 %v1254, %v1250
      %v1471 = vpack.c.b16 %v1255, %v1251
      %v1472 = vpack.c.b16 %v1260, %v1256
      %v1473 = vpack.c.b16 %v1261, %v1257
      %v1474 = vpack.c.b16 %v1262, %v1258
      %v1475 = vpack.c.b16 %v1263, %v1259
      %v1476 = vpack.c.b16 %v1268, %v1264
      %v1477 = vpack.c.b16 %v1269, %v1265
      %v1478 = vpack.c.b16 %v1270, %v1266
      %v1479 = vpack.c.b16 %v1271, %v1267
      %v1480 = vpack.c.b16 %v1276, %v1272
      %v1481 = vpack.c.b16 %v1277, %v1273
      %v1482 = vpack.c.b16 %v1278, %v1274
      %v1483 = vpack.c.b16 %v1279, %v1275
      %v1484 = vpack.c.b16 %v1284, %v1280
      %v1485 = vpack.c.b16 %v1285, %v1281
      %v1486 = vpack.c.b16 %v1286, %v1282
      %v1487 = vpack.c.b16 %v1287, %v1283
      %v1488 = vpack.c.b16 %v1292, %v1288
      %v1489 = vpack.c.b16 %v1293, %v1289
      %v1490 = vpack.c.b16 %v1294, %v1290
      %v1491 = vpack.c.b16 %v1295, %v1291
      %v1492 = vpack.c.b16 %v1300, %v1296
      %v1493 = vpack.c.b16 %v1301, %v1297
      %v1494 = vpack.c.b16 %v1302, %v1298
      %v1495 = vpack.c.b16 %v1303, %v1299
      %v1496 = vpack.c.b16 %v1308, %v1304
      %v1497 = vpack.c.b16 %v1309, %v1305
      %v1498 = vpack.c.b16 %v1310, %v1306
      %v1499 = vpack.c.b16 %v1311, %v1307
      %v1500 = vpack.c.b16 %v1316, %v1312
      %v1501 = vpack.c.b16 %v1317, %v1313
      %v1502 = vpack.c.b16 %v1318, %v1314
      %v1503 = vpack.c.b16 %v1319, %v1315
      %v1504 = vpack.c.b16 %v1324, %v1320
      %v1505 = vpack.c.b16 %v1325, %v1321
      %v1506 = vpack.c.b16 %v1326, %v1322
      %v1507 = vpack.c.b16 %v1327, %v1323
      %v1508 = vpack.c.b16 %v1332, %v1328
      %v1509 = vpack.c.b16 %v1333, %v1329
      %v1510 = vpack.c.b16 %v1334, %v1330
      %v1511 = vpack.c.b16 %v1335, %v1331
      %v1512 = vpack.c.b16 %v1340, %v1336
      %v1513 = vpack.c.b16 %v1341, %v1337
      %v1514 = vpack.c.b16 %v1342, %v1338
      %v1515 = vpack.c.b16 %v1343, %v1339
      %v1516 = vpack.c.b16 %v1348, %v1344
      %v1517 = vpack.c.b16 %v1349, %v1345
      %v1518 = vpack.c.b16 %v1350, %v1346
      %v1519 = vpack.c.b16 %v1351, %v1347
      %v1520 = vpack.c.b16 %v1356, %v1352
      %v1521 = vpack.c.b16 %v1357, %v1353
      %v1522 = vpack.c.b16 %v1358, %v1354
      %v1523 = vpack.c.b16 %v1359, %v1355
      %v1524 = vpack.c.b16 %v1364, %v1360
      %v1525 = vpack.c.b16 %v1365, %v1361
      %v1526 = vpack.c.b16 %v1366, %v1362
      %v1527 = vpack.c.b16 %v1367, %v1363
      %v1528 = vpack.c.b16 %v1372, %v1368
      %v1529 = vpack.c.b16 %v1373, %v1369
      %v1530 = vpack.c.b16 %v1374, %v1370
      %v1531 = vpack.c.b16 %v1375, %v1371
      %v1532 = vpack.c.b16 %v1380, %v1376
      %v1533 = vpack.c.b16 %v1381, %v1377
      %v1534 = vpack.c.b16 %v1382, %v1378
      %v1535 = vpack.c.b16 %v1383, %v1379
      %v1536 = vpack.c.b16 %v1388, %v1384
      %v1537 = vpack.c.b16 %v1389, %v1385
      %v1538 = vpack.c.b16 %v1390, %v1386
      %v1539 = vpack.c.b16 %v1391, %v1387
      %v1540 = vpack.c.b16 %v1396, %v1392
      %v1541 = vpack.c.b16 %v1397, %v1393
      %v1542 = vpack.c.b16 %v1398, %v1394
      %v1543 = vpack.c.b16 %v1399, %v1395
      %v1544 = vpack.c.b16 %v1404, %v1400
      %v1545 = vpack.c.b16 %v1405, %v1401
      %v1546 = vpack.c.b16 %v1406, %v1402
      %v1547 = vpack.c.b16 %v1407, %v1403
      %v1548 = vpack.c.b16 %v1412, %v1408
      %v1549 = vpack.c.b16 %v1413, %v1409
      %v1550 = vpack.c.b16 %v1414, %v1410
      %v1551 = vpack.c.b16 %v1415, %v1411
      %v1552 = vpack.c.b16 %v1420, %v1416
      %v1553 = vpack.c.b16 %v1421, %v1417
      %v1554 = vpack.c.b16 %v1422, %v1418
      %v1555 = vpack.c.b16 %v1423, %v1419
      %v1556 = vpack.c.b16 %v1428, %v1424
      %v1557 = vpack.c.b16 %v1429, %v1425
      %v1558 = vpack.c.b16 %v1430, %v1426
      %v1559 = vpack.c.b16 %v1431, %v1427
      %1688 = vmatprep.subr.bf16.mxu0 %v1433
      %1689 = vmatpush1.bf16.msra.mxu0 %v1432
      %1690 = vmatprep.subr.bf16.mxu0 %v1437
      %1691 = vmatpush1.bf16.msra.mxu0 %v1436
      %1692 = vmatprep.subr.bf16.mxu0 %v1441
      %1693 = vmatpush1.bf16.msra.mxu0 %v1440
      %1694 = vmatprep.subr.bf16.mxu0 %v1445
      %1695 = vmatpush1.bf16.msra.mxu0 %v1444
      %1696 = vmatprep.subr.bf16.mxu0 %v1449
      %1697 = vmatpush1.bf16.msra.mxu0 %v1448
      %1698 = vmatprep.subr.bf16.mxu0 %v1453
      %1699 = vmatpush1.bf16.msra.mxu0 %v1452
      %1700 = vmatprep.subr.bf16.mxu0 %v1457
      %1701 = vmatpush1.bf16.msra.mxu0 %v1456
      %1702 = vmatprep.subr.bf16.mxu0 %v1461
      %1703 = vmatpush1.bf16.msra.mxu0 %v1460
      %1704 = vmatprep.subr.bf16.mxu0 %v1465
      %1705 = vmatpush1.bf16.msra.mxu0 %v1464
      %1706 = vmatprep.subr.bf16.mxu0 %v1469
      %1707 = vmatpush1.bf16.msra.mxu0 %v1468
      %1708 = vmatprep.subr.bf16.mxu0 %v1473
      %1709 = vmatpush1.bf16.msra.mxu0 %v1472
      %1710 = vmatprep.subr.bf16.mxu0 %v1477
      %1711 = vmatpush1.bf16.msra.mxu0 %v1476
      %1712 = vmatprep.subr.bf16.mxu0 %v1481
      %1713 = vmatpush1.bf16.msra.mxu0 %v1480
      %1714 = vmatprep.subr.bf16.mxu0 %v1485
      %1715 = vmatpush1.bf16.msra.mxu0 %v1484
      %1716 = vmatprep.subr.bf16.mxu0 %v1489
      %1717 = vmatpush1.bf16.msra.mxu0 %v1488
      %1718 = vmatprep.subr.bf16.mxu0 %v1493
      %1719 = vmatpush1.bf16.msra.mxu0 %v1492
      %1720 = vmatprep.mubr.bf16.mxu0 %v883
      %1721 = vmatmul.mubr.bf16.gmra.mrb[0].mxu0 %v882
      %v1722 = vpop.f32.mrb[0].mxu0
      %v1723 = vadd.f32 %v1031, %v1722
      %v1724 = vpop.f32.mrb[0].mxu0
      %v1725 = vadd.f32 %v1035, %v1724
      %v1726 = vpop.f32.mrb[0].mxu0
      %v1727 = vadd.f32 %v1031, %v1726
      %v1728 = vpop.f32.mrb[0].mxu0
      %v1729 = vadd.f32 %v1035, %v1728
      %1730 = vmatprep.mubr.bf16.mxu0 %v887
      %1731 = vmatmul.mubr.bf16.gmra.mrb[0].mxu0 %v886
      %v1732 = vpop.f32.mrb[0].mxu0
      %v1733 = vadd.f32 %v1031, %v1732
      %v1734 = vpop.f32.mrb[0].mxu0
      %v1735 = vadd.f32 %v1035, %v1734
      %v1736 = vpop.f32.mrb[0].mxu0
      %v1737 = vadd.f32 %v1031, %v1736
      %v1738 = vpop.f32.mrb[0].mxu0
      %v1739 = vadd.f32 %v1035, %v1738
      %1740 = vmatprep.mubr.bf16.mxu0 %v891
      %1741 = vmatmul.mubr.bf16.gmra.mrb[0].mxu0 %v890
      %v1742 = vpop.f32.mrb[0].mxu0
      %v1743 = vadd.f32 %v1031, %v1742
      %v1744 = vpop.f32.mrb[0].mxu0
      %v1745 = vadd.f32 %v1035, %v1744
      %v1746 = vpop.f32.mrb[0].mxu0
      %v1747 = vadd.f32 %v1031, %v1746
      %v1748 = vpop.f32.mrb[0].mxu0
      %v1749 = vadd.f32 %v1035, %v1748
      %1750 = vmatprep.mubr.bf16.mxu0 %v895
      %1751 = vmatmul.mubr.bf16.gmra.mrb[0].mxu0 %v894
      %v1752 = vpop.f32.mrb[0].mxu0
      %v1753 = vadd.f32 %v1031, %v1752
      %v1754 = vpop.f32.mrb[0].mxu0
      %v1755 = vadd.f32 %v1035, %v1754
      %v1756 = vpop.f32.mrb[0].mxu0
      %v1757 = vadd.f32 %v1031, %v1756
      %v1758 = vpop.f32.mrb[0].mxu0
      %v1759 = vadd.f32 %v1035, %v1758
      %1760 = vdwg.mxu0
      %1761 = vmatprep.subr.bf16.mxu0 %v1497
      %1762 = vmatpush1.bf16.msra.mxu0 %v1496
      %1763 = vmatprep.subr.bf16.mxu0 %v1501
      %1764 = vmatpush1.bf16.msra.mxu0 %v1500
      %1765 = vmatprep.subr.bf16.mxu0 %v1505
      %1766 = vmatpush1.bf16.msra.mxu0 %v1504
      %1767 = vmatprep.subr.bf16.mxu0 %v1509
      %1768 = vmatpush1.bf16.msra.mxu0 %v1508
      %1769 = vmatprep.subr.bf16.mxu0 %v1513
      %1770 = vmatpush1.bf16.msra.mxu0 %v1512
      %1771 = vmatprep.subr.bf16.mxu0 %v1517
      %1772 = vmatpush1.bf16.msra.mxu0 %v1516
      %1773 = vmatprep.subr.bf16.mxu0 %v1521
      %1774 = vmatpush1.bf16.msra.mxu0 %v1520
      %1775 = vmatprep.subr.bf16.mxu0 %v1525
      %1776 = vmatpush1.bf16.msra.mxu0 %v1524
      %1777 = vmatprep.subr.bf16.mxu0 %v1529
      %1778 = vmatpush1.bf16.msra.mxu0 %v1528
      %1779 = vmatprep.subr.bf16.mxu0 %v1533
      %1780 = vmatpush1.bf16.msra.mxu0 %v1532
      %1781 = vmatprep.subr.bf16.mxu0 %v1537
      %1782 = vmatpush1.bf16.msra.mxu0 %v1536
      %1783 = vmatprep.subr.bf16.mxu0 %v1541
      %1784 = vmatpush1.bf16.msra.mxu0 %v1540
      %1785 = vmatprep.subr.bf16.mxu0 %v1545
      %1786 = vmatpush1.bf16.msra.mxu0 %v1544
      %1787 = vmatprep.subr.bf16.mxu0 %v1549
      %1788 = vmatpush1.bf16.msra.mxu0 %v1548
      %1789 = vmatprep.subr.bf16.mxu0 %v1553
      %1790 = vmatpush1.bf16.msra.mxu0 %v1552
      %1791 = vmatprep.subr.bf16.mxu0 %v1557
      %1792 = vmatpush1.bf16.msra.mxu0 %v1556
      %1793 = vmatprep.mubr.bf16.mxu0 %v885
      %1794 = vmatmul.mubr.bf16.gmra.mrb[0].mxu0 %v884
      %v1795 = vpop.f32.mrb[0].mxu0
      %v1796 = vadd.f32 %v1723, %v1795
      %v1797 = vpop.f32.mrb[0].mxu0
      %v1798 = vadd.f32 %v1725, %v1797
      %v1799 = vpop.f32.mrb[0].mxu0
      %v1800 = vadd.f32 %v1727, %v1799
      %v1801 = vpop.f32.mrb[0].mxu0
      %v1802 = vadd.f32 %v1729, %v1801
      %1803 = vmatprep.mubr.bf16.mxu0 %v889
      %1804 = vmatmul.mubr.bf16.gmra.mrb[0].mxu0 %v888
      %v1805 = vpop.f32.mrb[0].mxu0
      %v1806 = vadd.f32 %v1733, %v1805
      %v1807 = vpop.f32.mrb[0].mxu0
      %v1808 = vadd.f32 %v1735, %v1807
      %v1809 = vpop.f32.mrb[0].mxu0
      %v1810 = vadd.f32 %v1737, %v1809
      %v1811 = vpop.f32.mrb[0].mxu0
      %v1812 = vadd.f32 %v1739, %v1811
      %1813 = vmatprep.mubr.bf16.mxu0 %v893
      %1814 = vmatmul.mubr.bf16.gmra.mrb[0].mxu0 %v892
      %v1815 = vpop.f32.mrb[0].mxu0
      %v1816 = vadd.f32 %v1743, %v1815
      %v1817 = vpop.f32.mrb[0].mxu0
      %v1818 = vadd.f32 %v1745, %v1817
      %v1819 = vpop.f32.mrb[0].mxu0
      %v1820 = vadd.f32 %v1747, %v1819
      %v1821 = vpop.f32.mrb[0].mxu0
      %v1822 = vadd.f32 %v1749, %v1821
      %1823 = vmatprep.mubr.bf16.mxu0 %v897
      %1824 = vmatmul.mubr.bf16.gmra.mrb[0].mxu0 %v896
      %v1825 = vpop.f32.mrb[0].mxu0
      %v1826 = vadd.f32 %v1753, %v1825
      %v1827 = vpop.f32.mrb[0].mxu0
      %v1828 = vadd.f32 %v1755, %v1827
      %v1829 = vpop.f32.mrb[0].mxu0
      %v1830 = vadd.f32 %v1757, %v1829
      %v1831 = vpop.f32.mrb[0].mxu0
      %v1832 = vadd.f32 %v1759, %v1831
      %1833 = vdwg.mxu0
      %1834 = vmatprep.subr.bf16.mxu0 %v1435
      %1835 = vmatpush1.bf16.msra.mxu0 %v1434
      %1836 = vmatprep.subr.bf16.mxu0 %v1439
      %1837 = vmatpush1.bf16.msra.mxu0 %v1438
      %1838 = vmatprep.subr.bf16.mxu0 %v1443
      %1839 = vmatpush1.bf16.msra.mxu0 %v1442
      %1840 = vmatprep.subr.bf16.mxu0 %v1447
      %1841 = vmatpush1.bf16.msra.mxu0 %v1446
      %1842 = vmatprep.subr.bf16.mxu0 %v1451
      %1843 = vmatpush1.bf16.msra.mxu0 %v1450
      %1844 = vmatprep.subr.bf16.mxu0 %v1455
      %1845 = vmatpush1.bf16.msra.mxu0 %v1454
      %1846 = vmatprep.subr.bf16.mxu0 %v1459
      %1847 = vmatpush1.bf16.msra.mxu0 %v1458
      %1848 = vmatprep.subr.bf16.mxu0 %v1463
      %1849 = vmatpush1.bf16.msra.mxu0 %v1462
      %1850 = vmatprep.subr.bf16.mxu0 %v1467
      %1851 = vmatpush1.bf16.msra.mxu0 %v1466
      %1852 = vmatprep.subr.bf16.mxu0 %v1471
      %1853 = vmatpush1.bf16.msra.mxu0 %v1470
      %1854 = vmatprep.subr.bf16.mxu0 %v1475
      %1855 = vmatpush1.bf16.msra.mxu0 %v1474
      %1856 = vmatprep.subr.bf16.mxu0 %v1479
      %1857 = vmatpush1.bf16.msra.mxu0 %v1478
      %1858 = vmatprep.subr.bf16.mxu0 %v1483
      %1859 = vmatpush1.bf16.msra.mxu0 %v1482
      %1860 = vmatprep.subr.bf16.mxu0 %v1487
      %1861 = vmatpush1.bf16.msra.mxu0 %v1486
      %1862 = vmatprep.subr.bf16.mxu0 %v1491
      %1863 = vmatpush1.bf16.msra.mxu0 %v1490
      %1864 = vmatprep.subr.bf16.mxu0 %v1495
      %1865 = vmatpush1.bf16.msra.mxu0 %v1494
      %1866 = vmatprep.mubr.bf16.mxu0 %v883
      %1867 = vmatmul.mubr.bf16.gmra.mrb[0].mxu0 %v882
      %v1868 = vpop.f32.mrb[0].mxu0
      %v1869 = vadd.f32 %v1039, %v1868
      %v1870 = vpop.f32.mrb[0].mxu0
      %v1871 = vadd.f32 %v1043, %v1870
      %v1872 = vpop.f32.mrb[0].mxu0
      %v1873 = vadd.f32 %v1039, %v1872
      %v1874 = vpop.f32.mrb[0].mxu0
      %v1875 = vadd.f32 %v1043, %v1874
      %1876 = vmatprep.mubr.bf16.mxu0 %v887
      %1877 = vmatmul.mubr.bf16.gmra.mrb[0].mxu0 %v886
      %v1878 = vpop.f32.mrb[0].mxu0
      %v1879 = vadd.f32 %v1039, %v1878
      %v1880 = vpop.f32.mrb[0].mxu0
      %v1881 = vadd.f32 %v1043, %v1880
      %v1882 = vpop.f32.mrb[0].mxu0
      %v1883 = vadd.f32 %v1039, %v1882
      %v1884 = vpop.f32.mrb[0].mxu0
      %v1885 = vadd.f32 %v1043, %v1884
      %1886 = vmatprep.mubr.bf16.mxu0 %v891
      %1887 = vmatmul.mubr.bf16.gmra.mrb[0].mxu0 %v890
      %v1888 = vpop.f32.mrb[0].mxu0
      %v1889 = vadd.f32 %v1039, %v1888
      %v1890 = vpop.f32.mrb[0].mxu0
      %v1891 = vadd.f32 %v1043, %v1890
      %v1892 = vpop.f32.mrb[0].mxu0
      %v1893 = vadd.f32 %v1039, %v1892
      %v1894 = vpop.f32.mrb[0].mxu0
      %v1895 = vadd.f32 %v1043, %v1894
      %1896 = vmatprep.mubr.bf16.mxu0 %v895
      %1897 = vmatmul.mubr.bf16.gmra.mrb[0].mxu0 %v894
      %v1898 = vpop.f32.mrb[0].mxu0
      %v1899 = vadd.f32 %v1039, %v1898
      %v1900 = vpop.f32.mrb[0].mxu0
      %v1901 = vadd.f32 %v1043, %v1900
      %v1902 = vpop.f32.mrb[0].mxu0
      %v1903 = vadd.f32 %v1039, %v1902
      %v1904 = vpop.f32.mrb[0].mxu0
      %v1905 = vadd.f32 %v1043, %v1904
      %1906 = vdwg.mxu0
      %1907 = vmatprep.subr.bf16.mxu0 %v1499
      %1908 = vmatpush1.bf16.msra.mxu0 %v1498
      %1909 = vmatprep.subr.bf16.mxu0 %v1503
      %1910 = vmatpush1.bf16.msra.mxu0 %v1502
      %1911 = vmatprep.subr.bf16.mxu0 %v1507
      %1912 = vmatpush1.bf16.msra.mxu0 %v1506
      %1913 = vmatprep.subr.bf16.mxu0 %v1511
      %1914 = vmatpush1.bf16.msra.mxu0 %v1510
      %1915 = vmatprep.subr.bf16.mxu0 %v1515
      %1916 = vmatpush1.bf16.msra.mxu0 %v1514
      %1917 = vmatprep.subr.bf16.mxu0 %v1519
      %1918 = vmatpush1.bf16.msra.mxu0 %v1518
      %1919 = vmatprep.subr.bf16.mxu0 %v1523
      %1920 = vmatpush1.bf16.msra.mxu0 %v1522
      %1921 = vmatprep.subr.bf16.mxu0 %v1527
      %1922 = vmatpush1.bf16.msra.mxu0 %v1526
      %1923 = vmatprep.subr.bf16.mxu0 %v1531
      %1924 = vmatpush1.bf16.msra.mxu0 %v1530
      %1925 = vmatprep.subr.bf16.mxu0 %v1535
      %1926 = vmatpush1.bf16.msra.mxu0 %v1534
      %1927 = vmatprep.subr.bf16.mxu0 %v1539
      %1928 = vmatpush1.bf16.msra.mxu0 %v1538
      %1929 = vmatprep.subr.bf16.mxu0 %v1543
      %1930 = vmatpush1.bf16.msra.mxu0 %v1542
      %1931 = vmatprep.subr.bf16.mxu0 %v1547
      %1932 = vmatpush1.bf16.msra.mxu0 %v1546
      %1933 = vmatprep.subr.bf16.mxu0 %v1551
      %1934 = vmatpush1.bf16.msra.mxu0 %v1550
      %1935 = vmatprep.subr.bf16.mxu0 %v1555
      %1936 = vmatpush1.bf16.msra.mxu0 %v1554
      %1937 = vmatprep.subr.bf16.mxu0 %v1559
      %1938 = vmatpush1.bf16.msra.mxu0 %v1558
      %1939 = vmatprep.mubr.bf16.mxu0 %v885
      %1940 = vmatmul.mubr.bf16.gmra.mrb[0].mxu0 %v884
      %v1941 = vpop.f32.mrb[0].mxu0
      %v1942 = vadd.f32 %v1869, %v1941
      %v1943 = vpop.f32.mrb[0].mxu0
      %v1944 = vadd.f32 %v1871, %v1943
      %v1945 = vpop.f32.mrb[0].mxu0
      %v1946 = vadd.f32 %v1873, %v1945
      %v1947 = vpop.f32.mrb[0].mxu0
      %v1948 = vadd.f32 %v1875, %v1947
      %1949 = vmatprep.mubr.bf16.mxu0 %v889
      %1950 = vmatmul.mubr.bf16.gmra.mrb[0].mxu0 %v888
      %v1951 = vpop.f32.mrb[0].mxu0
      %v1952 = vadd.f32 %v1879, %v1951
      %v1953 = vpop.f32.mrb[0].mxu0
      %v1954 = vadd.f32 %v1881, %v1953
      %v1955 = vpop.f32.mrb[0].mxu0
      %v1956 = vadd.f32 %v1883, %v1955
      %v1957 = vpop.f32.mrb[0].mxu0
      %v1958 = vadd.f32 %v1885, %v1957
      %1959 = vmatprep.mubr.bf16.mxu0 %v893
      %1960 = vmatmul.mubr.bf16.gmra.mrb[0].mxu0 %v892
      %v1961 = vpop.f32.mrb[0].mxu0
      %v1962 = vadd.f32 %v1889, %v1961
      %v1963 = vpop.f32.mrb[0].mxu0
      %v1964 = vadd.f32 %v1891, %v1963
      %v1965 = vpop.f32.mrb[0].mxu0
      %v1966 = vadd.f32 %v1893, %v1965
      %v1967 = vpop.f32.mrb[0].mxu0
      %v1968 = vadd.f32 %v1895, %v1967
      %1969 = vmatprep.mubr.bf16.mxu0 %v897
      %1970 = vmatmul.mubr.bf16.gmra.mrb[0].mxu0 %v896
      %v1971 = vpop.f32.mrb[0].mxu0
      %v1972 = vadd.f32 %v1899, %v1971
      %v1973 = vpop.f32.mrb[0].mxu0
      %v1974 = vadd.f32 %v1901, %v1973
      %v1975 = vpop.f32.mrb[0].mxu0
      %v1976 = vadd.f32 %v1903, %v1975
      %v1977 = vpop.f32.mrb[0].mxu0
      %v1978 = vadd.f32 %v1905, %v1977
      %1979 = vdwg.mxu0
      %v1980 = vmax.f32 %v1796, 0.0
      %v1981 = vmax.f32 %v1798, 0.0
      %v1982 = vmax.f32 %v1942, 0.0
      %v1983 = vmax.f32 %v1944, 0.0
      %v1984 = vmax.f32 %v1800, 0.0
      %v1985 = vmax.f32 %v1802, 0.0
      %v1986 = vmax.f32 %v1946, 0.0
      %v1987 = vmax.f32 %v1948, 0.0
      %v1988 = vmax.f32 %v1806, 0.0
      %v1989 = vmax.f32 %v1808, 0.0
      %v1990 = vmax.f32 %v1952, 0.0
      %v1991 = vmax.f32 %v1954, 0.0
      %v1992 = vmax.f32 %v1810, 0.0
      %v1993 = vmax.f32 %v1812, 0.0
      %v1994 = vmax.f32 %v1956, 0.0
      %v1995 = vmax.f32 %v1958, 0.0
      %v1996 = vmax.f32 %v1816, 0.0
      %v1997 = vmax.f32 %v1818, 0.0
      %v1998 = vmax.f32 %v1962, 0.0
      %v1999 = vmax.f32 %v1964, 0.0
      %v2000 = vmax.f32 %v1820, 0.0
      %v2001 = vmax.f32 %v1822, 0.0
      %v2002 = vmax.f32 %v1966, 0.0
      %v2003 = vmax.f32 %v1968, 0.0
      %v2004 = vmax.f32 %v1826, 0.0
      %v2005 = vmax.f32 %v1828, 0.0
      %v2006 = vmax.f32 %v1972, 0.0
      %v2007 = vmax.f32 %v1974, 0.0
      %v2008 = vmax.f32 %v1830, 0.0
      %v2009 = vmax.f32 %v1832, 0.0
      %v2010 = vmax.f32 %v1976, 0.0
      %v2011 = vmax.f32 %v1978, 0.0
      %v2012 = vld [vmem:[%s5] sm:$0xff]
      %v2013 = vld [vmem:[%s5 + $0x8] sm:$0xff]
      %v2014 = vld [vmem:[%s5 + $0x10] sm:$0xff]
      %v2015 = vld [vmem:[%s5 + $0x18] sm:$0xff]
      %v2016 = vld [vmem:[%s5 + $0x20] sm:$0xff]
      %v2017 = vld [vmem:[%s5 + $0x28] sm:$0xff]
      %v2018 = vld [vmem:[%s5 + $0x30] sm:$0xff]
      %v2019 = vld [vmem:[%s5 + $0x38] sm:$0xff]
      %v2020 = vld [vmem:[%s5 + $0x40] sm:$0xff]
      %v2021 = vld [vmem:[%s5 + $0x48] sm:$0xff]
      %v2022 = vld [vmem:[%s5 + $0x50] sm:$0xff]
      %v2023 = vld [vmem:[%s5 + $0x58] sm:$0xff]
      %v2024 = vld [vmem:[%s5 + $0x60] sm:$0xff]
      %v2025 = vld [vmem:[%s5 + $0x68] sm:$0xff]
      %v2026 = vld [vmem:[%s5 + $0x70] sm:$0xff]
      %v2027 = vld [vmem:[%s5 + $0x78] sm:$0xff]
      %v2028 = vld [vmem:[%s5 + $0x80] sm:$0xff]
      %v2029 = vld [vmem:[%s5 + $0x88] sm:$0xff]
      %v2030 = vld [vmem:[%s5 + $0x90] sm:$0xff]
      %v2031 = vld [vmem:[%s5 + $0x98] sm:$0xff]
      %v2032 = vld [vmem:[%s5 + $0xa0] sm:$0xff]
      %v2033 = vld [vmem:[%s5 + $0xa8] sm:$0xff]
      %v2034 = vld [vmem:[%s5 + $0xb0] sm:$0xff]
      %v2035 = vld [vmem:[%s5 + $0xb8] sm:$0xff]
      %v2036 = vld [vmem:[%s5 + $0xc0] sm:$0xff]
      %v2037 = vld [vmem:[%s5 + $0xc8] sm:$0xff]
      %v2038 = vld [vmem:[%s5 + $0xd0] sm:$0xff]
      %v2039 = vld [vmem:[%s5 + $0xd8] sm:$0xff]
      %v2040 = vld [vmem:[%s5 + $0xe0] sm:$0xff]
      %v2041 = vld [vmem:[%s5 + $0xe8] sm:$0xff]
      %v2042 = vld [vmem:[%s5 + $0xf0] sm:$0xff]
      %v2043 = vld [vmem:[%s5 + $0xf8] sm:$0xff]
      %v2044 = vld [vmem:[%s5 + $0x100] sm:$0xff]
      %v2045 = vld [vmem:[%s5 + $0x108] sm:$0xff]
      %v2046 = vld [vmem:[%s5 + $0x110] sm:$0xff]
      %v2047 = vld [vmem:[%s5 + $0x118] sm:$0xff]
      %v2048 = vld [vmem:[%s5 + $0x120] sm:$0xff]
      %v2049 = vld [vmem:[%s5 + $0x128] sm:$0xff]
      %v2050 = vld [vmem:[%s5 + $0x130] sm:$0xff]
      %v2051 = vld [vmem:[%s5 + $0x138] sm:$0xff]
      %v2052 = vld [vmem:[%s5 + $0x140] sm:$0xff]
      %v2053 = vld [vmem:[%s5 + $0x148] sm:$0xff]
      %v2054 = vld [vmem:[%s5 + $0x150] sm:$0xff]
      %v2055 = vld [vmem:[%s5 + $0x158] sm:$0xff]
      %v2056 = vld [vmem:[%s5 + $0x160] sm:$0xff]
      %v2057 = vld [vmem:[%s5 + $0x168] sm:$0xff]
      %v2058 = vld [vmem:[%s5 + $0x170] sm:$0xff]
      %v2059 = vld [vmem:[%s5 + $0x178] sm:$0xff]
      %v2060 = vld [vmem:[%s5 + $0x180] sm:$0xff]
      %v2061 = vld [vmem:[%s5 + $0x188] sm:$0xff]
      %v2062 = vld [vmem:[%s5 + $0x190] sm:$0xff]
      %v2063 = vld [vmem:[%s5 + $0x198] sm:$0xff]
      %v2064 = vld [vmem:[%s5 + $0x1a0] sm:$0xff]
      %v2065 = vld [vmem:[%s5 + $0x1a8] sm:$0xff]
      %v2066 = vld [vmem:[%s5 + $0x1b0] sm:$0xff]
      %v2067 = vld [vmem:[%s5 + $0x1b8] sm:$0xff]
      %v2068 = vld [vmem:[%s5 + $0x1c0] sm:$0xff]
      %v2069 = vld [vmem:[%s5 + $0x1c8] sm:$0xff]
      %v2070 = vld [vmem:[%s5 + $0x1d0] sm:$0xff]
      %v2071 = vld [vmem:[%s5 + $0x1d8] sm:$0xff]
      %v2072 = vld [vmem:[%s5 + $0x1e0] sm:$0xff]
      %v2073 = vld [vmem:[%s5 + $0x1e8] sm:$0xff]
      %v2074 = vld [vmem:[%s5 + $0x1f0] sm:$0xff]
      %v2075 = vld [vmem:[%s5 + $0x1f8] sm:$0xff]
      %v2076 = vld [vmem:[%s6] sm:$0x1]
      %v2078 = vlaneseq
      %v2079 = vshrl.u32 %v2078, 7
      %v2080 = vsub.s32 0, %v2079
      %v2081 = vrot.slane %v2076, %v2080
      %2083 = vmatprep.subr.mxu0 0.0
      %2084 = vmatpush1.msra.mxu0 %v2012
      %2085 = vmatprep.subr.mxu0 0.0
      %2086 = vmatpush1.msra.mxu0 %v2013
      %2087 = vmatprep.subr.mxu0 0.0
      %2088 = vmatpush1.msra.mxu0 %v2014
      %2089 = vmatprep.subr.mxu0 0.0
      %2090 = vmatpush1.msra.mxu0 %v2015
      %2091 = vmatprep.subr.mxu0 0.0
      %2092 = vmatpush1.msra.mxu0 %v2016
      %2093 = vmatprep.subr.mxu0 0.0
      %2094 = vmatpush1.msra.mxu0 %v2017
      %2095 = vmatprep.subr.mxu0 0.0
      %2096 = vmatpush1.msra.mxu0 %v2018
      %2097 = vmatprep.subr.mxu0 0.0
      %2098 = vmatpush1.msra.mxu0 %v2019
      %2099 = vmatprep.subr.mxu0 0.0
      %2100 = vmatpush1.msra.mxu0 %v2020
      %2101 = vmatprep.subr.mxu0 0.0
      %2102 = vmatpush1.msra.mxu0 %v2021
      %2103 = vmatprep.subr.mxu0 0.0
      %2104 = vmatpush1.msra.mxu0 %v2022
      %2105 = vmatprep.subr.mxu0 0.0
      %2106 = vmatpush1.msra.mxu0 %v2023
      %2107 = vmatprep.subr.mxu0 0.0
      %2108 = vmatpush1.msra.mxu0 %v2024
      %2109 = vmatprep.subr.mxu0 0.0
      %2110 = vmatpush1.msra.mxu0 %v2025
      %2111 = vmatprep.subr.mxu0 0.0
      %2112 = vmatpush1.msra.mxu0 %v2026
      %2113 = vmatprep.subr.mxu0 0.0
      %2114 = vmatpush1.msra.mxu0 %v2027
      %2115 = vmatprep.subr.mxu0 0.0
      %2116 = vmatpush1.msra.mxu0 %v2028
      %2117 = vmatprep.subr.mxu0 0.0
      %2118 = vmatpush1.msra.mxu0 %v2029
      %2119 = vmatprep.subr.mxu0 0.0
      %2120 = vmatpush1.msra.mxu0 %v2030
      %2121 = vmatprep.subr.mxu0 0.0
      %2122 = vmatpush1.msra.mxu0 %v2031
      %2123 = vmatprep.subr.mxu0 0.0
      %2124 = vmatpush1.msra.mxu0 %v2032
      %2125 = vmatprep.subr.mxu0 0.0
      %2126 = vmatpush1.msra.mxu0 %v2033
      %2127 = vmatprep.subr.mxu0 0.0
      %2128 = vmatpush1.msra.mxu0 %v2034
      %2129 = vmatprep.subr.mxu0 0.0
      %2130 = vmatpush1.msra.mxu0 %v2035
      %2131 = vmatprep.subr.mxu0 0.0
      %2132 = vmatpush1.msra.mxu0 %v2036
      %2133 = vmatprep.subr.mxu0 0.0
      %2134 = vmatpush1.msra.mxu0 %v2037
      %2135 = vmatprep.subr.mxu0 0.0
      %2136 = vmatpush1.msra.mxu0 %v2038
      %2137 = vmatprep.subr.mxu0 0.0
      %2138 = vmatpush1.msra.mxu0 %v2039
      %2139 = vmatprep.subr.mxu0 0.0
      %2140 = vmatpush1.msra.mxu0 %v2040
      %2141 = vmatprep.subr.mxu0 0.0
      %2142 = vmatpush1.msra.mxu0 %v2041
      %2143 = vmatprep.subr.mxu0 0.0
      %2144 = vmatpush1.msra.mxu0 %v2042
      %2145 = vmatprep.subr.mxu0 0.0
      %2146 = vmatpush1.msra.mxu0 %v2043
      %2147 = vmatprep.mubr.f32.mxu0 %v1981
      %2148 = vmatmul.mubr.f32.gmra.mrb[0].mxu0 %v1980
      %v2149 = vpop.f32.mrb[0].mxu0
      %v2150 = vadd.f32 %v2081, %v2149
      %v2151 = vpop.f32.mrb[0].mxu0
      %2152 = vmatprep.mubr.f32.mxu0 %v1985
      %2153 = vmatmul.mubr.f32.gmra.mrb[0].mxu0 %v1984
      %v2154 = vpop.f32.mrb[0].mxu0
      %v2155 = vadd.f32 %v2081, %v2154
      %v2156 = vpop.f32.mrb[0].mxu0
      %2157 = vmatprep.mubr.f32.mxu0 %v1989
      %2158 = vmatmul.mubr.f32.gmra.mrb[0].mxu0 %v1988
      %v2159 = vpop.f32.mrb[0].mxu0
      %v2160 = vadd.f32 %v2081, %v2159
      %v2161 = vpop.f32.mrb[0].mxu0
      %2162 = vmatprep.mubr.f32.mxu0 %v1993
      %2163 = vmatmul.mubr.f32.gmra.mrb[0].mxu0 %v1992
      %v2164 = vpop.f32.mrb[0].mxu0
      %v2165 = vadd.f32 %v2081, %v2164
      %v2166 = vpop.f32.mrb[0].mxu0
      %2167 = vmatprep.mubr.f32.mxu0 %v1997
      %2168 = vmatmul.mubr.f32.gmra.mrb[0].mxu0 %v1996
      %v2169 = vpop.f32.mrb[0].mxu0
      %v2170 = vadd.f32 %v2081, %v2169
      %v2171 = vpop.f32.mrb[0].mxu0
      %2172 = vmatprep.mubr.f32.mxu0 %v2001
      %2173 = vmatmul.mubr.f32.gmra.mrb[0].mxu0 %v2000
      %v2174 = vpop.f32.mrb[0].mxu0
      %v2175 = vadd.f32 %v2081, %v2174
      %v2176 = vpop.f32.mrb[0].mxu0
      %2177 = vmatprep.mubr.f32.mxu0 %v2005
      %2178 = vmatmul.mubr.f32.gmra.mrb[0].mxu0 %v2004
      %v2179 = vpop.f32.mrb[0].mxu0
      %v2180 = vadd.f32 %v2081, %v2179
      %v2181 = vpop.f32.mrb[0].mxu0
      %2182 = vmatprep.mubr.f32.mxu0 %v2009
      %2183 = vmatmul.mubr.f32.gmra.mrb[0].mxu0 %v2008
      %v2184 = vpop.f32.mrb[0].mxu0
      %v2185 = vadd.f32 %v2081, %v2184
      %v2186 = vpop.f32.mrb[0].mxu0
      %2187 = vdwg.mxu0
      %2188 = vmatprep.subr.mxu0 0.0
      %2189 = vmatpush1.msra.mxu0 %v2044
      %2190 = vmatprep.subr.mxu0 0.0
      %2191 = vmatpush1.msra.mxu0 %v2045
      %2192 = vmatprep.subr.mxu0 0.0
      %2193 = vmatpush1.msra.mxu0 %v2046
      %2194 = vmatprep.subr.mxu0 0.0
      %2195 = vmatpush1.msra.mxu0 %v2047
      %2196 = vmatprep.subr.mxu0 0.0
      %2197 = vmatpush1.msra.mxu0 %v2048
      %2198 = vmatprep.subr.mxu0 0.0
      %2199 = vmatpush1.msra.mxu0 %v2049
      %2200 = vmatprep.subr.mxu0 0.0
      %2201 = vmatpush1.msra.mxu0 %v2050
      %2202 = vmatprep.subr.mxu0 0.0
      %2203 = vmatpush1.msra.mxu0 %v2051
      %2204 = vmatprep.subr.mxu0 0.0
      %2205 = vmatpush1.msra.mxu0 %v2052
      %2206 = vmatprep.subr.mxu0 0.0
      %2207 = vmatpush1.msra.mxu0 %v2053
      %2208 = vmatprep.subr.mxu0 0.0
      %2209 = vmatpush1.msra.mxu0 %v2054
      %2210 = vmatprep.subr.mxu0 0.0
      %2211 = vmatpush1.msra.mxu0 %v2055
      %2212 = vmatprep.subr.mxu0 0.0
      %2213 = vmatpush1.msra.mxu0 %v2056
      %2214 = vmatprep.subr.mxu0 0.0
      %2215 = vmatpush1.msra.mxu0 %v2057
      %2216 = vmatprep.subr.mxu0 0.0
      %2217 = vmatpush1.msra.mxu0 %v2058
      %2218 = vmatprep.subr.mxu0 0.0
      %2219 = vmatpush1.msra.mxu0 %v2059
      %2220 = vmatprep.subr.mxu0 0.0
      %2221 = vmatpush1.msra.mxu0 %v2060
      %2222 = vmatprep.subr.mxu0 0.0
      %2223 = vmatpush1.msra.mxu0 %v2061
      %2224 = vmatprep.subr.mxu0 0.0
      %2225 = vmatpush1.msra.mxu0 %v2062
      %2226 = vmatprep.subr.mxu0 0.0
      %2227 = vmatpush1.msra.mxu0 %v2063
      %2228 = vmatprep.subr.mxu0 0.0
      %2229 = vmatpush1.msra.mxu0 %v2064
      %2230 = vmatprep.subr.mxu0 0.0
      %2231 = vmatpush1.msra.mxu0 %v2065
      %2232 = vmatprep.subr.mxu0 0.0
      %2233 = vmatpush1.msra.mxu0 %v2066
      %2234 = vmatprep.subr.mxu0 0.0
      %2235 = vmatpush1.msra.mxu0 %v2067
      %2236 = vmatprep.subr.mxu0 0.0
      %2237 = vmatpush1.msra.mxu0 %v2068
      %2238 = vmatprep.subr.mxu0 0.0
      %2239 = vmatpush1.msra.mxu0 %v2069
      %2240 = vmatprep.subr.mxu0 0.0
      %2241 = vmatpush1.msra.mxu0 %v2070
      %2242 = vmatprep.subr.mxu0 0.0
      %2243 = vmatpush1.msra.mxu0 %v2071
      %2244 = vmatprep.subr.mxu0 0.0
      %2245 = vmatpush1.msra.mxu0 %v2072
      %2246 = vmatprep.subr.mxu0 0.0
      %2247 = vmatpush1.msra.mxu0 %v2073
      %2248 = vmatprep.subr.mxu0 0.0
      %2249 = vmatpush1.msra.mxu0 %v2074
      %2250 = vmatprep.subr.mxu0 0.0
      %2251 = vmatpush1.msra.mxu0 %v2075
      %2252 = vmatprep.mubr.f32.mxu0 %v1983
      %2253 = vmatmul.mubr.f32.gmra.mrb[0].mxu0 %v1982
      %v2254 = vpop.f32.mrb[0].mxu0
      %v2255 = vadd.f32 %v2150, %v2254
      %v2256 = vpop.f32.mrb[0].mxu0
      %2257 = vmatprep.mubr.f32.mxu0 %v1987
      %2258 = vmatmul.mubr.f32.gmra.mrb[0].mxu0 %v1986
      %v2259 = vpop.f32.mrb[0].mxu0
      %v2260 = vadd.f32 %v2155, %v2259
      %v2261 = vpop.f32.mrb[0].mxu0
      %2262 = vmatprep.mubr.f32.mxu0 %v1991
      %2263 = vmatmul.mubr.f32.gmra.mrb[0].mxu0 %v1990
      %v2264 = vpop.f32.mrb[0].mxu0
      %v2265 = vadd.f32 %v2160, %v2264
      %v2266 = vpop.f32.mrb[0].mxu0
      %2267 = vmatprep.mubr.f32.mxu0 %v1995
      %2268 = vmatmul.mubr.f32.gmra.mrb[0].mxu0 %v1994
      %v2269 = vpop.f32.mrb[0].mxu0
      %v2270 = vadd.f32 %v2165, %v2269
      %v2271 = vpop.f32.mrb[0].mxu0
      %2272 = vmatprep.mubr.f32.mxu0 %v1999
      %2273 = vmatmul.mubr.f32.gmra.mrb[0].mxu0 %v1998
      %v2274 = vpop.f32.mrb[0].mxu0
      %v2275 = vadd.f32 %v2170, %v2274
      %v2276 = vpop.f32.mrb[0].mxu0
      %2277 = vmatprep.mubr.f32.mxu0 %v2003
      %2278 = vmatmul.mubr.f32.gmra.mrb[0].mxu0 %v2002
      %v2279 = vpop.f32.mrb[0].mxu0
      %v2280 = vadd.f32 %v2175, %v2279
      %v2281 = vpop.f32.mrb[0].mxu0
      %2282 = vmatprep.mubr.f32.mxu0 %v2007
      %2283 = vmatmul.mubr.f32.gmra.mrb[0].mxu0 %v2006
      %v2284 = vpop.f32.mrb[0].mxu0
      %v2285 = vadd.f32 %v2180, %v2284
      %v2286 = vpop.f32.mrb[0].mxu0
      %2287 = vmatprep.mubr.f32.mxu0 %v2011
      %2288 = vmatmul.mubr.f32.gmra.mrb[0].mxu0 %v2010
      %v2289 = vpop.f32.mrb[0].mxu0
      %v2290 = vadd.f32 %v2185, %v2289
      %v2291 = vpop.f32.mrb[0].mxu0
      %2292 = vdwg.mxu0
      %2293 = vst.msk [vmem:[%s553] sm:$0xff] %vm599, %v2255
      %2294 = vst.msk [vmem:[%s553 + $0x8] sm:$0xff] %vm599, %v2260
      %2295 = vst.msk [vmem:[%s553 + $0x10] sm:$0xff] %vm599, %v2265
      %2296 = vst.msk [vmem:[%s553 + $0x18] sm:$0xff] %vm599, %v2270
      %2297 = vst.msk [vmem:[%s553 + $0x20] sm:$0xff] %vm599, %v2275
      %2298 = vst.msk [vmem:[%s553 + $0x28] sm:$0xff] %vm599, %v2280
      %2299 = vst.msk [vmem:[%s553 + $0x30] sm:$0xff] %vm599, %v2285
      %2300 = vst.msk [vmem:[%s553 + $0x38] sm:$0xff] %vm599, %v2290
      %v2301 = vld [vmem:[%s8] sm:$0xff]
      %v2302 = vld [vmem:[%s8 + $0x8] sm:$0xff]
      %v2303 = vld [vmem:[%s8 + $0x10] sm:$0xff]
      %v2304 = vld [vmem:[%s8 + $0x18] sm:$0xff]
      %v2305 = vld [vmem:[%s544] sm:$0xf]
      %v2307 = vlaneseq
      %v2308 = vshrl.u32 %v2307, 7
      %v2309 = vsub.s32 0, %v2308
      %v2310 = vrot.slane %v2305, %v2309
      %v2311 = vlaneseq
      %v2312 = vshrl.u32 %v2311, 7
      %v2313 = vsub.s32 1, %v2312
      %v2314 = vrot.slane %v2305, %v2313
      %v2315 = vlaneseq
      %v2316 = vshrl.u32 %v2315, 7
      %v2317 = vsub.s32 2, %v2316
      %v2318 = vrot.slane %v2305, %v2317
      %v2319 = vlaneseq
      %v2320 = vshrl.u32 %v2319, 7
      %v2321 = vsub.s32 3, %v2320
      %v2322 = vrot.slane %v2305, %v2321
      %v2328 = vsel %vm599, %v2255, 0
      %v2331 = vsel %vm599, %v2260, 0
      %v2334 = vsel %vm599, %v2265, 0
      %v2337 = vsel %vm599, %v2270, 0
      %v2340 = vsel %vm599, %v2275, 0
      %v2343 = vsel %vm599, %v2280, 0
      %v2346 = vsel %vm599, %v2285, 0
      %v2349 = vsel %vm599, %v2290, 0
      %2351 = vmatprep.subr.mxu0 %v2302
      %2352 = vmatpush1.msra.mxu0 %v2301
      %2353 = vmatprep.subr.mxu0 0.0
      %2354 = vmatpush1.msra.mxu0 0.0
      %2355 = vmatprep.subr.mxu0 0.0
      %2356 = vmatpush1.msra.mxu0 0.0
      %2357 = vmatprep.subr.mxu0 0.0
      %2358 = vmatpush1.msra.mxu0 0.0
      %2359 = vmatprep.subr.mxu0 0.0
      %2360 = vmatpush1.msra.mxu0 0.0
      %2361 = vmatprep.subr.mxu0 0.0
      %2362 = vmatpush1.msra.mxu0 0.0
      %2363 = vmatprep.subr.mxu0 0.0
      %2364 = vmatpush1.msra.mxu0 0.0
      %2365 = vmatprep.subr.mxu0 0.0
      %2366 = vmatpush1.msra.mxu0 0.0
      %2367 = vmatprep.subr.mxu0 0.0
      %2368 = vmatpush1.msra.mxu0 0.0
      %2369 = vmatprep.subr.mxu0 0.0
      %2370 = vmatpush1.msra.mxu0 0.0
      %2371 = vmatprep.subr.mxu0 0.0
      %2372 = vmatpush1.msra.mxu0 0.0
      %2373 = vmatprep.subr.mxu0 0.0
      %2374 = vmatpush1.msra.mxu0 0.0
      %2375 = vmatprep.subr.mxu0 0.0
      %2376 = vmatpush1.msra.mxu0 0.0
      %2377 = vmatprep.subr.mxu0 0.0
      %2378 = vmatpush1.msra.mxu0 0.0
      %2379 = vmatprep.subr.mxu0 0.0
      %2380 = vmatpush1.msra.mxu0 0.0
      %2381 = vmatprep.subr.mxu0 0.0
      %2382 = vmatpush1.msra.mxu0 0.0
      %2383 = vmatprep.subr.mxu0 0.0
      %2384 = vmatpush1.msra.mxu0 0.0
      %2385 = vmatprep.subr.mxu0 0.0
      %2386 = vmatpush1.msra.mxu0 0.0
      %2387 = vmatprep.subr.mxu0 0.0
      %2388 = vmatpush1.msra.mxu0 0.0
      %2389 = vmatprep.subr.mxu0 0.0
      %2390 = vmatpush1.msra.mxu0 0.0
      %2391 = vmatprep.subr.mxu0 0.0
      %2392 = vmatpush1.msra.mxu0 0.0
      %2393 = vmatprep.subr.mxu0 0.0
      %2394 = vmatpush1.msra.mxu0 0.0
      %2395 = vmatprep.subr.mxu0 0.0
      %2396 = vmatpush1.msra.mxu0 0.0
      %2397 = vmatprep.subr.mxu0 0.0
      %2398 = vmatpush1.msra.mxu0 0.0
      %2399 = vmatprep.subr.mxu0 0.0
      %2400 = vmatpush1.msra.mxu0 0.0
      %2401 = vmatprep.subr.mxu0 0.0
      %2402 = vmatpush1.msra.mxu0 0.0
      %2403 = vmatprep.subr.mxu0 0.0
      %2404 = vmatpush1.msra.mxu0 0.0
      %2405 = vmatprep.subr.mxu0 0.0
      %2406 = vmatpush1.msra.mxu0 0.0
      %2407 = vmatprep.subr.mxu0 0.0
      %2408 = vmatpush1.msra.mxu0 0.0
      %2409 = vmatprep.subr.mxu0 0.0
      %2410 = vmatpush1.msra.mxu0 0.0
      %2411 = vmatprep.subr.mxu0 0.0
      %2412 = vmatpush1.msra.mxu0 0.0
      %2413 = vmatprep.subr.mxu0 0.0
      %2414 = vmatpush1.msra.mxu0 0.0
      %2415 = vmatprep.mubr.f32.mxu0 0.0
      %2416 = vmatmul.mubr.f32.gmra.mrb[0].mxu0 %v2328
      %v2417 = vpop.f32.mrb[0].mxu0
      %v2418 = vadd.f32 %v2310, %v2417
      %v2419 = vpop.f32.mrb[0].mxu0
      %v2420 = vadd.f32 %v2314, %v2419
      %2421 = vmatprep.mubr.f32.mxu0 0.0
      %2422 = vmatmul.mubr.f32.gmra.mrb[0].mxu0 %v2331
      %v2423 = vpop.f32.mrb[0].mxu0
      %v2424 = vadd.f32 %v2310, %v2423
      %v2425 = vpop.f32.mrb[0].mxu0
      %v2426 = vadd.f32 %v2314, %v2425
      %2427 = vmatprep.mubr.f32.mxu0 0.0
      %2428 = vmatmul.mubr.f32.gmra.mrb[0].mxu0 %v2334
      %v2429 = vpop.f32.mrb[0].mxu0
      %v2430 = vadd.f32 %v2310, %v2429
      %v2431 = vpop.f32.mrb[0].mxu0
      %v2432 = vadd.f32 %v2314, %v2431
      %2433 = vmatprep.mubr.f32.mxu0 0.0
      %2434 = vmatmul.mubr.f32.gmra.mrb[0].mxu0 %v2337
      %v2435 = vpop.f32.mrb[0].mxu0
      %v2436 = vadd.f32 %v2310, %v2435
      %v2437 = vpop.f32.mrb[0].mxu0
      %v2438 = vadd.f32 %v2314, %v2437
      %2439 = vmatprep.mubr.f32.mxu0 0.0
      %2440 = vmatmul.mubr.f32.gmra.mrb[0].mxu0 %v2340
      %v2441 = vpop.f32.mrb[0].mxu0
      %v2442 = vadd.f32 %v2310, %v2441
      %v2443 = vpop.f32.mrb[0].mxu0
      %v2444 = vadd.f32 %v2314, %v2443
      %2445 = vmatprep.mubr.f32.mxu0 0.0
      %2446 = vmatmul.mubr.f32.gmra.mrb[0].mxu0 %v2343
      %v2447 = vpop.f32.mrb[0].mxu0
      %v2448 = vadd.f32 %v2310, %v2447
      %v2449 = vpop.f32.mrb[0].mxu0
      %v2450 = vadd.f32 %v2314, %v2449
      %2451 = vmatprep.mubr.f32.mxu0 0.0
      %2452 = vmatmul.mubr.f32.gmra.mrb[0].mxu0 %v2346
      %v2453 = vpop.f32.mrb[0].mxu0
      %v2454 = vadd.f32 %v2310, %v2453
      %v2455 = vpop.f32.mrb[0].mxu0
      %v2456 = vadd.f32 %v2314, %v2455
      %2457 = vmatprep.mubr.f32.mxu0 0.0
      %2458 = vmatmul.mubr.f32.gmra.mrb[0].mxu0 %v2349
      %v2459 = vpop.f32.mrb[0].mxu0
      %v2460 = vadd.f32 %v2310, %v2459
      %v2461 = vpop.f32.mrb[0].mxu0
      %v2462 = vadd.f32 %v2314, %v2461
      %2463 = vdwg.mxu0
      %2464 = vmatprep.subr.mxu0 %v2304
      %2465 = vmatpush1.msra.mxu0 %v2303
      %2466 = vmatprep.subr.mxu0 0.0
      %2467 = vmatpush1.msra.mxu0 0.0
      %2468 = vmatprep.subr.mxu0 0.0
      %2469 = vmatpush1.msra.mxu0 0.0
      %2470 = vmatprep.subr.mxu0 0.0
      %2471 = vmatpush1.msra.mxu0 0.0
      %2472 = vmatprep.subr.mxu0 0.0
      %2473 = vmatpush1.msra.mxu0 0.0
      %2474 = vmatprep.subr.mxu0 0.0
      %2475 = vmatpush1.msra.mxu0 0.0
      %2476 = vmatprep.subr.mxu0 0.0
      %2477 = vmatpush1.msra.mxu0 0.0
      %2478 = vmatprep.subr.mxu0 0.0
      %2479 = vmatpush1.msra.mxu0 0.0
      %2480 = vmatprep.subr.mxu0 0.0
      %2481 = vmatpush1.msra.mxu0 0.0
      %2482 = vmatprep.subr.mxu0 0.0
      %2483 = vmatpush1.msra.mxu0 0.0
      %2484 = vmatprep.subr.mxu0 0.0
      %2485 = vmatpush1.msra.mxu0 0.0
      %2486 = vmatprep.subr.mxu0 0.0
      %2487 = vmatpush1.msra.mxu0 0.0
      %2488 = vmatprep.subr.mxu0 0.0
      %2489 = vmatpush1.msra.mxu0 0.0
      %2490 = vmatprep.subr.mxu0 0.0
      %2491 = vmatpush1.msra.mxu0 0.0
      %2492 = vmatprep.subr.mxu0 0.0
      %2493 = vmatpush1.msra.mxu0 0.0
      %2494 = vmatprep.subr.mxu0 0.0
      %2495 = vmatpush1.msra.mxu0 0.0
      %2496 = vmatprep.subr.mxu0 0.0
      %2497 = vmatpush1.msra.mxu0 0.0
      %2498 = vmatprep.subr.mxu0 0.0
      %2499 = vmatpush1.msra.mxu0 0.0
      %2500 = vmatprep.subr.mxu0 0.0
      %2501 = vmatpush1.msra.mxu0 0.0
      %2502 = vmatprep.subr.mxu0 0.0
      %2503 = vmatpush1.msra.mxu0 0.0
      %2504 = vmatprep.subr.mxu0 0.0
      %2505 = vmatpush1.msra.mxu0 0.0
      %2506 = vmatprep.subr.mxu0 0.0
      %2507 = vmatpush1.msra.mxu0 0.0
      %2508 = vmatprep.subr.mxu0 0.0
      %2509 = vmatpush1.msra.mxu0 0.0
      %2510 = vmatprep.subr.mxu0 0.0
      %2511 = vmatpush1.msra.mxu0 0.0
      %2512 = vmatprep.subr.mxu0 0.0
      %2513 = vmatpush1.msra.mxu0 0.0
      %2514 = vmatprep.subr.mxu0 0.0
      %2515 = vmatpush1.msra.mxu0 0.0
      %2516 = vmatprep.subr.mxu0 0.0
      %2517 = vmatpush1.msra.mxu0 0.0
      %2518 = vmatprep.subr.mxu0 0.0
      %2519 = vmatpush1.msra.mxu0 0.0
      %2520 = vmatprep.subr.mxu0 0.0
      %2521 = vmatpush1.msra.mxu0 0.0
      %2522 = vmatprep.subr.mxu0 0.0
      %2523 = vmatpush1.msra.mxu0 0.0
      %2524 = vmatprep.subr.mxu0 0.0
      %2525 = vmatpush1.msra.mxu0 0.0
      %2526 = vmatprep.subr.mxu0 0.0
      %2527 = vmatpush1.msra.mxu0 0.0
      %2528 = vmatprep.mubr.f32.mxu0 0.0
      %2529 = vmatmul.mubr.f32.gmra.mrb[0].mxu0 %v2328
      %v2530 = vpop.f32.mrb[0].mxu0
      %v2531 = vadd.f32 %v2318, %v2530
      %v2532 = vpop.f32.mrb[0].mxu0
      %v2533 = vadd.f32 %v2322, %v2532
      %2534 = vmatprep.mubr.f32.mxu0 0.0
      %2535 = vmatmul.mubr.f32.gmra.mrb[0].mxu0 %v2331
      %v2536 = vpop.f32.mrb[0].mxu0
      %v2537 = vadd.f32 %v2318, %v2536
      %v2538 = vpop.f32.mrb[0].mxu0
      %v2539 = vadd.f32 %v2322, %v2538
      %2540 = vmatprep.mubr.f32.mxu0 0.0
      %2541 = vmatmul.mubr.f32.gmra.mrb[0].mxu0 %v2334
      %v2542 = vpop.f32.mrb[0].mxu0
      %v2543 = vadd.f32 %v2318, %v2542
      %v2544 = vpop.f32.mrb[0].mxu0
      %v2545 = vadd.f32 %v2322, %v2544
      %2546 = vmatprep.mubr.f32.mxu0 0.0
      %2547 = vmatmul.mubr.f32.gmra.mrb[0].mxu0 %v2337
      %v2548 = vpop.f32.mrb[0].mxu0
      %v2549 = vadd.f32 %v2318, %v2548
      %v2550 = vpop.f32.mrb[0].mxu0
      %v2551 = vadd.f32 %v2322, %v2550
      %2552 = vmatprep.mubr.f32.mxu0 0.0
      %2553 = vmatmul.mubr.f32.gmra.mrb[0].mxu0 %v2340
      %v2554 = vpop.f32.mrb[0].mxu0
      %v2555 = vadd.f32 %v2318, %v2554
      %v2556 = vpop.f32.mrb[0].mxu0
      %v2557 = vadd.f32 %v2322, %v2556
      %2558 = vmatprep.mubr.f32.mxu0 0.0
      %2559 = vmatmul.mubr.f32.gmra.mrb[0].mxu0 %v2343
      %v2560 = vpop.f32.mrb[0].mxu0
      %v2561 = vadd.f32 %v2318, %v2560
      %v2562 = vpop.f32.mrb[0].mxu0
      %v2563 = vadd.f32 %v2322, %v2562
      %2564 = vmatprep.mubr.f32.mxu0 0.0
      %2565 = vmatmul.mubr.f32.gmra.mrb[0].mxu0 %v2346
      %v2566 = vpop.f32.mrb[0].mxu0
      %v2567 = vadd.f32 %v2318, %v2566
      %v2568 = vpop.f32.mrb[0].mxu0
      %v2569 = vadd.f32 %v2322, %v2568
      %2570 = vmatprep.mubr.f32.mxu0 0.0
      %2571 = vmatmul.mubr.f32.gmra.mrb[0].mxu0 %v2349
      %v2572 = vpop.f32.mrb[0].mxu0
      %v2573 = vadd.f32 %v2318, %v2572
      %v2574 = vpop.f32.mrb[0].mxu0
      %v2575 = vadd.f32 %v2322, %v2574
      %2576 = vdwg.mxu0
      %v2577 = vmax.f32 %v2418, 0.0
      %v2578 = vmax.f32 %v2420, 0.0
      %v2579 = vmax.f32 %v2531, 0.0
      %v2580 = vmax.f32 %v2533, 0.0
      %v2581 = vmax.f32 %v2424, 0.0
      %v2582 = vmax.f32 %v2426, 0.0
      %v2583 = vmax.f32 %v2537, 0.0
      %v2584 = vmax.f32 %v2539, 0.0
      %v2585 = vmax.f32 %v2430, 0.0
      %v2586 = vmax.f32 %v2432, 0.0
      %v2587 = vmax.f32 %v2543, 0.0
      %v2588 = vmax.f32 %v2545, 0.0
      %v2589 = vmax.f32 %v2436, 0.0
      %v2590 = vmax.f32 %v2438, 0.0
      %v2591 = vmax.f32 %v2549, 0.0
      %v2592 = vmax.f32 %v2551, 0.0
      %v2593 = vmax.f32 %v2442, 0.0
      %v2594 = vmax.f32 %v2444, 0.0
      %v2595 = vmax.f32 %v2555, 0.0
      %v2596 = vmax.f32 %v2557, 0.0
      %v2597 = vmax.f32 %v2448, 0.0
      %v2598 = vmax.f32 %v2450, 0.0
      %v2599 = vmax.f32 %v2561, 0.0
      %v2600 = vmax.f32 %v2563, 0.0
      %v2601 = vmax.f32 %v2454, 0.0
      %v2602 = vmax.f32 %v2456, 0.0
      %v2603 = vmax.f32 %v2567, 0.0
      %v2604 = vmax.f32 %v2569, 0.0
      %v2605 = vmax.f32 %v2460, 0.0
      %v2606 = vmax.f32 %v2462, 0.0
      %v2607 = vmax.f32 %v2573, 0.0
      %v2608 = vmax.f32 %v2575, 0.0
      %v2609 = vpack.c.bf16 %v2581, %v2577
      %v2610 = vpack.c.bf16 %v2582, %v2578
      %v2611 = vpack.c.bf16 %v2583, %v2579
      %v2612 = vpack.c.bf16 %v2584, %v2580
      %v2613 = vpack.c.bf16 %v2589, %v2585
      %v2614 = vpack.c.bf16 %v2590, %v2586
      %v2615 = vpack.c.bf16 %v2591, %v2587
      %v2616 = vpack.c.bf16 %v2592, %v2588
      %v2617 = vpack.c.bf16 %v2597, %v2593
      %v2618 = vpack.c.bf16 %v2598, %v2594
      %v2619 = vpack.c.bf16 %v2599, %v2595
      %v2620 = vpack.c.bf16 %v2600, %v2596
      %v2621 = vpack.c.bf16 %v2605, %v2601
      %v2622 = vpack.c.bf16 %v2606, %v2602
      %v2623 = vpack.c.bf16 %v2607, %v2603
      %v2624 = vpack.c.bf16 %v2608, %v2604
      %v2625 = vld [vmem:[%s9] sm:$0xff]
      %v2626 = vld [vmem:[%s9 + $0x8] sm:$0xff]
      %v2627 = vld [vmem:[%s9 + $0x10] sm:$0xff]
      %v2628 = vld [vmem:[%s9 + $0x18] sm:$0xff]
      %v2629 = vld [vmem:[%s9 + $0x20] sm:$0xff]
      %v2630 = vld [vmem:[%s9 + $0x28] sm:$0xff]
      %v2631 = vld [vmem:[%s9 + $0x30] sm:$0xff]
      %v2632 = vld [vmem:[%s9 + $0x38] sm:$0xff]
      %v2633 = vld [vmem:[%s9 + $0x40] sm:$0xff]
      %v2634 = vld [vmem:[%s9 + $0x48] sm:$0xff]
      %v2635 = vld [vmem:[%s9 + $0x50] sm:$0xff]
      %v2636 = vld [vmem:[%s9 + $0x58] sm:$0xff]
      %v2637 = vld [vmem:[%s9 + $0x60] sm:$0xff]
      %v2638 = vld [vmem:[%s9 + $0x68] sm:$0xff]
      %v2639 = vld [vmem:[%s9 + $0x70] sm:$0xff]
      %v2640 = vld [vmem:[%s9 + $0x78] sm:$0xff]
      %v2641 = vld [vmem:[%s9 + $0x80] sm:$0xff]
      %v2642 = vld [vmem:[%s9 + $0x88] sm:$0xff]
      %v2643 = vld [vmem:[%s9 + $0x90] sm:$0xff]
      %v2644 = vld [vmem:[%s9 + $0x98] sm:$0xff]
      %v2645 = vld [vmem:[%s9 + $0xa0] sm:$0xff]
      %v2646 = vld [vmem:[%s9 + $0xa8] sm:$0xff]
      %v2647 = vld [vmem:[%s9 + $0xb0] sm:$0xff]
      %v2648 = vld [vmem:[%s9 + $0xb8] sm:$0xff]
      %v2649 = vld [vmem:[%s9 + $0xc0] sm:$0xff]
      %v2650 = vld [vmem:[%s9 + $0xc8] sm:$0xff]
      %v2651 = vld [vmem:[%s9 + $0xd0] sm:$0xff]
      %v2652 = vld [vmem:[%s9 + $0xd8] sm:$0xff]
      %v2653 = vld [vmem:[%s9 + $0xe0] sm:$0xff]
      %v2654 = vld [vmem:[%s9 + $0xe8] sm:$0xff]
      %v2655 = vld [vmem:[%s9 + $0xf0] sm:$0xff]
      %v2656 = vld [vmem:[%s9 + $0xf8] sm:$0xff]
      %v2657 = vld [vmem:[%s9 + $0x100] sm:$0xff]
      %v2658 = vld [vmem:[%s9 + $0x108] sm:$0xff]
      %v2659 = vld [vmem:[%s9 + $0x110] sm:$0xff]
      %v2660 = vld [vmem:[%s9 + $0x118] sm:$0xff]
      %v2661 = vld [vmem:[%s9 + $0x120] sm:$0xff]
      %v2662 = vld [vmem:[%s9 + $0x128] sm:$0xff]
      %v2663 = vld [vmem:[%s9 + $0x130] sm:$0xff]
      %v2664 = vld [vmem:[%s9 + $0x138] sm:$0xff]
      %v2665 = vld [vmem:[%s9 + $0x140] sm:$0xff]
      %v2666 = vld [vmem:[%s9 + $0x148] sm:$0xff]
      %v2667 = vld [vmem:[%s9 + $0x150] sm:$0xff]
      %v2668 = vld [vmem:[%s9 + $0x158] sm:$0xff]
      %v2669 = vld [vmem:[%s9 + $0x160] sm:$0xff]
      %v2670 = vld [vmem:[%s9 + $0x168] sm:$0xff]
      %v2671 = vld [vmem:[%s9 + $0x170] sm:$0xff]
      %v2672 = vld [vmem:[%s9 + $0x178] sm:$0xff]
      %v2673 = vld [vmem:[%s9 + $0x180] sm:$0xff]
      %v2674 = vld [vmem:[%s9 + $0x188] sm:$0xff]
      %v2675 = vld [vmem:[%s9 + $0x190] sm:$0xff]
      %v2676 = vld [vmem:[%s9 + $0x198] sm:$0xff]
      %v2677 = vld [vmem:[%s9 + $0x1a0] sm:$0xff]
      %v2678 = vld [vmem:[%s9 + $0x1a8] sm:$0xff]
      %v2679 = vld [vmem:[%s9 + $0x1b0] sm:$0xff]
      %v2680 = vld [vmem:[%s9 + $0x1b8] sm:$0xff]
      %v2681 = vld [vmem:[%s9 + $0x1c0] sm:$0xff]
      %v2682 = vld [vmem:[%s9 + $0x1c8] sm:$0xff]
      %v2683 = vld [vmem:[%s9 + $0x1d0] sm:$0xff]
      %v2684 = vld [vmem:[%s9 + $0x1d8] sm:$0xff]
      %v2685 = vld [vmem:[%s9 + $0x1e0] sm:$0xff]
      %v2686 = vld [vmem:[%s9 + $0x1e8] sm:$0xff]
      %v2687 = vld [vmem:[%s9 + $0x1f0] sm:$0xff]
      %v2688 = vld [vmem:[%s9 + $0x1f8] sm:$0xff]
      %v2689 = vld [vmem:[%s9 + $0x200] sm:$0xff]
      %v2690 = vld [vmem:[%s9 + $0x208] sm:$0xff]
      %v2691 = vld [vmem:[%s9 + $0x210] sm:$0xff]
      %v2692 = vld [vmem:[%s9 + $0x218] sm:$0xff]
      %v2693 = vld [vmem:[%s9 + $0x220] sm:$0xff]
      %v2694 = vld [vmem:[%s9 + $0x228] sm:$0xff]
      %v2695 = vld [vmem:[%s9 + $0x230] sm:$0xff]
      %v2696 = vld [vmem:[%s9 + $0x238] sm:$0xff]
      %v2697 = vld [vmem:[%s9 + $0x240] sm:$0xff]
      %v2698 = vld [vmem:[%s9 + $0x248] sm:$0xff]
      %v2699 = vld [vmem:[%s9 + $0x250] sm:$0xff]
      %v2700 = vld [vmem:[%s9 + $0x258] sm:$0xff]
      %v2701 = vld [vmem:[%s9 + $0x260] sm:$0xff]
      %v2702 = vld [vmem:[%s9 + $0x268] sm:$0xff]
      %v2703 = vld [vmem:[%s9 + $0x270] sm:$0xff]
      %v2704 = vld [vmem:[%s9 + $0x278] sm:$0xff]
      %v2705 = vld [vmem:[%s9 + $0x280] sm:$0xff]
      %v2706 = vld [vmem:[%s9 + $0x288] sm:$0xff]
      %v2707 = vld [vmem:[%s9 + $0x290] sm:$0xff]
      %v2708 = vld [vmem:[%s9 + $0x298] sm:$0xff]
      %v2709 = vld [vmem:[%s9 + $0x2a0] sm:$0xff]
      %v2710 = vld [vmem:[%s9 + $0x2a8] sm:$0xff]
      %v2711 = vld [vmem:[%s9 + $0x2b0] sm:$0xff]
      %v2712 = vld [vmem:[%s9 + $0x2b8] sm:$0xff]
      %v2713 = vld [vmem:[%s9 + $0x2c0] sm:$0xff]
      %v2714 = vld [vmem:[%s9 + $0x2c8] sm:$0xff]
      %v2715 = vld [vmem:[%s9 + $0x2d0] sm:$0xff]
      %v2716 = vld [vmem:[%s9 + $0x2d8] sm:$0xff]
      %v2717 = vld [vmem:[%s9 + $0x2e0] sm:$0xff]
      %v2718 = vld [vmem:[%s9 + $0x2e8] sm:$0xff]
      %v2719 = vld [vmem:[%s9 + $0x2f0] sm:$0xff]
      %v2720 = vld [vmem:[%s9 + $0x2f8] sm:$0xff]
      %v2721 = vld [vmem:[%s9 + $0x300] sm:$0xff]
      %v2722 = vld [vmem:[%s9 + $0x308] sm:$0xff]
      %v2723 = vld [vmem:[%s9 + $0x310] sm:$0xff]
      %v2724 = vld [vmem:[%s9 + $0x318] sm:$0xff]
      %v2725 = vld [vmem:[%s9 + $0x320] sm:$0xff]
      %v2726 = vld [vmem:[%s9 + $0x328] sm:$0xff]
      %v2727 = vld [vmem:[%s9 + $0x330] sm:$0xff]
      %v2728 = vld [vmem:[%s9 + $0x338] sm:$0xff]
      %v2729 = vld [vmem:[%s9 + $0x340] sm:$0xff]
      %v2730 = vld [vmem:[%s9 + $0x348] sm:$0xff]
      %v2731 = vld [vmem:[%s9 + $0x350] sm:$0xff]
      %v2732 = vld [vmem:[%s9 + $0x358] sm:$0xff]
      %v2733 = vld [vmem:[%s9 + $0x360] sm:$0xff]
      %v2734 = vld [vmem:[%s9 + $0x368] sm:$0xff]
      %v2735 = vld [vmem:[%s9 + $0x370] sm:$0xff]
      %v2736 = vld [vmem:[%s9 + $0x378] sm:$0xff]
      %v2737 = vld [vmem:[%s9 + $0x380] sm:$0xff]
      %v2738 = vld [vmem:[%s9 + $0x388] sm:$0xff]
      %v2739 = vld [vmem:[%s9 + $0x390] sm:$0xff]
      %v2740 = vld [vmem:[%s9 + $0x398] sm:$0xff]
      %v2741 = vld [vmem:[%s9 + $0x3a0] sm:$0xff]
      %v2742 = vld [vmem:[%s9 + $0x3a8] sm:$0xff]
      %v2743 = vld [vmem:[%s9 + $0x3b0] sm:$0xff]
      %v2744 = vld [vmem:[%s9 + $0x3b8] sm:$0xff]
      %v2745 = vld [vmem:[%s9 + $0x3c0] sm:$0xff]
      %v2746 = vld [vmem:[%s9 + $0x3c8] sm:$0xff]
      %v2747 = vld [vmem:[%s9 + $0x3d0] sm:$0xff]
      %v2748 = vld [vmem:[%s9 + $0x3d8] sm:$0xff]
      %v2749 = vld [vmem:[%s9 + $0x3e0] sm:$0xff]
      %v2750 = vld [vmem:[%s9 + $0x3e8] sm:$0xff]
      %v2751 = vld [vmem:[%s9 + $0x3f0] sm:$0xff]
      %v2752 = vld [vmem:[%s9 + $0x3f8] sm:$0xff]
      %v2753 = vld [vmem:[%s10] sm:$0xf]
      %v2755 = vlaneseq
      %v2756 = vshrl.u32 %v2755, 7
      %v2757 = vsub.s32 0, %v2756
      %v2758 = vrot.slane %v2753, %v2757
      %v2759 = vlaneseq
      %v2760 = vshrl.u32 %v2759, 7
      %v2761 = vsub.s32 1, %v2760
      %v2762 = vrot.slane %v2753, %v2761
      %v2763 = vlaneseq
      %v2764 = vshrl.u32 %v2763, 7
      %v2765 = vsub.s32 2, %v2764
      %v2766 = vrot.slane %v2753, %v2765
      %v2767 = vlaneseq
      %v2768 = vshrl.u32 %v2767, 7
      %v2769 = vsub.s32 3, %v2768
      %v2770 = vrot.slane %v2753, %v2769
      %v2903 = vunpack.c.l.b16 %v2625
      %v2904 = vunpack.c.h.b16 %v2625
      %v2905 = vunpack.c.l.b16 %v2626
      %v2906 = vunpack.c.h.b16 %v2626
      %v2907 = vunpack.c.l.b16 %v2627
      %v2908 = vunpack.c.h.b16 %v2627
      %v2909 = vunpack.c.l.b16 %v2628
      %v2910 = vunpack.c.h.b16 %v2628
      %v2911 = vunpack.c.l.b16 %v2629
      %v2912 = vunpack.c.h.b16 %v2629
      %v2913 = vunpack.c.l.b16 %v2630
      %v2914 = vunpack.c.h.b16 %v2630
      %v2915 = vunpack.c.l.b16 %v2631
      %v2916 = vunpack.c.h.b16 %v2631
      %v2917 = vunpack.c.l.b16 %v2632
      %v2918 = vunpack.c.h.b16 %v2632
      %v2919 = vunpack.c.l.b16 %v2633
      %v2920 = vunpack.c.h.b16 %v2633
      %v2921 = vunpack.c.l.b16 %v2634
      %v2922 = vunpack.c.h.b16 %v2634
      %v2923 = vunpack.c.l.b16 %v2635
      %v2924 = vunpack.c.h.b16 %v2635
      %v2925 = vunpack.c.l.b16 %v2636
      %v2926 = vunpack.c.h.b16 %v2636
      %v2927 = vunpack.c.l.b16 %v2637
      %v2928 = vunpack.c.h.b16 %v2637
      %v2929 = vunpack.c.l.b16 %v2638
      %v2930 = vunpack.c.h.b16 %v2638
      %v2931 = vunpack.c.l.b16 %v2639
      %v2932 = vunpack.c.h.b16 %v2639
      %v2933 = vunpack.c.l.b16 %v2640
      %v2934 = vunpack.c.h.b16 %v2640
      %v2935 = vunpack.c.l.b16 %v2641
      %v2936 = vunpack.c.h.b16 %v2641
      %v2937 = vunpack.c.l.b16 %v2642
      %v2938 = vunpack.c.h.b16 %v2642
      %v2939 = vunpack.c.l.b16 %v2643
      %v2940 = vunpack.c.h.b16 %v2643
      %v2941 = vunpack.c.l.b16 %v2644
      %v2942 = vunpack.c.h.b16 %v2644
      %v2943 = vunpack.c.l.b16 %v2645
      %v2944 = vunpack.c.h.b16 %v2645
      %v2945 = vunpack.c.l.b16 %v2646
      %v2946 = vunpack.c.h.b16 %v2646
      %v2947 = vunpack.c.l.b16 %v2647
      %v2948 = vunpack.c.h.b16 %v2647
      %v2949 = vunpack.c.l.b16 %v2648
      %v2950 = vunpack.c.h.b16 %v2648
      %v2951 = vunpack.c.l.b16 %v2649
      %v2952 = vunpack.c.h.b16 %v2649
      %v2953 = vunpack.c.l.b16 %v2650
      %v2954 = vunpack.c.h.b16 %v2650
      %v2955 = vunpack.c.l.b16 %v2651
      %v2956 = vunpack.c.h.b16 %v2651
      %v2957 = vunpack.c.l.b16 %v2652
      %v2958 = vunpack.c.h.b16 %v2652
      %v2959 = vunpack.c.l.b16 %v2653
      %v2960 = vunpack.c.h.b16 %v2653
      %v2961 = vunpack.c.l.b16 %v2654
      %v2962 = vunpack.c.h.b16 %v2654
      %v2963 = vunpack.c.l.b16 %v2655
      %v2964 = vunpack.c.h.b16 %v2655
      %v2965 = vunpack.c.l.b16 %v2656
      %v2966 = vunpack.c.h.b16 %v2656
      %v2967 = vunpack.c.l.b16 %v2657
      %v2968 = vunpack.c.h.b16 %v2657
      %v2969 = vunpack.c.l.b16 %v2658
      %v2970 = vunpack.c.h.b16 %v2658
      %v2971 = vunpack.c.l.b16 %v2659
      %v2972 = vunpack.c.h.b16 %v2659
      %v2973 = vunpack.c.l.b16 %v2660
      %v2974 = vunpack.c.h.b16 %v2660
      %v2975 = vunpack.c.l.b16 %v2661
      %v2976 = vunpack.c.h.b16 %v2661
      %v2977 = vunpack.c.l.b16 %v2662
      %v2978 = vunpack.c.h.b16 %v2662
      %v2979 = vunpack.c.l.b16 %v2663
      %v2980 = vunpack.c.h.b16 %v2663
      %v2981 = vunpack.c.l.b16 %v2664
      %v2982 = vunpack.c.h.b16 %v2664
      %v2983 = vunpack.c.l.b16 %v2665
      %v2984 = vunpack.c.h.b16 %v2665
      %v2985 = vunpack.c.l.b16 %v2666
      %v2986 = vunpack.c.h.b16 %v2666
      %v2987 = vunpack.c.l.b16 %v2667
      %v2988 = vunpack.c.h.b16 %v2667
      %v2989 = vunpack.c.l.b16 %v2668
      %v2990 = vunpack.c.h.b16 %v2668
      %v2991 = vunpack.c.l.b16 %v2669
      %v2992 = vunpack.c.h.b16 %v2669
      %v2993 = vunpack.c.l.b16 %v2670
      %v2994 = vunpack.c.h.b16 %v2670
      %v2995 = vunpack.c.l.b16 %v2671
      %v2996 = vunpack.c.h.b16 %v2671
      %v2997 = vunpack.c.l.b16 %v2672
      %v2998 = vunpack.c.h.b16 %v2672
      %v2999 = vunpack.c.l.b16 %v2673
      %v3000 = vunpack.c.h.b16 %v2673
      %v3001 = vunpack.c.l.b16 %v2674
      %v3002 = vunpack.c.h.b16 %v2674
      %v3003 = vunpack.c.l.b16 %v2675
      %v3004 = vunpack.c.h.b16 %v2675
      %v3005 = vunpack.c.l.b16 %v2676
      %v3006 = vunpack.c.h.b16 %v2676
      %v3007 = vunpack.c.l.b16 %v2677
      %v3008 = vunpack.c.h.b16 %v2677
      %v3009 = vunpack.c.l.b16 %v2678
      %v3010 = vunpack.c.h.b16 %v2678
      %v3011 = vunpack.c.l.b16 %v2679
      %v3012 = vunpack.c.h.b16 %v2679
      %v3013 = vunpack.c.l.b16 %v2680
      %v3014 = vunpack.c.h.b16 %v2680
      %v3015 = vunpack.c.l.b16 %v2681
      %v3016 = vunpack.c.h.b16 %v2681
      %v3017 = vunpack.c.l.b16 %v2682
      %v3018 = vunpack.c.h.b16 %v2682
      %v3019 = vunpack.c.l.b16 %v2683
      %v3020 = vunpack.c.h.b16 %v2683
      %v3021 = vunpack.c.l.b16 %v2684
      %v3022 = vunpack.c.h.b16 %v2684
      %v3023 = vunpack.c.l.b16 %v2685
      %v3024 = vunpack.c.h.b16 %v2685
      %v3025 = vunpack.c.l.b16 %v2686
      %v3026 = vunpack.c.h.b16 %v2686
      %v3027 = vunpack.c.l.b16 %v2687
      %v3028 = vunpack.c.h.b16 %v2687
      %v3029 = vunpack.c.l.b16 %v2688
      %v3030 = vunpack.c.h.b16 %v2688
      %v3031 = vunpack.c.l.b16 %v2689
      %v3032 = vunpack.c.h.b16 %v2689
      %v3033 = vunpack.c.l.b16 %v2690
      %v3034 = vunpack.c.h.b16 %v2690
      %v3035 = vunpack.c.l.b16 %v2691
      %v3036 = vunpack.c.h.b16 %v2691
      %v3037 = vunpack.c.l.b16 %v2692
      %v3038 = vunpack.c.h.b16 %v2692
      %v3039 = vunpack.c.l.b16 %v2693
      %v3040 = vunpack.c.h.b16 %v2693
      %v3041 = vunpack.c.l.b16 %v2694
      %v3042 = vunpack.c.h.b16 %v2694
      %v3043 = vunpack.c.l.b16 %v2695
      %v3044 = vunpack.c.h.b16 %v2695
      %v3045 = vunpack.c.l.b16 %v2696
      %v3046 = vunpack.c.h.b16 %v2696
      %v3047 = vunpack.c.l.b16 %v2697
      %v3048 = vunpack.c.h.b16 %v2697
      %v3049 = vunpack.c.l.b16 %v2698
      %v3050 = vunpack.c.h.b16 %v2698
      %v3051 = vunpack.c.l.b16 %v2699
      %v3052 = vunpack.c.h.b16 %v2699
      %v3053 = vunpack.c.l.b16 %v2700
      %v3054 = vunpack.c.h.b16 %v2700
      %v3055 = vunpack.c.l.b16 %v2701
      %v3056 = vunpack.c.h.b16 %v2701
      %v3057 = vunpack.c.l.b16 %v2702
      %v3058 = vunpack.c.h.b16 %v2702
      %v3059 = vunpack.c.l.b16 %v2703
      %v3060 = vunpack.c.h.b16 %v2703
      %v3061 = vunpack.c.l.b16 %v2704
      %v3062 = vunpack.c.h.b16 %v2704
      %v3063 = vunpack.c.l.b16 %v2705
      %v3064 = vunpack.c.h.b16 %v2705
      %v3065 = vunpack.c.l.b16 %v2706
      %v3066 = vunpack.c.h.b16 %v2706
      %v3067 = vunpack.c.l.b16 %v2707
      %v3068 = vunpack.c.h.b16 %v2707
      %v3069 = vunpack.c.l.b16 %v2708
      %v3070 = vunpack.c.h.b16 %v2708
      %v3071 = vunpack.c.l.b16 %v2709
      %v3072 = vunpack.c.h.b16 %v2709
      %v3073 = vunpack.c.l.b16 %v2710
      %v3074 = vunpack.c.h.b16 %v2710
      %v3075 = vunpack.c.l.b16 %v2711
      %v3076 = vunpack.c.h.b16 %v2711
      %v3077 = vunpack.c.l.b16 %v2712
      %v3078 = vunpack.c.h.b16 %v2712
      %v3079 = vunpack.c.l.b16 %v2713
      %v3080 = vunpack.c.h.b16 %v2713
      %v3081 = vunpack.c.l.b16 %v2714
      %v3082 = vunpack.c.h.b16 %v2714
      %v3083 = vunpack.c.l.b16 %v2715
      %v3084 = vunpack.c.h.b16 %v2715
      %v3085 = vunpack.c.l.b16 %v2716
      %v3086 = vunpack.c.h.b16 %v2716
      %v3087 = vunpack.c.l.b16 %v2717
      %v3088 = vunpack.c.h.b16 %v2717
      %v3089 = vunpack.c.l.b16 %v2718
      %v3090 = vunpack.c.h.b16 %v2718
      %v3091 = vunpack.c.l.b16 %v2719
      %v3092 = vunpack.c.h.b16 %v2719
      %v3093 = vunpack.c.l.b16 %v2720
      %v3094 = vunpack.c.h.b16 %v2720
      %v3095 = vunpack.c.l.b16 %v2721
      %v3096 = vunpack.c.h.b16 %v2721
      %v3097 = vunpack.c.l.b16 %v2722
      %v3098 = vunpack.c.h.b16 %v2722
      %v3099 = vunpack.c.l.b16 %v2723
      %v3100 = vunpack.c.h.b16 %v2723
      %v3101 = vunpack.c.l.b16 %v2724
      %v3102 = vunpack.c.h.b16 %v2724
      %v3103 = vunpack.c.l.b16 %v2725
      %v3104 = vunpack.c.h.b16 %v2725
      %v3105 = vunpack.c.l.b16 %v2726
      %v3106 = vunpack.c.h.b16 %v2726
      %v3107 = vunpack.c.l.b16 %v2727
      %v3108 = vunpack.c.h.b16 %v2727
      %v3109 = vunpack.c.l.b16 %v2728
      %v3110 = vunpack.c.h.b16 %v2728
      %v3111 = vunpack.c.l.b16 %v2729
      %v3112 = vunpack.c.h.b16 %v2729
      %v3113 = vunpack.c.l.b16 %v2730
      %v3114 = vunpack.c.h.b16 %v2730
      %v3115 = vunpack.c.l.b16 %v2731
      %v3116 = vunpack.c.h.b16 %v2731
      %v3117 = vunpack.c.l.b16 %v2732
      %v3118 = vunpack.c.h.b16 %v2732
      %v3119 = vunpack.c.l.b16 %v2733
      %v3120 = vunpack.c.h.b16 %v2733
      %v3121 = vunpack.c.l.b16 %v2734
      %v3122 = vunpack.c.h.b16 %v2734
      %v3123 = vunpack.c.l.b16 %v2735
      %v3124 = vunpack.c.h.b16 %v2735
      %v3125 = vunpack.c.l.b16 %v2736
      %v3126 = vunpack.c.h.b16 %v2736
      %v3127 = vunpack.c.l.b16 %v2737
      %v3128 = vunpack.c.h.b16 %v2737
      %v3129 = vunpack.c.l.b16 %v2738
      %v3130 = vunpack.c.h.b16 %v2738
      %v3131 = vunpack.c.l.b16 %v2739
      %v3132 = vunpack.c.h.b16 %v2739
      %v3133 = vunpack.c.l.b16 %v2740
      %v3134 = vunpack.c.h.b16 %v2740
      %v3135 = vunpack.c.l.b16 %v2741
      %v3136 = vunpack.c.h.b16 %v2741
      %v3137 = vunpack.c.l.b16 %v2742
      %v3138 = vunpack.c.h.b16 %v2742
      %v3139 = vunpack.c.l.b16 %v2743
      %v3140 = vunpack.c.h.b16 %v2743
      %v3141 = vunpack.c.l.b16 %v2744
      %v3142 = vunpack.c.h.b16 %v2744
      %v3143 = vunpack.c.l.b16 %v2745
      %v3144 = vunpack.c.h.b16 %v2745
      %v3145 = vunpack.c.l.b16 %v2746
      %v3146 = vunpack.c.h.b16 %v2746
      %v3147 = vunpack.c.l.b16 %v2747
      %v3148 = vunpack.c.h.b16 %v2747
      %v3149 = vunpack.c.l.b16 %v2748
      %v3150 = vunpack.c.h.b16 %v2748
      %v3151 = vunpack.c.l.b16 %v2749
      %v3152 = vunpack.c.h.b16 %v2749
      %v3153 = vunpack.c.l.b16 %v2750
      %v3154 = vunpack.c.h.b16 %v2750
      %v3155 = vunpack.c.l.b16 %v2751
      %v3156 = vunpack.c.h.b16 %v2751
      %v3157 = vunpack.c.l.b16 %v2752
      %v3158 = vunpack.c.h.b16 %v2752
      %v3159 = vpack.c.b16 %v2907, %v2903
      %v3160 = vpack.c.b16 %v2908, %v2904
      %v3161 = vpack.c.b16 %v2909, %v2905
      %v3162 = vpack.c.b16 %v2910, %v2906
      %v3163 = vpack.c.b16 %v2915, %v2911
      %v3164 = vpack.c.b16 %v2916, %v2912
      %v3165 = vpack.c.b16 %v2917, %v2913
      %v3166 = vpack.c.b16 %v2918, %v2914
      %v3167 = vpack.c.b16 %v2923, %v2919
      %v3168 = vpack.c.b16 %v2924, %v2920
      %v3169 = vpack.c.b16 %v2925, %v2921
      %v3170 = vpack.c.b16 %v2926, %v2922
      %v3171 = vpack.c.b16 %v2931, %v2927
      %v3172 = vpack.c.b16 %v2932, %v2928
      %v3173 = vpack.c.b16 %v2933, %v2929
      %v3174 = vpack.c.b16 %v2934, %v2930
      %v3175 = vpack.c.b16 %v2939, %v2935
      %v3176 = vpack.c.b16 %v2940, %v2936
      %v3177 = vpack.c.b16 %v2941, %v2937
      %v3178 = vpack.c.b16 %v2942, %v2938
      %v3179 = vpack.c.b16 %v2947, %v2943
      %v3180 = vpack.c.b16 %v2948, %v2944
      %v3181 = vpack.c.b16 %v2949, %v2945
      %v3182 = vpack.c.b16 %v2950, %v2946
      %v3183 = vpack.c.b16 %v2955, %v2951
      %v3184 = vpack.c.b16 %v2956, %v2952
      %v3185 = vpack.c.b16 %v2957, %v2953
      %v3186 = vpack.c.b16 %v2958, %v2954
      %v3187 = vpack.c.b16 %v2963, %v2959
      %v3188 = vpack.c.b16 %v2964, %v2960
      %v3189 = vpack.c.b16 %v2965, %v2961
      %v3190 = vpack.c.b16 %v2966, %v2962
      %v3191 = vpack.c.b16 %v2971, %v2967
      %v3192 = vpack.c.b16 %v2972, %v2968
      %v3193 = vpack.c.b16 %v2973, %v2969
      %v3194 = vpack.c.b16 %v2974, %v2970
      %v3195 = vpack.c.b16 %v2979, %v2975
      %v3196 = vpack.c.b16 %v2980, %v2976
      %v3197 = vpack.c.b16 %v2981, %v2977
      %v3198 = vpack.c.b16 %v2982, %v2978
      %v3199 = vpack.c.b16 %v2987, %v2983
      %v3200 = vpack.c.b16 %v2988, %v2984
      %v3201 = vpack.c.b16 %v2989, %v2985
      %v3202 = vpack.c.b16 %v2990, %v2986
      %v3203 = vpack.c.b16 %v2995, %v2991
      %v3204 = vpack.c.b16 %v2996, %v2992
      %v3205 = vpack.c.b16 %v2997, %v2993
      %v3206 = vpack.c.b16 %v2998, %v2994
      %v3207 = vpack.c.b16 %v3003, %v2999
      %v3208 = vpack.c.b16 %v3004, %v3000
      %v3209 = vpack.c.b16 %v3005, %v3001
      %v3210 = vpack.c.b16 %v3006, %v3002
      %v3211 = vpack.c.b16 %v3011, %v3007
      %v3212 = vpack.c.b16 %v3012, %v3008
      %v3213 = vpack.c.b16 %v3013, %v3009
      %v3214 = vpack.c.b16 %v3014, %v3010
      %v3215 = vpack.c.b16 %v3019, %v3015
      %v3216 = vpack.c.b16 %v3020, %v3016
      %v3217 = vpack.c.b16 %v3021, %v3017
      %v3218 = vpack.c.b16 %v3022, %v3018
      %v3219 = vpack.c.b16 %v3027, %v3023
      %v3220 = vpack.c.b16 %v3028, %v3024
      %v3221 = vpack.c.b16 %v3029, %v3025
      %v3222 = vpack.c.b16 %v3030, %v3026
      %v3223 = vpack.c.b16 %v3035, %v3031
      %v3224 = vpack.c.b16 %v3036, %v3032
      %v3225 = vpack.c.b16 %v3037, %v3033
      %v3226 = vpack.c.b16 %v3038, %v3034
      %v3227 = vpack.c.b16 %v3043, %v3039
      %v3228 = vpack.c.b16 %v3044, %v3040
      %v3229 = vpack.c.b16 %v3045, %v3041
      %v3230 = vpack.c.b16 %v3046, %v3042
      %v3231 = vpack.c.b16 %v3051, %v3047
      %v3232 = vpack.c.b16 %v3052, %v3048
      %v3233 = vpack.c.b16 %v3053, %v3049
      %v3234 = vpack.c.b16 %v3054, %v3050
      %v3235 = vpack.c.b16 %v3059, %v3055
      %v3236 = vpack.c.b16 %v3060, %v3056
      %v3237 = vpack.c.b16 %v3061, %v3057
      %v3238 = vpack.c.b16 %v3062, %v3058
      %v3239 = vpack.c.b16 %v3067, %v3063
      %v3240 = vpack.c.b16 %v3068, %v3064
      %v3241 = vpack.c.b16 %v3069, %v3065
      %v3242 = vpack.c.b16 %v3070, %v3066
      %v3243 = vpack.c.b16 %v3075, %v3071
      %v3244 = vpack.c.b16 %v3076, %v3072
      %v3245 = vpack.c.b16 %v3077, %v3073
      %v3246 = vpack.c.b16 %v3078, %v3074
      %v3247 = vpack.c.b16 %v3083, %v3079
      %v3248 = vpack.c.b16 %v3084, %v3080
      %v3249 = vpack.c.b16 %v3085, %v3081
      %v3250 = vpack.c.b16 %v3086, %v3082
      %v3251 = vpack.c.b16 %v3091, %v3087
      %v3252 = vpack.c.b16 %v3092, %v3088
      %v3253 = vpack.c.b16 %v3093, %v3089
      %v3254 = vpack.c.b16 %v3094, %v3090
      %v3255 = vpack.c.b16 %v3099, %v3095
      %v3256 = vpack.c.b16 %v3100, %v3096
      %v3257 = vpack.c.b16 %v3101, %v3097
      %v3258 = vpack.c.b16 %v3102, %v3098
      %v3259 = vpack.c.b16 %v3107, %v3103
      %v3260 = vpack.c.b16 %v3108, %v3104
      %v3261 = vpack.c.b16 %v3109, %v3105
      %v3262 = vpack.c.b16 %v3110, %v3106
      %v3263 = vpack.c.b16 %v3115, %v3111
      %v3264 = vpack.c.b16 %v3116, %v3112
      %v3265 = vpack.c.b16 %v3117, %v3113
      %v3266 = vpack.c.b16 %v3118, %v3114
      %v3267 = vpack.c.b16 %v3123, %v3119
      %v3268 = vpack.c.b16 %v3124, %v3120
      %v3269 = vpack.c.b16 %v3125, %v3121
      %v3270 = vpack.c.b16 %v3126, %v3122
      %v3271 = vpack.c.b16 %v3131, %v3127
      %v3272 = vpack.c.b16 %v3132, %v3128
      %v3273 = vpack.c.b16 %v3133, %v3129
      %v3274 = vpack.c.b16 %v3134, %v3130
      %v3275 = vpack.c.b16 %v3139, %v3135
      %v3276 = vpack.c.b16 %v3140, %v3136
      %v3277 = vpack.c.b16 %v3141, %v3137
      %v3278 = vpack.c.b16 %v3142, %v3138
      %v3279 = vpack.c.b16 %v3147, %v3143
      %v3280 = vpack.c.b16 %v3148, %v3144
      %v3281 = vpack.c.b16 %v3149, %v3145
      %v3282 = vpack.c.b16 %v3150, %v3146
      %v3283 = vpack.c.b16 %v3155, %v3151
      %v3284 = vpack.c.b16 %v3156, %v3152
      %v3285 = vpack.c.b16 %v3157, %v3153
      %v3286 = vpack.c.b16 %v3158, %v3154
      %3415 = vmatprep.subr.bf16.mxu0 %v3160
      %3416 = vmatpush1.bf16.msra.mxu0 %v3159
      %3417 = vmatprep.subr.bf16.mxu0 %v3164
      %3418 = vmatpush1.bf16.msra.mxu0 %v3163
      %3419 = vmatprep.subr.bf16.mxu0 %v3168
      %3420 = vmatpush1.bf16.msra.mxu0 %v3167
      %3421 = vmatprep.subr.bf16.mxu0 %v3172
      %3422 = vmatpush1.bf16.msra.mxu0 %v3171
      %3423 = vmatprep.subr.bf16.mxu0 %v3176
      %3424 = vmatpush1.bf16.msra.mxu0 %v3175
      %3425 = vmatprep.subr.bf16.mxu0 %v3180
      %3426 = vmatpush1.bf16.msra.mxu0 %v3179
      %3427 = vmatprep.subr.bf16.mxu0 %v3184
      %3428 = vmatpush1.bf16.msra.mxu0 %v3183
      %3429 = vmatprep.subr.bf16.mxu0 %v3188
      %3430 = vmatpush1.bf16.msra.mxu0 %v3187
      %3431 = vmatprep.subr.bf16.mxu0 %v3192
      %3432 = vmatpush1.bf16.msra.mxu0 %v3191
      %3433 = vmatprep.subr.bf16.mxu0 %v3196
      %3434 = vmatpush1.bf16.msra.mxu0 %v3195
      %3435 = vmatprep.subr.bf16.mxu0 %v3200
      %3436 = vmatpush1.bf16.msra.mxu0 %v3199
      %3437 = vmatprep.subr.bf16.mxu0 %v3204
      %3438 = vmatpush1.bf16.msra.mxu0 %v3203
      %3439 = vmatprep.subr.bf16.mxu0 %v3208
      %3440 = vmatpush1.bf16.msra.mxu0 %v3207
      %3441 = vmatprep.subr.bf16.mxu0 %v3212
      %3442 = vmatpush1.bf16.msra.mxu0 %v3211
      %3443 = vmatprep.subr.bf16.mxu0 %v3216
      %3444 = vmatpush1.bf16.msra.mxu0 %v3215
      %3445 = vmatprep.subr.bf16.mxu0 %v3220
      %3446 = vmatpush1.bf16.msra.mxu0 %v3219
      %3447 = vmatprep.mubr.bf16.mxu0 %v2610
      %3448 = vmatmul.mubr.bf16.gmra.mrb[0].mxu0 %v2609
      %v3449 = vpop.f32.mrb[0].mxu0
      %v3450 = vadd.f32 %v2758, %v3449
      %v3451 = vpop.f32.mrb[0].mxu0
      %v3452 = vadd.f32 %v2762, %v3451
      %v3453 = vpop.f32.mrb[0].mxu0
      %v3454 = vadd.f32 %v2758, %v3453
      %v3455 = vpop.f32.mrb[0].mxu0
      %v3456 = vadd.f32 %v2762, %v3455
      %3457 = vmatprep.mubr.bf16.mxu0 %v2614
      %3458 = vmatmul.mubr.bf16.gmra.mrb[0].mxu0 %v2613
      %v3459 = vpop.f32.mrb[0].mxu0
      %v3460 = vadd.f32 %v2758, %v3459
      %v3461 = vpop.f32.mrb[0].mxu0
      %v3462 = vadd.f32 %v2762, %v3461
      %v3463 = vpop.f32.mrb[0].mxu0
      %v3464 = vadd.f32 %v2758, %v3463
      %v3465 = vpop.f32.mrb[0].mxu0
      %v3466 = vadd.f32 %v2762, %v3465
      %3467 = vmatprep.mubr.bf16.mxu0 %v2618
      %3468 = vmatmul.mubr.bf16.gmra.mrb[0].mxu0 %v2617
      %v3469 = vpop.f32.mrb[0].mxu0
      %v3470 = vadd.f32 %v2758, %v3469
      %v3471 = vpop.f32.mrb[0].mxu0
      %v3472 = vadd.f32 %v2762, %v3471
      %v3473 = vpop.f32.mrb[0].mxu0
      %v3474 = vadd.f32 %v2758, %v3473
      %v3475 = vpop.f32.mrb[0].mxu0
      %v3476 = vadd.f32 %v2762, %v3475
      %3477 = vmatprep.mubr.bf16.mxu0 %v2622
      %3478 = vmatmul.mubr.bf16.gmra.mrb[0].mxu0 %v2621
      %v3479 = vpop.f32.mrb[0].mxu0
      %v3480 = vadd.f32 %v2758, %v3479
      %v3481 = vpop.f32.mrb[0].mxu0
      %v3482 = vadd.f32 %v2762, %v3481
      %v3483 = vpop.f32.mrb[0].mxu0
      %v3484 = vadd.f32 %v2758, %v3483
      %v3485 = vpop.f32.mrb[0].mxu0
      %v3486 = vadd.f32 %v2762, %v3485
      %3487 = vdwg.mxu0
      %3488 = vmatprep.subr.bf16.mxu0 %v3224
      %3489 = vmatpush1.bf16.msra.mxu0 %v3223
      %3490 = vmatprep.subr.bf16.mxu0 %v3228
      %3491 = vmatpush1.bf16.msra.mxu0 %v3227
      %3492 = vmatprep.subr.bf16.mxu0 %v3232
      %3493 = vmatpush1.bf16.msra.mxu0 %v3231
      %3494 = vmatprep.subr.bf16.mxu0 %v3236
      %3495 = vmatpush1.bf16.msra.mxu0 %v3235
      %3496 = vmatprep.subr.bf16.mxu0 %v3240
      %3497 = vmatpush1.bf16.msra.mxu0 %v3239
      %3498 = vmatprep.subr.bf16.mxu0 %v3244
      %3499 = vmatpush1.bf16.msra.mxu0 %v3243
      %3500 = vmatprep.subr.bf16.mxu0 %v3248
      %3501 = vmatpush1.bf16.msra.mxu0 %v3247
      %3502 = vmatprep.subr.bf16.mxu0 %v3252
      %3503 = vmatpush1.bf16.msra.mxu0 %v3251
      %3504 = vmatprep.subr.bf16.mxu0 %v3256
      %3505 = vmatpush1.bf16.msra.mxu0 %v3255
      %3506 = vmatprep.subr.bf16.mxu0 %v3260
      %3507 = vmatpush1.bf16.msra.mxu0 %v3259
      %3508 = vmatprep.subr.bf16.mxu0 %v3264
      %3509 = vmatpush1.bf16.msra.mxu0 %v3263
      %3510 = vmatprep.subr.bf16.mxu0 %v3268
      %3511 = vmatpush1.bf16.msra.mxu0 %v3267
      %3512 = vmatprep.subr.bf16.mxu0 %v3272
      %3513 = vmatpush1.bf16.msra.mxu0 %v3271
      %3514 = vmatprep.subr.bf16.mxu0 %v3276
      %3515 = vmatpush1.bf16.msra.mxu0 %v3275
      %3516 = vmatprep.subr.bf16.mxu0 %v3280
      %3517 = vmatpush1.bf16.msra.mxu0 %v3279
      %3518 = vmatprep.subr.bf16.mxu0 %v3284
      %3519 = vmatpush1.bf16.msra.mxu0 %v3283
      %3520 = vmatprep.mubr.bf16.mxu0 %v2612
      %3521 = vmatmul.mubr.bf16.gmra.mrb[0].mxu0 %v2611
      %v3522 = vpop.f32.mrb[0].mxu0
      %v3523 = vadd.f32 %v3450, %v3522
      %v3524 = vpop.f32.mrb[0].mxu0
      %v3525 = vadd.f32 %v3452, %v3524
      %v3526 = vpop.f32.mrb[0].mxu0
      %v3527 = vadd.f32 %v3454, %v3526
      %v3528 = vpop.f32.mrb[0].mxu0
      %v3529 = vadd.f32 %v3456, %v3528
      %3530 = vmatprep.mubr.bf16.mxu0 %v2616
      %3531 = vmatmul.mubr.bf16.gmra.mrb[0].mxu0 %v2615
      %v3532 = vpop.f32.mrb[0].mxu0
      %v3533 = vadd.f32 %v3460, %v3532
      %v3534 = vpop.f32.mrb[0].mxu0
      %v3535 = vadd.f32 %v3462, %v3534
      %v3536 = vpop.f32.mrb[0].mxu0
      %v3537 = vadd.f32 %v3464, %v3536
      %v3538 = vpop.f32.mrb[0].mxu0
      %v3539 = vadd.f32 %v3466, %v3538
      %3540 = vmatprep.mubr.bf16.mxu0 %v2620
      %3541 = vmatmul.mubr.bf16.gmra.mrb[0].mxu0 %v2619
      %v3542 = vpop.f32.mrb[0].mxu0
      %v3543 = vadd.f32 %v3470, %v3542
      %v3544 = vpop.f32.mrb[0].mxu0
      %v3545 = vadd.f32 %v3472, %v3544
      %v3546 = vpop.f32.mrb[0].mxu0
      %v3547 = vadd.f32 %v3474, %v3546
      %v3548 = vpop.f32.mrb[0].mxu0
      %v3549 = vadd.f32 %v3476, %v3548
      %3550 = vmatprep.mubr.bf16.mxu0 %v2624
      %3551 = vmatmul.mubr.bf16.gmra.mrb[0].mxu0 %v2623
      %v3552 = vpop.f32.mrb[0].mxu0
      %v3553 = vadd.f32 %v3480, %v3552
      %v3554 = vpop.f32.mrb[0].mxu0
      %v3555 = vadd.f32 %v3482, %v3554
      %v3556 = vpop.f32.mrb[0].mxu0
      %v3557 = vadd.f32 %v3484, %v3556
      %v3558 = vpop.f32.mrb[0].mxu0
      %v3559 = vadd.f32 %v3486, %v3558
      %3560 = vdwg.mxu0
      %3561 = vmatprep.subr.bf16.mxu0 %v3162
      %3562 = vmatpush1.bf16.msra.mxu0 %v3161
      %3563 = vmatprep.subr.bf16.mxu0 %v3166
      %3564 = vmatpush1.bf16.msra.mxu0 %v3165
      %3565 = vmatprep.subr.bf16.mxu0 %v3170
      %3566 = vmatpush1.bf16.msra.mxu0 %v3169
      %3567 = vmatprep.subr.bf16.mxu0 %v3174
      %3568 = vmatpush1.bf16.msra.mxu0 %v3173
      %3569 = vmatprep.subr.bf16.mxu0 %v3178
      %3570 = vmatpush1.bf16.msra.mxu0 %v3177
      %3571 = vmatprep.subr.bf16.mxu0 %v3182
      %3572 = vmatpush1.bf16.msra.mxu0 %v3181
      %3573 = vmatprep.subr.bf16.mxu0 %v3186
      %3574 = vmatpush1.bf16.msra.mxu0 %v3185
      %3575 = vmatprep.subr.bf16.mxu0 %v3190
      %3576 = vmatpush1.bf16.msra.mxu0 %v3189
      %3577 = vmatprep.subr.bf16.mxu0 %v3194
      %3578 = vmatpush1.bf16.msra.mxu0 %v3193
      %3579 = vmatprep.subr.bf16.mxu0 %v3198
      %3580 = vmatpush1.bf16.msra.mxu0 %v3197
      %3581 = vmatprep.subr.bf16.mxu0 %v3202
      %3582 = vmatpush1.bf16.msra.mxu0 %v3201
      %3583 = vmatprep.subr.bf16.mxu0 %v3206
      %3584 = vmatpush1.bf16.msra.mxu0 %v3205
      %3585 = vmatprep.subr.bf16.mxu0 %v3210
      %3586 = vmatpush1.bf16.msra.mxu0 %v3209
      %3587 = vmatprep.subr.bf16.mxu0 %v3214
      %3588 = vmatpush1.bf16.msra.mxu0 %v3213
      %3589 = vmatprep.subr.bf16.mxu0 %v3218
      %3590 = vmatpush1.bf16.msra.mxu0 %v3217
      %3591 = vmatprep.subr.bf16.mxu0 %v3222
      %3592 = vmatpush1.bf16.msra.mxu0 %v3221
      %3593 = vmatprep.mubr.bf16.mxu0 %v2610
      %3594 = vmatmul.mubr.bf16.gmra.mrb[0].mxu0 %v2609
      %v3595 = vpop.f32.mrb[0].mxu0
      %v3596 = vadd.f32 %v2766, %v3595
      %v3597 = vpop.f32.mrb[0].mxu0
      %v3598 = vadd.f32 %v2770, %v3597
      %v3599 = vpop.f32.mrb[0].mxu0
      %v3600 = vadd.f32 %v2766, %v3599
      %v3601 = vpop.f32.mrb[0].mxu0
      %v3602 = vadd.f32 %v2770, %v3601
      %3603 = vmatprep.mubr.bf16.mxu0 %v2614
      %3604 = vmatmul.mubr.bf16.gmra.mrb[0].mxu0 %v2613
      %v3605 = vpop.f32.mrb[0].mxu0
      %v3606 = vadd.f32 %v2766, %v3605
      %v3607 = vpop.f32.mrb[0].mxu0
      %v3608 = vadd.f32 %v2770, %v3607
      %v3609 = vpop.f32.mrb[0].mxu0
      %v3610 = vadd.f32 %v2766, %v3609
      %v3611 = vpop.f32.mrb[0].mxu0
      %v3612 = vadd.f32 %v2770, %v3611
      %3613 = vmatprep.mubr.bf16.mxu0 %v2618
      %3614 = vmatmul.mubr.bf16.gmra.mrb[0].mxu0 %v2617
      %v3615 = vpop.f32.mrb[0].mxu0
      %v3616 = vadd.f32 %v2766, %v3615
      %v3617 = vpop.f32.mrb[0].mxu0
      %v3618 = vadd.f32 %v2770, %v3617
      %v3619 = vpop.f32.mrb[0].mxu0
      %v3620 = vadd.f32 %v2766, %v3619
      %v3621 = vpop.f32.mrb[0].mxu0
      %v3622 = vadd.f32 %v2770, %v3621
      %3623 = vmatprep.mubr.bf16.mxu0 %v2622
      %3624 = vmatmul.mubr.bf16.gmra.mrb[0].mxu0 %v2621
      %v3625 = vpop.f32.mrb[0].mxu0
      %v3626 = vadd.f32 %v2766, %v3625
      %v3627 = vpop.f32.mrb[0].mxu0
      %v3628 = vadd.f32 %v2770, %v3627
      %v3629 = vpop.f32.mrb[0].mxu0
      %v3630 = vadd.f32 %v2766, %v3629
      %v3631 = vpop.f32.mrb[0].mxu0
      %v3632 = vadd.f32 %v2770, %v3631
      %3633 = vdwg.mxu0
      %3634 = vmatprep.subr.bf16.mxu0 %v3226
      %3635 = vmatpush1.bf16.msra.mxu0 %v3225
      %3636 = vmatprep.subr.bf16.mxu0 %v3230
      %3637 = vmatpush1.bf16.msra.mxu0 %v3229
      %3638 = vmatprep.subr.bf16.mxu0 %v3234
      %3639 = vmatpush1.bf16.msra.mxu0 %v3233
      %3640 = vmatprep.subr.bf16.mxu0 %v3238
      %3641 = vmatpush1.bf16.msra.mxu0 %v3237
      %3642 = vmatprep.subr.bf16.mxu0 %v3242
      %3643 = vmatpush1.bf16.msra.mxu0 %v3241
      %3644 = vmatprep.subr.bf16.mxu0 %v3246
      %3645 = vmatpush1.bf16.msra.mxu0 %v3245
      %3646 = vmatprep.subr.bf16.mxu0 %v3250
      %3647 = vmatpush1.bf16.msra.mxu0 %v3249
      %3648 = vmatprep.subr.bf16.mxu0 %v3254
      %3649 = vmatpush1.bf16.msra.mxu0 %v3253
      %3650 = vmatprep.subr.bf16.mxu0 %v3258
      %3651 = vmatpush1.bf16.msra.mxu0 %v3257
      %3652 = vmatprep.subr.bf16.mxu0 %v3262
      %3653 = vmatpush1.bf16.msra.mxu0 %v3261
      %3654 = vmatprep.subr.bf16.mxu0 %v3266
      %3655 = vmatpush1.bf16.msra.mxu0 %v3265
      %3656 = vmatprep.subr.bf16.mxu0 %v3270
      %3657 = vmatpush1.bf16.msra.mxu0 %v3269
      %3658 = vmatprep.subr.bf16.mxu0 %v3274
      %3659 = vmatpush1.bf16.msra.mxu0 %v3273
      %3660 = vmatprep.subr.bf16.mxu0 %v3278
      %3661 = vmatpush1.bf16.msra.mxu0 %v3277
      %3662 = vmatprep.subr.bf16.mxu0 %v3282
      %3663 = vmatpush1.bf16.msra.mxu0 %v3281
      %3664 = vmatprep.subr.bf16.mxu0 %v3286
      %3665 = vmatpush1.bf16.msra.mxu0 %v3285
      %3666 = vmatprep.mubr.bf16.mxu0 %v2612
      %3667 = vmatmul.mubr.bf16.gmra.mrb[0].mxu0 %v2611
      %v3668 = vpop.f32.mrb[0].mxu0
      %v3669 = vadd.f32 %v3596, %v3668
      %v3670 = vpop.f32.mrb[0].mxu0
      %v3671 = vadd.f32 %v3598, %v3670
      %v3672 = vpop.f32.mrb[0].mxu0
      %v3673 = vadd.f32 %v3600, %v3672
      %v3674 = vpop.f32.mrb[0].mxu0
      %v3675 = vadd.f32 %v3602, %v3674
      %3676 = vmatprep.mubr.bf16.mxu0 %v2616
      %3677 = vmatmul.mubr.bf16.gmra.mrb[0].mxu0 %v2615
      %v3678 = vpop.f32.mrb[0].mxu0
      %v3679 = vadd.f32 %v3606, %v3678
      %v3680 = vpop.f32.mrb[0].mxu0
      %v3681 = vadd.f32 %v3608, %v3680
      %v3682 = vpop.f32.mrb[0].mxu0
      %v3683 = vadd.f32 %v3610, %v3682
      %v3684 = vpop.f32.mrb[0].mxu0
      %v3685 = vadd.f32 %v3612, %v3684
      %3686 = vmatprep.mubr.bf16.mxu0 %v2620
      %3687 = vmatmul.mubr.bf16.gmra.mrb[0].mxu0 %v2619
      %v3688 = vpop.f32.mrb[0].mxu0
      %v3689 = vadd.f32 %v3616, %v3688
      %v3690 = vpop.f32.mrb[0].mxu0
      %v3691 = vadd.f32 %v3618, %v3690
      %v3692 = vpop.f32.mrb[0].mxu0
      %v3693 = vadd.f32 %v3620, %v3692
      %v3694 = vpop.f32.mrb[0].mxu0
      %v3695 = vadd.f32 %v3622, %v3694
      %3696 = vmatprep.mubr.bf16.mxu0 %v2624
      %3697 = vmatmul.mubr.bf16.gmra.mrb[0].mxu0 %v2623
      %v3698 = vpop.f32.mrb[0].mxu0
      %v3699 = vadd.f32 %v3626, %v3698
      %v3700 = vpop.f32.mrb[0].mxu0
      %v3701 = vadd.f32 %v3628, %v3700
      %v3702 = vpop.f32.mrb[0].mxu0
      %v3703 = vadd.f32 %v3630, %v3702
      %v3704 = vpop.f32.mrb[0].mxu0
      %v3705 = vadd.f32 %v3632, %v3704
      %3706 = vdwg.mxu0
      %v3707 = vmax.f32 %v3523, 0.0
      %v3708 = vmax.f32 %v3525, 0.0
      %v3709 = vmax.f32 %v3669, 0.0
      %v3710 = vmax.f32 %v3671, 0.0
      %v3711 = vmax.f32 %v3527, 0.0
      %v3712 = vmax.f32 %v3529, 0.0
      %v3713 = vmax.f32 %v3673, 0.0
      %v3714 = vmax.f32 %v3675, 0.0
      %v3715 = vmax.f32 %v3533, 0.0
      %v3716 = vmax.f32 %v3535, 0.0
      %v3717 = vmax.f32 %v3679, 0.0
      %v3718 = vmax.f32 %v3681, 0.0
      %v3719 = vmax.f32 %v3537, 0.0
      %v3720 = vmax.f32 %v3539, 0.0
      %v3721 = vmax.f32 %v3683, 0.0
      %v3722 = vmax.f32 %v3685, 0.0
      %v3723 = vmax.f32 %v3543, 0.0
      %v3724 = vmax.f32 %v3545, 0.0
      %v3725 = vmax.f32 %v3689, 0.0
      %v3726 = vmax.f32 %v3691, 0.0
      %v3727 = vmax.f32 %v3547, 0.0
      %v3728 = vmax.f32 %v3549, 0.0
      %v3729 = vmax.f32 %v3693, 0.0
      %v3730 = vmax.f32 %v3695, 0.0
      %v3731 = vmax.f32 %v3553, 0.0
      %v3732 = vmax.f32 %v3555, 0.0
      %v3733 = vmax.f32 %v3699, 0.0
      %v3734 = vmax.f32 %v3701, 0.0
      %v3735 = vmax.f32 %v3557, 0.0
      %v3736 = vmax.f32 %v3559, 0.0
      %v3737 = vmax.f32 %v3703, 0.0
      %v3738 = vmax.f32 %v3705, 0.0
      %v3739 = vld [vmem:[%s11] sm:$0xff]
      %v3740 = vld [vmem:[%s11 + $0x8] sm:$0xff]
      %v3741 = vld [vmem:[%s11 + $0x10] sm:$0xff]
      %v3742 = vld [vmem:[%s11 + $0x18] sm:$0xff]
      %v3743 = vld [vmem:[%s11 + $0x20] sm:$0xff]
      %v3744 = vld [vmem:[%s11 + $0x28] sm:$0xff]
      %v3745 = vld [vmem:[%s11 + $0x30] sm:$0xff]
      %v3746 = vld [vmem:[%s11 + $0x38] sm:$0xff]
      %v3747 = vld [vmem:[%s11 + $0x40] sm:$0xff]
      %v3748 = vld [vmem:[%s11 + $0x48] sm:$0xff]
      %v3749 = vld [vmem:[%s11 + $0x50] sm:$0xff]
      %v3750 = vld [vmem:[%s11 + $0x58] sm:$0xff]
      %v3751 = vld [vmem:[%s11 + $0x60] sm:$0xff]
      %v3752 = vld [vmem:[%s11 + $0x68] sm:$0xff]
      %v3753 = vld [vmem:[%s11 + $0x70] sm:$0xff]
      %v3754 = vld [vmem:[%s11 + $0x78] sm:$0xff]
      %v3755 = vld [vmem:[%s11 + $0x80] sm:$0xff]
      %v3756 = vld [vmem:[%s11 + $0x88] sm:$0xff]
      %v3757 = vld [vmem:[%s11 + $0x90] sm:$0xff]
      %v3758 = vld [vmem:[%s11 + $0x98] sm:$0xff]
      %v3759 = vld [vmem:[%s11 + $0xa0] sm:$0xff]
      %v3760 = vld [vmem:[%s11 + $0xa8] sm:$0xff]
      %v3761 = vld [vmem:[%s11 + $0xb0] sm:$0xff]
      %v3762 = vld [vmem:[%s11 + $0xb8] sm:$0xff]
      %v3763 = vld [vmem:[%s11 + $0xc0] sm:$0xff]
      %v3764 = vld [vmem:[%s11 + $0xc8] sm:$0xff]
      %v3765 = vld [vmem:[%s11 + $0xd0] sm:$0xff]
      %v3766 = vld [vmem:[%s11 + $0xd8] sm:$0xff]
      %v3767 = vld [vmem:[%s11 + $0xe0] sm:$0xff]
      %v3768 = vld [vmem:[%s11 + $0xe8] sm:$0xff]
      %v3769 = vld [vmem:[%s11 + $0xf0] sm:$0xff]
      %v3770 = vld [vmem:[%s11 + $0xf8] sm:$0xff]
      %v3771 = vld [vmem:[%s11 + $0x100] sm:$0xff]
      %v3772 = vld [vmem:[%s11 + $0x108] sm:$0xff]
      %v3773 = vld [vmem:[%s11 + $0x110] sm:$0xff]
      %v3774 = vld [vmem:[%s11 + $0x118] sm:$0xff]
      %v3775 = vld [vmem:[%s11 + $0x120] sm:$0xff]
      %v3776 = vld [vmem:[%s11 + $0x128] sm:$0xff]
      %v3777 = vld [vmem:[%s11 + $0x130] sm:$0xff]
      %v3778 = vld [vmem:[%s11 + $0x138] sm:$0xff]
      %v3779 = vld [vmem:[%s11 + $0x140] sm:$0xff]
      %v3780 = vld [vmem:[%s11 + $0x148] sm:$0xff]
      %v3781 = vld [vmem:[%s11 + $0x150] sm:$0xff]
      %v3782 = vld [vmem:[%s11 + $0x158] sm:$0xff]
      %v3783 = vld [vmem:[%s11 + $0x160] sm:$0xff]
      %v3784 = vld [vmem:[%s11 + $0x168] sm:$0xff]
      %v3785 = vld [vmem:[%s11 + $0x170] sm:$0xff]
      %v3786 = vld [vmem:[%s11 + $0x178] sm:$0xff]
      %v3787 = vld [vmem:[%s11 + $0x180] sm:$0xff]
      %v3788 = vld [vmem:[%s11 + $0x188] sm:$0xff]
      %v3789 = vld [vmem:[%s11 + $0x190] sm:$0xff]
      %v3790 = vld [vmem:[%s11 + $0x198] sm:$0xff]
      %v3791 = vld [vmem:[%s11 + $0x1a0] sm:$0xff]
      %v3792 = vld [vmem:[%s11 + $0x1a8] sm:$0xff]
      %v3793 = vld [vmem:[%s11 + $0x1b0] sm:$0xff]
      %v3794 = vld [vmem:[%s11 + $0x1b8] sm:$0xff]
      %v3795 = vld [vmem:[%s11 + $0x1c0] sm:$0xff]
      %v3796 = vld [vmem:[%s11 + $0x1c8] sm:$0xff]
      %v3797 = vld [vmem:[%s11 + $0x1d0] sm:$0xff]
      %v3798 = vld [vmem:[%s11 + $0x1d8] sm:$0xff]
      %v3799 = vld [vmem:[%s11 + $0x1e0] sm:$0xff]
      %v3800 = vld [vmem:[%s11 + $0x1e8] sm:$0xff]
      %v3801 = vld [vmem:[%s11 + $0x1f0] sm:$0xff]
      %v3802 = vld [vmem:[%s11 + $0x1f8] sm:$0xff]
      %v3803 = vld [vmem:[%s12] sm:$0x1]
      %v3805 = vlaneseq
      %v3806 = vshrl.u32 %v3805, 7
      %v3807 = vsub.s32 0, %v3806
      %v3808 = vrot.slane %v3803, %v3807
      %3810 = vmatprep.subr.mxu0 0.0
      %3811 = vmatpush1.msra.mxu0 %v3739
      %3812 = vmatprep.subr.mxu0 0.0
      %3813 = vmatpush1.msra.mxu0 %v3740
      %3814 = vmatprep.subr.mxu0 0.0
      %3815 = vmatpush1.msra.mxu0 %v3741
      %3816 = vmatprep.subr.mxu0 0.0
      %3817 = vmatpush1.msra.mxu0 %v3742
      %3818 = vmatprep.subr.mxu0 0.0
      %3819 = vmatpush1.msra.mxu0 %v3743
      %3820 = vmatprep.subr.mxu0 0.0
      %3821 = vmatpush1.msra.mxu0 %v3744
      %3822 = vmatprep.subr.mxu0 0.0
      %3823 = vmatpush1.msra.mxu0 %v3745
      %3824 = vmatprep.subr.mxu0 0.0
      %3825 = vmatpush1.msra.mxu0 %v3746
      %3826 = vmatprep.subr.mxu0 0.0
      %3827 = vmatpush1.msra.mxu0 %v3747
      %3828 = vmatprep.subr.mxu0 0.0
      %3829 = vmatpush1.msra.mxu0 %v3748
      %3830 = vmatprep.subr.mxu0 0.0
      %3831 = vmatpush1.msra.mxu0 %v3749
      %3832 = vmatprep.subr.mxu0 0.0
      %3833 = vmatpush1.msra.mxu0 %v3750
      %3834 = vmatprep.subr.mxu0 0.0
      %3835 = vmatpush1.msra.mxu0 %v3751
      %3836 = vmatprep.subr.mxu0 0.0
      %3837 = vmatpush1.msra.mxu0 %v3752
      %3838 = vmatprep.subr.mxu0 0.0
      %3839 = vmatpush1.msra.mxu0 %v3753
      %3840 = vmatprep.subr.mxu0 0.0
      %3841 = vmatpush1.msra.mxu0 %v3754
      %3842 = vmatprep.subr.mxu0 0.0
      %3843 = vmatpush1.msra.mxu0 %v3755
      %3844 = vmatprep.subr.mxu0 0.0
      %3845 = vmatpush1.msra.mxu0 %v3756
      %3846 = vmatprep.subr.mxu0 0.0
      %3847 = vmatpush1.msra.mxu0 %v3757
      %3848 = vmatprep.subr.mxu0 0.0
      %3849 = vmatpush1.msra.mxu0 %v3758
      %3850 = vmatprep.subr.mxu0 0.0
      %3851 = vmatpush1.msra.mxu0 %v3759
      %3852 = vmatprep.subr.mxu0 0.0
      %3853 = vmatpush1.msra.mxu0 %v3760
      %3854 = vmatprep.subr.mxu0 0.0
      %3855 = vmatpush1.msra.mxu0 %v3761
      %3856 = vmatprep.subr.mxu0 0.0
      %3857 = vmatpush1.msra.mxu0 %v3762
      %3858 = vmatprep.subr.mxu0 0.0
      %3859 = vmatpush1.msra.mxu0 %v3763
      %3860 = vmatprep.subr.mxu0 0.0
      %3861 = vmatpush1.msra.mxu0 %v3764
      %3862 = vmatprep.subr.mxu0 0.0
      %3863 = vmatpush1.msra.mxu0 %v3765
      %3864 = vmatprep.subr.mxu0 0.0
      %3865 = vmatpush1.msra.mxu0 %v3766
      %3866 = vmatprep.subr.mxu0 0.0
      %3867 = vmatpush1.msra.mxu0 %v3767
      %3868 = vmatprep.subr.mxu0 0.0
      %3869 = vmatpush1.msra.mxu0 %v3768
      %3870 = vmatprep.subr.mxu0 0.0
      %3871 = vmatpush1.msra.mxu0 %v3769
      %3872 = vmatprep.subr.mxu0 0.0
      %3873 = vmatpush1.msra.mxu0 %v3770
      %3874 = vmatprep.mubr.f32.mxu0 %v3708
      %3875 = vmatmul.mubr.f32.gmra.mrb[0].mxu0 %v3707
      %v3876 = vpop.f32.mrb[0].mxu0
      %v3877 = vadd.f32 %v3808, %v3876
      %v3878 = vpop.f32.mrb[0].mxu0
      %3879 = vmatprep.mubr.f32.mxu0 %v3712
      %3880 = vmatmul.mubr.f32.gmra.mrb[0].mxu0 %v3711
      %v3881 = vpop.f32.mrb[0].mxu0
      %v3882 = vadd.f32 %v3808, %v3881
      %v3883 = vpop.f32.mrb[0].mxu0
      %3884 = vmatprep.mubr.f32.mxu0 %v3716
      %3885 = vmatmul.mubr.f32.gmra.mrb[0].mxu0 %v3715
      %v3886 = vpop.f32.mrb[0].mxu0
      %v3887 = vadd.f32 %v3808, %v3886
      %v3888 = vpop.f32.mrb[0].mxu0
      %3889 = vmatprep.mubr.f32.mxu0 %v3720
      %3890 = vmatmul.mubr.f32.gmra.mrb[0].mxu0 %v3719
      %v3891 = vpop.f32.mrb[0].mxu0
      %v3892 = vadd.f32 %v3808, %v3891
      %v3893 = vpop.f32.mrb[0].mxu0
      %3894 = vmatprep.mubr.f32.mxu0 %v3724
      %3895 = vmatmul.mubr.f32.gmra.mrb[0].mxu0 %v3723
      %v3896 = vpop.f32.mrb[0].mxu0
      %v3897 = vadd.f32 %v3808, %v3896
      %v3898 = vpop.f32.mrb[0].mxu0
      %3899 = vmatprep.mubr.f32.mxu0 %v3728
      %3900 = vmatmul.mubr.f32.gmra.mrb[0].mxu0 %v3727
      %v3901 = vpop.f32.mrb[0].mxu0
      %v3902 = vadd.f32 %v3808, %v3901
      %v3903 = vpop.f32.mrb[0].mxu0
      %3904 = vmatprep.mubr.f32.mxu0 %v3732
      %3905 = vmatmul.mubr.f32.gmra.mrb[0].mxu0 %v3731
      %v3906 = vpop.f32.mrb[0].mxu0
      %v3907 = vadd.f32 %v3808, %v3906
      %v3908 = vpop.f32.mrb[0].mxu0
      %3909 = vmatprep.mubr.f32.mxu0 %v3736
      %3910 = vmatmul.mubr.f32.gmra.mrb[0].mxu0 %v3735
      %v3911 = vpop.f32.mrb[0].mxu0
      %v3912 = vadd.f32 %v3808, %v3911
      %v3913 = vpop.f32.mrb[0].mxu0
      %3914 = vdwg.mxu0
      %3915 = vmatprep.subr.mxu0 0.0
      %3916 = vmatpush1.msra.mxu0 %v3771
      %3917 = vmatprep.subr.mxu0 0.0
      %3918 = vmatpush1.msra.mxu0 %v3772
      %3919 = vmatprep.subr.mxu0 0.0
      %3920 = vmatpush1.msra.mxu0 %v3773
      %3921 = vmatprep.subr.mxu0 0.0
      %3922 = vmatpush1.msra.mxu0 %v3774
      %3923 = vmatprep.subr.mxu0 0.0
      %3924 = vmatpush1.msra.mxu0 %v3775
      %3925 = vmatprep.subr.mxu0 0.0
      %3926 = vmatpush1.msra.mxu0 %v3776
      %3927 = vmatprep.subr.mxu0 0.0
      %3928 = vmatpush1.msra.mxu0 %v3777
      %3929 = vmatprep.subr.mxu0 0.0
      %3930 = vmatpush1.msra.mxu0 %v3778
      %3931 = vmatprep.subr.mxu0 0.0
      %3932 = vmatpush1.msra.mxu0 %v3779
      %3933 = vmatprep.subr.mxu0 0.0
      %3934 = vmatpush1.msra.mxu0 %v3780
      %3935 = vmatprep.subr.mxu0 0.0
      %3936 = vmatpush1.msra.mxu0 %v3781
      %3937 = vmatprep.subr.mxu0 0.0
      %3938 = vmatpush1.msra.mxu0 %v3782
      %3939 = vmatprep.subr.mxu0 0.0
      %3940 = vmatpush1.msra.mxu0 %v3783
      %3941 = vmatprep.subr.mxu0 0.0
      %3942 = vmatpush1.msra.mxu0 %v3784
      %3943 = vmatprep.subr.mxu0 0.0
      %3944 = vmatpush1.msra.mxu0 %v3785
      %3945 = vmatprep.subr.mxu0 0.0
      %3946 = vmatpush1.msra.mxu0 %v3786
      %3947 = vmatprep.subr.mxu0 0.0
      %3948 = vmatpush1.msra.mxu0 %v3787
      %3949 = vmatprep.subr.mxu0 0.0
      %3950 = vmatpush1.msra.mxu0 %v3788
      %3951 = vmatprep.subr.mxu0 0.0
      %3952 = vmatpush1.msra.mxu0 %v3789
      %3953 = vmatprep.subr.mxu0 0.0
      %3954 = vmatpush1.msra.mxu0 %v3790
      %3955 = vmatprep.subr.mxu0 0.0
      %3956 = vmatpush1.msra.mxu0 %v3791
      %3957 = vmatprep.subr.mxu0 0.0
      %3958 = vmatpush1.msra.mxu0 %v3792
      %3959 = vmatprep.subr.mxu0 0.0
      %3960 = vmatpush1.msra.mxu0 %v3793
      %3961 = vmatprep.subr.mxu0 0.0
      %3962 = vmatpush1.msra.mxu0 %v3794
      %3963 = vmatprep.subr.mxu0 0.0
      %3964 = vmatpush1.msra.mxu0 %v3795
      %3965 = vmatprep.subr.mxu0 0.0
      %3966 = vmatpush1.msra.mxu0 %v3796
      %3967 = vmatprep.subr.mxu0 0.0
      %3968 = vmatpush1.msra.mxu0 %v3797
      %3969 = vmatprep.subr.mxu0 0.0
      %3970 = vmatpush1.msra.mxu0 %v3798
      %3971 = vmatprep.subr.mxu0 0.0
      %3972 = vmatpush1.msra.mxu0 %v3799
      %3973 = vmatprep.subr.mxu0 0.0
      %3974 = vmatpush1.msra.mxu0 %v3800
      %3975 = vmatprep.subr.mxu0 0.0
      %3976 = vmatpush1.msra.mxu0 %v3801
      %3977 = vmatprep.subr.mxu0 0.0
      %3978 = vmatpush1.msra.mxu0 %v3802
      %3979 = vmatprep.mubr.f32.mxu0 %v3710
      %3980 = vmatmul.mubr.f32.gmra.mrb[0].mxu0 %v3709
      %v3981 = vpop.f32.mrb[0].mxu0
      %v3982 = vadd.f32 %v3877, %v3981
      %v3983 = vpop.f32.mrb[0].mxu0
      %3984 = vmatprep.mubr.f32.mxu0 %v3714
      %3985 = vmatmul.mubr.f32.gmra.mrb[0].mxu0 %v3713
      %v3986 = vpop.f32.mrb[0].mxu0
      %v3987 = vadd.f32 %v3882, %v3986
      %v3988 = vpop.f32.mrb[0].mxu0
      %3989 = vmatprep.mubr.f32.mxu0 %v3718
      %3990 = vmatmul.mubr.f32.gmra.mrb[0].mxu0 %v3717
      %v3991 = vpop.f32.mrb[0].mxu0
      %v3992 = vadd.f32 %v3887, %v3991
      %v3993 = vpop.f32.mrb[0].mxu0
      %3994 = vmatprep.mubr.f32.mxu0 %v3722
      %3995 = vmatmul.mubr.f32.gmra.mrb[0].mxu0 %v3721
      %v3996 = vpop.f32.mrb[0].mxu0
      %v3997 = vadd.f32 %v3892, %v3996
      %v3998 = vpop.f32.mrb[0].mxu0
      %3999 = vmatprep.mubr.f32.mxu0 %v3726
      %4000 = vmatmul.mubr.f32.gmra.mrb[0].mxu0 %v3725
      %v4001 = vpop.f32.mrb[0].mxu0
      %v4002 = vadd.f32 %v3897, %v4001
      %v4003 = vpop.f32.mrb[0].mxu0
      %4004 = vmatprep.mubr.f32.mxu0 %v3730
      %4005 = vmatmul.mubr.f32.gmra.mrb[0].mxu0 %v3729
      %v4006 = vpop.f32.mrb[0].mxu0
      %v4007 = vadd.f32 %v3902, %v4006
      %v4008 = vpop.f32.mrb[0].mxu0
      %4009 = vmatprep.mubr.f32.mxu0 %v3734
      %4010 = vmatmul.mubr.f32.gmra.mrb[0].mxu0 %v3733
      %v4011 = vpop.f32.mrb[0].mxu0
      %v4012 = vadd.f32 %v3907, %v4011
      %v4013 = vpop.f32.mrb[0].mxu0
      %4014 = vmatprep.mubr.f32.mxu0 %v3738
      %4015 = vmatmul.mubr.f32.gmra.mrb[0].mxu0 %v3737
      %v4016 = vpop.f32.mrb[0].mxu0
      %v4017 = vadd.f32 %v3912, %v4016
      %v4018 = vpop.f32.mrb[0].mxu0
      %4019 = vdwg.mxu0
      %4020 = vst.msk [vmem:[%s563] sm:$0xff] %vm599, %v3982
      %4021 = vst.msk [vmem:[%s563 + $0x8] sm:$0xff] %vm599, %v3987
      %4022 = vst.msk [vmem:[%s563 + $0x10] sm:$0xff] %vm599, %v3992
      %4023 = vst.msk [vmem:[%s563 + $0x18] sm:$0xff] %vm599, %v3997
      %4024 = vst.msk [vmem:[%s563 + $0x20] sm:$0xff] %vm599, %v4002
      %4025 = vst.msk [vmem:[%s563 + $0x28] sm:$0xff] %vm599, %v4007
      %4026 = vst.msk [vmem:[%s563 + $0x30] sm:$0xff] %vm599, %v4012
      %4027 = vst.msk [vmem:[%s563 + $0x38] sm:$0xff] %vm599, %v4017
      %s4028 = smul.u32 8, %s31
      %p4029 = scmp.lt.s32.totalorder %s30, 1
      %s4030 = scalar_select %p4029, %s30, 1
      %p4031 = scmp.lt.s32.totalorder %s4028, 15
      %s4032 = scalar_select %p4031, %s4028, 15
      %s4033 = smul.addr %s4030, 16
      %s4034 = sadd.s32 %s4032, %s4033
      %s4035 = smul.addr %s4034, 8
      %s4036 = scalar_lea.vmem %s13, %s4035
      %s4037 = smul.u32 8, %s31
      %p4038 = scmp.lt.s32.totalorder %s30, 1
      %s4039 = scalar_select %p4038, %s30, 1
      %p4040 = scmp.lt.s32.totalorder %s4037, 15
      %s4041 = scalar_select %p4040, %s4037, 15
      %s4042 = smul.addr %s4039, 16
      %s4043 = sadd.s32 %s4041, %s4042
      %s4044 = smul.addr %s4043, 8
      %s4045 = scalar_lea.vmem %s14, %s4044
      // Predicated region
      $region73: #{unfolding_net_forward.5} parent=71 // pred_check
        %p4046 = pneg %p348
      $region74: #{unfolding_net_forward.5} parent=71 // pred_check_branch
        %4048 = sbr.rel (%p4046) target = $region76
      $region75: #{unfolding_net_forward.5} parent=71 // pred_region
        %s4049 = smul.u32 8, %s31
      $region76: #{unfolding_net_forward.5} parent=71 // pred_fallthru
        _
      // Predicated region
      $region77: #{unfolding_net_forward.5} parent=71 // pred_check
        %p4050 = pneg %p376
      $region78: #{unfolding_net_forward.5} parent=71 // pred_check_branch
        %4052 = sbr.rel (%p4050) target = $region80
      $region79: #{unfolding_net_forward.5} parent=71 // pred_region
        %s4053 = smul.u32 8, %s31
      $region80: #{unfolding_net_forward.5} parent=71 // pred_fallthru
        _
    $region72: #{unfolding_net_forward.5} parent=5 // pred_fallthru
      _
    %p4054 = scmp.le.s32.totalorder 2, %s21
    // Predicated region
    $region81: #{unfolding_net_forward.5} parent=5 // pred_check
      %p4055 = pneg %p4054
    $region82: #{unfolding_net_forward.5} parent=5 // pred_check_branch
      %4057 = sbr.rel (%p4055) target = $region84
    $region83: #{unfolding_net_forward.5} parent=5 // pred_region
      %s4058 = ssub.s32 %s21, 2
      // Predicated region
      $region85: #{unfolding_net_forward.5} parent=83 // pred_check
        %p4059 = pneg %p354
      $region86: #{unfolding_net_forward.5} parent=83 // pred_check_branch
        %4061 = sbr.rel (%p4059) target = $region88
      $region87: #{unfolding_net_forward.5} parent=83 // pred_region
        %s4062 = smul.u32 8, %s33
        %p4063 = scmp.lt.s32.totalorder %s32, 1
        %s4064 = scalar_select %p4063, %s32, 1
        %p4065 = scmp.lt.s32.totalorder %s4062, 15
        %s4066 = scalar_select %p4065, %s4062, 15
        %s4067 = smul.addr %s4064, 16
        %s4068 = sadd.s32 %s4066, %s4067
        %s4069 = smul.addr %s4068, 8
        %s4070 = scalar_lea.vmem %s13, %s4069
      $region88: #{unfolding_net_forward.5} parent=83 // pred_fallthru
        _
      // Predicated region
      $region89: #{unfolding_net_forward.5} parent=83 // pred_check
        %p4071 = pneg %p382
      $region90: #{unfolding_net_forward.5} parent=83 // pred_check_branch
        %4073 = sbr.rel (%p4071) target = $region92
      $region91: #{unfolding_net_forward.5} parent=83 // pred_region
        %s4074 = smul.u32 8, %s33
        %p4075 = scmp.lt.s32.totalorder %s32, 1
        %s4076 = scalar_select %p4075, %s32, 1
        %p4077 = scmp.lt.s32.totalorder %s4074, 15
        %s4078 = scalar_select %p4077, %s4074, 15
        %s4079 = smul.addr %s4076, 16
        %s4080 = sadd.s32 %s4078, %s4079
        %s4081 = smul.addr %s4080, 8
        %s4082 = scalar_lea.vmem %s14, %s4081
      $region92: #{unfolding_net_forward.5} parent=83 // pred_fallthru
        _
    $region84: #{unfolding_net_forward.5} parent=5 // pred_fallthru
      _
  $region6: #{unfolding_net_forward.5} parent=0 // loop_footer
    %s25 = sadd.s32 1, %s21
  $region7: #{unfolding_net_forward.5} parent=0 // loop_footer_branch
    %20 = sbr.rel target = $region3
  $region8: #{unfolding_net_forward.5} parent=0 // loop_exit
    _

</llo_original>
